<compile_context>
chip_gen: v7x
topology: tpu7x:2x2x1
jax: 0.10.0
libtpu: 0.0.40
codegen_flags: <defaults>
</compile_context>

<pallas_src>
import functools

import jax
import jax.numpy as jnp
from jax.experimental import pallas as pl
from jax.experimental.pallas import tpu as pltpu


# --------------------------------------------------------------------- helpers
def _full_spec(a):
    """BlockSpec bringing a small array whole into VMEM (grid has a single step)."""
    nd = a.ndim
    return pl.BlockSpec(a.shape, lambda i, _nd=nd: (0,) * _nd)


def _layernorm(x, gamma, beta, eps):
    """LayerNorm over the last dim of an f32 value. gamma/beta: (1, E)."""
    mu = jnp.mean(x, axis=-1, keepdims=True)
    xc = x - mu
    var = jnp.mean(xc * xc, axis=-1, keepdims=True)
    return xc * jax.lax.rsqrt(var + eps) * gamma + beta


def _erf(x):
    # Abramowitz & Stegun 7.1.26 rational approximation (|err| < 1.5e-7, i.e. f32-accurate)
    # built from exp / mul / div only, so it lowers cleanly on Mosaic.
    a1, a2, a3, a4, a5 = (0.254829592, -0.284496736, 1.421413741,
                          -1.453152027, 1.061405429)
    p = 0.3275911
    ax = jnp.abs(x)
    t = 1.0 / (1.0 + p * ax)
    poly = ((((a5 * t + a4) * t + a3) * t + a2) * t + a1) * t
    y = 1.0 - poly * jnp.exp(-ax * ax)
    return jnp.where(x >= 0.0, y, -y)


def _gelu_exact(x):
    """erf-based GELU matching F.gelu's default (non-tanh) behaviour."""
    return 0.5 * x * (1.0 + _erf(x * 0.7071067811865476))


def _mha_core(q_in, k_in, v_in, w, head_masks):
    """nn.MultiheadAttention math (no masks, dropout=0) on f32 2-D values.

    q_in: (Lq, E); k_in/v_in: (Lk, E).  w = (wq, bq, wk, bk, wv, bv, wo, bo), pre-transposed so
    y = x @ W + b and with the 1/sqrt(head_dim) scale already folded into wq/bq.  Projections are
    full E-wide MXU matmuls; only k and v need per-head lane masks (masking q too is redundant),
    so head contexts land directly in their output columns before one full-width output proj.
    """
    wq, bq, wk, bk, wv, bv, wo, bo = w
    lq, e = q_in.shape
    q = jnp.dot(q_in, wq, preferred_element_type=jnp.float32) + bq
    k = jnp.dot(k_in, wk, preferred_element_type=jnp.float32) + bk
    v = jnp.dot(v_in, wv, preferred_element_type=jnp.float32) + bv
    ctx = jnp.zeros((lq, e), jnp.float32)
    # TODO(synk): for long sequences convert to a flash-style Lk-tiled online softmax and batch
    # the per-head softmax into one (nhead*Lq, Lk) pass.
    for m in head_masks:
        kh = jnp.where(m, k, 0.0)
        s = jax.lax.dot_general(q, kh, (((1,), (1,)), ((), ())),
                                preferred_element_type=jnp.float32)      # (Lq, Lk)
        s = s - jnp.max(s, axis=-1, keepdims=True)
        pr = jnp.exp(s)
        pr = pr * pl.reciprocal(jnp.sum(pr, axis=-1, keepdims=True), approx=True)
        ctx = ctx + jnp.dot(pr, jnp.where(m, v, 0.0), preferred_element_type=jnp.float32)
    return jnp.dot(ctx, wo, preferred_element_type=jnp.float32) + bo


# --------------------------------------------------------------- fused kernel
def _transformer_layer_kernel(
        tgt_ref, ctx_ref, pos_ref,
        n1w_ref, n1b_ref, n2w_ref, n2b_ref, n3w_ref, n3b_ref,
        swq_ref, sbq_ref, swk_ref, sbk_ref, swv_ref, sbv_ref, swo_ref, sbo_ref,
        cwq_ref, cbq_ref, cwk_ref, cbk_ref, cwv_ref, cbv_ref, cwo_ref, cbo_ref,
        w1_ref, b1_ref, w2_ref, b2_ref,
        o_ref,
        pad_ref,
        *, B, H, W, nhead, eps, use_spatial_attn):
    hw = H * W
    E = tgt_ref.shape[-1]
    C1 = b1_ref.shape[-1]
    hd = E // nhead

    # Zero the shared padded conv plane ONCE (single kernel invocation); per batch / per conv only
    # the interior window is rewritten, the permanent zero border provides the 3x3 padding.
    pad_ref[...] = jnp.zeros(pad_ref.shape, jnp.float32)

    # Hoist weights / biases / head masks out of the (unrolled) per-batch loop.
    n1w, n1b = n1w_ref[...], n1b_ref[...]
    n2w, n2b = n2w_ref[...], n2b_ref[...]
    n3w, n3b = n3w_ref[...], n3b_ref[...]
    self_w = (swq_ref[...], sbq_ref[...], swk_ref[...], sbk_ref[...],
              swv_ref[...], sbv_ref[...], swo_ref[...], sbo_ref[...])
    cross_w = (cwq_ref[...], cbq_ref[...], cwk_ref[...], cbk_ref[...],
               cwv_ref[...], cbv_ref[...], cwo_ref[...], cbo_ref[...])
    w1, b1 = w1_ref[...], b1_ref[...]
    w2, b2 = w2_ref[...], b2_ref[...]
    col = jax.lax.broadcasted_iota(jnp.int32, (1, E), 1)
    head_masks = [(col >= h * hd) & (col < (h + 1) * hd) for h in range(nhead)]

    tgt_all = tgt_ref[...].astype(jnp.float32)        # (L,  B, E)
    pos_all = pos_ref[...].astype(jnp.float32)        # (L,  B, E)
    ctx_all = ctx_ref[...].astype(jnp.float32)        # (Lc, B, E)

    # TODO(synk): for large B (or on v7x's two TensorCores) split this loop across a 2-wide
    # "parallel" grid axis instead of unrolling it inside a single grid step.
    for b in range(B):
        x = tgt_all[:, b, :]                          # (L, E)
        p = pos_all[:, b, :]
        c = ctx_all[:, b, :]

        # ---- block 1: LN1 + pos embed + self-attention + residual -------------------------
        xn = _layernorm(x, n1w, n1b, eps)
        qk = xn + p                                   # with_pos_embed (q and k)
        x = x + _mha_core(qk, qk, xn, self_w, head_masks)

        if use_spatial_attn:
            x = x[:hw]
            p = p[:hw]

        # ---- block 2: LN2 + pos embed + cross-attention + residual ------------------------
        xn = _layernorm(x, n2w, n2b, eps)
        x = x + _mha_core(xn + p, c, c, cross_w, head_masks)

        # ---- block 3: LN3 + conv3x3 -> GELU -> conv3x3 + bias + residual ------------------
        # Each conv is 9 shifted (H*W, Cin) @ (Cin, Cout) MXU matmuls against the shared padded
        # plane; the dim_conv intermediate never leaves VMEM.
        # TODO(synk): at production spatial sizes switch to a row-tiled (halo) im2col matmul,
        # gated on available VMEM (v7x: 64 MiB physical / 32 MiB default scoped).
        xn = _layernorm(x, n3w, n3b, eps)

        pad_ref[1:1 + H, 1:1 + W, :E] = xn.reshape(H, W, E)      # single interior block store
        xp = pad_ref[...]
        acc1 = jnp.zeros((hw, C1), jnp.float32)
        for t in range(9):
            ky, kx = t // 3, t % 3
            patch = xp[ky:ky + H, kx:kx + W, :E].reshape(hw, E)
            acc1 = acc1 + jnp.dot(patch, w1[t], preferred_element_type=jnp.float32)
        y = _gelu_exact(acc1 + b1)                               # (H*W, C1), stays in VMEM

        pad_ref[1:1 + H, 1:1 + W, :C1] = y.reshape(H, W, C1)
        yp = pad_ref[...]
        acc2 = jnp.zeros((hw, E), jnp.float32)
        for t in range(9):
            ky, kx = t // 3, t % 3
            patch = yp[ky:ky + H, kx:kx + W, :C1].reshape(hw, C1)
            acc2 = acc2 + jnp.dot(patch, w2[t], preferred_element_type=jnp.float32)
        x = x + acc2 + b2

        o_ref[:, b:b + 1, :] = x[:, None, :].astype(o_ref.dtype)


# ------------------------------------------------------------ full forward
def transformer_layer_forward(params, tgt, context, shape, nhead,
                              query_pos=None, use_spatial_attn=False,
                              use_residual=False):
    """Mirrors TransformerLayer.forward; tgt/context/query_pos are seq-first (L, B, E)."""
    # TODO(synk): tgt_mask / tgt_key_padding_mask not implemented (they are None in this demo).
    b, _, h, w = shape
    L, B, E = tgt.shape
    hw = h * w
    assert use_spatial_attn or L == hw
    if use_residual:
        inp = tgt

    pos = jnp.zeros_like(tgt) if query_pos is None else query_pos
    L_out = hw if use_spatial_attn else L

    sa, ca = params['self_attn'], params['cross_attn']
    C1 = params['conv1_b'].shape[-1]
    w_pad = ((w + 2 + 7) // 8) * 8            # sublane-aligned padded conv-plane width
    c_max = max(E, C1)

    args = (tgt, context, pos,
            params['norm1_w'], params['norm1_b'],
            params['norm2_w'], params['norm2_b'],
            params['norm3_w'], params['norm3_b'],
            sa['wq'], sa['bq'], sa['wk'], sa['bk'], sa['wv'], sa['bv'], sa['wo'], sa['bo'],
            ca['wq'], ca['bq'], ca['wk'], ca['bk'], ca['wv'], ca['bv'], ca['wo'], ca['bo'],
            params['conv1_w'], params['conv1_b'], params['conv2_w'], params['conv2_b'])

    out = pl.pallas_call(
        functools.partial(_transformer_layer_kernel, B=B, H=h, W=w, nhead=nhead,
                          eps=1e-5, use_spatial_attn=use_spatial_attn),
        out_shape=jax.ShapeDtypeStruct((L_out, B, E), tgt.dtype),
        grid=(1,),
        in_specs=[_full_spec(a) for a in args],
        out_specs=pl.BlockSpec((L_out, B, E), lambda i: (0, 0, 0)),
        scratch_shapes=[pltpu.VMEM((h + 2, w_pad, c_max), jnp.float32)],
        compiler_params=pltpu.CompilerParams(dimension_semantics=("arbitrary",)),
    )(*args)

    if use_residual:
        out = out + inp
    return out


# ------------------------------------------------------------ parameter init
def init_params(key, embed_dim, nhead, dim_conv):
    E = embed_dim
    hd = E // nhead
    scale = float(hd) ** -0.5
    ks = jax.random.split(key, 18)

    def nrm(k, shape, s=0.05):
        return (s * jax.random.normal(k, shape)).astype(jnp.float32)

    def attn_params(k1, k2, k3, k4):
        in_w = nrm(k1, (3 * E, E))       # torch in_proj_weight
        in_b = nrm(k2, (3 * E,))         # torch in_proj_bias
        out_w = nrm(k3, (E, E))          # torch out_proj.weight
        out_b = nrm(k4, (E,))            # torch out_proj.bias
        return {
            # pre-transposed so y = x @ W + b; 1/sqrt(head_dim) folded into the q projection.
            'wq': in_w[:E].T * scale, 'bq': (in_b[:E] * scale).reshape(1, E),
            'wk': in_w[E:2 * E].T,    'bk': in_b[E:2 * E].reshape(1, E),
            'wv': in_w[2 * E:].T,     'bv': in_b[2 * E:].reshape(1, E),
            'wo': out_w.T,            'bo': out_b.reshape(1, E),
        }

    p = {}
    p['self_attn'] = attn_params(ks[0], ks[1], ks[2], ks[3])
    p['cross_attn'] = attn_params(ks[4], ks[5], ks[6], ks[7])

    conv1_w = nrm(ks[8], (dim_conv, E, 3, 3))   # torch OIHW
    conv1_b = nrm(ks[9], (dim_conv,))
    conv2_w = nrm(ks[10], (E, dim_conv, 3, 3))
    conv2_b = nrm(ks[11], (E,))
    # OIHW -> (kh*kw, Cin, Cout) for the 9-tap matmul formulation.
    p['conv1_w'] = jnp.transpose(conv1_w, (2, 3, 1, 0)).reshape(9, E, dim_conv)
    p['conv1_b'] = conv1_b.reshape(1, dim_conv)
    p['conv2_w'] = jnp.transpose(conv2_w, (2, 3, 1, 0)).reshape(9, dim_conv, E)
    p['conv2_b'] = conv2_b.reshape(1, E)

    p['norm1_w'] = (1.0 + 0.1 * jax.random.normal(ks[12], (1, E))).astype(jnp.float32)
    p['norm1_b'] = nrm(ks[13], (1, E), 0.1)
    p['norm2_w'] = (1.0 + 0.1 * jax.random.normal(ks[14], (1, E))).astype(jnp.float32)
    p['norm2_b'] = nrm(ks[15], (1, E), 0.1)
    p['norm3_w'] = (1.0 + 0.1 * jax.random.normal(ks[16], (1, E))).astype(jnp.float32)
    p['norm3_b'] = nrm(ks[17], (1, E), 0.1)
    return p


if __name__ == "__main__":
    embed_dim, nhead, dim_conv = 32, 4, 64
    b, h, w = 2, 4, 4
    L = h * w       # seq length for tgt / query_pos
    Lc = 8          # context seq length

    key = jax.random.PRNGKey(0)
    k_par, k_tgt, k_ctx, k_pos = jax.random.split(key, 4)
    params = init_params(k_par, embed_dim, nhead, dim_conv)

    tgt = jax.random.normal(k_tgt, (L, b, embed_dim), jnp.float32)
    context = jax.random.normal(k_ctx, (Lc, b, embed_dim), jnp.float32)
    query_pos = jax.random.normal(k_pos, (L, b, embed_dim), jnp.float32)
    shape = (b, embed_dim, h, w)

    fwd = jax.jit(transformer_layer_forward,
                  static_argnames=("shape", "nhead", "use_spatial_attn", "use_residual"))
    out = fwd(params, tgt, context, shape=shape, nhead=nhead, query_pos=query_pos)
    out = jax.block_until_ready(out)
    assert out.shape == (L, b, embed_dim)
    assert bool(jnp.all(jnp.isfinite(out)))
    print("KERNEL_OK")
</pallas_src>

<mosaic_0001>
module attributes {stable_mosaic.version = 11 : i64} {
  func.func @_transformer_layer_kernel(%arg0: i32, %arg1: memref<16x2x32xf32, #tpu.memory_space<vmem>>, %arg2: memref<8x2x32xf32, #tpu.memory_space<vmem>>, %arg3: memref<16x2x32xf32, #tpu.memory_space<vmem>>, %arg4: memref<1x32xf32, #tpu.memory_space<vmem>>, %arg5: memref<1x32xf32, #tpu.memory_space<vmem>>, %arg6: memref<1x32xf32, #tpu.memory_space<vmem>>, %arg7: memref<1x32xf32, #tpu.memory_space<vmem>>, %arg8: memref<1x32xf32, #tpu.memory_space<vmem>>, %arg9: memref<1x32xf32, #tpu.memory_space<vmem>>, %arg10: memref<32x32xf32, #tpu.memory_space<vmem>>, %arg11: memref<1x32xf32, #tpu.memory_space<vmem>>, %arg12: memref<32x32xf32, #tpu.memory_space<vmem>>, %arg13: memref<1x32xf32, #tpu.memory_space<vmem>>, %arg14: memref<32x32xf32, #tpu.memory_space<vmem>>, %arg15: memref<1x32xf32, #tpu.memory_space<vmem>>, %arg16: memref<32x32xf32, #tpu.memory_space<vmem>>, %arg17: memref<1x32xf32, #tpu.memory_space<vmem>>, %arg18: memref<32x32xf32, #tpu.memory_space<vmem>>, %arg19: memref<1x32xf32, #tpu.memory_space<vmem>>, %arg20: memref<32x32xf32, #tpu.memory_space<vmem>>, %arg21: memref<1x32xf32, #tpu.memory_space<vmem>>, %arg22: memref<32x32xf32, #tpu.memory_space<vmem>>, %arg23: memref<1x32xf32, #tpu.memory_space<vmem>>, %arg24: memref<32x32xf32, #tpu.memory_space<vmem>>, %arg25: memref<1x32xf32, #tpu.memory_space<vmem>>, %arg26: memref<9x32x64xf32, #tpu.memory_space<vmem>>, %arg27: memref<1x64xf32, #tpu.memory_space<vmem>>, %arg28: memref<9x64x32xf32, #tpu.memory_space<vmem>>, %arg29: memref<1x32xf32, #tpu.memory_space<vmem>>, %arg30: memref<16x2x32xf32, #tpu.memory_space<vmem>>, %arg31: memref<6x8x64xf32, #tpu.memory_space<vmem>>) attributes {dimension_semantics = [#tpu.dimension_semantics<arbitrary>], iteration_bounds = array<i64: 1>, scalar_prefetch = 0 : i64, scratch_operands = 1 : i64, tpu.core_type = #tpu.core_type<tc>, window_params = [{pipeline_mode = #tpu.pipeline_mode<synchronous>, transform_indices = @transform_0, window_bounds = array<i64: 16, 2, 32>}, {pipeline_mode = #tpu.pipeline_mode<synchronous>, transform_indices = @transform_1, window_bounds = array<i64: 8, 2, 32>}, {pipeline_mode = #tpu.pipeline_mode<synchronous>, transform_indices = @transform_2, window_bounds = array<i64: 16, 2, 32>}, {pipeline_mode = #tpu.pipeline_mode<synchronous>, transform_indices = @transform_3, window_bounds = array<i64: 1, 32>}, {pipeline_mode = #tpu.pipeline_mode<synchronous>, transform_indices = @transform_4, window_bounds = array<i64: 1, 32>}, {pipeline_mode = #tpu.pipeline_mode<synchronous>, transform_indices = @transform_5, window_bounds = array<i64: 1, 32>}, {pipeline_mode = #tpu.pipeline_mode<synchronous>, transform_indices = @transform_6, window_bounds = array<i64: 1, 32>}, {pipeline_mode = #tpu.pipeline_mode<synchronous>, transform_indices = @transform_7, window_bounds = array<i64: 1, 32>}, {pipeline_mode = #tpu.pipeline_mode<synchronous>, transform_indices = @transform_8, window_bounds = array<i64: 1, 32>}, {pipeline_mode = #tpu.pipeline_mode<synchronous>, transform_indices = @transform_9, window_bounds = array<i64: 32, 32>}, {pipeline_mode = #tpu.pipeline_mode<synchronous>, transform_indices = @transform_10, window_bounds = array<i64: 1, 32>}, {pipeline_mode = #tpu.pipeline_mode<synchronous>, transform_indices = @transform_11, window_bounds = array<i64: 32, 32>}, {pipeline_mode = #tpu.pipeline_mode<synchronous>, transform_indices = @transform_12, window_bounds = array<i64: 1, 32>}, {pipeline_mode = #tpu.pipeline_mode<synchronous>, transform_indices = @transform_13, window_bounds = array<i64: 32, 32>}, {pipeline_mode = #tpu.pipeline_mode<synchronous>, transform_indices = @transform_14, window_bounds = array<i64: 1, 32>}, {pipeline_mode = #tpu.pipeline_mode<synchronous>, transform_indices = @transform_15, window_bounds = array<i64: 32, 32>}, {pipeline_mode = #tpu.pipeline_mode<synchronous>, transform_indices = @transform_16, window_bounds = array<i64: 1, 32>}, {pipeline_mode = #tpu.pipeline_mode<synchronous>, transform_indices = @transform_17, window_bounds = array<i64: 32, 32>}, {pipeline_mode = #tpu.pipeline_mode<synchronous>, transform_indices = @transform_18, window_bounds = array<i64: 1, 32>}, {pipeline_mode = #tpu.pipeline_mode<synchronous>, transform_indices = @transform_19, window_bounds = array<i64: 32, 32>}, {pipeline_mode = #tpu.pipeline_mode<synchronous>, transform_indices = @transform_20, window_bounds = array<i64: 1, 32>}, {pipeline_mode = #tpu.pipeline_mode<synchronous>, transform_indices = @transform_21, window_bounds = array<i64: 32, 32>}, {pipeline_mode = #tpu.pipeline_mode<synchronous>, transform_indices = @transform_22, window_bounds = array<i64: 1, 32>}, {pipeline_mode = #tpu.pipeline_mode<synchronous>, transform_indices = @transform_23, window_bounds = array<i64: 32, 32>}, {pipeline_mode = #tpu.pipeline_mode<synchronous>, transform_indices = @transform_24, window_bounds = array<i64: 1, 32>}, {pipeline_mode = #tpu.pipeline_mode<synchronous>, transform_indices = @transform_25, window_bounds = array<i64: 9, 32, 64>}, {pipeline_mode = #tpu.pipeline_mode<synchronous>, transform_indices = @transform_26, window_bounds = array<i64: 1, 64>}, {pipeline_mode = #tpu.pipeline_mode<synchronous>, transform_indices = @transform_27, window_bounds = array<i64: 9, 64, 32>}, {pipeline_mode = #tpu.pipeline_mode<synchronous>, transform_indices = @transform_28, window_bounds = array<i64: 1, 32>}, {pipeline_mode = #tpu.pipeline_mode<synchronous>, transform_indices = @transform_29, window_bounds = array<i64: 16, 2, 32>}]} {
    %cst = arith.constant 0.000000e+00 : f32
    %0 = vector.broadcast %cst : f32 to vector<6x8x64xf32>
    %c0 = arith.constant 0 : index
    %c0_0 = arith.constant 0 : index
    %c0_1 = arith.constant 0 : index
    %1 = vector.load %arg31[%c0, %c0_0, %c0_1] : memref<6x8x64xf32, #tpu.memory_space<vmem>>, vector<6x8x64xf32>
    tpu.vector_store %arg31[%c0, %c0_0, %c0_1], %0 {strides = array<i32>} : memref<6x8x64xf32, #tpu.memory_space<vmem>>, vector<6x8x64xf32>,
    %c0_2 = arith.constant 0 : index
    %c0_3 = arith.constant 0 : index
    %2 = vector.load %arg4[%c0_2, %c0_3] : memref<1x32xf32, #tpu.memory_space<vmem>>, vector<1x32xf32>
    %c0_4 = arith.constant 0 : index
    %c0_5 = arith.constant 0 : index
    %3 = vector.load %arg5[%c0_4, %c0_5] : memref<1x32xf32, #tpu.memory_space<vmem>>, vector<1x32xf32>
    %c0_6 = arith.constant 0 : index
    %c0_7 = arith.constant 0 : index
    %4 = vector.load %arg6[%c0_6, %c0_7] : memref<1x32xf32, #tpu.memory_space<vmem>>, vector<1x32xf32>
    %c0_8 = arith.constant 0 : index
    %c0_9 = arith.constant 0 : index
    %5 = vector.load %arg7[%c0_8, %c0_9] : memref<1x32xf32, #tpu.memory_space<vmem>>, vector<1x32xf32>
    %c0_10 = arith.constant 0 : index
    %c0_11 = arith.constant 0 : index
    %6 = vector.load %arg8[%c0_10, %c0_11] : memref<1x32xf32, #tpu.memory_space<vmem>>, vector<1x32xf32>
    %c0_12 = arith.constant 0 : index
    %c0_13 = arith.constant 0 : index
    %7 = vector.load %arg9[%c0_12, %c0_13] : memref<1x32xf32, #tpu.memory_space<vmem>>, vector<1x32xf32>
    %c0_14 = arith.constant 0 : index
    %c0_15 = arith.constant 0 : index
    %8 = vector.load %arg10[%c0_14, %c0_15] : memref<32x32xf32, #tpu.memory_space<vmem>>, vector<32x32xf32>
    %c0_16 = arith.constant 0 : index
    %c0_17 = arith.constant 0 : index
    %9 = vector.load %arg11[%c0_16, %c0_17] : memref<1x32xf32, #tpu.memory_space<vmem>>, vector<1x32xf32>
    %c0_18 = arith.constant 0 : index
    %c0_19 = arith.constant 0 : index
    %10 = vector.load %arg12[%c0_18, %c0_19] : memref<32x32xf32, #tpu.memory_space<vmem>>, vector<32x32xf32>
    %c0_20 = arith.constant 0 : index
    %c0_21 = arith.constant 0 : index
    %11 = vector.load %arg13[%c0_20, %c0_21] : memref<1x32xf32, #tpu.memory_space<vmem>>, vector<1x32xf32>
    %c0_22 = arith.constant 0 : index
    %c0_23 = arith.constant 0 : index
    %12 = vector.load %arg14[%c0_22, %c0_23] : memref<32x32xf32, #tpu.memory_space<vmem>>, vector<32x32xf32>
    %c0_24 = arith.constant 0 : index
    %c0_25 = arith.constant 0 : index
    %13 = vector.load %arg15[%c0_24, %c0_25] : memref<1x32xf32, #tpu.memory_space<vmem>>, vector<1x32xf32>
    %c0_26 = arith.constant 0 : index
    %c0_27 = arith.constant 0 : index
    %14 = vector.load %arg16[%c0_26, %c0_27] : memref<32x32xf32, #tpu.memory_space<vmem>>, vector<32x32xf32>
    %c0_28 = arith.constant 0 : index
    %c0_29 = arith.constant 0 : index
    %15 = vector.load %arg17[%c0_28, %c0_29] : memref<1x32xf32, #tpu.memory_space<vmem>>, vector<1x32xf32>
    %c0_30 = arith.constant 0 : index
    %c0_31 = arith.constant 0 : index
    %16 = vector.load %arg18[%c0_30, %c0_31] : memref<32x32xf32, #tpu.memory_space<vmem>>, vector<32x32xf32>
    %c0_32 = arith.constant 0 : index
    %c0_33 = arith.constant 0 : index
    %17 = vector.load %arg19[%c0_32, %c0_33] : memref<1x32xf32, #tpu.memory_space<vmem>>, vector<1x32xf32>
    %c0_34 = arith.constant 0 : index
    %c0_35 = arith.constant 0 : index
    %18 = vector.load %arg20[%c0_34, %c0_35] : memref<32x32xf32, #tpu.memory_space<vmem>>, vector<32x32xf32>
    %c0_36 = arith.constant 0 : index
    %c0_37 = arith.constant 0 : index
    %19 = vector.load %arg21[%c0_36, %c0_37] : memref<1x32xf32, #tpu.memory_space<vmem>>, vector<1x32xf32>
    %c0_38 = arith.constant 0 : index
    %c0_39 = arith.constant 0 : index
    %20 = vector.load %arg22[%c0_38, %c0_39] : memref<32x32xf32, #tpu.memory_space<vmem>>, vector<32x32xf32>
    %c0_40 = arith.constant 0 : index
    %c0_41 = arith.constant 0 : index
    %21 = vector.load %arg23[%c0_40, %c0_41] : memref<1x32xf32, #tpu.memory_space<vmem>>, vector<1x32xf32>
    %c0_42 = arith.constant 0 : index
    %c0_43 = arith.constant 0 : index
    %22 = vector.load %arg24[%c0_42, %c0_43] : memref<32x32xf32, #tpu.memory_space<vmem>>, vector<32x32xf32>
    %c0_44 = arith.constant 0 : index
    %c0_45 = arith.constant 0 : index
    %23 = vector.load %arg25[%c0_44, %c0_45] : memref<1x32xf32, #tpu.memory_space<vmem>>, vector<1x32xf32>
    %c0_46 = arith.constant 0 : index
    %c0_47 = arith.constant 0 : index
    %c0_48 = arith.constant 0 : index
    %24 = vector.load %arg26[%c0_46, %c0_47, %c0_48] : memref<9x32x64xf32, #tpu.memory_space<vmem>>, vector<9x32x64xf32>
    %c0_49 = arith.constant 0 : index
    %c0_50 = arith.constant 0 : index
    %25 = vector.load %arg27[%c0_49, %c0_50] : memref<1x64xf32, #tpu.memory_space<vmem>>, vector<1x64xf32>
    %c0_51 = arith.constant 0 : index
    %c0_52 = arith.constant 0 : index
    %c0_53 = arith.constant 0 : index
    %26 = vector.load %arg28[%c0_51, %c0_52, %c0_53] : memref<9x64x32xf32, #tpu.memory_space<vmem>>, vector<9x64x32xf32>
    %c0_54 = arith.constant 0 : index
    %c0_55 = arith.constant 0 : index
    %27 = vector.load %arg29[%c0_54, %c0_55] : memref<1x32xf32, #tpu.memory_space<vmem>>, vector<1x32xf32>
    %28 = tpu.iota {dimensions = array<i32: 1>} : vector<1x32xi32>
    %c0_i32 = arith.constant 0 : i32
    %29 = vector.broadcast %c0_i32 : i32 to vector<1x32xi32>
    %30 = arith.cmpi sge, %28, %29 : vector<1x32xi32>
    %c8_i32 = arith.constant 8 : i32
    %31 = vector.broadcast %c8_i32 : i32 to vector<1x32xi32>
    %32 = arith.cmpi slt, %28, %31 : vector<1x32xi32>
    %33 = arith.andi %30, %32 : vector<1x32xi1>
    %c8_i32_56 = arith.constant 8 : i32
    %34 = vector.broadcast %c8_i32_56 : i32 to vector<1x32xi32>
    %35 = arith.cmpi sge, %28, %34 : vector<1x32xi32>
    %c16_i32 = arith.constant 16 : i32
    %36 = vector.broadcast %c16_i32 : i32 to vector<1x32xi32>
    %37 = arith.cmpi slt, %28, %36 : vector<1x32xi32>
    %38 = arith.andi %35, %37 : vector<1x32xi1>
    %c16_i32_57 = arith.constant 16 : i32
    %39 = vector.broadcast %c16_i32_57 : i32 to vector<1x32xi32>
    %40 = arith.cmpi sge, %28, %39 : vector<1x32xi32>
    %c24_i32 = arith.constant 24 : i32
    %41 = vector.broadcast %c24_i32 : i32 to vector<1x32xi32>
    %42 = arith.cmpi slt, %28, %41 : vector<1x32xi32>
    %43 = arith.andi %40, %42 : vector<1x32xi1>
    %c24_i32_58 = arith.constant 24 : i32
    %44 = vector.broadcast %c24_i32_58 : i32 to vector<1x32xi32>
    %45 = arith.cmpi sge, %28, %44 : vector<1x32xi32>
    %c32_i32 = arith.constant 32 : i32
    %46 = vector.broadcast %c32_i32 : i32 to vector<1x32xi32>
    %47 = arith.cmpi slt, %28, %46 : vector<1x32xi32>
    %48 = arith.andi %45, %47 : vector<1x32xi1>
    %c0_59 = arith.constant 0 : index
    %c0_60 = arith.constant 0 : index
    %c0_61 = arith.constant 0 : index
    %49 = vector.load %arg1[%c0_59, %c0_60, %c0_61] : memref<16x2x32xf32, #tpu.memory_space<vmem>>, vector<16x2x32xf32>
    %c0_62 = arith.constant 0 : index
    %c0_63 = arith.constant 0 : index
    %c0_64 = arith.constant 0 : index
    %50 = vector.load %arg3[%c0_62, %c0_63, %c0_64] : memref<16x2x32xf32, #tpu.memory_space<vmem>>, vector<16x2x32xf32>
    %c0_65 = arith.constant 0 : index
    %c0_66 = arith.constant 0 : index
    %c0_67 = arith.constant 0 : index
    %51 = vector.load %arg2[%c0_65, %c0_66, %c0_67] : memref<8x2x32xf32, #tpu.memory_space<vmem>>, vector<8x2x32xf32>
    %52 = vector.extract_strided_slice %49 {offsets = [0, 0, 0], sizes = [16, 1, 32], strides = [1, 1, 1]} : vector<16x2x32xf32> to vector<16x1x32xf32>
    %53 = vector.shape_cast %52 : vector<16x1x32xf32> to vector<16x32xf32>
    %54 = vector.extract_strided_slice %50 {offsets = [0, 0, 0], sizes = [16, 1, 32], strides = [1, 1, 1]} : vector<16x2x32xf32> to vector<16x1x32xf32>
    %55 = vector.shape_cast %54 : vector<16x1x32xf32> to vector<16x32xf32>
    %56 = vector.extract_strided_slice %51 {offsets = [0, 0, 0], sizes = [8, 1, 32], strides = [1, 1, 1]} : vector<8x2x32xf32> to vector<8x1x32xf32>
    %57 = vector.shape_cast %56 : vector<8x1x32xf32> to vector<8x32xf32>
    %cst_68 = arith.constant dense<0.000000e+00> : vector<16xf32>
    %58 = vector.multi_reduction <add>, %53, %cst_68 [1] : vector<16x32xf32> to vector<16xf32>
    %59 = vector.shape_cast %58 : vector<16xf32> to vector<16x1xf32>
    %cst_69 = arith.constant 3.200000e+01 : f32
    %60 = vector.broadcast %cst_69 : f32 to vector<16x1xf32>
    %61 = arith.divf %59, %60 : vector<16x1xf32>
    %62 = vector.broadcast %61 : vector<16x1xf32> to vector<16x32xf32>
    %63 = arith.subf %53, %62 : vector<16x32xf32>
    %64 = arith.mulf %63, %63 : vector<16x32xf32>
    %cst_70 = arith.constant dense<0.000000e+00> : vector<16xf32>
    %65 = vector.multi_reduction <add>, %64, %cst_70 [1] : vector<16x32xf32> to vector<16xf32>
    %66 = vector.shape_cast %65 : vector<16xf32> to vector<16x1xf32>
    %cst_71 = arith.constant 3.200000e+01 : f32
    %67 = vector.broadcast %cst_71 : f32 to vector<16x1xf32>
    %68 = arith.divf %66, %67 : vector<16x1xf32>
    %cst_72 = arith.constant 9.99999974E-6 : f32
    %69 = vector.broadcast %cst_72 : f32 to vector<16x1xf32>
    %70 = arith.addf %68, %69 : vector<16x1xf32>
    %71 = math.rsqrt %70 : vector<16x1xf32>
    %72 = vector.broadcast %71 : vector<16x1xf32> to vector<16x32xf32>
    %73 = arith.mulf %63, %72 : vector<16x32xf32>
    %74 = vector.broadcast %2 : vector<1x32xf32> to vector<16x32xf32>
    %75 = arith.mulf %73, %74 : vector<16x32xf32>
    %76 = vector.broadcast %3 : vector<1x32xf32> to vector<16x32xf32>
    %77 = arith.addf %75, %76 : vector<16x32xf32>
    %78 = arith.addf %77, %55 : vector<16x32xf32>
    %cst_73 = arith.constant dense<0.000000e+00> : vector<16x32xf32>
    %79 = tpu.matmul %78, %8, %cst_73 {dimension_numbers = #tpu.dot_dimension_numbers<[1], [0], [0], [1], [0, 0, 1, 1], [], []>} : vector<16x32xf32>, vector<32x32xf32>, vector<16x32xf32> -> vector<16x32xf32>
    %80 = vector.broadcast %9 : vector<1x32xf32> to vector<16x32xf32>
    %81 = arith.addf %79, %80 : vector<16x32xf32>
    %cst_74 = arith.constant dense<0.000000e+00> : vector<16x32xf32>
    %82 = tpu.matmul %78, %10, %cst_74 {dimension_numbers = #tpu.dot_dimension_numbers<[1], [0], [0], [1], [0, 0, 1, 1], [], []>} : vector<16x32xf32>, vector<32x32xf32>, vector<16x32xf32> -> vector<16x32xf32>
    %83 = vector.broadcast %11 : vector<1x32xf32> to vector<16x32xf32>
    %84 = arith.addf %82, %83 : vector<16x32xf32>
    %cst_75 = arith.constant dense<0.000000e+00> : vector<16x32xf32>
    %85 = tpu.matmul %77, %12, %cst_75 {dimension_numbers = #tpu.dot_dimension_numbers<[1], [0], [0], [1], [0, 0, 1, 1], [], []>} : vector<16x32xf32>, vector<32x32xf32>, vector<16x32xf32> -> vector<16x32xf32>
    %86 = vector.broadcast %13 : vector<1x32xf32> to vector<16x32xf32>
    %87 = arith.addf %85, %86 : vector<16x32xf32>
    %cst_76 = arith.constant 0.000000e+00 : f32
    %88 = vector.broadcast %cst_76 : f32 to vector<16x32xf32>
    %cst_77 = arith.constant 0.000000e+00 : f32
    %89 = vector.shape_cast %33 : vector<1x32xi1> to vector<1x32xi1>
    %90 = vector.broadcast %89 : vector<1x32xi1> to vector<16x32xi1>
    %91 = vector.broadcast %cst_77 : f32 to vector<16x32xf32>
    %92 = arith.select %90, %84, %91 : vector<16x32xi1>, vector<16x32xf32>
    %cst_78 = arith.constant dense<0.000000e+00> : vector<16x16xf32>
    %93 = tpu.matmul %81, %92, %cst_78 {dimension_numbers = #tpu.dot_dimension_numbers<[1], [1], [0], [0], [0, 0, 1, 0], [], []>} : vector<16x32xf32>, vector<16x32xf32>, vector<16x16xf32> -> vector<16x16xf32>
    %cst_79 = arith.constant dense<0xFF800000> : vector<16xf32>
    %94 = vector.multi_reduction <maximumf>, %93, %cst_79 [1] : vector<16x16xf32> to vector<16xf32>
    %95 = vector.shape_cast %94 : vector<16xf32> to vector<16x1xf32>
    %96 = vector.broadcast %95 : vector<16x1xf32> to vector<16x16xf32>
    %97 = arith.subf %93, %96 : vector<16x16xf32>
    %98 = math.exp %97 : vector<16x16xf32>
    %cst_80 = arith.constant dense<0.000000e+00> : vector<16xf32>
    %99 = vector.multi_reduction <add>, %98, %cst_80 [1] : vector<16x16xf32> to vector<16xf32>
    %100 = vector.shape_cast %99 : vector<16xf32> to vector<16x1xf32>
    %101 = tpu.reciprocal %100 {approx = true} : vector<16x1xf32> -> vector<16x1xf32>
    %102 = vector.broadcast %101 : vector<16x1xf32> to vector<16x16xf32>
    %103 = arith.mulf %98, %102 : vector<16x16xf32>
    %cst_81 = arith.constant 0.000000e+00 : f32
    %104 = vector.shape_cast %33 : vector<1x32xi1> to vector<1x32xi1>
    %105 = vector.broadcast %104 : vector<1x32xi1> to vector<16x32xi1>
    %106 = vector.broadcast %cst_81 : f32 to vector<16x32xf32>
    %107 = arith.select %105, %87, %106 : vector<16x32xi1>, vector<16x32xf32>
    %cst_82 = arith.constant dense<0.000000e+00> : vector<16x32xf32>
    %108 = tpu.matmul %103, %107, %cst_82 {dimension_numbers = #tpu.dot_dimension_numbers<[1], [0], [0], [1], [0, 0, 1, 1], [], []>} : vector<16x16xf32>, vector<16x32xf32>, vector<16x32xf32> -> vector<16x32xf32>
    %109 = arith.addf %88, %108 : vector<16x32xf32>
    %cst_83 = arith.constant 0.000000e+00 : f32
    %110 = vector.shape_cast %38 : vector<1x32xi1> to vector<1x32xi1>
    %111 = vector.broadcast %110 : vector<1x32xi1> to vector<16x32xi1>
    %112 = vector.broadcast %cst_83 : f32 to vector<16x32xf32>
    %113 = arith.select %111, %84, %112 : vector<16x32xi1>, vector<16x32xf32>
    %cst_84 = arith.constant dense<0.000000e+00> : vector<16x16xf32>
    %114 = tpu.matmul %81, %113, %cst_84 {dimension_numbers = #tpu.dot_dimension_numbers<[1], [1], [0], [0], [0, 0, 1, 0], [], []>} : vector<16x32xf32>, vector<16x32xf32>, vector<16x16xf32> -> vector<16x16xf32>
    %cst_85 = arith.constant dense<0xFF800000> : vector<16xf32>
    %115 = vector.multi_reduction <maximumf>, %114, %cst_85 [1] : vector<16x16xf32> to vector<16xf32>
    %116 = vector.shape_cast %115 : vector<16xf32> to vector<16x1xf32>
    %117 = vector.broadcast %116 : vector<16x1xf32> to vector<16x16xf32>
    %118 = arith.subf %114, %117 : vector<16x16xf32>
    %119 = math.exp %118 : vector<16x16xf32>
    %cst_86 = arith.constant dense<0.000000e+00> : vector<16xf32>
    %120 = vector.multi_reduction <add>, %119, %cst_86 [1] : vector<16x16xf32> to vector<16xf32>
    %121 = vector.shape_cast %120 : vector<16xf32> to vector<16x1xf32>
    %122 = tpu.reciprocal %121 {approx = true} : vector<16x1xf32> -> vector<16x1xf32>
    %123 = vector.broadcast %122 : vector<16x1xf32> to vector<16x16xf32>
    %124 = arith.mulf %119, %123 : vector<16x16xf32>
    %cst_87 = arith.constant 0.000000e+00 : f32
    %125 = vector.shape_cast %38 : vector<1x32xi1> to vector<1x32xi1>
    %126 = vector.broadcast %125 : vector<1x32xi1> to vector<16x32xi1>
    %127 = vector.broadcast %cst_87 : f32 to vector<16x32xf32>
    %128 = arith.select %126, %87, %127 : vector<16x32xi1>, vector<16x32xf32>
    %cst_88 = arith.constant dense<0.000000e+00> : vector<16x32xf32>
    %129 = tpu.matmul %124, %128, %cst_88 {dimension_numbers = #tpu.dot_dimension_numbers<[1], [0], [0], [1], [0, 0, 1, 1], [], []>} : vector<16x16xf32>, vector<16x32xf32>, vector<16x32xf32> -> vector<16x32xf32>
    %130 = arith.addf %109, %129 : vector<16x32xf32>
    %cst_89 = arith.constant 0.000000e+00 : f32
    %131 = vector.shape_cast %43 : vector<1x32xi1> to vector<1x32xi1>
    %132 = vector.broadcast %131 : vector<1x32xi1> to vector<16x32xi1>
    %133 = vector.broadcast %cst_89 : f32 to vector<16x32xf32>
    %134 = arith.select %132, %84, %133 : vector<16x32xi1>, vector<16x32xf32>
    %cst_90 = arith.constant dense<0.000000e+00> : vector<16x16xf32>
    %135 = tpu.matmul %81, %134, %cst_90 {dimension_numbers = #tpu.dot_dimension_numbers<[1], [1], [0], [0], [0, 0, 1, 0], [], []>} : vector<16x32xf32>, vector<16x32xf32>, vector<16x16xf32> -> vector<16x16xf32>
    %cst_91 = arith.constant dense<0xFF800000> : vector<16xf32>
    %136 = vector.multi_reduction <maximumf>, %135, %cst_91 [1] : vector<16x16xf32> to vector<16xf32>
    %137 = vector.shape_cast %136 : vector<16xf32> to vector<16x1xf32>
    %138 = vector.broadcast %137 : vector<16x1xf32> to vector<16x16xf32>
    %139 = arith.subf %135, %138 : vector<16x16xf32>
    %140 = math.exp %139 : vector<16x16xf32>
    %cst_92 = arith.constant dense<0.000000e+00> : vector<16xf32>
    %141 = vector.multi_reduction <add>, %140, %cst_92 [1] : vector<16x16xf32> to vector<16xf32>
    %142 = vector.shape_cast %141 : vector<16xf32> to vector<16x1xf32>
    %143 = tpu.reciprocal %142 {approx = true} : vector<16x1xf32> -> vector<16x1xf32>
    %144 = vector.broadcast %143 : vector<16x1xf32> to vector<16x16xf32>
    %145 = arith.mulf %140, %144 : vector<16x16xf32>
    %cst_93 = arith.constant 0.000000e+00 : f32
    %146 = vector.shape_cast %43 : vector<1x32xi1> to vector<1x32xi1>
    %147 = vector.broadcast %146 : vector<1x32xi1> to vector<16x32xi1>
    %148 = vector.broadcast %cst_93 : f32 to vector<16x32xf32>
    %149 = arith.select %147, %87, %148 : vector<16x32xi1>, vector<16x32xf32>
    %cst_94 = arith.constant dense<0.000000e+00> : vector<16x32xf32>
    %150 = tpu.matmul %145, %149, %cst_94 {dimension_numbers = #tpu.dot_dimension_numbers<[1], [0], [0], [1], [0, 0, 1, 1], [], []>} : vector<16x16xf32>, vector<16x32xf32>, vector<16x32xf32> -> vector<16x32xf32>
    %151 = arith.addf %130, %150 : vector<16x32xf32>
    %cst_95 = arith.constant 0.000000e+00 : f32
    %152 = vector.shape_cast %48 : vector<1x32xi1> to vector<1x32xi1>
    %153 = vector.broadcast %152 : vector<1x32xi1> to vector<16x32xi1>
    %154 = vector.broadcast %cst_95 : f32 to vector<16x32xf32>
    %155 = arith.select %153, %84, %154 : vector<16x32xi1>, vector<16x32xf32>
    %cst_96 = arith.constant dense<0.000000e+00> : vector<16x16xf32>
    %156 = tpu.matmul %81, %155, %cst_96 {dimension_numbers = #tpu.dot_dimension_numbers<[1], [1], [0], [0], [0, 0, 1, 0], [], []>} : vector<16x32xf32>, vector<16x32xf32>, vector<16x16xf32> -> vector<16x16xf32>
    %cst_97 = arith.constant dense<0xFF800000> : vector<16xf32>
    %157 = vector.multi_reduction <maximumf>, %156, %cst_97 [1] : vector<16x16xf32> to vector<16xf32>
    %158 = vector.shape_cast %157 : vector<16xf32> to vector<16x1xf32>
    %159 = vector.broadcast %158 : vector<16x1xf32> to vector<16x16xf32>
    %160 = arith.subf %156, %159 : vector<16x16xf32>
    %161 = math.exp %160 : vector<16x16xf32>
    %cst_98 = arith.constant dense<0.000000e+00> : vector<16xf32>
    %162 = vector.multi_reduction <add>, %161, %cst_98 [1] : vector<16x16xf32> to vector<16xf32>
    %163 = vector.shape_cast %162 : vector<16xf32> to vector<16x1xf32>
    %164 = tpu.reciprocal %163 {approx = true} : vector<16x1xf32> -> vector<16x1xf32>
    %165 = vector.broadcast %164 : vector<16x1xf32> to vector<16x16xf32>
    %166 = arith.mulf %161, %165 : vector<16x16xf32>
    %cst_99 = arith.constant 0.000000e+00 : f32
    %167 = vector.shape_cast %48 : vector<1x32xi1> to vector<1x32xi1>
    %168 = vector.broadcast %167 : vector<1x32xi1> to vector<16x32xi1>
    %169 = vector.broadcast %cst_99 : f32 to vector<16x32xf32>
    %170 = arith.select %168, %87, %169 : vector<16x32xi1>, vector<16x32xf32>
    %cst_100 = arith.constant dense<0.000000e+00> : vector<16x32xf32>
    %171 = tpu.matmul %166, %170, %cst_100 {dimension_numbers = #tpu.dot_dimension_numbers<[1], [0], [0], [1], [0, 0, 1, 1], [], []>} : vector<16x16xf32>, vector<16x32xf32>, vector<16x32xf32> -> vector<16x32xf32>
    %172 = arith.addf %151, %171 : vector<16x32xf32>
    %cst_101 = arith.constant dense<0.000000e+00> : vector<16x32xf32>
    %173 = tpu.matmul %172, %14, %cst_101 {dimension_numbers = #tpu.dot_dimension_numbers<[1], [0], [0], [1], [0, 0, 1, 1], [], []>} : vector<16x32xf32>, vector<32x32xf32>, vector<16x32xf32> -> vector<16x32xf32>
    %174 = vector.broadcast %15 : vector<1x32xf32> to vector<16x32xf32>
    %175 = arith.addf %173, %174 : vector<16x32xf32>
    %176 = arith.addf %53, %175 : vector<16x32xf32>
    %cst_102 = arith.constant dense<0.000000e+00> : vector<16xf32>
    %177 = vector.multi_reduction <add>, %176, %cst_102 [1] : vector<16x32xf32> to vector<16xf32>
    %178 = vector.shape_cast %177 : vector<16xf32> to vector<16x1xf32>
    %cst_103 = arith.constant 3.200000e+01 : f32
    %179 = vector.broadcast %cst_103 : f32 to vector<16x1xf32>
    %180 = arith.divf %178, %179 : vector<16x1xf32>
    %181 = vector.broadcast %180 : vector<16x1xf32> to vector<16x32xf32>
    %182 = arith.subf %176, %181 : vector<16x32xf32>
    %183 = arith.mulf %182, %182 : vector<16x32xf32>
    %cst_104 = arith.constant dense<0.000000e+00> : vector<16xf32>
    %184 = vector.multi_reduction <add>, %183, %cst_104 [1] : vector<16x32xf32> to vector<16xf32>
    %185 = vector.shape_cast %184 : vector<16xf32> to vector<16x1xf32>
    %cst_105 = arith.constant 3.200000e+01 : f32
    %186 = vector.broadcast %cst_105 : f32 to vector<16x1xf32>
    %187 = arith.divf %185, %186 : vector<16x1xf32>
    %cst_106 = arith.constant 9.99999974E-6 : f32
    %188 = vector.broadcast %cst_106 : f32 to vector<16x1xf32>
    %189 = arith.addf %187, %188 : vector<16x1xf32>
    %190 = math.rsqrt %189 : vector<16x1xf32>
    %191 = vector.broadcast %190 : vector<16x1xf32> to vector<16x32xf32>
    %192 = arith.mulf %182, %191 : vector<16x32xf32>
    %193 = vector.broadcast %4 : vector<1x32xf32> to vector<16x32xf32>
    %194 = arith.mulf %192, %193 : vector<16x32xf32>
    %195 = vector.broadcast %5 : vector<1x32xf32> to vector<16x32xf32>
    %196 = arith.addf %194, %195 : vector<16x32xf32>
    %197 = arith.addf %196, %55 : vector<16x32xf32>
    %cst_107 = arith.constant dense<0.000000e+00> : vector<16x32xf32>
    %198 = tpu.matmul %197, %16, %cst_107 {dimension_numbers = #tpu.dot_dimension_numbers<[1], [0], [0], [1], [0, 0, 1, 1], [], []>} : vector<16x32xf32>, vector<32x32xf32>, vector<16x32xf32> -> vector<16x32xf32>
    %199 = vector.broadcast %17 : vector<1x32xf32> to vector<16x32xf32>
    %200 = arith.addf %198, %199 : vector<16x32xf32>
    %cst_108 = arith.constant dense<0.000000e+00> : vector<8x32xf32>
    %201 = tpu.matmul %57, %18, %cst_108 {dimension_numbers = #tpu.dot_dimension_numbers<[1], [0], [0], [1], [0, 0, 1, 1], [], []>} : vector<8x32xf32>, vector<32x32xf32>, vector<8x32xf32> -> vector<8x32xf32>
    %202 = vector.broadcast %19 : vector<1x32xf32> to vector<8x32xf32>
    %203 = arith.addf %201, %202 : vector<8x32xf32>
    %cst_109 = arith.constant dense<0.000000e+00> : vector<8x32xf32>
    %204 = tpu.matmul %57, %20, %cst_109 {dimension_numbers = #tpu.dot_dimension_numbers<[1], [0], [0], [1], [0, 0, 1, 1], [], []>} : vector<8x32xf32>, vector<32x32xf32>, vector<8x32xf32> -> vector<8x32xf32>
    %205 = vector.broadcast %21 : vector<1x32xf32> to vector<8x32xf32>
    %206 = arith.addf %204, %205 : vector<8x32xf32>
    %cst_110 = arith.constant 0.000000e+00 : f32
    %207 = vector.broadcast %cst_110 : f32 to vector<16x32xf32>
    %cst_111 = arith.constant 0.000000e+00 : f32
    %208 = vector.shape_cast %33 : vector<1x32xi1> to vector<1x32xi1>
    %209 = vector.broadcast %208 : vector<1x32xi1> to vector<8x32xi1>
    %210 = vector.broadcast %cst_111 : f32 to vector<8x32xf32>
    %211 = arith.select %209, %203, %210 : vector<8x32xi1>, vector<8x32xf32>
    %cst_112 = arith.constant dense<0.000000e+00> : vector<16x8xf32>
    %212 = tpu.matmul %200, %211, %cst_112 {dimension_numbers = #tpu.dot_dimension_numbers<[1], [1], [0], [0], [0, 0, 1, 0], [], []>} : vector<16x32xf32>, vector<8x32xf32>, vector<16x8xf32> -> vector<16x8xf32>
    %cst_113 = arith.constant dense<0xFF800000> : vector<16xf32>
    %213 = vector.multi_reduction <maximumf>, %212, %cst_113 [1] : vector<16x8xf32> to vector<16xf32>
    %214 = vector.shape_cast %213 : vector<16xf32> to vector<16x1xf32>
    %215 = vector.broadcast %214 : vector<16x1xf32> to vector<16x8xf32>
    %216 = arith.subf %212, %215 : vector<16x8xf32>
    %217 = math.exp %216 : vector<16x8xf32>
    %cst_114 = arith.constant dense<0.000000e+00> : vector<16xf32>
    %218 = vector.multi_reduction <add>, %217, %cst_114 [1] : vector<16x8xf32> to vector<16xf32>
    %219 = vector.shape_cast %218 : vector<16xf32> to vector<16x1xf32>
    %220 = tpu.reciprocal %219 {approx = true} : vector<16x1xf32> -> vector<16x1xf32>
    %221 = vector.broadcast %220 : vector<16x1xf32> to vector<16x8xf32>
    %222 = arith.mulf %217, %221 : vector<16x8xf32>
    %cst_115 = arith.constant 0.000000e+00 : f32
    %223 = vector.shape_cast %33 : vector<1x32xi1> to vector<1x32xi1>
    %224 = vector.broadcast %223 : vector<1x32xi1> to vector<8x32xi1>
    %225 = vector.broadcast %cst_115 : f32 to vector<8x32xf32>
    %226 = arith.select %224, %206, %225 : vector<8x32xi1>, vector<8x32xf32>
    %cst_116 = arith.constant dense<0.000000e+00> : vector<16x32xf32>
    %227 = tpu.matmul %222, %226, %cst_116 {dimension_numbers = #tpu.dot_dimension_numbers<[1], [0], [0], [1], [0, 0, 1, 1], [], []>} : vector<16x8xf32>, vector<8x32xf32>, vector<16x32xf32> -> vector<16x32xf32>
    %228 = arith.addf %207, %227 : vector<16x32xf32>
    %cst_117 = arith.constant 0.000000e+00 : f32
    %229 = vector.shape_cast %38 : vector<1x32xi1> to vector<1x32xi1>
    %230 = vector.broadcast %229 : vector<1x32xi1> to vector<8x32xi1>
    %231 = vector.broadcast %cst_117 : f32 to vector<8x32xf32>
    %232 = arith.select %230, %203, %231 : vector<8x32xi1>, vector<8x32xf32>
    %cst_118 = arith.constant dense<0.000000e+00> : vector<16x8xf32>
    %233 = tpu.matmul %200, %232, %cst_118 {dimension_numbers = #tpu.dot_dimension_numbers<[1], [1], [0], [0], [0, 0, 1, 0], [], []>} : vector<16x32xf32>, vector<8x32xf32>, vector<16x8xf32> -> vector<16x8xf32>
    %cst_119 = arith.constant dense<0xFF800000> : vector<16xf32>
    %234 = vector.multi_reduction <maximumf>, %233, %cst_119 [1] : vector<16x8xf32> to vector<16xf32>
    %235 = vector.shape_cast %234 : vector<16xf32> to vector<16x1xf32>
    %236 = vector.broadcast %235 : vector<16x1xf32> to vector<16x8xf32>
    %237 = arith.subf %233, %236 : vector<16x8xf32>
    %238 = math.exp %237 : vector<16x8xf32>
    %cst_120 = arith.constant dense<0.000000e+00> : vector<16xf32>
    %239 = vector.multi_reduction <add>, %238, %cst_120 [1] : vector<16x8xf32> to vector<16xf32>
    %240 = vector.shape_cast %239 : vector<16xf32> to vector<16x1xf32>
    %241 = tpu.reciprocal %240 {approx = true} : vector<16x1xf32> -> vector<16x1xf32>
    %242 = vector.broadcast %241 : vector<16x1xf32> to vector<16x8xf32>
    %243 = arith.mulf %238, %242 : vector<16x8xf32>
    %cst_121 = arith.constant 0.000000e+00 : f32
    %244 = vector.shape_cast %38 : vector<1x32xi1> to vector<1x32xi1>
    %245 = vector.broadcast %244 : vector<1x32xi1> to vector<8x32xi1>
    %246 = vector.broadcast %cst_121 : f32 to vector<8x32xf32>
    %247 = arith.select %245, %206, %246 : vector<8x32xi1>, vector<8x32xf32>
    %cst_122 = arith.constant dense<0.000000e+00> : vector<16x32xf32>
    %248 = tpu.matmul %243, %247, %cst_122 {dimension_numbers = #tpu.dot_dimension_numbers<[1], [0], [0], [1], [0, 0, 1, 1], [], []>} : vector<16x8xf32>, vector<8x32xf32>, vector<16x32xf32> -> vector<16x32xf32>
    %249 = arith.addf %228, %248 : vector<16x32xf32>
    %cst_123 = arith.constant 0.000000e+00 : f32
    %250 = vector.shape_cast %43 : vector<1x32xi1> to vector<1x32xi1>
    %251 = vector.broadcast %250 : vector<1x32xi1> to vector<8x32xi1>
    %252 = vector.broadcast %cst_123 : f32 to vector<8x32xf32>
    %253 = arith.select %251, %203, %252 : vector<8x32xi1>, vector<8x32xf32>
    %cst_124 = arith.constant dense<0.000000e+00> : vector<16x8xf32>
    %254 = tpu.matmul %200, %253, %cst_124 {dimension_numbers = #tpu.dot_dimension_numbers<[1], [1], [0], [0], [0, 0, 1, 0], [], []>} : vector<16x32xf32>, vector<8x32xf32>, vector<16x8xf32> -> vector<16x8xf32>
    %cst_125 = arith.constant dense<0xFF800000> : vector<16xf32>
    %255 = vector.multi_reduction <maximumf>, %254, %cst_125 [1] : vector<16x8xf32> to vector<16xf32>
    %256 = vector.shape_cast %255 : vector<16xf32> to vector<16x1xf32>
    %257 = vector.broadcast %256 : vector<16x1xf32> to vector<16x8xf32>
    %258 = arith.subf %254, %257 : vector<16x8xf32>
    %259 = math.exp %258 : vector<16x8xf32>
    %cst_126 = arith.constant dense<0.000000e+00> : vector<16xf32>
    %260 = vector.multi_reduction <add>, %259, %cst_126 [1] : vector<16x8xf32> to vector<16xf32>
    %261 = vector.shape_cast %260 : vector<16xf32> to vector<16x1xf32>
    %262 = tpu.reciprocal %261 {approx = true} : vector<16x1xf32> -> vector<16x1xf32>
    %263 = vector.broadcast %262 : vector<16x1xf32> to vector<16x8xf32>
    %264 = arith.mulf %259, %263 : vector<16x8xf32>
    %cst_127 = arith.constant 0.000000e+00 : f32
    %265 = vector.shape_cast %43 : vector<1x32xi1> to vector<1x32xi1>
    %266 = vector.broadcast %265 : vector<1x32xi1> to vector<8x32xi1>
    %267 = vector.broadcast %cst_127 : f32 to vector<8x32xf32>
    %268 = arith.select %266, %206, %267 : vector<8x32xi1>, vector<8x32xf32>
    %cst_128 = arith.constant dense<0.000000e+00> : vector<16x32xf32>
    %269 = tpu.matmul %264, %268, %cst_128 {dimension_numbers = #tpu.dot_dimension_numbers<[1], [0], [0], [1], [0, 0, 1, 1], [], []>} : vector<16x8xf32>, vector<8x32xf32>, vector<16x32xf32> -> vector<16x32xf32>
    %270 = arith.addf %249, %269 : vector<16x32xf32>
    %cst_129 = arith.constant 0.000000e+00 : f32
    %271 = vector.shape_cast %48 : vector<1x32xi1> to vector<1x32xi1>
    %272 = vector.broadcast %271 : vector<1x32xi1> to vector<8x32xi1>
    %273 = vector.broadcast %cst_129 : f32 to vector<8x32xf32>
    %274 = arith.select %272, %203, %273 : vector<8x32xi1>, vector<8x32xf32>
    %cst_130 = arith.constant dense<0.000000e+00> : vector<16x8xf32>
    %275 = tpu.matmul %200, %274, %cst_130 {dimension_numbers = #tpu.dot_dimension_numbers<[1], [1], [0], [0], [0, 0, 1, 0], [], []>} : vector<16x32xf32>, vector<8x32xf32>, vector<16x8xf32> -> vector<16x8xf32>
    %cst_131 = arith.constant dense<0xFF800000> : vector<16xf32>
    %276 = vector.multi_reduction <maximumf>, %275, %cst_131 [1] : vector<16x8xf32> to vector<16xf32>
    %277 = vector.shape_cast %276 : vector<16xf32> to vector<16x1xf32>
    %278 = vector.broadcast %277 : vector<16x1xf32> to vector<16x8xf32>
    %279 = arith.subf %275, %278 : vector<16x8xf32>
    %280 = math.exp %279 : vector<16x8xf32>
    %cst_132 = arith.constant dense<0.000000e+00> : vector<16xf32>
    %281 = vector.multi_reduction <add>, %280, %cst_132 [1] : vector<16x8xf32> to vector<16xf32>
    %282 = vector.shape_cast %281 : vector<16xf32> to vector<16x1xf32>
    %283 = tpu.reciprocal %282 {approx = true} : vector<16x1xf32> -> vector<16x1xf32>
    %284 = vector.broadcast %283 : vector<16x1xf32> to vector<16x8xf32>
    %285 = arith.mulf %280, %284 : vector<16x8xf32>
    %cst_133 = arith.constant 0.000000e+00 : f32
    %286 = vector.shape_cast %48 : vector<1x32xi1> to vector<1x32xi1>
    %287 = vector.broadcast %286 : vector<1x32xi1> to vector<8x32xi1>
    %288 = vector.broadcast %cst_133 : f32 to vector<8x32xf32>
    %289 = arith.select %287, %206, %288 : vector<8x32xi1>, vector<8x32xf32>
    %cst_134 = arith.constant dense<0.000000e+00> : vector<16x32xf32>
    %290 = tpu.matmul %285, %289, %cst_134 {dimension_numbers = #tpu.dot_dimension_numbers<[1], [0], [0], [1], [0, 0, 1, 1], [], []>} : vector<16x8xf32>, vector<8x32xf32>, vector<16x32xf32> -> vector<16x32xf32>
    %291 = arith.addf %270, %290 : vector<16x32xf32>
    %cst_135 = arith.constant dense<0.000000e+00> : vector<16x32xf32>
    %292 = tpu.matmul %291, %22, %cst_135 {dimension_numbers = #tpu.dot_dimension_numbers<[1], [0], [0], [1], [0, 0, 1, 1], [], []>} : vector<16x32xf32>, vector<32x32xf32>, vector<16x32xf32> -> vector<16x32xf32>
    %293 = vector.broadcast %23 : vector<1x32xf32> to vector<16x32xf32>
    %294 = arith.addf %292, %293 : vector<16x32xf32>
    %295 = arith.addf %176, %294 : vector<16x32xf32>
    %cst_136 = arith.constant dense<0.000000e+00> : vector<16xf32>
    %296 = vector.multi_reduction <add>, %295, %cst_136 [1] : vector<16x32xf32> to vector<16xf32>
    %297 = vector.shape_cast %296 : vector<16xf32> to vector<16x1xf32>
    %cst_137 = arith.constant 3.200000e+01 : f32
    %298 = vector.broadcast %cst_137 : f32 to vector<16x1xf32>
    %299 = arith.divf %297, %298 : vector<16x1xf32>
    %300 = vector.broadcast %299 : vector<16x1xf32> to vector<16x32xf32>
    %301 = arith.subf %295, %300 : vector<16x32xf32>
    %302 = arith.mulf %301, %301 : vector<16x32xf32>
    %cst_138 = arith.constant dense<0.000000e+00> : vector<16xf32>
    %303 = vector.multi_reduction <add>, %302, %cst_138 [1] : vector<16x32xf32> to vector<16xf32>
    %304 = vector.shape_cast %303 : vector<16xf32> to vector<16x1xf32>
    %cst_139 = arith.constant 3.200000e+01 : f32
    %305 = vector.broadcast %cst_139 : f32 to vector<16x1xf32>
    %306 = arith.divf %304, %305 : vector<16x1xf32>
    %cst_140 = arith.constant 9.99999974E-6 : f32
    %307 = vector.broadcast %cst_140 : f32 to vector<16x1xf32>
    %308 = arith.addf %306, %307 : vector<16x1xf32>
    %309 = math.rsqrt %308 : vector<16x1xf32>
    %310 = vector.broadcast %309 : vector<16x1xf32> to vector<16x32xf32>
    %311 = arith.mulf %301, %310 : vector<16x32xf32>
    %312 = vector.broadcast %6 : vector<1x32xf32> to vector<16x32xf32>
    %313 = arith.mulf %311, %312 : vector<16x32xf32>
    %314 = vector.broadcast %7 : vector<1x32xf32> to vector<16x32xf32>
    %315 = arith.addf %313, %314 : vector<16x32xf32>
    %316 = vector.shape_cast %315 : vector<16x32xf32> to vector<4x4x32xf32>
    %c1 = arith.constant 1 : index
    %c1_141 = arith.constant 1 : index
    %c0_142 = arith.constant 0 : index
    %317 = vector.load %arg31[%c1, %c1_141, %c0_142] : memref<6x8x64xf32, #tpu.memory_space<vmem>>, vector<4x4x32xf32>
    tpu.vector_store %arg31[%c1, %c1_141, %c0_142], %316 {strides = array<i32>} : memref<6x8x64xf32, #tpu.memory_space<vmem>>, vector<4x4x32xf32>,
    %c0_143 = arith.constant 0 : index
    %c0_144 = arith.constant 0 : index
    %c0_145 = arith.constant 0 : index
    %318 = vector.load %arg31[%c0_143, %c0_144, %c0_145] : memref<6x8x64xf32, #tpu.memory_space<vmem>>, vector<6x8x64xf32>
    %cst_146 = arith.constant 0.000000e+00 : f32
    %319 = vector.broadcast %cst_146 : f32 to vector<16x64xf32>
    %320 = vector.extract_strided_slice %318 {offsets = [0, 0, 0], sizes = [4, 4, 32], strides = [1, 1, 1]} : vector<6x8x64xf32> to vector<4x4x32xf32>
    %321 = vector.shape_cast %320 : vector<4x4x32xf32> to vector<16x32xf32>
    %322 = vector.extract_strided_slice %24 {offsets = [0, 0, 0], sizes = [1, 32, 64], strides = [1, 1, 1]} : vector<9x32x64xf32> to vector<1x32x64xf32>
    %323 = vector.shape_cast %322 : vector<1x32x64xf32> to vector<32x64xf32>
    %cst_147 = arith.constant dense<0.000000e+00> : vector<16x64xf32>
    %324 = tpu.matmul %321, %323, %cst_147 {dimension_numbers = #tpu.dot_dimension_numbers<[1], [0], [0], [1], [0, 0, 1, 1], [], []>} : vector<16x32xf32>, vector<32x64xf32>, vector<16x64xf32> -> vector<16x64xf32>
    %325 = arith.addf %319, %324 : vector<16x64xf32>
    %326 = vector.extract_strided_slice %318 {offsets = [0, 1, 0], sizes = [4, 4, 32], strides = [1, 1, 1]} : vector<6x8x64xf32> to vector<4x4x32xf32>
    %327 = vector.shape_cast %326 : vector<4x4x32xf32> to vector<16x32xf32>
    %328 = vector.extract_strided_slice %24 {offsets = [1, 0, 0], sizes = [1, 32, 64], strides = [1, 1, 1]} : vector<9x32x64xf32> to vector<1x32x64xf32>
    %329 = vector.shape_cast %328 : vector<1x32x64xf32> to vector<32x64xf32>
    %cst_148 = arith.constant dense<0.000000e+00> : vector<16x64xf32>
    %330 = tpu.matmul %327, %329, %cst_148 {dimension_numbers = #tpu.dot_dimension_numbers<[1], [0], [0], [1], [0, 0, 1, 1], [], []>} : vector<16x32xf32>, vector<32x64xf32>, vector<16x64xf32> -> vector<16x64xf32>
    %331 = arith.addf %325, %330 : vector<16x64xf32>
    %332 = vector.extract_strided_slice %318 {offsets = [0, 2, 0], sizes = [4, 4, 32], strides = [1, 1, 1]} : vector<6x8x64xf32> to vector<4x4x32xf32>
    %333 = vector.shape_cast %332 : vector<4x4x32xf32> to vector<16x32xf32>
    %334 = vector.extract_strided_slice %24 {offsets = [2, 0, 0], sizes = [1, 32, 64], strides = [1, 1, 1]} : vector<9x32x64xf32> to vector<1x32x64xf32>
    %335 = vector.shape_cast %334 : vector<1x32x64xf32> to vector<32x64xf32>
    %cst_149 = arith.constant dense<0.000000e+00> : vector<16x64xf32>
    %336 = tpu.matmul %333, %335, %cst_149 {dimension_numbers = #tpu.dot_dimension_numbers<[1], [0], [0], [1], [0, 0, 1, 1], [], []>} : vector<16x32xf32>, vector<32x64xf32>, vector<16x64xf32> -> vector<16x64xf32>
    %337 = arith.addf %331, %336 : vector<16x64xf32>
    %338 = vector.extract_strided_slice %318 {offsets = [1, 0, 0], sizes = [4, 4, 32], strides = [1, 1, 1]} : vector<6x8x64xf32> to vector<4x4x32xf32>
    %339 = vector.shape_cast %338 : vector<4x4x32xf32> to vector<16x32xf32>
    %340 = vector.extract_strided_slice %24 {offsets = [3, 0, 0], sizes = [1, 32, 64], strides = [1, 1, 1]} : vector<9x32x64xf32> to vector<1x32x64xf32>
    %341 = vector.shape_cast %340 : vector<1x32x64xf32> to vector<32x64xf32>
    %cst_150 = arith.constant dense<0.000000e+00> : vector<16x64xf32>
    %342 = tpu.matmul %339, %341, %cst_150 {dimension_numbers = #tpu.dot_dimension_numbers<[1], [0], [0], [1], [0, 0, 1, 1], [], []>} : vector<16x32xf32>, vector<32x64xf32>, vector<16x64xf32> -> vector<16x64xf32>
    %343 = arith.addf %337, %342 : vector<16x64xf32>
    %344 = vector.extract_strided_slice %318 {offsets = [1, 1, 0], sizes = [4, 4, 32], strides = [1, 1, 1]} : vector<6x8x64xf32> to vector<4x4x32xf32>
    %345 = vector.shape_cast %344 : vector<4x4x32xf32> to vector<16x32xf32>
    %346 = vector.extract_strided_slice %24 {offsets = [4, 0, 0], sizes = [1, 32, 64], strides = [1, 1, 1]} : vector<9x32x64xf32> to vector<1x32x64xf32>
    %347 = vector.shape_cast %346 : vector<1x32x64xf32> to vector<32x64xf32>
    %cst_151 = arith.constant dense<0.000000e+00> : vector<16x64xf32>
    %348 = tpu.matmul %345, %347, %cst_151 {dimension_numbers = #tpu.dot_dimension_numbers<[1], [0], [0], [1], [0, 0, 1, 1], [], []>} : vector<16x32xf32>, vector<32x64xf32>, vector<16x64xf32> -> vector<16x64xf32>
    %349 = arith.addf %343, %348 : vector<16x64xf32>
    %350 = vector.extract_strided_slice %318 {offsets = [1, 2, 0], sizes = [4, 4, 32], strides = [1, 1, 1]} : vector<6x8x64xf32> to vector<4x4x32xf32>
    %351 = vector.shape_cast %350 : vector<4x4x32xf32> to vector<16x32xf32>
    %352 = vector.extract_strided_slice %24 {offsets = [5, 0, 0], sizes = [1, 32, 64], strides = [1, 1, 1]} : vector<9x32x64xf32> to vector<1x32x64xf32>
    %353 = vector.shape_cast %352 : vector<1x32x64xf32> to vector<32x64xf32>
    %cst_152 = arith.constant dense<0.000000e+00> : vector<16x64xf32>
    %354 = tpu.matmul %351, %353, %cst_152 {dimension_numbers = #tpu.dot_dimension_numbers<[1], [0], [0], [1], [0, 0, 1, 1], [], []>} : vector<16x32xf32>, vector<32x64xf32>, vector<16x64xf32> -> vector<16x64xf32>
    %355 = arith.addf %349, %354 : vector<16x64xf32>
    %356 = vector.extract_strided_slice %318 {offsets = [2, 0, 0], sizes = [4, 4, 32], strides = [1, 1, 1]} : vector<6x8x64xf32> to vector<4x4x32xf32>
    %357 = vector.shape_cast %356 : vector<4x4x32xf32> to vector<16x32xf32>
    %358 = vector.extract_strided_slice %24 {offsets = [6, 0, 0], sizes = [1, 32, 64], strides = [1, 1, 1]} : vector<9x32x64xf32> to vector<1x32x64xf32>
    %359 = vector.shape_cast %358 : vector<1x32x64xf32> to vector<32x64xf32>
    %cst_153 = arith.constant dense<0.000000e+00> : vector<16x64xf32>
    %360 = tpu.matmul %357, %359, %cst_153 {dimension_numbers = #tpu.dot_dimension_numbers<[1], [0], [0], [1], [0, 0, 1, 1], [], []>} : vector<16x32xf32>, vector<32x64xf32>, vector<16x64xf32> -> vector<16x64xf32>
    %361 = arith.addf %355, %360 : vector<16x64xf32>
    %362 = vector.extract_strided_slice %318 {offsets = [2, 1, 0], sizes = [4, 4, 32], strides = [1, 1, 1]} : vector<6x8x64xf32> to vector<4x4x32xf32>
    %363 = vector.shape_cast %362 : vector<4x4x32xf32> to vector<16x32xf32>
    %364 = vector.extract_strided_slice %24 {offsets = [7, 0, 0], sizes = [1, 32, 64], strides = [1, 1, 1]} : vector<9x32x64xf32> to vector<1x32x64xf32>
    %365 = vector.shape_cast %364 : vector<1x32x64xf32> to vector<32x64xf32>
    %cst_154 = arith.constant dense<0.000000e+00> : vector<16x64xf32>
    %366 = tpu.matmul %363, %365, %cst_154 {dimension_numbers = #tpu.dot_dimension_numbers<[1], [0], [0], [1], [0, 0, 1, 1], [], []>} : vector<16x32xf32>, vector<32x64xf32>, vector<16x64xf32> -> vector<16x64xf32>
    %367 = arith.addf %361, %366 : vector<16x64xf32>
    %368 = vector.extract_strided_slice %318 {offsets = [2, 2, 0], sizes = [4, 4, 32], strides = [1, 1, 1]} : vector<6x8x64xf32> to vector<4x4x32xf32>
    %369 = vector.shape_cast %368 : vector<4x4x32xf32> to vector<16x32xf32>
    %370 = vector.extract_strided_slice %24 {offsets = [8, 0, 0], sizes = [1, 32, 64], strides = [1, 1, 1]} : vector<9x32x64xf32> to vector<1x32x64xf32>
    %371 = vector.shape_cast %370 : vector<1x32x64xf32> to vector<32x64xf32>
    %cst_155 = arith.constant dense<0.000000e+00> : vector<16x64xf32>
    %372 = tpu.matmul %369, %371, %cst_155 {dimension_numbers = #tpu.dot_dimension_numbers<[1], [0], [0], [1], [0, 0, 1, 1], [], []>} : vector<16x32xf32>, vector<32x64xf32>, vector<16x64xf32> -> vector<16x64xf32>
    %373 = arith.addf %367, %372 : vector<16x64xf32>
    %374 = vector.broadcast %25 : vector<1x64xf32> to vector<16x64xf32>
    %375 = arith.addf %373, %374 : vector<16x64xf32>
    %cst_156 = arith.constant 5.000000e-01 : f32
    %376 = vector.broadcast %cst_156 : f32 to vector<16x64xf32>
    %377 = arith.mulf %376, %375 : vector<16x64xf32>
    %cst_157 = arith.constant 0.707106769 : f32
    %378 = vector.broadcast %cst_157 : f32 to vector<16x64xf32>
    %379 = arith.mulf %375, %378 : vector<16x64xf32>
    %380 = math.absf %379 : vector<16x64xf32>
    %cst_158 = arith.constant 0.327591091 : f32
    %381 = vector.broadcast %cst_158 : f32 to vector<16x64xf32>
    %382 = arith.mulf %381, %380 : vector<16x64xf32>
    %cst_159 = arith.constant 1.000000e+00 : f32
    %383 = vector.broadcast %cst_159 : f32 to vector<16x64xf32>
    %384 = arith.addf %383, %382 : vector<16x64xf32>
    %cst_160 = arith.constant 1.000000e+00 : f32
    %385 = vector.broadcast %cst_160 : f32 to vector<16x64xf32>
    %386 = arith.divf %385, %384 : vector<16x64xf32>
    %cst_161 = arith.constant 1.06140542 : f32
    %387 = vector.broadcast %cst_161 : f32 to vector<16x64xf32>
    %388 = arith.mulf %387, %386 : vector<16x64xf32>
    %cst_162 = arith.constant -1.45315206 : f32
    %389 = vector.broadcast %cst_162 : f32 to vector<16x64xf32>
    %390 = arith.addf %388, %389 : vector<16x64xf32>
    %391 = arith.mulf %390, %386 : vector<16x64xf32>
    %cst_163 = arith.constant 1.42141378 : f32
    %392 = vector.broadcast %cst_163 : f32 to vector<16x64xf32>
    %393 = arith.addf %391, %392 : vector<16x64xf32>
    %394 = arith.mulf %393, %386 : vector<16x64xf32>
    %cst_164 = arith.constant -0.284496725 : f32
    %395 = vector.broadcast %cst_164 : f32 to vector<16x64xf32>
    %396 = arith.addf %394, %395 : vector<16x64xf32>
    %397 = arith.mulf %396, %386 : vector<16x64xf32>
    %cst_165 = arith.constant 0.254829586 : f32
    %398 = vector.broadcast %cst_165 : f32 to vector<16x64xf32>
    %399 = arith.addf %397, %398 : vector<16x64xf32>
    %400 = arith.mulf %399, %386 : vector<16x64xf32>
    %cst_166 = arith.constant 0.000000e+00 : f32
    %401 = vector.broadcast %cst_166 : f32 to vector<16x64xf32>
    %402 = arith.subf %401, %380 : vector<16x64xf32>
    %403 = arith.mulf %402, %380 : vector<16x64xf32>
    %404 = math.exp %403 : vector<16x64xf32>
    %405 = arith.mulf %400, %404 : vector<16x64xf32>
    %cst_167 = arith.constant 1.000000e+00 : f32
    %406 = vector.broadcast %cst_167 : f32 to vector<16x64xf32>
    %407 = arith.subf %406, %405 : vector<16x64xf32>
    %cst_168 = arith.constant 0.000000e+00 : f32
    %408 = vector.broadcast %cst_168 : f32 to vector<16x64xf32>
    %409 = arith.cmpf oge, %379, %408 : vector<16x64xf32>
    %cst_169 = arith.constant 0.000000e+00 : f32
    %410 = vector.broadcast %cst_169 : f32 to vector<16x64xf32>
    %411 = arith.subf %410, %407 : vector<16x64xf32>
    %412 = arith.select %409, %407, %411 : vector<16x64xi1>, vector<16x64xf32>
    %cst_170 = arith.constant 1.000000e+00 : f32
    %413 = vector.broadcast %cst_170 : f32 to vector<16x64xf32>
    %414 = arith.addf %413, %412 : vector<16x64xf32>
    %415 = arith.mulf %377, %414 : vector<16x64xf32>
    %416 = vector.shape_cast %415 : vector<16x64xf32> to vector<4x4x64xf32>
    %c1_171 = arith.constant 1 : index
    %c1_172 = arith.constant 1 : index
    %c0_173 = arith.constant 0 : index
    %417 = vector.load %arg31[%c1_171, %c1_172, %c0_173] : memref<6x8x64xf32, #tpu.memory_space<vmem>>, vector<4x4x64xf32>
    tpu.vector_store %arg31[%c1_171, %c1_172, %c0_173], %416 {strides = array<i32>} : memref<6x8x64xf32, #tpu.memory_space<vmem>>, vector<4x4x64xf32>,
    %c0_174 = arith.constant 0 : index
    %c0_175 = arith.constant 0 : index
    %c0_176 = arith.constant 0 : index
    %418 = vector.load %arg31[%c0_174, %c0_175, %c0_176] : memref<6x8x64xf32, #tpu.memory_space<vmem>>, vector<6x8x64xf32>
    %cst_177 = arith.constant 0.000000e+00 : f32
    %419 = vector.broadcast %cst_177 : f32 to vector<16x32xf32>
    %420 = vector.extract_strided_slice %418 {offsets = [0, 0, 0], sizes = [4, 4, 64], strides = [1, 1, 1]} : vector<6x8x64xf32> to vector<4x4x64xf32>
    %421 = vector.shape_cast %420 : vector<4x4x64xf32> to vector<16x64xf32>
    %422 = vector.extract_strided_slice %26 {offsets = [0, 0, 0], sizes = [1, 64, 32], strides = [1, 1, 1]} : vector<9x64x32xf32> to vector<1x64x32xf32>
    %423 = vector.shape_cast %422 : vector<1x64x32xf32> to vector<64x32xf32>
    %cst_178 = arith.constant dense<0.000000e+00> : vector<16x32xf32>
    %424 = tpu.matmul %421, %423, %cst_178 {dimension_numbers = #tpu.dot_dimension_numbers<[1], [0], [0], [1], [0, 0, 1, 1], [], []>} : vector<16x64xf32>, vector<64x32xf32>, vector<16x32xf32> -> vector<16x32xf32>
    %425 = arith.addf %419, %424 : vector<16x32xf32>
    %426 = vector.extract_strided_slice %418 {offsets = [0, 1, 0], sizes = [4, 4, 64], strides = [1, 1, 1]} : vector<6x8x64xf32> to vector<4x4x64xf32>
    %427 = vector.shape_cast %426 : vector<4x4x64xf32> to vector<16x64xf32>
    %428 = vector.extract_strided_slice %26 {offsets = [1, 0, 0], sizes = [1, 64, 32], strides = [1, 1, 1]} : vector<9x64x32xf32> to vector<1x64x32xf32>
    %429 = vector.shape_cast %428 : vector<1x64x32xf32> to vector<64x32xf32>
    %cst_179 = arith.constant dense<0.000000e+00> : vector<16x32xf32>
    %430 = tpu.matmul %427, %429, %cst_179 {dimension_numbers = #tpu.dot_dimension_numbers<[1], [0], [0], [1], [0, 0, 1, 1], [], []>} : vector<16x64xf32>, vector<64x32xf32>, vector<16x32xf32> -> vector<16x32xf32>
    %431 = arith.addf %425, %430 : vector<16x32xf32>
    %432 = vector.extract_strided_slice %418 {offsets = [0, 2, 0], sizes = [4, 4, 64], strides = [1, 1, 1]} : vector<6x8x64xf32> to vector<4x4x64xf32>
    %433 = vector.shape_cast %432 : vector<4x4x64xf32> to vector<16x64xf32>
    %434 = vector.extract_strided_slice %26 {offsets = [2, 0, 0], sizes = [1, 64, 32], strides = [1, 1, 1]} : vector<9x64x32xf32> to vector<1x64x32xf32>
    %435 = vector.shape_cast %434 : vector<1x64x32xf32> to vector<64x32xf32>
    %cst_180 = arith.constant dense<0.000000e+00> : vector<16x32xf32>
    %436 = tpu.matmul %433, %435, %cst_180 {dimension_numbers = #tpu.dot_dimension_numbers<[1], [0], [0], [1], [0, 0, 1, 1], [], []>} : vector<16x64xf32>, vector<64x32xf32>, vector<16x32xf32> -> vector<16x32xf32>
    %437 = arith.addf %431, %436 : vector<16x32xf32>
    %438 = vector.extract_strided_slice %418 {offsets = [1, 0, 0], sizes = [4, 4, 64], strides = [1, 1, 1]} : vector<6x8x64xf32> to vector<4x4x64xf32>
    %439 = vector.shape_cast %438 : vector<4x4x64xf32> to vector<16x64xf32>
    %440 = vector.extract_strided_slice %26 {offsets = [3, 0, 0], sizes = [1, 64, 32], strides = [1, 1, 1]} : vector<9x64x32xf32> to vector<1x64x32xf32>
    %441 = vector.shape_cast %440 : vector<1x64x32xf32> to vector<64x32xf32>
    %cst_181 = arith.constant dense<0.000000e+00> : vector<16x32xf32>
    %442 = tpu.matmul %439, %441, %cst_181 {dimension_numbers = #tpu.dot_dimension_numbers<[1], [0], [0], [1], [0, 0, 1, 1], [], []>} : vector<16x64xf32>, vector<64x32xf32>, vector<16x32xf32> -> vector<16x32xf32>
    %443 = arith.addf %437, %442 : vector<16x32xf32>
    %444 = vector.extract_strided_slice %418 {offsets = [1, 1, 0], sizes = [4, 4, 64], strides = [1, 1, 1]} : vector<6x8x64xf32> to vector<4x4x64xf32>
    %445 = vector.shape_cast %444 : vector<4x4x64xf32> to vector<16x64xf32>
    %446 = vector.extract_strided_slice %26 {offsets = [4, 0, 0], sizes = [1, 64, 32], strides = [1, 1, 1]} : vector<9x64x32xf32> to vector<1x64x32xf32>
    %447 = vector.shape_cast %446 : vector<1x64x32xf32> to vector<64x32xf32>
    %cst_182 = arith.constant dense<0.000000e+00> : vector<16x32xf32>
    %448 = tpu.matmul %445, %447, %cst_182 {dimension_numbers = #tpu.dot_dimension_numbers<[1], [0], [0], [1], [0, 0, 1, 1], [], []>} : vector<16x64xf32>, vector<64x32xf32>, vector<16x32xf32> -> vector<16x32xf32>
    %449 = arith.addf %443, %448 : vector<16x32xf32>
    %450 = vector.extract_strided_slice %418 {offsets = [1, 2, 0], sizes = [4, 4, 64], strides = [1, 1, 1]} : vector<6x8x64xf32> to vector<4x4x64xf32>
    %451 = vector.shape_cast %450 : vector<4x4x64xf32> to vector<16x64xf32>
    %452 = vector.extract_strided_slice %26 {offsets = [5, 0, 0], sizes = [1, 64, 32], strides = [1, 1, 1]} : vector<9x64x32xf32> to vector<1x64x32xf32>
    %453 = vector.shape_cast %452 : vector<1x64x32xf32> to vector<64x32xf32>
    %cst_183 = arith.constant dense<0.000000e+00> : vector<16x32xf32>
    %454 = tpu.matmul %451, %453, %cst_183 {dimension_numbers = #tpu.dot_dimension_numbers<[1], [0], [0], [1], [0, 0, 1, 1], [], []>} : vector<16x64xf32>, vector<64x32xf32>, vector<16x32xf32> -> vector<16x32xf32>
    %455 = arith.addf %449, %454 : vector<16x32xf32>
    %456 = vector.extract_strided_slice %418 {offsets = [2, 0, 0], sizes = [4, 4, 64], strides = [1, 1, 1]} : vector<6x8x64xf32> to vector<4x4x64xf32>
    %457 = vector.shape_cast %456 : vector<4x4x64xf32> to vector<16x64xf32>
    %458 = vector.extract_strided_slice %26 {offsets = [6, 0, 0], sizes = [1, 64, 32], strides = [1, 1, 1]} : vector<9x64x32xf32> to vector<1x64x32xf32>
    %459 = vector.shape_cast %458 : vector<1x64x32xf32> to vector<64x32xf32>
    %cst_184 = arith.constant dense<0.000000e+00> : vector<16x32xf32>
    %460 = tpu.matmul %457, %459, %cst_184 {dimension_numbers = #tpu.dot_dimension_numbers<[1], [0], [0], [1], [0, 0, 1, 1], [], []>} : vector<16x64xf32>, vector<64x32xf32>, vector<16x32xf32> -> vector<16x32xf32>
    %461 = arith.addf %455, %460 : vector<16x32xf32>
    %462 = vector.extract_strided_slice %418 {offsets = [2, 1, 0], sizes = [4, 4, 64], strides = [1, 1, 1]} : vector<6x8x64xf32> to vector<4x4x64xf32>
    %463 = vector.shape_cast %462 : vector<4x4x64xf32> to vector<16x64xf32>
    %464 = vector.extract_strided_slice %26 {offsets = [7, 0, 0], sizes = [1, 64, 32], strides = [1, 1, 1]} : vector<9x64x32xf32> to vector<1x64x32xf32>
    %465 = vector.shape_cast %464 : vector<1x64x32xf32> to vector<64x32xf32>
    %cst_185 = arith.constant dense<0.000000e+00> : vector<16x32xf32>
    %466 = tpu.matmul %463, %465, %cst_185 {dimension_numbers = #tpu.dot_dimension_numbers<[1], [0], [0], [1], [0, 0, 1, 1], [], []>} : vector<16x64xf32>, vector<64x32xf32>, vector<16x32xf32> -> vector<16x32xf32>
    %467 = arith.addf %461, %466 : vector<16x32xf32>
    %468 = vector.extract_strided_slice %418 {offsets = [2, 2, 0], sizes = [4, 4, 64], strides = [1, 1, 1]} : vector<6x8x64xf32> to vector<4x4x64xf32>
    %469 = vector.shape_cast %468 : vector<4x4x64xf32> to vector<16x64xf32>
    %470 = vector.extract_strided_slice %26 {offsets = [8, 0, 0], sizes = [1, 64, 32], strides = [1, 1, 1]} : vector<9x64x32xf32> to vector<1x64x32xf32>
    %471 = vector.shape_cast %470 : vector<1x64x32xf32> to vector<64x32xf32>
    %cst_186 = arith.constant dense<0.000000e+00> : vector<16x32xf32>
    %472 = tpu.matmul %469, %471, %cst_186 {dimension_numbers = #tpu.dot_dimension_numbers<[1], [0], [0], [1], [0, 0, 1, 1], [], []>} : vector<16x64xf32>, vector<64x32xf32>, vector<16x32xf32> -> vector<16x32xf32>
    %473 = arith.addf %467, %472 : vector<16x32xf32>
    %474 = arith.addf %295, %473 : vector<16x32xf32>
    %475 = vector.broadcast %27 : vector<1x32xf32> to vector<16x32xf32>
    %476 = arith.addf %474, %475 : vector<16x32xf32>
    %477 = vector.shape_cast %476 : vector<16x32xf32> to vector<16x1x32xf32>
    %c0_187 = arith.constant 0 : index
    %c0_188 = arith.constant 0 : index
    %c0_189 = arith.constant 0 : index
    %478 = vector.load %arg30[%c0_187, %c0_188, %c0_189] : memref<16x2x32xf32, #tpu.memory_space<vmem>>, vector<16x1x32xf32>
    tpu.vector_store %arg30[%c0_187, %c0_188, %c0_189], %477 {strides = array<i32>} : memref<16x2x32xf32, #tpu.memory_space<vmem>>, vector<16x1x32xf32>,
    %479 = vector.extract_strided_slice %49 {offsets = [0, 1, 0], sizes = [16, 1, 32], strides = [1, 1, 1]} : vector<16x2x32xf32> to vector<16x1x32xf32>
    %480 = vector.shape_cast %479 : vector<16x1x32xf32> to vector<16x32xf32>
    %481 = vector.extract_strided_slice %50 {offsets = [0, 1, 0], sizes = [16, 1, 32], strides = [1, 1, 1]} : vector<16x2x32xf32> to vector<16x1x32xf32>
    %482 = vector.shape_cast %481 : vector<16x1x32xf32> to vector<16x32xf32>
    %483 = vector.extract_strided_slice %51 {offsets = [0, 1, 0], sizes = [8, 1, 32], strides = [1, 1, 1]} : vector<8x2x32xf32> to vector<8x1x32xf32>
    %484 = vector.shape_cast %483 : vector<8x1x32xf32> to vector<8x32xf32>
    %cst_190 = arith.constant dense<0.000000e+00> : vector<16xf32>
    %485 = vector.multi_reduction <add>, %480, %cst_190 [1] : vector<16x32xf32> to vector<16xf32>
    %486 = vector.shape_cast %485 : vector<16xf32> to vector<16x1xf32>
    %cst_191 = arith.constant 3.200000e+01 : f32
    %487 = vector.broadcast %cst_191 : f32 to vector<16x1xf32>
    %488 = arith.divf %486, %487 : vector<16x1xf32>
    %489 = vector.broadcast %488 : vector<16x1xf32> to vector<16x32xf32>
    %490 = arith.subf %480, %489 : vector<16x32xf32>
    %491 = arith.mulf %490, %490 : vector<16x32xf32>
    %cst_192 = arith.constant dense<0.000000e+00> : vector<16xf32>
    %492 = vector.multi_reduction <add>, %491, %cst_192 [1] : vector<16x32xf32> to vector<16xf32>
    %493 = vector.shape_cast %492 : vector<16xf32> to vector<16x1xf32>
    %cst_193 = arith.constant 3.200000e+01 : f32
    %494 = vector.broadcast %cst_193 : f32 to vector<16x1xf32>
    %495 = arith.divf %493, %494 : vector<16x1xf32>
    %cst_194 = arith.constant 9.99999974E-6 : f32
    %496 = vector.broadcast %cst_194 : f32 to vector<16x1xf32>
    %497 = arith.addf %495, %496 : vector<16x1xf32>
    %498 = math.rsqrt %497 : vector<16x1xf32>
    %499 = vector.broadcast %498 : vector<16x1xf32> to vector<16x32xf32>
    %500 = arith.mulf %490, %499 : vector<16x32xf32>
    %501 = vector.broadcast %2 : vector<1x32xf32> to vector<16x32xf32>
    %502 = arith.mulf %500, %501 : vector<16x32xf32>
    %503 = vector.broadcast %3 : vector<1x32xf32> to vector<16x32xf32>
    %504 = arith.addf %502, %503 : vector<16x32xf32>
    %505 = arith.addf %504, %482 : vector<16x32xf32>
    %cst_195 = arith.constant dense<0.000000e+00> : vector<16x32xf32>
    %506 = tpu.matmul %505, %8, %cst_195 {dimension_numbers = #tpu.dot_dimension_numbers<[1], [0], [0], [1], [0, 0, 1, 1], [], []>} : vector<16x32xf32>, vector<32x32xf32>, vector<16x32xf32> -> vector<16x32xf32>
    %507 = vector.broadcast %9 : vector<1x32xf32> to vector<16x32xf32>
    %508 = arith.addf %506, %507 : vector<16x32xf32>
    %cst_196 = arith.constant dense<0.000000e+00> : vector<16x32xf32>
    %509 = tpu.matmul %505, %10, %cst_196 {dimension_numbers = #tpu.dot_dimension_numbers<[1], [0], [0], [1], [0, 0, 1, 1], [], []>} : vector<16x32xf32>, vector<32x32xf32>, vector<16x32xf32> -> vector<16x32xf32>
    %510 = vector.broadcast %11 : vector<1x32xf32> to vector<16x32xf32>
    %511 = arith.addf %509, %510 : vector<16x32xf32>
    %cst_197 = arith.constant dense<0.000000e+00> : vector<16x32xf32>
    %512 = tpu.matmul %504, %12, %cst_197 {dimension_numbers = #tpu.dot_dimension_numbers<[1], [0], [0], [1], [0, 0, 1, 1], [], []>} : vector<16x32xf32>, vector<32x32xf32>, vector<16x32xf32> -> vector<16x32xf32>
    %513 = vector.broadcast %13 : vector<1x32xf32> to vector<16x32xf32>
    %514 = arith.addf %512, %513 : vector<16x32xf32>
    %cst_198 = arith.constant 0.000000e+00 : f32
    %515 = vector.broadcast %cst_198 : f32 to vector<16x32xf32>
    %cst_199 = arith.constant 0.000000e+00 : f32
    %516 = vector.shape_cast %33 : vector<1x32xi1> to vector<1x32xi1>
    %517 = vector.broadcast %516 : vector<1x32xi1> to vector<16x32xi1>
    %518 = vector.broadcast %cst_199 : f32 to vector<16x32xf32>
    %519 = arith.select %517, %511, %518 : vector<16x32xi1>, vector<16x32xf32>
    %cst_200 = arith.constant dense<0.000000e+00> : vector<16x16xf32>
    %520 = tpu.matmul %508, %519, %cst_200 {dimension_numbers = #tpu.dot_dimension_numbers<[1], [1], [0], [0], [0, 0, 1, 0], [], []>} : vector<16x32xf32>, vector<16x32xf32>, vector<16x16xf32> -> vector<16x16xf32>
    %cst_201 = arith.constant dense<0xFF800000> : vector<16xf32>
    %521 = vector.multi_reduction <maximumf>, %520, %cst_201 [1] : vector<16x16xf32> to vector<16xf32>
    %522 = vector.shape_cast %521 : vector<16xf32> to vector<16x1xf32>
    %523 = vector.broadcast %522 : vector<16x1xf32> to vector<16x16xf32>
    %524 = arith.subf %520, %523 : vector<16x16xf32>
    %525 = math.exp %524 : vector<16x16xf32>
    %cst_202 = arith.constant dense<0.000000e+00> : vector<16xf32>
    %526 = vector.multi_reduction <add>, %525, %cst_202 [1] : vector<16x16xf32> to vector<16xf32>
    %527 = vector.shape_cast %526 : vector<16xf32> to vector<16x1xf32>
    %528 = tpu.reciprocal %527 {approx = true} : vector<16x1xf32> -> vector<16x1xf32>
    %529 = vector.broadcast %528 : vector<16x1xf32> to vector<16x16xf32>
    %530 = arith.mulf %525, %529 : vector<16x16xf32>
    %cst_203 = arith.constant 0.000000e+00 : f32
    %531 = vector.shape_cast %33 : vector<1x32xi1> to vector<1x32xi1>
    %532 = vector.broadcast %531 : vector<1x32xi1> to vector<16x32xi1>
    %533 = vector.broadcast %cst_203 : f32 to vector<16x32xf32>
    %534 = arith.select %532, %514, %533 : vector<16x32xi1>, vector<16x32xf32>
    %cst_204 = arith.constant dense<0.000000e+00> : vector<16x32xf32>
    %535 = tpu.matmul %530, %534, %cst_204 {dimension_numbers = #tpu.dot_dimension_numbers<[1], [0], [0], [1], [0, 0, 1, 1], [], []>} : vector<16x16xf32>, vector<16x32xf32>, vector<16x32xf32> -> vector<16x32xf32>
    %536 = arith.addf %515, %535 : vector<16x32xf32>
    %cst_205 = arith.constant 0.000000e+00 : f32
    %537 = vector.shape_cast %38 : vector<1x32xi1> to vector<1x32xi1>
    %538 = vector.broadcast %537 : vector<1x32xi1> to vector<16x32xi1>
    %539 = vector.broadcast %cst_205 : f32 to vector<16x32xf32>
    %540 = arith.select %538, %511, %539 : vector<16x32xi1>, vector<16x32xf32>
    %cst_206 = arith.constant dense<0.000000e+00> : vector<16x16xf32>
    %541 = tpu.matmul %508, %540, %cst_206 {dimension_numbers = #tpu.dot_dimension_numbers<[1], [1], [0], [0], [0, 0, 1, 0], [], []>} : vector<16x32xf32>, vector<16x32xf32>, vector<16x16xf32> -> vector<16x16xf32>
    %cst_207 = arith.constant dense<0xFF800000> : vector<16xf32>
    %542 = vector.multi_reduction <maximumf>, %541, %cst_207 [1] : vector<16x16xf32> to vector<16xf32>
    %543 = vector.shape_cast %542 : vector<16xf32> to vector<16x1xf32>
    %544 = vector.broadcast %543 : vector<16x1xf32> to vector<16x16xf32>
    %545 = arith.subf %541, %544 : vector<16x16xf32>
    %546 = math.exp %545 : vector<16x16xf32>
    %cst_208 = arith.constant dense<0.000000e+00> : vector<16xf32>
    %547 = vector.multi_reduction <add>, %546, %cst_208 [1] : vector<16x16xf32> to vector<16xf32>
    %548 = vector.shape_cast %547 : vector<16xf32> to vector<16x1xf32>
    %549 = tpu.reciprocal %548 {approx = true} : vector<16x1xf32> -> vector<16x1xf32>
    %550 = vector.broadcast %549 : vector<16x1xf32> to vector<16x16xf32>
    %551 = arith.mulf %546, %550 : vector<16x16xf32>
    %cst_209 = arith.constant 0.000000e+00 : f32
    %552 = vector.shape_cast %38 : vector<1x32xi1> to vector<1x32xi1>
    %553 = vector.broadcast %552 : vector<1x32xi1> to vector<16x32xi1>
    %554 = vector.broadcast %cst_209 : f32 to vector<16x32xf32>
    %555 = arith.select %553, %514, %554 : vector<16x32xi1>, vector<16x32xf32>
    %cst_210 = arith.constant dense<0.000000e+00> : vector<16x32xf32>
    %556 = tpu.matmul %551, %555, %cst_210 {dimension_numbers = #tpu.dot_dimension_numbers<[1], [0], [0], [1], [0, 0, 1, 1], [], []>} : vector<16x16xf32>, vector<16x32xf32>, vector<16x32xf32> -> vector<16x32xf32>
    %557 = arith.addf %536, %556 : vector<16x32xf32>
    %cst_211 = arith.constant 0.000000e+00 : f32
    %558 = vector.shape_cast %43 : vector<1x32xi1> to vector<1x32xi1>
    %559 = vector.broadcast %558 : vector<1x32xi1> to vector<16x32xi1>
    %560 = vector.broadcast %cst_211 : f32 to vector<16x32xf32>
    %561 = arith.select %559, %511, %560 : vector<16x32xi1>, vector<16x32xf32>
    %cst_212 = arith.constant dense<0.000000e+00> : vector<16x16xf32>
    %562 = tpu.matmul %508, %561, %cst_212 {dimension_numbers = #tpu.dot_dimension_numbers<[1], [1], [0], [0], [0, 0, 1, 0], [], []>} : vector<16x32xf32>, vector<16x32xf32>, vector<16x16xf32> -> vector<16x16xf32>
    %cst_213 = arith.constant dense<0xFF800000> : vector<16xf32>
    %563 = vector.multi_reduction <maximumf>, %562, %cst_213 [1] : vector<16x16xf32> to vector<16xf32>
    %564 = vector.shape_cast %563 : vector<16xf32> to vector<16x1xf32>
    %565 = vector.broadcast %564 : vector<16x1xf32> to vector<16x16xf32>
    %566 = arith.subf %562, %565 : vector<16x16xf32>
    %567 = math.exp %566 : vector<16x16xf32>
    %cst_214 = arith.constant dense<0.000000e+00> : vector<16xf32>
    %568 = vector.multi_reduction <add>, %567, %cst_214 [1] : vector<16x16xf32> to vector<16xf32>
    %569 = vector.shape_cast %568 : vector<16xf32> to vector<16x1xf32>
    %570 = tpu.reciprocal %569 {approx = true} : vector<16x1xf32> -> vector<16x1xf32>
    %571 = vector.broadcast %570 : vector<16x1xf32> to vector<16x16xf32>
    %572 = arith.mulf %567, %571 : vector<16x16xf32>
    %cst_215 = arith.constant 0.000000e+00 : f32
    %573 = vector.shape_cast %43 : vector<1x32xi1> to vector<1x32xi1>
    %574 = vector.broadcast %573 : vector<1x32xi1> to vector<16x32xi1>
    %575 = vector.broadcast %cst_215 : f32 to vector<16x32xf32>
    %576 = arith.select %574, %514, %575 : vector<16x32xi1>, vector<16x32xf32>
    %cst_216 = arith.constant dense<0.000000e+00> : vector<16x32xf32>
    %577 = tpu.matmul %572, %576, %cst_216 {dimension_numbers = #tpu.dot_dimension_numbers<[1], [0], [0], [1], [0, 0, 1, 1], [], []>} : vector<16x16xf32>, vector<16x32xf32>, vector<16x32xf32> -> vector<16x32xf32>
    %578 = arith.addf %557, %577 : vector<16x32xf32>
    %cst_217 = arith.constant 0.000000e+00 : f32
    %579 = vector.shape_cast %48 : vector<1x32xi1> to vector<1x32xi1>
    %580 = vector.broadcast %579 : vector<1x32xi1> to vector<16x32xi1>
    %581 = vector.broadcast %cst_217 : f32 to vector<16x32xf32>
    %582 = arith.select %580, %511, %581 : vector<16x32xi1>, vector<16x32xf32>
    %cst_218 = arith.constant dense<0.000000e+00> : vector<16x16xf32>
    %583 = tpu.matmul %508, %582, %cst_218 {dimension_numbers = #tpu.dot_dimension_numbers<[1], [1], [0], [0], [0, 0, 1, 0], [], []>} : vector<16x32xf32>, vector<16x32xf32>, vector<16x16xf32> -> vector<16x16xf32>
    %cst_219 = arith.constant dense<0xFF800000> : vector<16xf32>
    %584 = vector.multi_reduction <maximumf>, %583, %cst_219 [1] : vector<16x16xf32> to vector<16xf32>
    %585 = vector.shape_cast %584 : vector<16xf32> to vector<16x1xf32>
    %586 = vector.broadcast %585 : vector<16x1xf32> to vector<16x16xf32>
    %587 = arith.subf %583, %586 : vector<16x16xf32>
    %588 = math.exp %587 : vector<16x16xf32>
    %cst_220 = arith.constant dense<0.000000e+00> : vector<16xf32>
    %589 = vector.multi_reduction <add>, %588, %cst_220 [1] : vector<16x16xf32> to vector<16xf32>
    %590 = vector.shape_cast %589 : vector<16xf32> to vector<16x1xf32>
    %591 = tpu.reciprocal %590 {approx = true} : vector<16x1xf32> -> vector<16x1xf32>
    %592 = vector.broadcast %591 : vector<16x1xf32> to vector<16x16xf32>
    %593 = arith.mulf %588, %592 : vector<16x16xf32>
    %cst_221 = arith.constant 0.000000e+00 : f32
    %594 = vector.shape_cast %48 : vector<1x32xi1> to vector<1x32xi1>
    %595 = vector.broadcast %594 : vector<1x32xi1> to vector<16x32xi1>
    %596 = vector.broadcast %cst_221 : f32 to vector<16x32xf32>
    %597 = arith.select %595, %514, %596 : vector<16x32xi1>, vector<16x32xf32>
    %cst_222 = arith.constant dense<0.000000e+00> : vector<16x32xf32>
    %598 = tpu.matmul %593, %597, %cst_222 {dimension_numbers = #tpu.dot_dimension_numbers<[1], [0], [0], [1], [0, 0, 1, 1], [], []>} : vector<16x16xf32>, vector<16x32xf32>, vector<16x32xf32> -> vector<16x32xf32>
    %599 = arith.addf %578, %598 : vector<16x32xf32>
    %cst_223 = arith.constant dense<0.000000e+00> : vector<16x32xf32>
    %600 = tpu.matmul %599, %14, %cst_223 {dimension_numbers = #tpu.dot_dimension_numbers<[1], [0], [0], [1], [0, 0, 1, 1], [], []>} : vector<16x32xf32>, vector<32x32xf32>, vector<16x32xf32> -> vector<16x32xf32>
    %601 = vector.broadcast %15 : vector<1x32xf32> to vector<16x32xf32>
    %602 = arith.addf %600, %601 : vector<16x32xf32>
    %603 = arith.addf %480, %602 : vector<16x32xf32>
    %cst_224 = arith.constant dense<0.000000e+00> : vector<16xf32>
    %604 = vector.multi_reduction <add>, %603, %cst_224 [1] : vector<16x32xf32> to vector<16xf32>
    %605 = vector.shape_cast %604 : vector<16xf32> to vector<16x1xf32>
    %cst_225 = arith.constant 3.200000e+01 : f32
    %606 = vector.broadcast %cst_225 : f32 to vector<16x1xf32>
    %607 = arith.divf %605, %606 : vector<16x1xf32>
    %608 = vector.broadcast %607 : vector<16x1xf32> to vector<16x32xf32>
    %609 = arith.subf %603, %608 : vector<16x32xf32>
    %610 = arith.mulf %609, %609 : vector<16x32xf32>
    %cst_226 = arith.constant dense<0.000000e+00> : vector<16xf32>
    %611 = vector.multi_reduction <add>, %610, %cst_226 [1] : vector<16x32xf32> to vector<16xf32>
    %612 = vector.shape_cast %611 : vector<16xf32> to vector<16x1xf32>
    %cst_227 = arith.constant 3.200000e+01 : f32
    %613 = vector.broadcast %cst_227 : f32 to vector<16x1xf32>
    %614 = arith.divf %612, %613 : vector<16x1xf32>
    %cst_228 = arith.constant 9.99999974E-6 : f32
    %615 = vector.broadcast %cst_228 : f32 to vector<16x1xf32>
    %616 = arith.addf %614, %615 : vector<16x1xf32>
    %617 = math.rsqrt %616 : vector<16x1xf32>
    %618 = vector.broadcast %617 : vector<16x1xf32> to vector<16x32xf32>
    %619 = arith.mulf %609, %618 : vector<16x32xf32>
    %620 = vector.broadcast %4 : vector<1x32xf32> to vector<16x32xf32>
    %621 = arith.mulf %619, %620 : vector<16x32xf32>
    %622 = vector.broadcast %5 : vector<1x32xf32> to vector<16x32xf32>
    %623 = arith.addf %621, %622 : vector<16x32xf32>
    %624 = arith.addf %623, %482 : vector<16x32xf32>
    %cst_229 = arith.constant dense<0.000000e+00> : vector<16x32xf32>
    %625 = tpu.matmul %624, %16, %cst_229 {dimension_numbers = #tpu.dot_dimension_numbers<[1], [0], [0], [1], [0, 0, 1, 1], [], []>} : vector<16x32xf32>, vector<32x32xf32>, vector<16x32xf32> -> vector<16x32xf32>
    %626 = vector.broadcast %17 : vector<1x32xf32> to vector<16x32xf32>
    %627 = arith.addf %625, %626 : vector<16x32xf32>
    %cst_230 = arith.constant dense<0.000000e+00> : vector<8x32xf32>
    %628 = tpu.matmul %484, %18, %cst_230 {dimension_numbers = #tpu.dot_dimension_numbers<[1], [0], [0], [1], [0, 0, 1, 1], [], []>} : vector<8x32xf32>, vector<32x32xf32>, vector<8x32xf32> -> vector<8x32xf32>
    %629 = vector.broadcast %19 : vector<1x32xf32> to vector<8x32xf32>
    %630 = arith.addf %628, %629 : vector<8x32xf32>
    %cst_231 = arith.constant dense<0.000000e+00> : vector<8x32xf32>
    %631 = tpu.matmul %484, %20, %cst_231 {dimension_numbers = #tpu.dot_dimension_numbers<[1], [0], [0], [1], [0, 0, 1, 1], [], []>} : vector<8x32xf32>, vector<32x32xf32>, vector<8x32xf32> -> vector<8x32xf32>
    %632 = vector.broadcast %21 : vector<1x32xf32> to vector<8x32xf32>
    %633 = arith.addf %631, %632 : vector<8x32xf32>
    %cst_232 = arith.constant 0.000000e+00 : f32
    %634 = vector.broadcast %cst_232 : f32 to vector<16x32xf32>
    %cst_233 = arith.constant 0.000000e+00 : f32
    %635 = vector.shape_cast %33 : vector<1x32xi1> to vector<1x32xi1>
    %636 = vector.broadcast %635 : vector<1x32xi1> to vector<8x32xi1>
    %637 = vector.broadcast %cst_233 : f32 to vector<8x32xf32>
    %638 = arith.select %636, %630, %637 : vector<8x32xi1>, vector<8x32xf32>
    %cst_234 = arith.constant dense<0.000000e+00> : vector<16x8xf32>
    %639 = tpu.matmul %627, %638, %cst_234 {dimension_numbers = #tpu.dot_dimension_numbers<[1], [1], [0], [0], [0, 0, 1, 0], [], []>} : vector<16x32xf32>, vector<8x32xf32>, vector<16x8xf32> -> vector<16x8xf32>
    %cst_235 = arith.constant dense<0xFF800000> : vector<16xf32>
    %640 = vector.multi_reduction <maximumf>, %639, %cst_235 [1] : vector<16x8xf32> to vector<16xf32>
    %641 = vector.shape_cast %640 : vector<16xf32> to vector<16x1xf32>
    %642 = vector.broadcast %641 : vector<16x1xf32> to vector<16x8xf32>
    %643 = arith.subf %639, %642 : vector<16x8xf32>
    %644 = math.exp %643 : vector<16x8xf32>
    %cst_236 = arith.constant dense<0.000000e+00> : vector<16xf32>
    %645 = vector.multi_reduction <add>, %644, %cst_236 [1] : vector<16x8xf32> to vector<16xf32>
    %646 = vector.shape_cast %645 : vector<16xf32> to vector<16x1xf32>
    %647 = tpu.reciprocal %646 {approx = true} : vector<16x1xf32> -> vector<16x1xf32>
    %648 = vector.broadcast %647 : vector<16x1xf32> to vector<16x8xf32>
    %649 = arith.mulf %644, %648 : vector<16x8xf32>
    %cst_237 = arith.constant 0.000000e+00 : f32
    %650 = vector.shape_cast %33 : vector<1x32xi1> to vector<1x32xi1>
    %651 = vector.broadcast %650 : vector<1x32xi1> to vector<8x32xi1>
    %652 = vector.broadcast %cst_237 : f32 to vector<8x32xf32>
    %653 = arith.select %651, %633, %652 : vector<8x32xi1>, vector<8x32xf32>
    %cst_238 = arith.constant dense<0.000000e+00> : vector<16x32xf32>
    %654 = tpu.matmul %649, %653, %cst_238 {dimension_numbers = #tpu.dot_dimension_numbers<[1], [0], [0], [1], [0, 0, 1, 1], [], []>} : vector<16x8xf32>, vector<8x32xf32>, vector<16x32xf32> -> vector<16x32xf32>
    %655 = arith.addf %634, %654 : vector<16x32xf32>
    %cst_239 = arith.constant 0.000000e+00 : f32
    %656 = vector.shape_cast %38 : vector<1x32xi1> to vector<1x32xi1>
    %657 = vector.broadcast %656 : vector<1x32xi1> to vector<8x32xi1>
    %658 = vector.broadcast %cst_239 : f32 to vector<8x32xf32>
    %659 = arith.select %657, %630, %658 : vector<8x32xi1>, vector<8x32xf32>
    %cst_240 = arith.constant dense<0.000000e+00> : vector<16x8xf32>
    %660 = tpu.matmul %627, %659, %cst_240 {dimension_numbers = #tpu.dot_dimension_numbers<[1], [1], [0], [0], [0, 0, 1, 0], [], []>} : vector<16x32xf32>, vector<8x32xf32>, vector<16x8xf32> -> vector<16x8xf32>
    %cst_241 = arith.constant dense<0xFF800000> : vector<16xf32>
    %661 = vector.multi_reduction <maximumf>, %660, %cst_241 [1] : vector<16x8xf32> to vector<16xf32>
    %662 = vector.shape_cast %661 : vector<16xf32> to vector<16x1xf32>
    %663 = vector.broadcast %662 : vector<16x1xf32> to vector<16x8xf32>
    %664 = arith.subf %660, %663 : vector<16x8xf32>
    %665 = math.exp %664 : vector<16x8xf32>
    %cst_242 = arith.constant dense<0.000000e+00> : vector<16xf32>
    %666 = vector.multi_reduction <add>, %665, %cst_242 [1] : vector<16x8xf32> to vector<16xf32>
    %667 = vector.shape_cast %666 : vector<16xf32> to vector<16x1xf32>
    %668 = tpu.reciprocal %667 {approx = true} : vector<16x1xf32> -> vector<16x1xf32>
    %669 = vector.broadcast %668 : vector<16x1xf32> to vector<16x8xf32>
    %670 = arith.mulf %665, %669 : vector<16x8xf32>
    %cst_243 = arith.constant 0.000000e+00 : f32
    %671 = vector.shape_cast %38 : vector<1x32xi1> to vector<1x32xi1>
    %672 = vector.broadcast %671 : vector<1x32xi1> to vector<8x32xi1>
    %673 = vector.broadcast %cst_243 : f32 to vector<8x32xf32>
    %674 = arith.select %672, %633, %673 : vector<8x32xi1>, vector<8x32xf32>
    %cst_244 = arith.constant dense<0.000000e+00> : vector<16x32xf32>
    %675 = tpu.matmul %670, %674, %cst_244 {dimension_numbers = #tpu.dot_dimension_numbers<[1], [0], [0], [1], [0, 0, 1, 1], [], []>} : vector<16x8xf32>, vector<8x32xf32>, vector<16x32xf32> -> vector<16x32xf32>
    %676 = arith.addf %655, %675 : vector<16x32xf32>
    %cst_245 = arith.constant 0.000000e+00 : f32
    %677 = vector.shape_cast %43 : vector<1x32xi1> to vector<1x32xi1>
    %678 = vector.broadcast %677 : vector<1x32xi1> to vector<8x32xi1>
    %679 = vector.broadcast %cst_245 : f32 to vector<8x32xf32>
    %680 = arith.select %678, %630, %679 : vector<8x32xi1>, vector<8x32xf32>
    %cst_246 = arith.constant dense<0.000000e+00> : vector<16x8xf32>
    %681 = tpu.matmul %627, %680, %cst_246 {dimension_numbers = #tpu.dot_dimension_numbers<[1], [1], [0], [0], [0, 0, 1, 0], [], []>} : vector<16x32xf32>, vector<8x32xf32>, vector<16x8xf32> -> vector<16x8xf32>
    %cst_247 = arith.constant dense<0xFF800000> : vector<16xf32>
    %682 = vector.multi_reduction <maximumf>, %681, %cst_247 [1] : vector<16x8xf32> to vector<16xf32>
    %683 = vector.shape_cast %682 : vector<16xf32> to vector<16x1xf32>
    %684 = vector.broadcast %683 : vector<16x1xf32> to vector<16x8xf32>
    %685 = arith.subf %681, %684 : vector<16x8xf32>
    %686 = math.exp %685 : vector<16x8xf32>
    %cst_248 = arith.constant dense<0.000000e+00> : vector<16xf32>
    %687 = vector.multi_reduction <add>, %686, %cst_248 [1] : vector<16x8xf32> to vector<16xf32>
    %688 = vector.shape_cast %687 : vector<16xf32> to vector<16x1xf32>
    %689 = tpu.reciprocal %688 {approx = true} : vector<16x1xf32> -> vector<16x1xf32>
    %690 = vector.broadcast %689 : vector<16x1xf32> to vector<16x8xf32>
    %691 = arith.mulf %686, %690 : vector<16x8xf32>
    %cst_249 = arith.constant 0.000000e+00 : f32
    %692 = vector.shape_cast %43 : vector<1x32xi1> to vector<1x32xi1>
    %693 = vector.broadcast %692 : vector<1x32xi1> to vector<8x32xi1>
    %694 = vector.broadcast %cst_249 : f32 to vector<8x32xf32>
    %695 = arith.select %693, %633, %694 : vector<8x32xi1>, vector<8x32xf32>
    %cst_250 = arith.constant dense<0.000000e+00> : vector<16x32xf32>
    %696 = tpu.matmul %691, %695, %cst_250 {dimension_numbers = #tpu.dot_dimension_numbers<[1], [0], [0], [1], [0, 0, 1, 1], [], []>} : vector<16x8xf32>, vector<8x32xf32>, vector<16x32xf32> -> vector<16x32xf32>
    %697 = arith.addf %676, %696 : vector<16x32xf32>
    %cst_251 = arith.constant 0.000000e+00 : f32
    %698 = vector.shape_cast %48 : vector<1x32xi1> to vector<1x32xi1>
    %699 = vector.broadcast %698 : vector<1x32xi1> to vector<8x32xi1>
    %700 = vector.broadcast %cst_251 : f32 to vector<8x32xf32>
    %701 = arith.select %699, %630, %700 : vector<8x32xi1>, vector<8x32xf32>
    %cst_252 = arith.constant dense<0.000000e+00> : vector<16x8xf32>
    %702 = tpu.matmul %627, %701, %cst_252 {dimension_numbers = #tpu.dot_dimension_numbers<[1], [1], [0], [0], [0, 0, 1, 0], [], []>} : vector<16x32xf32>, vector<8x32xf32>, vector<16x8xf32> -> vector<16x8xf32>
    %cst_253 = arith.constant dense<0xFF800000> : vector<16xf32>
    %703 = vector.multi_reduction <maximumf>, %702, %cst_253 [1] : vector<16x8xf32> to vector<16xf32>
    %704 = vector.shape_cast %703 : vector<16xf32> to vector<16x1xf32>
    %705 = vector.broadcast %704 : vector<16x1xf32> to vector<16x8xf32>
    %706 = arith.subf %702, %705 : vector<16x8xf32>
    %707 = math.exp %706 : vector<16x8xf32>
    %cst_254 = arith.constant dense<0.000000e+00> : vector<16xf32>
    %708 = vector.multi_reduction <add>, %707, %cst_254 [1] : vector<16x8xf32> to vector<16xf32>
    %709 = vector.shape_cast %708 : vector<16xf32> to vector<16x1xf32>
    %710 = tpu.reciprocal %709 {approx = true} : vector<16x1xf32> -> vector<16x1xf32>
    %711 = vector.broadcast %710 : vector<16x1xf32> to vector<16x8xf32>
    %712 = arith.mulf %707, %711 : vector<16x8xf32>
    %cst_255 = arith.constant 0.000000e+00 : f32
    %713 = vector.shape_cast %48 : vector<1x32xi1> to vector<1x32xi1>
    %714 = vector.broadcast %713 : vector<1x32xi1> to vector<8x32xi1>
    %715 = vector.broadcast %cst_255 : f32 to vector<8x32xf32>
    %716 = arith.select %714, %633, %715 : vector<8x32xi1>, vector<8x32xf32>
    %cst_256 = arith.constant dense<0.000000e+00> : vector<16x32xf32>
    %717 = tpu.matmul %712, %716, %cst_256 {dimension_numbers = #tpu.dot_dimension_numbers<[1], [0], [0], [1], [0, 0, 1, 1], [], []>} : vector<16x8xf32>, vector<8x32xf32>, vector<16x32xf32> -> vector<16x32xf32>
    %718 = arith.addf %697, %717 : vector<16x32xf32>
    %cst_257 = arith.constant dense<0.000000e+00> : vector<16x32xf32>
    %719 = tpu.matmul %718, %22, %cst_257 {dimension_numbers = #tpu.dot_dimension_numbers<[1], [0], [0], [1], [0, 0, 1, 1], [], []>} : vector<16x32xf32>, vector<32x32xf32>, vector<16x32xf32> -> vector<16x32xf32>
    %720 = vector.broadcast %23 : vector<1x32xf32> to vector<16x32xf32>
    %721 = arith.addf %719, %720 : vector<16x32xf32>
    %722 = arith.addf %603, %721 : vector<16x32xf32>
    %cst_258 = arith.constant dense<0.000000e+00> : vector<16xf32>
    %723 = vector.multi_reduction <add>, %722, %cst_258 [1] : vector<16x32xf32> to vector<16xf32>
    %724 = vector.shape_cast %723 : vector<16xf32> to vector<16x1xf32>
    %cst_259 = arith.constant 3.200000e+01 : f32
    %725 = vector.broadcast %cst_259 : f32 to vector<16x1xf32>
    %726 = arith.divf %724, %725 : vector<16x1xf32>
    %727 = vector.broadcast %726 : vector<16x1xf32> to vector<16x32xf32>
    %728 = arith.subf %722, %727 : vector<16x32xf32>
    %729 = arith.mulf %728, %728 : vector<16x32xf32>
    %cst_260 = arith.constant dense<0.000000e+00> : vector<16xf32>
    %730 = vector.multi_reduction <add>, %729, %cst_260 [1] : vector<16x32xf32> to vector<16xf32>
    %731 = vector.shape_cast %730 : vector<16xf32> to vector<16x1xf32>
    %cst_261 = arith.constant 3.200000e+01 : f32
    %732 = vector.broadcast %cst_261 : f32 to vector<16x1xf32>
    %733 = arith.divf %731, %732 : vector<16x1xf32>
    %cst_262 = arith.constant 9.99999974E-6 : f32
    %734 = vector.broadcast %cst_262 : f32 to vector<16x1xf32>
    %735 = arith.addf %733, %734 : vector<16x1xf32>
    %736 = math.rsqrt %735 : vector<16x1xf32>
    %737 = vector.broadcast %736 : vector<16x1xf32> to vector<16x32xf32>
    %738 = arith.mulf %728, %737 : vector<16x32xf32>
    %739 = vector.broadcast %6 : vector<1x32xf32> to vector<16x32xf32>
    %740 = arith.mulf %738, %739 : vector<16x32xf32>
    %741 = vector.broadcast %7 : vector<1x32xf32> to vector<16x32xf32>
    %742 = arith.addf %740, %741 : vector<16x32xf32>
    %743 = vector.shape_cast %742 : vector<16x32xf32> to vector<4x4x32xf32>
    %c1_263 = arith.constant 1 : index
    %c1_264 = arith.constant 1 : index
    %c0_265 = arith.constant 0 : index
    %744 = vector.load %arg31[%c1_263, %c1_264, %c0_265] : memref<6x8x64xf32, #tpu.memory_space<vmem>>, vector<4x4x32xf32>
    tpu.vector_store %arg31[%c1_263, %c1_264, %c0_265], %743 {strides = array<i32>} : memref<6x8x64xf32, #tpu.memory_space<vmem>>, vector<4x4x32xf32>,
    %c0_266 = arith.constant 0 : index
    %c0_267 = arith.constant 0 : index
    %c0_268 = arith.constant 0 : index
    %745 = vector.load %arg31[%c0_266, %c0_267, %c0_268] : memref<6x8x64xf32, #tpu.memory_space<vmem>>, vector<6x8x64xf32>
    %cst_269 = arith.constant 0.000000e+00 : f32
    %746 = vector.broadcast %cst_269 : f32 to vector<16x64xf32>
    %747 = vector.extract_strided_slice %745 {offsets = [0, 0, 0], sizes = [4, 4, 32], strides = [1, 1, 1]} : vector<6x8x64xf32> to vector<4x4x32xf32>
    %748 = vector.shape_cast %747 : vector<4x4x32xf32> to vector<16x32xf32>
    %749 = vector.extract_strided_slice %24 {offsets = [0, 0, 0], sizes = [1, 32, 64], strides = [1, 1, 1]} : vector<9x32x64xf32> to vector<1x32x64xf32>
    %750 = vector.shape_cast %749 : vector<1x32x64xf32> to vector<32x64xf32>
    %cst_270 = arith.constant dense<0.000000e+00> : vector<16x64xf32>
    %751 = tpu.matmul %748, %750, %cst_270 {dimension_numbers = #tpu.dot_dimension_numbers<[1], [0], [0], [1], [0, 0, 1, 1], [], []>} : vector<16x32xf32>, vector<32x64xf32>, vector<16x64xf32> -> vector<16x64xf32>
    %752 = arith.addf %746, %751 : vector<16x64xf32>
    %753 = vector.extract_strided_slice %745 {offsets = [0, 1, 0], sizes = [4, 4, 32], strides = [1, 1, 1]} : vector<6x8x64xf32> to vector<4x4x32xf32>
    %754 = vector.shape_cast %753 : vector<4x4x32xf32> to vector<16x32xf32>
    %755 = vector.extract_strided_slice %24 {offsets = [1, 0, 0], sizes = [1, 32, 64], strides = [1, 1, 1]} : vector<9x32x64xf32> to vector<1x32x64xf32>
    %756 = vector.shape_cast %755 : vector<1x32x64xf32> to vector<32x64xf32>
    %cst_271 = arith.constant dense<0.000000e+00> : vector<16x64xf32>
    %757 = tpu.matmul %754, %756, %cst_271 {dimension_numbers = #tpu.dot_dimension_numbers<[1], [0], [0], [1], [0, 0, 1, 1], [], []>} : vector<16x32xf32>, vector<32x64xf32>, vector<16x64xf32> -> vector<16x64xf32>
    %758 = arith.addf %752, %757 : vector<16x64xf32>
    %759 = vector.extract_strided_slice %745 {offsets = [0, 2, 0], sizes = [4, 4, 32], strides = [1, 1, 1]} : vector<6x8x64xf32> to vector<4x4x32xf32>
    %760 = vector.shape_cast %759 : vector<4x4x32xf32> to vector<16x32xf32>
    %761 = vector.extract_strided_slice %24 {offsets = [2, 0, 0], sizes = [1, 32, 64], strides = [1, 1, 1]} : vector<9x32x64xf32> to vector<1x32x64xf32>
    %762 = vector.shape_cast %761 : vector<1x32x64xf32> to vector<32x64xf32>
    %cst_272 = arith.constant dense<0.000000e+00> : vector<16x64xf32>
    %763 = tpu.matmul %760, %762, %cst_272 {dimension_numbers = #tpu.dot_dimension_numbers<[1], [0], [0], [1], [0, 0, 1, 1], [], []>} : vector<16x32xf32>, vector<32x64xf32>, vector<16x64xf32> -> vector<16x64xf32>
    %764 = arith.addf %758, %763 : vector<16x64xf32>
    %765 = vector.extract_strided_slice %745 {offsets = [1, 0, 0], sizes = [4, 4, 32], strides = [1, 1, 1]} : vector<6x8x64xf32> to vector<4x4x32xf32>
    %766 = vector.shape_cast %765 : vector<4x4x32xf32> to vector<16x32xf32>
    %767 = vector.extract_strided_slice %24 {offsets = [3, 0, 0], sizes = [1, 32, 64], strides = [1, 1, 1]} : vector<9x32x64xf32> to vector<1x32x64xf32>
    %768 = vector.shape_cast %767 : vector<1x32x64xf32> to vector<32x64xf32>
    %cst_273 = arith.constant dense<0.000000e+00> : vector<16x64xf32>
    %769 = tpu.matmul %766, %768, %cst_273 {dimension_numbers = #tpu.dot_dimension_numbers<[1], [0], [0], [1], [0, 0, 1, 1], [], []>} : vector<16x32xf32>, vector<32x64xf32>, vector<16x64xf32> -> vector<16x64xf32>
    %770 = arith.addf %764, %769 : vector<16x64xf32>
    %771 = vector.extract_strided_slice %745 {offsets = [1, 1, 0], sizes = [4, 4, 32], strides = [1, 1, 1]} : vector<6x8x64xf32> to vector<4x4x32xf32>
    %772 = vector.shape_cast %771 : vector<4x4x32xf32> to vector<16x32xf32>
    %773 = vector.extract_strided_slice %24 {offsets = [4, 0, 0], sizes = [1, 32, 64], strides = [1, 1, 1]} : vector<9x32x64xf32> to vector<1x32x64xf32>
    %774 = vector.shape_cast %773 : vector<1x32x64xf32> to vector<32x64xf32>
    %cst_274 = arith.constant dense<0.000000e+00> : vector<16x64xf32>
    %775 = tpu.matmul %772, %774, %cst_274 {dimension_numbers = #tpu.dot_dimension_numbers<[1], [0], [0], [1], [0, 0, 1, 1], [], []>} : vector<16x32xf32>, vector<32x64xf32>, vector<16x64xf32> -> vector<16x64xf32>
    %776 = arith.addf %770, %775 : vector<16x64xf32>
    %777 = vector.extract_strided_slice %745 {offsets = [1, 2, 0], sizes = [4, 4, 32], strides = [1, 1, 1]} : vector<6x8x64xf32> to vector<4x4x32xf32>
    %778 = vector.shape_cast %777 : vector<4x4x32xf32> to vector<16x32xf32>
    %779 = vector.extract_strided_slice %24 {offsets = [5, 0, 0], sizes = [1, 32, 64], strides = [1, 1, 1]} : vector<9x32x64xf32> to vector<1x32x64xf32>
    %780 = vector.shape_cast %779 : vector<1x32x64xf32> to vector<32x64xf32>
    %cst_275 = arith.constant dense<0.000000e+00> : vector<16x64xf32>
    %781 = tpu.matmul %778, %780, %cst_275 {dimension_numbers = #tpu.dot_dimension_numbers<[1], [0], [0], [1], [0, 0, 1, 1], [], []>} : vector<16x32xf32>, vector<32x64xf32>, vector<16x64xf32> -> vector<16x64xf32>
    %782 = arith.addf %776, %781 : vector<16x64xf32>
    %783 = vector.extract_strided_slice %745 {offsets = [2, 0, 0], sizes = [4, 4, 32], strides = [1, 1, 1]} : vector<6x8x64xf32> to vector<4x4x32xf32>
    %784 = vector.shape_cast %783 : vector<4x4x32xf32> to vector<16x32xf32>
    %785 = vector.extract_strided_slice %24 {offsets = [6, 0, 0], sizes = [1, 32, 64], strides = [1, 1, 1]} : vector<9x32x64xf32> to vector<1x32x64xf32>
    %786 = vector.shape_cast %785 : vector<1x32x64xf32> to vector<32x64xf32>
    %cst_276 = arith.constant dense<0.000000e+00> : vector<16x64xf32>
    %787 = tpu.matmul %784, %786, %cst_276 {dimension_numbers = #tpu.dot_dimension_numbers<[1], [0], [0], [1], [0, 0, 1, 1], [], []>} : vector<16x32xf32>, vector<32x64xf32>, vector<16x64xf32> -> vector<16x64xf32>
    %788 = arith.addf %782, %787 : vector<16x64xf32>
    %789 = vector.extract_strided_slice %745 {offsets = [2, 1, 0], sizes = [4, 4, 32], strides = [1, 1, 1]} : vector<6x8x64xf32> to vector<4x4x32xf32>
    %790 = vector.shape_cast %789 : vector<4x4x32xf32> to vector<16x32xf32>
    %791 = vector.extract_strided_slice %24 {offsets = [7, 0, 0], sizes = [1, 32, 64], strides = [1, 1, 1]} : vector<9x32x64xf32> to vector<1x32x64xf32>
    %792 = vector.shape_cast %791 : vector<1x32x64xf32> to vector<32x64xf32>
    %cst_277 = arith.constant dense<0.000000e+00> : vector<16x64xf32>
    %793 = tpu.matmul %790, %792, %cst_277 {dimension_numbers = #tpu.dot_dimension_numbers<[1], [0], [0], [1], [0, 0, 1, 1], [], []>} : vector<16x32xf32>, vector<32x64xf32>, vector<16x64xf32> -> vector<16x64xf32>
    %794 = arith.addf %788, %793 : vector<16x64xf32>
    %795 = vector.extract_strided_slice %745 {offsets = [2, 2, 0], sizes = [4, 4, 32], strides = [1, 1, 1]} : vector<6x8x64xf32> to vector<4x4x32xf32>
    %796 = vector.shape_cast %795 : vector<4x4x32xf32> to vector<16x32xf32>
    %797 = vector.extract_strided_slice %24 {offsets = [8, 0, 0], sizes = [1, 32, 64], strides = [1, 1, 1]} : vector<9x32x64xf32> to vector<1x32x64xf32>
    %798 = vector.shape_cast %797 : vector<1x32x64xf32> to vector<32x64xf32>
    %cst_278 = arith.constant dense<0.000000e+00> : vector<16x64xf32>
    %799 = tpu.matmul %796, %798, %cst_278 {dimension_numbers = #tpu.dot_dimension_numbers<[1], [0], [0], [1], [0, 0, 1, 1], [], []>} : vector<16x32xf32>, vector<32x64xf32>, vector<16x64xf32> -> vector<16x64xf32>
    %800 = arith.addf %794, %799 : vector<16x64xf32>
    %801 = vector.broadcast %25 : vector<1x64xf32> to vector<16x64xf32>
    %802 = arith.addf %800, %801 : vector<16x64xf32>
    %cst_279 = arith.constant 5.000000e-01 : f32
    %803 = vector.broadcast %cst_279 : f32 to vector<16x64xf32>
    %804 = arith.mulf %803, %802 : vector<16x64xf32>
    %cst_280 = arith.constant 0.707106769 : f32
    %805 = vector.broadcast %cst_280 : f32 to vector<16x64xf32>
    %806 = arith.mulf %802, %805 : vector<16x64xf32>
    %807 = math.absf %806 : vector<16x64xf32>
    %cst_281 = arith.constant 0.327591091 : f32
    %808 = vector.broadcast %cst_281 : f32 to vector<16x64xf32>
    %809 = arith.mulf %808, %807 : vector<16x64xf32>
    %cst_282 = arith.constant 1.000000e+00 : f32
    %810 = vector.broadcast %cst_282 : f32 to vector<16x64xf32>
    %811 = arith.addf %810, %809 : vector<16x64xf32>
    %cst_283 = arith.constant 1.000000e+00 : f32
    %812 = vector.broadcast %cst_283 : f32 to vector<16x64xf32>
    %813 = arith.divf %812, %811 : vector<16x64xf32>
    %cst_284 = arith.constant 1.06140542 : f32
    %814 = vector.broadcast %cst_284 : f32 to vector<16x64xf32>
    %815 = arith.mulf %814, %813 : vector<16x64xf32>
    %cst_285 = arith.constant -1.45315206 : f32
    %816 = vector.broadcast %cst_285 : f32 to vector<16x64xf32>
    %817 = arith.addf %815, %816 : vector<16x64xf32>
    %818 = arith.mulf %817, %813 : vector<16x64xf32>
    %cst_286 = arith.constant 1.42141378 : f32
    %819 = vector.broadcast %cst_286 : f32 to vector<16x64xf32>
    %820 = arith.addf %818, %819 : vector<16x64xf32>
    %821 = arith.mulf %820, %813 : vector<16x64xf32>
    %cst_287 = arith.constant -0.284496725 : f32
    %822 = vector.broadcast %cst_287 : f32 to vector<16x64xf32>
    %823 = arith.addf %821, %822 : vector<16x64xf32>
    %824 = arith.mulf %823, %813 : vector<16x64xf32>
    %cst_288 = arith.constant 0.254829586 : f32
    %825 = vector.broadcast %cst_288 : f32 to vector<16x64xf32>
    %826 = arith.addf %824, %825 : vector<16x64xf32>
    %827 = arith.mulf %826, %813 : vector<16x64xf32>
    %cst_289 = arith.constant 0.000000e+00 : f32
    %828 = vector.broadcast %cst_289 : f32 to vector<16x64xf32>
    %829 = arith.subf %828, %807 : vector<16x64xf32>
    %830 = arith.mulf %829, %807 : vector<16x64xf32>
    %831 = math.exp %830 : vector<16x64xf32>
    %832 = arith.mulf %827, %831 : vector<16x64xf32>
    %cst_290 = arith.constant 1.000000e+00 : f32
    %833 = vector.broadcast %cst_290 : f32 to vector<16x64xf32>
    %834 = arith.subf %833, %832 : vector<16x64xf32>
    %cst_291 = arith.constant 0.000000e+00 : f32
    %835 = vector.broadcast %cst_291 : f32 to vector<16x64xf32>
    %836 = arith.cmpf oge, %806, %835 : vector<16x64xf32>
    %cst_292 = arith.constant 0.000000e+00 : f32
    %837 = vector.broadcast %cst_292 : f32 to vector<16x64xf32>
    %838 = arith.subf %837, %834 : vector<16x64xf32>
    %839 = arith.select %836, %834, %838 : vector<16x64xi1>, vector<16x64xf32>
    %cst_293 = arith.constant 1.000000e+00 : f32
    %840 = vector.broadcast %cst_293 : f32 to vector<16x64xf32>
    %841 = arith.addf %840, %839 : vector<16x64xf32>
    %842 = arith.mulf %804, %841 : vector<16x64xf32>
    %843 = vector.shape_cast %842 : vector<16x64xf32> to vector<4x4x64xf32>
    %c1_294 = arith.constant 1 : index
    %c1_295 = arith.constant 1 : index
    %c0_296 = arith.constant 0 : index
    %844 = vector.load %arg31[%c1_294, %c1_295, %c0_296] : memref<6x8x64xf32, #tpu.memory_space<vmem>>, vector<4x4x64xf32>
    tpu.vector_store %arg31[%c1_294, %c1_295, %c0_296], %843 {strides = array<i32>} : memref<6x8x64xf32, #tpu.memory_space<vmem>>, vector<4x4x64xf32>,
    %c0_297 = arith.constant 0 : index
    %c0_298 = arith.constant 0 : index
    %c0_299 = arith.constant 0 : index
    %845 = vector.load %arg31[%c0_297, %c0_298, %c0_299] : memref<6x8x64xf32, #tpu.memory_space<vmem>>, vector<6x8x64xf32>
    %cst_300 = arith.constant 0.000000e+00 : f32
    %846 = vector.broadcast %cst_300 : f32 to vector<16x32xf32>
    %847 = vector.extract_strided_slice %845 {offsets = [0, 0, 0], sizes = [4, 4, 64], strides = [1, 1, 1]} : vector<6x8x64xf32> to vector<4x4x64xf32>
    %848 = vector.shape_cast %847 : vector<4x4x64xf32> to vector<16x64xf32>
    %849 = vector.extract_strided_slice %26 {offsets = [0, 0, 0], sizes = [1, 64, 32], strides = [1, 1, 1]} : vector<9x64x32xf32> to vector<1x64x32xf32>
    %850 = vector.shape_cast %849 : vector<1x64x32xf32> to vector<64x32xf32>
    %cst_301 = arith.constant dense<0.000000e+00> : vector<16x32xf32>
    %851 = tpu.matmul %848, %850, %cst_301 {dimension_numbers = #tpu.dot_dimension_numbers<[1], [0], [0], [1], [0, 0, 1, 1], [], []>} : vector<16x64xf32>, vector<64x32xf32>, vector<16x32xf32> -> vector<16x32xf32>
    %852 = arith.addf %846, %851 : vector<16x32xf32>
    %853 = vector.extract_strided_slice %845 {offsets = [0, 1, 0], sizes = [4, 4, 64], strides = [1, 1, 1]} : vector<6x8x64xf32> to vector<4x4x64xf32>
    %854 = vector.shape_cast %853 : vector<4x4x64xf32> to vector<16x64xf32>
    %855 = vector.extract_strided_slice %26 {offsets = [1, 0, 0], sizes = [1, 64, 32], strides = [1, 1, 1]} : vector<9x64x32xf32> to vector<1x64x32xf32>
    %856 = vector.shape_cast %855 : vector<1x64x32xf32> to vector<64x32xf32>
    %cst_302 = arith.constant dense<0.000000e+00> : vector<16x32xf32>
    %857 = tpu.matmul %854, %856, %cst_302 {dimension_numbers = #tpu.dot_dimension_numbers<[1], [0], [0], [1], [0, 0, 1, 1], [], []>} : vector<16x64xf32>, vector<64x32xf32>, vector<16x32xf32> -> vector<16x32xf32>
    %858 = arith.addf %852, %857 : vector<16x32xf32>
    %859 = vector.extract_strided_slice %845 {offsets = [0, 2, 0], sizes = [4, 4, 64], strides = [1, 1, 1]} : vector<6x8x64xf32> to vector<4x4x64xf32>
    %860 = vector.shape_cast %859 : vector<4x4x64xf32> to vector<16x64xf32>
    %861 = vector.extract_strided_slice %26 {offsets = [2, 0, 0], sizes = [1, 64, 32], strides = [1, 1, 1]} : vector<9x64x32xf32> to vector<1x64x32xf32>
    %862 = vector.shape_cast %861 : vector<1x64x32xf32> to vector<64x32xf32>
    %cst_303 = arith.constant dense<0.000000e+00> : vector<16x32xf32>
    %863 = tpu.matmul %860, %862, %cst_303 {dimension_numbers = #tpu.dot_dimension_numbers<[1], [0], [0], [1], [0, 0, 1, 1], [], []>} : vector<16x64xf32>, vector<64x32xf32>, vector<16x32xf32> -> vector<16x32xf32>
    %864 = arith.addf %858, %863 : vector<16x32xf32>
    %865 = vector.extract_strided_slice %845 {offsets = [1, 0, 0], sizes = [4, 4, 64], strides = [1, 1, 1]} : vector<6x8x64xf32> to vector<4x4x64xf32>
    %866 = vector.shape_cast %865 : vector<4x4x64xf32> to vector<16x64xf32>
    %867 = vector.extract_strided_slice %26 {offsets = [3, 0, 0], sizes = [1, 64, 32], strides = [1, 1, 1]} : vector<9x64x32xf32> to vector<1x64x32xf32>
    %868 = vector.shape_cast %867 : vector<1x64x32xf32> to vector<64x32xf32>
    %cst_304 = arith.constant dense<0.000000e+00> : vector<16x32xf32>
    %869 = tpu.matmul %866, %868, %cst_304 {dimension_numbers = #tpu.dot_dimension_numbers<[1], [0], [0], [1], [0, 0, 1, 1], [], []>} : vector<16x64xf32>, vector<64x32xf32>, vector<16x32xf32> -> vector<16x32xf32>
    %870 = arith.addf %864, %869 : vector<16x32xf32>
    %871 = vector.extract_strided_slice %845 {offsets = [1, 1, 0], sizes = [4, 4, 64], strides = [1, 1, 1]} : vector<6x8x64xf32> to vector<4x4x64xf32>
    %872 = vector.shape_cast %871 : vector<4x4x64xf32> to vector<16x64xf32>
    %873 = vector.extract_strided_slice %26 {offsets = [4, 0, 0], sizes = [1, 64, 32], strides = [1, 1, 1]} : vector<9x64x32xf32> to vector<1x64x32xf32>
    %874 = vector.shape_cast %873 : vector<1x64x32xf32> to vector<64x32xf32>
    %cst_305 = arith.constant dense<0.000000e+00> : vector<16x32xf32>
    %875 = tpu.matmul %872, %874, %cst_305 {dimension_numbers = #tpu.dot_dimension_numbers<[1], [0], [0], [1], [0, 0, 1, 1], [], []>} : vector<16x64xf32>, vector<64x32xf32>, vector<16x32xf32> -> vector<16x32xf32>
    %876 = arith.addf %870, %875 : vector<16x32xf32>
    %877 = vector.extract_strided_slice %845 {offsets = [1, 2, 0], sizes = [4, 4, 64], strides = [1, 1, 1]} : vector<6x8x64xf32> to vector<4x4x64xf32>
    %878 = vector.shape_cast %877 : vector<4x4x64xf32> to vector<16x64xf32>
    %879 = vector.extract_strided_slice %26 {offsets = [5, 0, 0], sizes = [1, 64, 32], strides = [1, 1, 1]} : vector<9x64x32xf32> to vector<1x64x32xf32>
    %880 = vector.shape_cast %879 : vector<1x64x32xf32> to vector<64x32xf32>
    %cst_306 = arith.constant dense<0.000000e+00> : vector<16x32xf32>
    %881 = tpu.matmul %878, %880, %cst_306 {dimension_numbers = #tpu.dot_dimension_numbers<[1], [0], [0], [1], [0, 0, 1, 1], [], []>} : vector<16x64xf32>, vector<64x32xf32>, vector<16x32xf32> -> vector<16x32xf32>
    %882 = arith.addf %876, %881 : vector<16x32xf32>
    %883 = vector.extract_strided_slice %845 {offsets = [2, 0, 0], sizes = [4, 4, 64], strides = [1, 1, 1]} : vector<6x8x64xf32> to vector<4x4x64xf32>
    %884 = vector.shape_cast %883 : vector<4x4x64xf32> to vector<16x64xf32>
    %885 = vector.extract_strided_slice %26 {offsets = [6, 0, 0], sizes = [1, 64, 32], strides = [1, 1, 1]} : vector<9x64x32xf32> to vector<1x64x32xf32>
    %886 = vector.shape_cast %885 : vector<1x64x32xf32> to vector<64x32xf32>
    %cst_307 = arith.constant dense<0.000000e+00> : vector<16x32xf32>
    %887 = tpu.matmul %884, %886, %cst_307 {dimension_numbers = #tpu.dot_dimension_numbers<[1], [0], [0], [1], [0, 0, 1, 1], [], []>} : vector<16x64xf32>, vector<64x32xf32>, vector<16x32xf32> -> vector<16x32xf32>
    %888 = arith.addf %882, %887 : vector<16x32xf32>
    %889 = vector.extract_strided_slice %845 {offsets = [2, 1, 0], sizes = [4, 4, 64], strides = [1, 1, 1]} : vector<6x8x64xf32> to vector<4x4x64xf32>
    %890 = vector.shape_cast %889 : vector<4x4x64xf32> to vector<16x64xf32>
    %891 = vector.extract_strided_slice %26 {offsets = [7, 0, 0], sizes = [1, 64, 32], strides = [1, 1, 1]} : vector<9x64x32xf32> to vector<1x64x32xf32>
    %892 = vector.shape_cast %891 : vector<1x64x32xf32> to vector<64x32xf32>
    %cst_308 = arith.constant dense<0.000000e+00> : vector<16x32xf32>
    %893 = tpu.matmul %890, %892, %cst_308 {dimension_numbers = #tpu.dot_dimension_numbers<[1], [0], [0], [1], [0, 0, 1, 1], [], []>} : vector<16x64xf32>, vector<64x32xf32>, vector<16x32xf32> -> vector<16x32xf32>
    %894 = arith.addf %888, %893 : vector<16x32xf32>
    %895 = vector.extract_strided_slice %845 {offsets = [2, 2, 0], sizes = [4, 4, 64], strides = [1, 1, 1]} : vector<6x8x64xf32> to vector<4x4x64xf32>
    %896 = vector.shape_cast %895 : vector<4x4x64xf32> to vector<16x64xf32>
    %897 = vector.extract_strided_slice %26 {offsets = [8, 0, 0], sizes = [1, 64, 32], strides = [1, 1, 1]} : vector<9x64x32xf32> to vector<1x64x32xf32>
    %898 = vector.shape_cast %897 : vector<1x64x32xf32> to vector<64x32xf32>
    %cst_309 = arith.constant dense<0.000000e+00> : vector<16x32xf32>
    %899 = tpu.matmul %896, %898, %cst_309 {dimension_numbers = #tpu.dot_dimension_numbers<[1], [0], [0], [1], [0, 0, 1, 1], [], []>} : vector<16x64xf32>, vector<64x32xf32>, vector<16x32xf32> -> vector<16x32xf32>
    %900 = arith.addf %894, %899 : vector<16x32xf32>
    %901 = arith.addf %722, %900 : vector<16x32xf32>
    %902 = vector.broadcast %27 : vector<1x32xf32> to vector<16x32xf32>
    %903 = arith.addf %901, %902 : vector<16x32xf32>
    %904 = vector.shape_cast %903 : vector<16x32xf32> to vector<16x1x32xf32>
    %c0_310 = arith.constant 0 : index
    %c1_311 = arith.constant 1 : index
    %c0_312 = arith.constant 0 : index
    %905 = vector.load %arg30[%c0_310, %c1_311, %c0_312] : memref<16x2x32xf32, #tpu.memory_space<vmem>>, vector<16x1x32xf32>
    tpu.vector_store %arg30[%c0_310, %c1_311, %c0_312], %904 {strides = array<i32>} : memref<16x2x32xf32, #tpu.memory_space<vmem>>, vector<16x1x32xf32>,
    return
  }
  func.func @transform_0(%arg0: i32) -> (i32, i32, i32) {
    %c0_i32 = arith.constant 0 : i32
    %c0_i32_0 = arith.constant 0 : i32
    %c0_i32_1 = arith.constant 0 : i32
    %c0_i32_2 = arith.constant 0 : i32
    return %c0_i32, %c0_i32_0, %c0_i32_1 : i32, i32, i32
  }
  func.func @transform_1(%arg0: i32) -> (i32, i32, i32) {
    %c0_i32 = arith.constant 0 : i32
    %c0_i32_0 = arith.constant 0 : i32
    %c0_i32_1 = arith.constant 0 : i32
    %c0_i32_2 = arith.constant 0 : i32
    return %c0_i32, %c0_i32_0, %c0_i32_1 : i32, i32, i32
  }
  func.func @transform_2(%arg0: i32) -> (i32, i32, i32) {
    %c0_i32 = arith.constant 0 : i32
    %c0_i32_0 = arith.constant 0 : i32
    %c0_i32_1 = arith.constant 0 : i32
    %c0_i32_2 = arith.constant 0 : i32
    return %c0_i32, %c0_i32_0, %c0_i32_1 : i32, i32, i32
  }
  func.func @transform_3(%arg0: i32) -> (i32, i32) {
    %c0_i32 = arith.constant 0 : i32
    %c0_i32_0 = arith.constant 0 : i32
    %c0_i32_1 = arith.constant 0 : i32
    return %c0_i32, %c0_i32_0 : i32, i32
  }
  func.func @transform_4(%arg0: i32) -> (i32, i32) {
    %c0_i32 = arith.constant 0 : i32
    %c0_i32_0 = arith.constant 0 : i32
    %c0_i32_1 = arith.constant 0 : i32
    return %c0_i32, %c0_i32_0 : i32, i32
  }
  func.func @transform_5(%arg0: i32) -> (i32, i32) {
    %c0_i32 = arith.constant 0 : i32
    %c0_i32_0 = arith.constant 0 : i32
    %c0_i32_1 = arith.constant 0 : i32
    return %c0_i32, %c0_i32_0 : i32, i32
  }
  func.func @transform_6(%arg0: i32) -> (i32, i32) {
    %c0_i32 = arith.constant 0 : i32
    %c0_i32_0 = arith.constant 0 : i32
    %c0_i32_1 = arith.constant 0 : i32
    return %c0_i32, %c0_i32_0 : i32, i32
  }
  func.func @transform_7(%arg0: i32) -> (i32, i32) {
    %c0_i32 = arith.constant 0 : i32
    %c0_i32_0 = arith.constant 0 : i32
    %c0_i32_1 = arith.constant 0 : i32
    return %c0_i32, %c0_i32_0 : i32, i32
  }
  func.func @transform_8(%arg0: i32) -> (i32, i32) {
    %c0_i32 = arith.constant 0 : i32
    %c0_i32_0 = arith.constant 0 : i32
    %c0_i32_1 = arith.constant 0 : i32
    return %c0_i32, %c0_i32_0 : i32, i32
  }
  func.func @transform_9(%arg0: i32) -> (i32, i32) {
    %c0_i32 = arith.constant 0 : i32
    %c0_i32_0 = arith.constant 0 : i32
    %c0_i32_1 = arith.constant 0 : i32
    return %c0_i32, %c0_i32_0 : i32, i32
  }
  func.func @transform_10(%arg0: i32) -> (i32, i32) {
    %c0_i32 = arith.constant 0 : i32
    %c0_i32_0 = arith.constant 0 : i32
    %c0_i32_1 = arith.constant 0 : i32
    return %c0_i32, %c0_i32_0 : i32, i32
  }
  func.func @transform_11(%arg0: i32) -> (i32, i32) {
    %c0_i32 = arith.constant 0 : i32
    %c0_i32_0 = arith.constant 0 : i32
    %c0_i32_1 = arith.constant 0 : i32
    return %c0_i32, %c0_i32_0 : i32, i32
  }
  func.func @transform_12(%arg0: i32) -> (i32, i32) {
    %c0_i32 = arith.constant 0 : i32
    %c0_i32_0 = arith.constant 0 : i32
    %c0_i32_1 = arith.constant 0 : i32
    return %c0_i32, %c0_i32_0 : i32, i32
  }
  func.func @transform_13(%arg0: i32) -> (i32, i32) {
    %c0_i32 = arith.constant 0 : i32
    %c0_i32_0 = arith.constant 0 : i32
    %c0_i32_1 = arith.constant 0 : i32
    return %c0_i32, %c0_i32_0 : i32, i32
  }
  func.func @transform_14(%arg0: i32) -> (i32, i32) {
    %c0_i32 = arith.constant 0 : i32
    %c0_i32_0 = arith.constant 0 : i32
    %c0_i32_1 = arith.constant 0 : i32
    return %c0_i32, %c0_i32_0 : i32, i32
  }
  func.func @transform_15(%arg0: i32) -> (i32, i32) {
    %c0_i32 = arith.constant 0 : i32
    %c0_i32_0 = arith.constant 0 : i32
    %c0_i32_1 = arith.constant 0 : i32
    return %c0_i32, %c0_i32_0 : i32, i32
  }
  func.func @transform_16(%arg0: i32) -> (i32, i32) {
    %c0_i32 = arith.constant 0 : i32
    %c0_i32_0 = arith.constant 0 : i32
    %c0_i32_1 = arith.constant 0 : i32
    return %c0_i32, %c0_i32_0 : i32, i32
  }
  func.func @transform_17(%arg0: i32) -> (i32, i32) {
    %c0_i32 = arith.constant 0 : i32
    %c0_i32_0 = arith.constant 0 : i32
    %c0_i32_1 = arith.constant 0 : i32
    return %c0_i32, %c0_i32_0 : i32, i32
  }
  func.func @transform_18(%arg0: i32) -> (i32, i32) {
    %c0_i32 = arith.constant 0 : i32
    %c0_i32_0 = arith.constant 0 : i32
    %c0_i32_1 = arith.constant 0 : i32
    return %c0_i32, %c0_i32_0 : i32, i32
  }
  func.func @transform_19(%arg0: i32) -> (i32, i32) {
    %c0_i32 = arith.constant 0 : i32
    %c0_i32_0 = arith.constant 0 : i32
    %c0_i32_1 = arith.constant 0 : i32
    return %c0_i32, %c0_i32_0 : i32, i32
  }
  func.func @transform_20(%arg0: i32) -> (i32, i32) {
    %c0_i32 = arith.constant 0 : i32
    %c0_i32_0 = arith.constant 0 : i32
    %c0_i32_1 = arith.constant 0 : i32
    return %c0_i32, %c0_i32_0 : i32, i32
  }
  func.func @transform_21(%arg0: i32) -> (i32, i32) {
    %c0_i32 = arith.constant 0 : i32
    %c0_i32_0 = arith.constant 0 : i32
    %c0_i32_1 = arith.constant 0 : i32
    return %c0_i32, %c0_i32_0 : i32, i32
  }
  func.func @transform_22(%arg0: i32) -> (i32, i32) {
    %c0_i32 = arith.constant 0 : i32
    %c0_i32_0 = arith.constant 0 : i32
    %c0_i32_1 = arith.constant 0 : i32
    return %c0_i32, %c0_i32_0 : i32, i32
  }
  func.func @transform_23(%arg0: i32) -> (i32, i32) {
    %c0_i32 = arith.constant 0 : i32
    %c0_i32_0 = arith.constant 0 : i32
    %c0_i32_1 = arith.constant 0 : i32
    return %c0_i32, %c0_i32_0 : i32, i32
  }
  func.func @transform_24(%arg0: i32) -> (i32, i32) {
    %c0_i32 = arith.constant 0 : i32
    %c0_i32_0 = arith.constant 0 : i32
    %c0_i32_1 = arith.constant 0 : i32
    return %c0_i32, %c0_i32_0 : i32, i32
  }
  func.func @transform_25(%arg0: i32) -> (i32, i32, i32) {
    %c0_i32 = arith.constant 0 : i32
    %c0_i32_0 = arith.constant 0 : i32
    %c0_i32_1 = arith.constant 0 : i32
    %c0_i32_2 = arith.constant 0 : i32
    return %c0_i32, %c0_i32_0, %c0_i32_1 : i32, i32, i32
  }
  func.func @transform_26(%arg0: i32) -> (i32, i32) {
    %c0_i32 = arith.constant 0 : i32
    %c0_i32_0 = arith.constant 0 : i32
    %c0_i32_1 = arith.constant 0 : i32
    return %c0_i32, %c0_i32_0 : i32, i32
  }
  func.func @transform_27(%arg0: i32) -> (i32, i32, i32) {
    %c0_i32 = arith.constant 0 : i32
    %c0_i32_0 = arith.constant 0 : i32
    %c0_i32_1 = arith.constant 0 : i32
    %c0_i32_2 = arith.constant 0 : i32
    return %c0_i32, %c0_i32_0, %c0_i32_1 : i32, i32, i32
  }
  func.func @transform_28(%arg0: i32) -> (i32, i32) {
    %c0_i32 = arith.constant 0 : i32
    %c0_i32_0 = arith.constant 0 : i32
    %c0_i32_1 = arith.constant 0 : i32
    return %c0_i32, %c0_i32_0 : i32, i32
  }
  func.func @transform_29(%arg0: i32) -> (i32, i32, i32) {
    %c0_i32 = arith.constant 0 : i32
    %c0_i32_0 = arith.constant 0 : i32
    %c0_i32_1 = arith.constant 0 : i32
    %c0_i32_2 = arith.constant 0 : i32
    return %c0_i32, %c0_i32_0, %c0_i32_1 : i32, i32, i32
  }
}

</mosaic_0001>

<llo_original>
// kernel: transformer_layer_forward.1
$region0: #{transformer_layer_forward.1}
  #allocation0 [shape = 'u32[]', space=smem, size = 0x4, offset = 0x4, fixed_abs, tag = 'smem constant byte address 0x4 - core index']
  #allocation1 [shape = 'u32[144,128]{1,0:T(1,128)}', space=vmem, size = 0x12000, scoped, tag = 'internal scratch']
  #allocation2 [shape = 'f32[6,8,64]{2,1,0:T(8,128)}', space=vmem, size = 0x6000, scoped, tag = 'scratch operand']
  %s0 = inlined_call_operand.smem [shape: u32[30], index: -1, kind: input, shape index: {}]
  %s1 = sld [smem:[%s0]]
  %s2 = scalar_lea.smem %s0, 1
  %s3 = sld [smem:[%s2]]
  %s4 = scalar_lea.smem %s0, 2
  %s5 = sld [smem:[%s4]]
  %s6 = scalar_lea.smem %s0, 3
  %s7 = sld [smem:[%s6]]
  %s8 = scalar_lea.smem %s0, 4
  %s9 = sld [smem:[%s8]]
  %s10 = scalar_lea.smem %s0, 5
  %s11 = sld [smem:[%s10]]
  %s12 = scalar_lea.smem %s0, 6
  %s13 = sld [smem:[%s12]]
  %s14 = scalar_lea.smem %s0, 7
  %s15 = sld [smem:[%s14]]
  %s16 = scalar_lea.smem %s0, 8
  %s17 = sld [smem:[%s16]]
  %s18 = scalar_lea.smem %s0, 9
  %s19 = sld [smem:[%s18]]
  %s20 = scalar_lea.smem %s0, 10
  %s21 = sld [smem:[%s20]]
  %s22 = scalar_lea.smem %s0, 11
  %s23 = sld [smem:[%s22]]
  %s24 = scalar_lea.smem %s0, 12
  %s25 = sld [smem:[%s24]]
  %s26 = scalar_lea.smem %s0, 13
  %s27 = sld [smem:[%s26]]
  %s28 = scalar_lea.smem %s0, 14
  %s29 = sld [smem:[%s28]]
  %s30 = scalar_lea.smem %s0, 15
  %s31 = sld [smem:[%s30]]
  %s32 = scalar_lea.smem %s0, 16
  %s33 = sld [smem:[%s32]]
  %s34 = scalar_lea.smem %s0, 17
  %s35 = sld [smem:[%s34]]
  %s36 = scalar_lea.smem %s0, 18
  %s37 = sld [smem:[%s36]]
  %s38 = scalar_lea.smem %s0, 19
  %s39 = sld [smem:[%s38]]
  %s40 = scalar_lea.smem %s0, 20
  %s41 = sld [smem:[%s40]]
  %s42 = scalar_lea.smem %s0, 21
  %s43 = sld [smem:[%s42]]
  %s44 = scalar_lea.smem %s0, 22
  %s45 = sld [smem:[%s44]]
  %s46 = scalar_lea.smem %s0, 23
  %s47 = sld [smem:[%s46]]
  %s48 = scalar_lea.smem %s0, 24
  %s49 = sld [smem:[%s48]]
  %s50 = scalar_lea.smem %s0, 25
  %s51 = sld [smem:[%s50]]
  %s52 = scalar_lea.smem %s0, 26
  %s53 = sld [smem:[%s52]]
  %s54 = scalar_lea.smem %s0, 27
  %s55 = sld [smem:[%s54]]
  %s56 = scalar_lea.smem %s0, 28
  %s57 = sld [smem:[%s56]]
  %s58 = scalar_lea.smem %s0, 29
  %s59 = sld [smem:[%s58]]
  %s60 = sld [smem:[#allocation0]]
  $region126: #{transformer_layer_forward.1} parent=0
    _
  %s62 = ssub.s32 1, %s60
  %s63 = scalar_select 0, %s62, %s60
  $region1: #{transformer_layer_forward.1} parent=0
    #allocation3 [shape = 'u8[16384]{0}', space=vmem, size = 0x4000, scoped, tag = 'output window, operand 0, single buffered']
    #allocation4 [shape = 's32[1]{0}', space=sflag, size = 0x4, scoped, tag = 'scoped memory for transformer_layer_forward.1']
    %64 = vsyncpa [#allocation4], 0
    // Predicated region
    $region2: #{transformer_layer_forward.1} parent=1 // pred_check
      _
    $region3: #{transformer_layer_forward.1} parent=1 // pred_check_branch
      %66 = sbr.rel (0) target = $region5
    $region4: #{transformer_layer_forward.1} parent=1 // pred_region
      _
    $region5: #{transformer_layer_forward.1} parent=1 // pred_fallthru
      _
    // Predicated region
    $region6: #{transformer_layer_forward.1} parent=1 // pred_check
      _
    $region7: #{transformer_layer_forward.1} parent=1 // pred_check_branch
      %68 = sbr.rel (0) target = $region9
    $region8: #{transformer_layer_forward.1} parent=1 // pred_region
      _
    $region9: #{transformer_layer_forward.1} parent=1 // pred_fallthru
      _
    // Predicated region
    $region10: #{transformer_layer_forward.1} parent=1 // pred_check
      _
    $region11: #{transformer_layer_forward.1} parent=1 // pred_check_branch
      %70 = sbr.rel (0) target = $region13
    $region12: #{transformer_layer_forward.1} parent=1 // pred_region
      _
    $region13: #{transformer_layer_forward.1} parent=1 // pred_fallthru
      _
    // Predicated region
    $region14: #{transformer_layer_forward.1} parent=1 // pred_check
      _
    $region15: #{transformer_layer_forward.1} parent=1 // pred_check_branch
      %72 = sbr.rel (0) target = $region17
    $region16: #{transformer_layer_forward.1} parent=1 // pred_region
      _
    $region17: #{transformer_layer_forward.1} parent=1 // pred_fallthru
      _
    // Predicated region
    $region18: #{transformer_layer_forward.1} parent=1 // pred_check
      _
    $region19: #{transformer_layer_forward.1} parent=1 // pred_check_branch
      %74 = sbr.rel (0) target = $region21
    $region20: #{transformer_layer_forward.1} parent=1 // pred_region
      _
    $region21: #{transformer_layer_forward.1} parent=1 // pred_fallthru
      _
    // Predicated region
    $region22: #{transformer_layer_forward.1} parent=1 // pred_check
      _
    $region23: #{transformer_layer_forward.1} parent=1 // pred_check_branch
      %76 = sbr.rel (0) target = $region25
    $region24: #{transformer_layer_forward.1} parent=1 // pred_region
      _
    $region25: #{transformer_layer_forward.1} parent=1 // pred_fallthru
      _
    // Predicated region
    $region26: #{transformer_layer_forward.1} parent=1 // pred_check
      _
    $region27: #{transformer_layer_forward.1} parent=1 // pred_check_branch
      %78 = sbr.rel (0) target = $region29
    $region28: #{transformer_layer_forward.1} parent=1 // pred_region
      _
    $region29: #{transformer_layer_forward.1} parent=1 // pred_fallthru
      _
    // Predicated region
    $region30: #{transformer_layer_forward.1} parent=1 // pred_check
      _
    $region31: #{transformer_layer_forward.1} parent=1 // pred_check_branch
      %80 = sbr.rel (0) target = $region33
    $region32: #{transformer_layer_forward.1} parent=1 // pred_region
      _
    $region33: #{transformer_layer_forward.1} parent=1 // pred_fallthru
      _
    // Predicated region
    $region34: #{transformer_layer_forward.1} parent=1 // pred_check
      _
    $region35: #{transformer_layer_forward.1} parent=1 // pred_check_branch
      %82 = sbr.rel (0) target = $region37
    $region36: #{transformer_layer_forward.1} parent=1 // pred_region
      _
    $region37: #{transformer_layer_forward.1} parent=1 // pred_fallthru
      _
    // Predicated region
    $region38: #{transformer_layer_forward.1} parent=1 // pred_check
      _
    $region39: #{transformer_layer_forward.1} parent=1 // pred_check_branch
      %84 = sbr.rel (0) target = $region41
    $region40: #{transformer_layer_forward.1} parent=1 // pred_region
      _
    $region41: #{transformer_layer_forward.1} parent=1 // pred_fallthru
      _
    // Predicated region
    $region42: #{transformer_layer_forward.1} parent=1 // pred_check
      _
    $region43: #{transformer_layer_forward.1} parent=1 // pred_check_branch
      %86 = sbr.rel (0) target = $region45
    $region44: #{transformer_layer_forward.1} parent=1 // pred_region
      _
    $region45: #{transformer_layer_forward.1} parent=1 // pred_fallthru
      _
    // Predicated region
    $region46: #{transformer_layer_forward.1} parent=1 // pred_check
      _
    $region47: #{transformer_layer_forward.1} parent=1 // pred_check_branch
      %88 = sbr.rel (0) target = $region49
    $region48: #{transformer_layer_forward.1} parent=1 // pred_region
      _
    $region49: #{transformer_layer_forward.1} parent=1 // pred_fallthru
      _
    // Predicated region
    $region50: #{transformer_layer_forward.1} parent=1 // pred_check
      _
    $region51: #{transformer_layer_forward.1} parent=1 // pred_check_branch
      %90 = sbr.rel (0) target = $region53
    $region52: #{transformer_layer_forward.1} parent=1 // pred_region
      _
    $region53: #{transformer_layer_forward.1} parent=1 // pred_fallthru
      _
    // Predicated region
    $region54: #{transformer_layer_forward.1} parent=1 // pred_check
      _
    $region55: #{transformer_layer_forward.1} parent=1 // pred_check_branch
      %92 = sbr.rel (0) target = $region57
    $region56: #{transformer_layer_forward.1} parent=1 // pred_region
      _
    $region57: #{transformer_layer_forward.1} parent=1 // pred_fallthru
      _
    // Predicated region
    $region58: #{transformer_layer_forward.1} parent=1 // pred_check
      _
    $region59: #{transformer_layer_forward.1} parent=1 // pred_check_branch
      %94 = sbr.rel (0) target = $region61
    $region60: #{transformer_layer_forward.1} parent=1 // pred_region
      _
    $region61: #{transformer_layer_forward.1} parent=1 // pred_fallthru
      _
    // Predicated region
    $region62: #{transformer_layer_forward.1} parent=1 // pred_check
      _
    $region63: #{transformer_layer_forward.1} parent=1 // pred_check_branch
      %96 = sbr.rel (0) target = $region65
    $region64: #{transformer_layer_forward.1} parent=1 // pred_region
      _
    $region65: #{transformer_layer_forward.1} parent=1 // pred_fallthru
      _
    // Predicated region
    $region66: #{transformer_layer_forward.1} parent=1 // pred_check
      _
    $region67: #{transformer_layer_forward.1} parent=1 // pred_check_branch
      %98 = sbr.rel (0) target = $region69
    $region68: #{transformer_layer_forward.1} parent=1 // pred_region
      _
    $region69: #{transformer_layer_forward.1} parent=1 // pred_fallthru
      _
    // Predicated region
    $region70: #{transformer_layer_forward.1} parent=1 // pred_check
      _
    $region71: #{transformer_layer_forward.1} parent=1 // pred_check_branch
      %100 = sbr.rel (0) target = $region73
    $region72: #{transformer_layer_forward.1} parent=1 // pred_region
      _
    $region73: #{transformer_layer_forward.1} parent=1 // pred_fallthru
      _
    // Predicated region
    $region74: #{transformer_layer_forward.1} parent=1 // pred_check
      _
    $region75: #{transformer_layer_forward.1} parent=1 // pred_check_branch
      %102 = sbr.rel (0) target = $region77
    $region76: #{transformer_layer_forward.1} parent=1 // pred_region
      _
    $region77: #{transformer_layer_forward.1} parent=1 // pred_fallthru
      _
    // Predicated region
    $region78: #{transformer_layer_forward.1} parent=1 // pred_check
      _
    $region79: #{transformer_layer_forward.1} parent=1 // pred_check_branch
      %104 = sbr.rel (0) target = $region81
    $region80: #{transformer_layer_forward.1} parent=1 // pred_region
      _
    $region81: #{transformer_layer_forward.1} parent=1 // pred_fallthru
      _
    // Predicated region
    $region82: #{transformer_layer_forward.1} parent=1 // pred_check
      _
    $region83: #{transformer_layer_forward.1} parent=1 // pred_check_branch
      %106 = sbr.rel (0) target = $region85
    $region84: #{transformer_layer_forward.1} parent=1 // pred_region
      _
    $region85: #{transformer_layer_forward.1} parent=1 // pred_fallthru
      _
    // Predicated region
    $region86: #{transformer_layer_forward.1} parent=1 // pred_check
      _
    $region87: #{transformer_layer_forward.1} parent=1 // pred_check_branch
      %108 = sbr.rel (0) target = $region89
    $region88: #{transformer_layer_forward.1} parent=1 // pred_region
      _
    $region89: #{transformer_layer_forward.1} parent=1 // pred_fallthru
      _
    // Predicated region
    $region90: #{transformer_layer_forward.1} parent=1 // pred_check
      _
    $region91: #{transformer_layer_forward.1} parent=1 // pred_check_branch
      %110 = sbr.rel (0) target = $region93
    $region92: #{transformer_layer_forward.1} parent=1 // pred_region
      _
    $region93: #{transformer_layer_forward.1} parent=1 // pred_fallthru
      _
    // Predicated region
    $region94: #{transformer_layer_forward.1} parent=1 // pred_check
      _
    $region95: #{transformer_layer_forward.1} parent=1 // pred_check_branch
      %112 = sbr.rel (0) target = $region97
    $region96: #{transformer_layer_forward.1} parent=1 // pred_region
      _
    $region97: #{transformer_layer_forward.1} parent=1 // pred_fallthru
      _
    // Predicated region
    $region98: #{transformer_layer_forward.1} parent=1 // pred_check
      _
    $region99: #{transformer_layer_forward.1} parent=1 // pred_check_branch
      %114 = sbr.rel (0) target = $region101
    $region100: #{transformer_layer_forward.1} parent=1 // pred_region
      _
    $region101: #{transformer_layer_forward.1} parent=1 // pred_fallthru
      _
    // Predicated region
    $region102: #{transformer_layer_forward.1} parent=1 // pred_check
      _
    $region103: #{transformer_layer_forward.1} parent=1 // pred_check_branch
      %116 = sbr.rel (0) target = $region105
    $region104: #{transformer_layer_forward.1} parent=1 // pred_region
      _
    $region105: #{transformer_layer_forward.1} parent=1 // pred_fallthru
      _
    // Predicated region
    $region106: #{transformer_layer_forward.1} parent=1 // pred_check
      _
    $region107: #{transformer_layer_forward.1} parent=1 // pred_check_branch
      %118 = sbr.rel (0) target = $region109
    $region108: #{transformer_layer_forward.1} parent=1 // pred_region
      _
    $region109: #{transformer_layer_forward.1} parent=1 // pred_fallthru
      _
    // Predicated region
    $region110: #{transformer_layer_forward.1} parent=1 // pred_check
      _
    $region111: #{transformer_layer_forward.1} parent=1 // pred_check_branch
      %120 = sbr.rel (0) target = $region113
    $region112: #{transformer_layer_forward.1} parent=1 // pred_region
      _
    $region113: #{transformer_layer_forward.1} parent=1 // pred_fallthru
      _
    // Predicated region
    $region114: #{transformer_layer_forward.1} parent=1 // pred_check
      _
    $region115: #{transformer_layer_forward.1} parent=1 // pred_check_branch
      %122 = sbr.rel (0) target = $region117
    $region116: #{transformer_layer_forward.1} parent=1 // pred_region
      _
    $region117: #{transformer_layer_forward.1} parent=1 // pred_fallthru
      _
    %vm123 = vcmask 523264
    %124 = vst.msk [vmem:[#allocation2] sm:$0xff] %vm123, 0.0
    %125 = vst.msk [vmem:[#allocation2 + $0x8] sm:$0xff] %vm123, 0.0
    %126 = vst.msk [vmem:[#allocation2 + $0x10] sm:$0xff] %vm123, 0.0
    %127 = vst.msk [vmem:[#allocation2 + $0x18] sm:$0xff] %vm123, 0.0
    %128 = vst.msk [vmem:[#allocation2 + $0x20] sm:$0xff] %vm123, 0.0
    %129 = vst.msk [vmem:[#allocation2 + $0x28] sm:$0xff] %vm123, 0.0
    %v130 = vld [vmem:[%s7] sm:$0x1]
    %v131 = vld [vmem:[%s9] sm:$0x1]
    %v132 = vld [vmem:[%s11] sm:$0x1]
    %v133 = vld [vmem:[%s13] sm:$0x1]
    %v134 = vld [vmem:[%s15] sm:$0x1]
    %v135 = vld [vmem:[%s17] sm:$0x1]
    %v136 = vld [vmem:[%s19] sm:$0xff]
    %v137 = vld [vmem:[%s19 + $0x8] sm:$0xff]
    %v138 = vld [vmem:[%s19 + $0x10] sm:$0xff]
    %v139 = vld [vmem:[%s19 + $0x18] sm:$0xff]
    %v140 = vld [vmem:[%s21] sm:$0x1]
    %v141 = vld [vmem:[%s23] sm:$0xff]
    %v142 = vld [vmem:[%s23 + $0x8] sm:$0xff]
    %v143 = vld [vmem:[%s23 + $0x10] sm:$0xff]
    %v144 = vld [vmem:[%s23 + $0x18] sm:$0xff]
    %v145 = vld [vmem:[%s25] sm:$0x1]
    %v146 = vld [vmem:[%s27] sm:$0xff]
    %v147 = vld [vmem:[%s27 + $0x8] sm:$0xff]
    %v148 = vld [vmem:[%s27 + $0x10] sm:$0xff]
    %v149 = vld [vmem:[%s27 + $0x18] sm:$0xff]
    %v150 = vld [vmem:[%s29] sm:$0x1]
    %v151 = vld [vmem:[%s31] sm:$0xff]
    %v152 = vld [vmem:[%s31 + $0x8] sm:$0xff]
    %v153 = vld [vmem:[%s31 + $0x10] sm:$0xff]
    %v154 = vld [vmem:[%s31 + $0x18] sm:$0xff]
    %v155 = vld [vmem:[%s33] sm:$0x1]
    %v156 = vld [vmem:[%s35] sm:$0xff]
    %v157 = vld [vmem:[%s35 + $0x8] sm:$0xff]
    %v158 = vld [vmem:[%s35 + $0x10] sm:$0xff]
    %v159 = vld [vmem:[%s35 + $0x18] sm:$0xff]
    %v160 = vld [vmem:[%s37] sm:$0x1]
    %v161 = vld [vmem:[%s39] sm:$0xff]
    %v162 = vld [vmem:[%s39 + $0x8] sm:$0xff]
    %v163 = vld [vmem:[%s39 + $0x10] sm:$0xff]
    %v164 = vld [vmem:[%s39 + $0x18] sm:$0xff]
    %v165 = vld [vmem:[%s41] sm:$0x1]
    %v166 = vld [vmem:[%s43] sm:$0xff]
    %v167 = vld [vmem:[%s43 + $0x8] sm:$0xff]
    %v168 = vld [vmem:[%s43 + $0x10] sm:$0xff]
    %v169 = vld [vmem:[%s43 + $0x18] sm:$0xff]
    %v170 = vld [vmem:[%s45] sm:$0x1]
    %v171 = vld [vmem:[%s47] sm:$0xff]
    %v172 = vld [vmem:[%s47 + $0x8] sm:$0xff]
    %v173 = vld [vmem:[%s47 + $0x10] sm:$0xff]
    %v174 = vld [vmem:[%s47 + $0x18] sm:$0xff]
    %v175 = vld [vmem:[%s49] sm:$0x1]
    %v176 = vld [vmem:[%s51] sm:$0xff]
    %v177 = vld [vmem:[%s51 + $0x8] sm:$0xff]
    %v178 = vld [vmem:[%s51 + $0x10] sm:$0xff]
    %v179 = vld [vmem:[%s51 + $0x18] sm:$0xff]
    %v180 = vld [vmem:[%s51 + $0x20] sm:$0xff]
    %v181 = vld [vmem:[%s51 + $0x28] sm:$0xff]
    %v182 = vld [vmem:[%s51 + $0x30] sm:$0xff]
    %v183 = vld [vmem:[%s51 + $0x38] sm:$0xff]
    %v184 = vld [vmem:[%s51 + $0x40] sm:$0xff]
    %v185 = vld [vmem:[%s51 + $0x48] sm:$0xff]
    %v186 = vld [vmem:[%s51 + $0x50] sm:$0xff]
    %v187 = vld [vmem:[%s51 + $0x58] sm:$0xff]
    %v188 = vld [vmem:[%s51 + $0x60] sm:$0xff]
    %v189 = vld [vmem:[%s51 + $0x68] sm:$0xff]
    %v190 = vld [vmem:[%s51 + $0x70] sm:$0xff]
    %v191 = vld [vmem:[%s51 + $0x78] sm:$0xff]
    %v192 = vld [vmem:[%s51 + $0x80] sm:$0xff]
    %v193 = vld [vmem:[%s51 + $0x88] sm:$0xff]
    %v194 = vld [vmem:[%s51 + $0x90] sm:$0xff]
    %v195 = vld [vmem:[%s51 + $0x98] sm:$0xff]
    %v196 = vld [vmem:[%s51 + $0xa0] sm:$0xff]
    %v197 = vld [vmem:[%s51 + $0xa8] sm:$0xff]
    %v198 = vld [vmem:[%s51 + $0xb0] sm:$0xff]
    %v199 = vld [vmem:[%s51 + $0xb8] sm:$0xff]
    %v200 = vld [vmem:[%s51 + $0xc0] sm:$0xff]
    %v201 = vld [vmem:[%s51 + $0xc8] sm:$0xff]
    %v202 = vld [vmem:[%s51 + $0xd0] sm:$0xff]
    %v203 = vld [vmem:[%s51 + $0xd8] sm:$0xff]
    %v204 = vld [vmem:[%s51 + $0xe0] sm:$0xff]
    %v205 = vld [vmem:[%s51 + $0xe8] sm:$0xff]
    %v206 = vld [vmem:[%s51 + $0xf0] sm:$0xff]
    %v207 = vld [vmem:[%s51 + $0xf8] sm:$0xff]
    %v208 = vld [vmem:[%s51 + $0x100] sm:$0xff]
    %v209 = vld [vmem:[%s51 + $0x108] sm:$0xff]
    %v210 = vld [vmem:[%s51 + $0x110] sm:$0xff]
    %v211 = vld [vmem:[%s51 + $0x118] sm:$0xff]
    %v212 = vld [vmem:[%s53] sm:$0x1]
    %v213 = vld [vmem:[%s55] sm:$0xff]
    %v214 = vld [vmem:[%s55 + $0x8] sm:$0xff]
    %v215 = vld [vmem:[%s55 + $0x10] sm:$0xff]
    %v216 = vld [vmem:[%s55 + $0x18] sm:$0xff]
    %v217 = vld [vmem:[%s55 + $0x20] sm:$0xff]
    %v218 = vld [vmem:[%s55 + $0x28] sm:$0xff]
    %v219 = vld [vmem:[%s55 + $0x30] sm:$0xff]
    %v220 = vld [vmem:[%s55 + $0x38] sm:$0xff]
    %v221 = vld [vmem:[%s55 + $0x40] sm:$0xff]
    %v222 = vld [vmem:[%s55 + $0x48] sm:$0xff]
    %v223 = vld [vmem:[%s55 + $0x50] sm:$0xff]
    %v224 = vld [vmem:[%s55 + $0x58] sm:$0xff]
    %v225 = vld [vmem:[%s55 + $0x60] sm:$0xff]
    %v226 = vld [vmem:[%s55 + $0x68] sm:$0xff]
    %v227 = vld [vmem:[%s55 + $0x70] sm:$0xff]
    %v228 = vld [vmem:[%s55 + $0x78] sm:$0xff]
    %v229 = vld [vmem:[%s55 + $0x80] sm:$0xff]
    %v230 = vld [vmem:[%s55 + $0x88] sm:$0xff]
    %v231 = vld [vmem:[%s55 + $0x90] sm:$0xff]
    %v232 = vld [vmem:[%s55 + $0x98] sm:$0xff]
    %v233 = vld [vmem:[%s55 + $0xa0] sm:$0xff]
    %v234 = vld [vmem:[%s55 + $0xa8] sm:$0xff]
    %v235 = vld [vmem:[%s55 + $0xb0] sm:$0xff]
    %v236 = vld [vmem:[%s55 + $0xb8] sm:$0xff]
    %v237 = vld [vmem:[%s55 + $0xc0] sm:$0xff]
    %v238 = vld [vmem:[%s55 + $0xc8] sm:$0xff]
    %v239 = vld [vmem:[%s55 + $0xd0] sm:$0xff]
    %v240 = vld [vmem:[%s55 + $0xd8] sm:$0xff]
    %v241 = vld [vmem:[%s55 + $0xe0] sm:$0xff]
    %v242 = vld [vmem:[%s55 + $0xe8] sm:$0xff]
    %v243 = vld [vmem:[%s55 + $0xf0] sm:$0xff]
    %v244 = vld [vmem:[%s55 + $0xf8] sm:$0xff]
    %v245 = vld [vmem:[%s55 + $0x100] sm:$0xff]
    %v246 = vld [vmem:[%s55 + $0x108] sm:$0xff]
    %v247 = vld [vmem:[%s55 + $0x110] sm:$0xff]
    %v248 = vld [vmem:[%s55 + $0x118] sm:$0xff]
    %v249 = vld [vmem:[%s55 + $0x120] sm:$0xff]
    %v250 = vld [vmem:[%s55 + $0x128] sm:$0xff]
    %v251 = vld [vmem:[%s55 + $0x130] sm:$0xff]
    %v252 = vld [vmem:[%s55 + $0x138] sm:$0xff]
    %v253 = vld [vmem:[%s55 + $0x140] sm:$0xff]
    %v254 = vld [vmem:[%s55 + $0x148] sm:$0xff]
    %v255 = vld [vmem:[%s55 + $0x150] sm:$0xff]
    %v256 = vld [vmem:[%s55 + $0x158] sm:$0xff]
    %v257 = vld [vmem:[%s55 + $0x160] sm:$0xff]
    %v258 = vld [vmem:[%s55 + $0x168] sm:$0xff]
    %v259 = vld [vmem:[%s55 + $0x170] sm:$0xff]
    %v260 = vld [vmem:[%s55 + $0x178] sm:$0xff]
    %v261 = vld [vmem:[%s55 + $0x180] sm:$0xff]
    %v262 = vld [vmem:[%s55 + $0x188] sm:$0xff]
    %v263 = vld [vmem:[%s55 + $0x190] sm:$0xff]
    %v264 = vld [vmem:[%s55 + $0x198] sm:$0xff]
    %v265 = vld [vmem:[%s55 + $0x1a0] sm:$0xff]
    %v266 = vld [vmem:[%s55 + $0x1a8] sm:$0xff]
    %v267 = vld [vmem:[%s55 + $0x1b0] sm:$0xff]
    %v268 = vld [vmem:[%s55 + $0x1b8] sm:$0xff]
    %v269 = vld [vmem:[%s55 + $0x1c0] sm:$0xff]
    %v270 = vld [vmem:[%s55 + $0x1c8] sm:$0xff]
    %v271 = vld [vmem:[%s55 + $0x1d0] sm:$0xff]
    %v272 = vld [vmem:[%s55 + $0x1d8] sm:$0xff]
    %v273 = vld [vmem:[%s55 + $0x1e0] sm:$0xff]
    %v274 = vld [vmem:[%s55 + $0x1e8] sm:$0xff]
    %v275 = vld [vmem:[%s55 + $0x1f0] sm:$0xff]
    %v276 = vld [vmem:[%s55 + $0x1f8] sm:$0xff]
    %v277 = vld [vmem:[%s55 + $0x200] sm:$0xff]
    %v278 = vld [vmem:[%s55 + $0x208] sm:$0xff]
    %v279 = vld [vmem:[%s55 + $0x210] sm:$0xff]
    %v280 = vld [vmem:[%s55 + $0x218] sm:$0xff]
    %v281 = vld [vmem:[%s55 + $0x220] sm:$0xff]
    %v282 = vld [vmem:[%s55 + $0x228] sm:$0xff]
    %v283 = vld [vmem:[%s55 + $0x230] sm:$0xff]
    %v284 = vld [vmem:[%s55 + $0x238] sm:$0xff]
    %v285 = vld [vmem:[%s57] sm:$0x1]
    %v286 = vlaneseq
    %v287 = vand.u32 %v286, 127
    %vm288 = vcmp.ge.s32.totalorder %v287, 0
    %vm289 = vcmp.lt.s32.totalorder %v287, 8
    %vm290 = vmand %vm288, %vm289
    %vm291 = vcmp.ge.s32.totalorder %v287, 8
    %vm292 = vcmp.lt.s32.totalorder %v287, 16
    %vm293 = vmand %vm291, %vm292
    %vm294 = vcmp.ge.s32.totalorder %v287, 16
    %vm295 = vcmp.lt.s32.totalorder %v287, 24
    %vm296 = vmand %vm294, %vm295
    %vm297 = vcmp.ge.s32.totalorder %v287, 24
    %vm298 = vcmp.lt.s32.totalorder %v287, 32
    %vm299 = vmand %vm297, %vm298
    %v300 = vld [vmem:[%s1] sm:$0x3]
    %v301 = vld [vmem:[%s1 + $0x2] sm:$0x3]
    %v302 = vld [vmem:[%s1 + $0x4] sm:$0x3]
    %v303 = vld [vmem:[%s1 + $0x6] sm:$0x3]
    %v304 = vld [vmem:[%s1 + $0x8] sm:$0x3]
    %v305 = vld [vmem:[%s1 + $0xa] sm:$0x3]
    %v306 = vld [vmem:[%s1 + $0xc] sm:$0x3]
    %v307 = vld [vmem:[%s1 + $0xe] sm:$0x3]
    %v308 = vld [vmem:[%s1 + $0x10] sm:$0x3]
    %v309 = vld [vmem:[%s1 + $0x12] sm:$0x3]
    %v310 = vld [vmem:[%s1 + $0x14] sm:$0x3]
    %v311 = vld [vmem:[%s1 + $0x16] sm:$0x3]
    %v312 = vld [vmem:[%s1 + $0x18] sm:$0x3]
    %v313 = vld [vmem:[%s1 + $0x1a] sm:$0x3]
    %v314 = vld [vmem:[%s1 + $0x1c] sm:$0x3]
    %v315 = vld [vmem:[%s1 + $0x1e] sm:$0x3]
    %v316 = vld [vmem:[%s5] sm:$0x3]
    %v317 = vld [vmem:[%s5 + $0x2] sm:$0x3]
    %v318 = vld [vmem:[%s5 + $0x4] sm:$0x3]
    %v319 = vld [vmem:[%s5 + $0x6] sm:$0x3]
    %v320 = vld [vmem:[%s5 + $0x8] sm:$0x3]
    %v321 = vld [vmem:[%s5 + $0xa] sm:$0x3]
    %v322 = vld [vmem:[%s5 + $0xc] sm:$0x3]
    %v323 = vld [vmem:[%s5 + $0xe] sm:$0x3]
    %v324 = vld [vmem:[%s5 + $0x10] sm:$0x3]
    %v325 = vld [vmem:[%s5 + $0x12] sm:$0x3]
    %v326 = vld [vmem:[%s5 + $0x14] sm:$0x3]
    %v327 = vld [vmem:[%s5 + $0x16] sm:$0x3]
    %v328 = vld [vmem:[%s5 + $0x18] sm:$0x3]
    %v329 = vld [vmem:[%s5 + $0x1a] sm:$0x3]
    %v330 = vld [vmem:[%s5 + $0x1c] sm:$0x3]
    %v331 = vld [vmem:[%s5 + $0x1e] sm:$0x3]
    %v332 = vld [vmem:[%s3] sm:$0x3]
    %v333 = vld [vmem:[%s3 + $0x2] sm:$0x3]
    %v334 = vld [vmem:[%s3 + $0x4] sm:$0x3]
    %v335 = vld [vmem:[%s3 + $0x6] sm:$0x3]
    %v336 = vld [vmem:[%s3 + $0x8] sm:$0x3]
    %v337 = vld [vmem:[%s3 + $0xa] sm:$0x3]
    %v338 = vld [vmem:[%s3 + $0xc] sm:$0x3]
    %v339 = vld [vmem:[%s3 + $0xe] sm:$0x3]
    %v356 = vrot.slane %v301, 7
    %vm357 = vcmask 1041409
    %v358 = vsel %vm357, %v356, %v300
    %v359 = vrot.slane %v302, 6
    %vm360 = vcmask 1042434
    %v361 = vsel %vm360, %v359, %v358
    %v362 = vrot.slane %v303, 5
    %vm363 = vcmask 1043459
    %v364 = vsel %vm363, %v362, %v361
    %v365 = vrot.slane %v304, 4
    %vm366 = vcmask 1044484
    %v367 = vsel %vm366, %v365, %v364
    %v368 = vrot.slane %v305, 3
    %vm369 = vcmask 1045509
    %v370 = vsel %vm369, %v368, %v367
    %v371 = vrot.slane %v306, 2
    %vm372 = vcmask 1046534
    %v373 = vsel %vm372, %v371, %v370
    %v374 = vrot.slane %v307, 1
    %vm375 = vcmask 1047559
    %v376 = vsel %vm375, %v374, %v373
    %v377 = vrot.slane %v309, 7
    %v378 = vsel %vm357, %v377, %v308
    %v379 = vrot.slane %v310, 6
    %v380 = vsel %vm360, %v379, %v378
    %v381 = vrot.slane %v311, 5
    %v382 = vsel %vm363, %v381, %v380
    %v383 = vrot.slane %v312, 4
    %v384 = vsel %vm366, %v383, %v382
    %v385 = vrot.slane %v313, 3
    %v386 = vsel %vm369, %v385, %v384
    %v387 = vrot.slane %v314, 2
    %v388 = vsel %vm372, %v387, %v386
    %v389 = vrot.slane %v315, 1
    %v390 = vsel %vm375, %v389, %v388
    %vm393 = vcmask 261120
    %v394 = vsel %vm393, %v376, 0.0
    %395 = vadd.xlane.f32.xlu0 %v394
    %v396 = vpop.xlane.xlu0 %395
    %v397 = vsel %vm393, %v390, 0.0
    %398 = vadd.xlane.f32.xlu0 %v397
    %v399 = vpop.xlane.xlu0 %398
    %v400 = vrcp.pop 32.0
    %v401 = vmul.f32 %v396, %v400
    %v402 = vmul.f32 %v399, %v400
    %v405 = vrot.slane %v401, 1
    %v406 = vrot.slane %v401, 2
    %v407 = vrot.slane %v401, 3
    %v408 = vrot.slane %v401, 4
    %v409 = vrot.slane %v401, 5
    %v410 = vrot.slane %v401, 6
    %v411 = vrot.slane %v401, 7
    %v412 = vrot.slane %v402, 1
    %v413 = vrot.slane %v402, 2
    %v414 = vrot.slane %v402, 3
    %v415 = vrot.slane %v402, 4
    %v416 = vrot.slane %v402, 5
    %v417 = vrot.slane %v402, 6
    %v418 = vrot.slane %v402, 7
    %v435 = vsub.f32 %v300, %v401
    %v436 = vsub.f32 %v301, %v405
    %v437 = vsub.f32 %v302, %v406
    %v438 = vsub.f32 %v303, %v407
    %v439 = vsub.f32 %v304, %v408
    %v440 = vsub.f32 %v305, %v409
    %v441 = vsub.f32 %v306, %v410
    %v442 = vsub.f32 %v307, %v411
    %v443 = vsub.f32 %v308, %v402
    %v444 = vsub.f32 %v309, %v412
    %v445 = vsub.f32 %v310, %v413
    %v446 = vsub.f32 %v311, %v414
    %v447 = vsub.f32 %v312, %v415
    %v448 = vsub.f32 %v313, %v416
    %v449 = vsub.f32 %v314, %v417
    %v450 = vsub.f32 %v315, %v418
    %v451 = vmul.f32 %v435, %v435
    %v452 = vmul.f32 %v436, %v436
    %v453 = vmul.f32 %v437, %v437
    %v454 = vmul.f32 %v438, %v438
    %v455 = vmul.f32 %v439, %v439
    %v456 = vmul.f32 %v440, %v440
    %v457 = vmul.f32 %v441, %v441
    %v458 = vmul.f32 %v442, %v442
    %v459 = vmul.f32 %v443, %v443
    %v460 = vmul.f32 %v444, %v444
    %v461 = vmul.f32 %v445, %v445
    %v462 = vmul.f32 %v446, %v446
    %v463 = vmul.f32 %v447, %v447
    %v464 = vmul.f32 %v448, %v448
    %v465 = vmul.f32 %v449, %v449
    %v466 = vmul.f32 %v450, %v450
    %v483 = vrot.slane %v452, 7
    %v484 = vsel %vm357, %v483, %v451
    %v485 = vrot.slane %v453, 6
    %v486 = vsel %vm360, %v485, %v484
    %v487 = vrot.slane %v454, 5
    %v488 = vsel %vm363, %v487, %v486
    %v489 = vrot.slane %v455, 4
    %v490 = vsel %vm366, %v489, %v488
    %v491 = vrot.slane %v456, 3
    %v492 = vsel %vm369, %v491, %v490
    %v493 = vrot.slane %v457, 2
    %v494 = vsel %vm372, %v493, %v492
    %v495 = vrot.slane %v458, 1
    %v496 = vsel %vm375, %v495, %v494
    %v497 = vrot.slane %v460, 7
    %v498 = vsel %vm357, %v497, %v459
    %v499 = vrot.slane %v461, 6
    %v500 = vsel %vm360, %v499, %v498
    %v501 = vrot.slane %v462, 5
    %v502 = vsel %vm363, %v501, %v500
    %v503 = vrot.slane %v463, 4
    %v504 = vsel %vm366, %v503, %v502
    %v505 = vrot.slane %v464, 3
    %v506 = vsel %vm369, %v505, %v504
    %v507 = vrot.slane %v465, 2
    %v508 = vsel %vm372, %v507, %v506
    %v509 = vrot.slane %v466, 1
    %v510 = vsel %vm375, %v509, %v508
    %v513 = vsel %vm393, %v496, 0.0
    %514 = vadd.xlane.f32.xlu0 %v513
    %v515 = vpop.xlane.xlu0 %514
    %v516 = vsel %vm393, %v510, 0.0
    %517 = vadd.xlane.f32.xlu0 %v516
    %v518 = vpop.xlane.xlu0 %517
    %v519 = vmul.f32 %v515, %v400
    %v520 = vmul.f32 %v518, %v400
    %v521 = vadd.f32 %v519, 1e-05
    %v522 = vadd.f32 %v520, 1e-05
    %v523 = vrsqrt.pop %v521
    %v524 = vrsqrt.pop %v522
    %v527 = vrot.slane %v523, 1
    %v528 = vrot.slane %v523, 2
    %v529 = vrot.slane %v523, 3
    %v530 = vrot.slane %v523, 4
    %v531 = vrot.slane %v523, 5
    %v532 = vrot.slane %v523, 6
    %v533 = vrot.slane %v523, 7
    %v534 = vrot.slane %v524, 1
    %v535 = vrot.slane %v524, 2
    %v536 = vrot.slane %v524, 3
    %v537 = vrot.slane %v524, 4
    %v538 = vrot.slane %v524, 5
    %v539 = vrot.slane %v524, 6
    %v540 = vrot.slane %v524, 7
    %v557 = vmul.f32 %v435, %v523
    %v558 = vmul.f32 %v436, %v527
    %v559 = vmul.f32 %v437, %v528
    %v560 = vmul.f32 %v438, %v529
    %v561 = vmul.f32 %v439, %v530
    %v562 = vmul.f32 %v440, %v531
    %v563 = vmul.f32 %v441, %v532
    %v564 = vmul.f32 %v442, %v533
    %v565 = vmul.f32 %v443, %v524
    %v566 = vmul.f32 %v444, %v534
    %v567 = vmul.f32 %v445, %v535
    %v568 = vmul.f32 %v446, %v536
    %v569 = vmul.f32 %v447, %v537
    %v570 = vmul.f32 %v448, %v538
    %v571 = vmul.f32 %v449, %v539
    %v572 = vmul.f32 %v450, %v540
    %v574 = vlaneseq
    %v575 = vshrl.u32 %v574, 7
    %v576 = vsub.s32 0, %v575
    %v577 = vrot.slane %v130, %v576
    %v579 = vmul.f32 %v557, %v577
    %v580 = vmul.f32 %v558, %v577
    %v581 = vmul.f32 %v559, %v577
    %v582 = vmul.f32 %v560, %v577
    %v583 = vmul.f32 %v561, %v577
    %v584 = vmul.f32 %v562, %v577
    %v585 = vmul.f32 %v563, %v577
    %v586 = vmul.f32 %v564, %v577
    %v587 = vmul.f32 %v565, %v577
    %v588 = vmul.f32 %v566, %v577
    %v589 = vmul.f32 %v567, %v577
    %v590 = vmul.f32 %v568, %v577
    %v591 = vmul.f32 %v569, %v577
    %v592 = vmul.f32 %v570, %v577
    %v593 = vmul.f32 %v571, %v577
    %v594 = vmul.f32 %v572, %v577
    %v596 = vlaneseq
    %v597 = vshrl.u32 %v596, 7
    %v598 = vsub.s32 0, %v597
    %v599 = vrot.slane %v131, %v598
    %v601 = vadd.f32 %v579, %v599
    %v602 = vadd.f32 %v580, %v599
    %v603 = vadd.f32 %v581, %v599
    %v604 = vadd.f32 %v582, %v599
    %v605 = vadd.f32 %v583, %v599
    %v606 = vadd.f32 %v584, %v599
    %v607 = vadd.f32 %v585, %v599
    %v608 = vadd.f32 %v586, %v599
    %v609 = vadd.f32 %v587, %v599
    %v610 = vadd.f32 %v588, %v599
    %v611 = vadd.f32 %v589, %v599
    %v612 = vadd.f32 %v590, %v599
    %v613 = vadd.f32 %v591, %v599
    %v614 = vadd.f32 %v592, %v599
    %v615 = vadd.f32 %v593, %v599
    %v616 = vadd.f32 %v594, %v599
    %v617 = vadd.f32 %v601, %v316
    %v618 = vadd.f32 %v602, %v317
    %v619 = vadd.f32 %v603, %v318
    %v620 = vadd.f32 %v604, %v319
    %v621 = vadd.f32 %v605, %v320
    %v622 = vadd.f32 %v606, %v321
    %v623 = vadd.f32 %v607, %v322
    %v624 = vadd.f32 %v608, %v323
    %v625 = vadd.f32 %v609, %v324
    %v626 = vadd.f32 %v610, %v325
    %v627 = vadd.f32 %v611, %v326
    %v628 = vadd.f32 %v612, %v327
    %v629 = vadd.f32 %v613, %v328
    %v630 = vadd.f32 %v614, %v329
    %v631 = vadd.f32 %v615, %v330
    %v632 = vadd.f32 %v616, %v331
    %v634 = vlaneseq
    %v635 = vshrl.u32 %v634, 7
    %v636 = vsub.s32 0, %v635
    %v637 = vrot.slane %v140, %v636
    %v655 = vrot.slane %v618, 7
    %v656 = vsel %vm357, %v655, %v617
    %v657 = vrot.slane %v619, 6
    %v658 = vsel %vm360, %v657, %v656
    %v659 = vrot.slane %v620, 5
    %v660 = vsel %vm363, %v659, %v658
    %v661 = vrot.slane %v621, 4
    %v662 = vsel %vm366, %v661, %v660
    %v663 = vrot.slane %v622, 3
    %v664 = vsel %vm369, %v663, %v662
    %v665 = vrot.slane %v623, 2
    %v666 = vsel %vm372, %v665, %v664
    %v667 = vrot.slane %v624, 1
    %v668 = vsel %vm375, %v667, %v666
    %v669 = vrot.slane %v626, 7
    %v670 = vsel %vm357, %v669, %v625
    %v671 = vrot.slane %v627, 6
    %v672 = vsel %vm360, %v671, %v670
    %v673 = vrot.slane %v628, 5
    %v674 = vsel %vm363, %v673, %v672
    %v675 = vrot.slane %v629, 4
    %v676 = vsel %vm366, %v675, %v674
    %v677 = vrot.slane %v630, 3
    %v678 = vsel %vm369, %v677, %v676
    %v679 = vrot.slane %v631, 2
    %v680 = vsel %vm372, %v679, %v678
    %v681 = vrot.slane %v632, 1
    %v682 = vsel %vm375, %v681, %v680
    %v683 = vsel %vm393, %v668, 0
    %v685 = vsel %vm393, %v682, 0
    %687 = vmatprep.subr.mxu0 0.0
    %688 = vmatpush1.msra.mxu0 %v136
    %689 = vmatprep.subr.mxu0 0.0
    %690 = vmatpush1.msra.mxu0 %v137
    %691 = vmatprep.subr.mxu0 0.0
    %692 = vmatpush1.msra.mxu0 %v138
    %693 = vmatprep.subr.mxu0 0.0
    %694 = vmatpush1.msra.mxu0 %v139
    %695 = vmatprep.subr.mxu0 0.0
    %696 = vmatpush1.msra.mxu0 0.0
    %697 = vmatprep.subr.mxu0 0.0
    %698 = vmatpush1.msra.mxu0 0.0
    %699 = vmatprep.subr.mxu0 0.0
    %700 = vmatpush1.msra.mxu0 0.0
    %701 = vmatprep.subr.mxu0 0.0
    %702 = vmatpush1.msra.mxu0 0.0
    %703 = vmatprep.subr.mxu0 0.0
    %704 = vmatpush1.msra.mxu0 0.0
    %705 = vmatprep.subr.mxu0 0.0
    %706 = vmatpush1.msra.mxu0 0.0
    %707 = vmatprep.subr.mxu0 0.0
    %708 = vmatpush1.msra.mxu0 0.0
    %709 = vmatprep.subr.mxu0 0.0
    %710 = vmatpush1.msra.mxu0 0.0
    %711 = vmatprep.subr.mxu0 0.0
    %712 = vmatpush1.msra.mxu0 0.0
    %713 = vmatprep.subr.mxu0 0.0
    %714 = vmatpush1.msra.mxu0 0.0
    %715 = vmatprep.subr.mxu0 0.0
    %716 = vmatpush1.msra.mxu0 0.0
    %717 = vmatprep.subr.mxu0 0.0
    %718 = vmatpush1.msra.mxu0 0.0
    %719 = vmatprep.subr.mxu0 0.0
    %720 = vmatpush1.msra.mxu0 0.0
    %721 = vmatprep.subr.mxu0 0.0
    %722 = vmatpush1.msra.mxu0 0.0
    %723 = vmatprep.subr.mxu0 0.0
    %724 = vmatpush1.msra.mxu0 0.0
    %725 = vmatprep.subr.mxu0 0.0
    %726 = vmatpush1.msra.mxu0 0.0
    %727 = vmatprep.subr.mxu0 0.0
    %728 = vmatpush1.msra.mxu0 0.0
    %729 = vmatprep.subr.mxu0 0.0
    %730 = vmatpush1.msra.mxu0 0.0
    %731 = vmatprep.subr.mxu0 0.0
    %732 = vmatpush1.msra.mxu0 0.0
    %733 = vmatprep.subr.mxu0 0.0
    %734 = vmatpush1.msra.mxu0 0.0
    %735 = vmatprep.subr.mxu0 0.0
    %736 = vmatpush1.msra.mxu0 0.0
    %737 = vmatprep.subr.mxu0 0.0
    %738 = vmatpush1.msra.mxu0 0.0
    %739 = vmatprep.subr.mxu0 0.0
    %740 = vmatpush1.msra.mxu0 0.0
    %741 = vmatprep.subr.mxu0 0.0
    %742 = vmatpush1.msra.mxu0 0.0
    %743 = vmatprep.subr.mxu0 0.0
    %744 = vmatpush1.msra.mxu0 0.0
    %745 = vmatprep.subr.mxu0 0.0
    %746 = vmatpush1.msra.mxu0 0.0
    %747 = vmatprep.subr.mxu0 0.0
    %748 = vmatpush1.msra.mxu0 0.0
    %749 = vmatprep.subr.mxu0 0.0
    %750 = vmatpush1.msra.mxu0 0.0
    %751 = vmatprep.mubr.f32.mxu0 0.0
    %752 = vmatmul.mubr.f32.gmra.mrb[0].mxu0 %v683
    %v753 = vpop.f32.mrb[0].mxu0
    %v754 = vadd.f32 %v637, %v753
    %v755 = vpop.f32.mrb[0].mxu0
    %756 = vmatprep.mubr.f32.mxu0 0.0
    %757 = vmatmul.mubr.f32.gmra.mrb[0].mxu0 %v685
    %v758 = vpop.f32.mrb[0].mxu0
    %v759 = vadd.f32 %v637, %v758
    %v760 = vpop.f32.mrb[0].mxu0
    %761 = vdwg.mxu0
    %v763 = vlaneseq
    %v764 = vshrl.u32 %v763, 7
    %v765 = vsub.s32 0, %v764
    %v766 = vrot.slane %v145, %v765
    %768 = vmatprep.subr.mxu0 0.0
    %769 = vmatpush1.msra.mxu0 %v141
    %770 = vmatprep.subr.mxu0 0.0
    %771 = vmatpush1.msra.mxu0 %v142
    %772 = vmatprep.subr.mxu0 0.0
    %773 = vmatpush1.msra.mxu0 %v143
    %774 = vmatprep.subr.mxu0 0.0
    %775 = vmatpush1.msra.mxu0 %v144
    %776 = vmatprep.subr.mxu0 0.0
    %777 = vmatpush1.msra.mxu0 0.0
    %778 = vmatprep.subr.mxu0 0.0
    %779 = vmatpush1.msra.mxu0 0.0
    %780 = vmatprep.subr.mxu0 0.0
    %781 = vmatpush1.msra.mxu0 0.0
    %782 = vmatprep.subr.mxu0 0.0
    %783 = vmatpush1.msra.mxu0 0.0
    %784 = vmatprep.subr.mxu0 0.0
    %785 = vmatpush1.msra.mxu0 0.0
    %786 = vmatprep.subr.mxu0 0.0
    %787 = vmatpush1.msra.mxu0 0.0
    %788 = vmatprep.subr.mxu0 0.0
    %789 = vmatpush1.msra.mxu0 0.0
    %790 = vmatprep.subr.mxu0 0.0
    %791 = vmatpush1.msra.mxu0 0.0
    %792 = vmatprep.subr.mxu0 0.0
    %793 = vmatpush1.msra.mxu0 0.0
    %794 = vmatprep.subr.mxu0 0.0
    %795 = vmatpush1.msra.mxu0 0.0
    %796 = vmatprep.subr.mxu0 0.0
    %797 = vmatpush1.msra.mxu0 0.0
    %798 = vmatprep.subr.mxu0 0.0
    %799 = vmatpush1.msra.mxu0 0.0
    %800 = vmatprep.subr.mxu0 0.0
    %801 = vmatpush1.msra.mxu0 0.0
    %802 = vmatprep.subr.mxu0 0.0
    %803 = vmatpush1.msra.mxu0 0.0
    %804 = vmatprep.subr.mxu0 0.0
    %805 = vmatpush1.msra.mxu0 0.0
    %806 = vmatprep.subr.mxu0 0.0
    %807 = vmatpush1.msra.mxu0 0.0
    %808 = vmatprep.subr.mxu0 0.0
    %809 = vmatpush1.msra.mxu0 0.0
    %810 = vmatprep.subr.mxu0 0.0
    %811 = vmatpush1.msra.mxu0 0.0
    %812 = vmatprep.subr.mxu0 0.0
    %813 = vmatpush1.msra.mxu0 0.0
    %814 = vmatprep.subr.mxu0 0.0
    %815 = vmatpush1.msra.mxu0 0.0
    %816 = vmatprep.subr.mxu0 0.0
    %817 = vmatpush1.msra.mxu0 0.0
    %818 = vmatprep.subr.mxu0 0.0
    %819 = vmatpush1.msra.mxu0 0.0
    %820 = vmatprep.subr.mxu0 0.0
    %821 = vmatpush1.msra.mxu0 0.0
    %822 = vmatprep.subr.mxu0 0.0
    %823 = vmatpush1.msra.mxu0 0.0
    %824 = vmatprep.subr.mxu0 0.0
    %825 = vmatpush1.msra.mxu0 0.0
    %826 = vmatprep.subr.mxu0 0.0
    %827 = vmatpush1.msra.mxu0 0.0
    %828 = vmatprep.subr.mxu0 0.0
    %829 = vmatpush1.msra.mxu0 0.0
    %830 = vmatprep.subr.mxu0 0.0
    %831 = vmatpush1.msra.mxu0 0.0
    %832 = vmatprep.mubr.f32.mxu0 0.0
    %833 = vmatmul.mubr.f32.gmra.mrb[0].mxu0 %v683
    %v834 = vpop.f32.mrb[0].mxu0
    %v835 = vadd.f32 %v766, %v834
    %v836 = vpop.f32.mrb[0].mxu0
    %837 = vmatprep.mubr.f32.mxu0 0.0
    %838 = vmatmul.mubr.f32.gmra.mrb[0].mxu0 %v685
    %v839 = vpop.f32.mrb[0].mxu0
    %v840 = vadd.f32 %v766, %v839
    %v841 = vpop.f32.mrb[0].mxu0
    %842 = vdwg.mxu0
    %v844 = vlaneseq
    %v845 = vshrl.u32 %v844, 7
    %v846 = vsub.s32 0, %v845
    %v847 = vrot.slane %v150, %v846
    %v865 = vrot.slane %v602, 7
    %v866 = vsel %vm357, %v865, %v601
    %v867 = vrot.slane %v603, 6
    %v868 = vsel %vm360, %v867, %v866
    %v869 = vrot.slane %v604, 5
    %v870 = vsel %vm363, %v869, %v868
    %v871 = vrot.slane %v605, 4
    %v872 = vsel %vm366, %v871, %v870
    %v873 = vrot.slane %v606, 3
    %v874 = vsel %vm369, %v873, %v872
    %v875 = vrot.slane %v607, 2
    %v876 = vsel %vm372, %v875, %v874
    %v877 = vrot.slane %v608, 1
    %v878 = vsel %vm375, %v877, %v876
    %v879 = vrot.slane %v610, 7
    %v880 = vsel %vm357, %v879, %v609
    %v881 = vrot.slane %v611, 6
    %v882 = vsel %vm360, %v881, %v880
    %v883 = vrot.slane %v612, 5
    %v884 = vsel %vm363, %v883, %v882
    %v885 = vrot.slane %v613, 4
    %v886 = vsel %vm366, %v885, %v884
    %v887 = vrot.slane %v614, 3
    %v888 = vsel %vm369, %v887, %v886
    %v889 = vrot.slane %v615, 2
    %v890 = vsel %vm372, %v889, %v888
    %v891 = vrot.slane %v616, 1
    %v892 = vsel %vm375, %v891, %v890
    %v893 = vsel %vm393, %v878, 0
    %v895 = vsel %vm393, %v892, 0
    %897 = vmatprep.subr.mxu0 0.0
    %898 = vmatpush1.msra.mxu0 %v146
    %899 = vmatprep.subr.mxu0 0.0
    %900 = vmatpush1.msra.mxu0 %v147
    %901 = vmatprep.subr.mxu0 0.0
    %902 = vmatpush1.msra.mxu0 %v148
    %903 = vmatprep.subr.mxu0 0.0
    %904 = vmatpush1.msra.mxu0 %v149
    %905 = vmatprep.subr.mxu0 0.0
    %906 = vmatpush1.msra.mxu0 0.0
    %907 = vmatprep.subr.mxu0 0.0
    %908 = vmatpush1.msra.mxu0 0.0
    %909 = vmatprep.subr.mxu0 0.0
    %910 = vmatpush1.msra.mxu0 0.0
    %911 = vmatprep.subr.mxu0 0.0
    %912 = vmatpush1.msra.mxu0 0.0
    %913 = vmatprep.subr.mxu0 0.0
    %914 = vmatpush1.msra.mxu0 0.0
    %915 = vmatprep.subr.mxu0 0.0
    %916 = vmatpush1.msra.mxu0 0.0
    %917 = vmatprep.subr.mxu0 0.0
    %918 = vmatpush1.msra.mxu0 0.0
    %919 = vmatprep.subr.mxu0 0.0
    %920 = vmatpush1.msra.mxu0 0.0
    %921 = vmatprep.subr.mxu0 0.0
    %922 = vmatpush1.msra.mxu0 0.0
    %923 = vmatprep.subr.mxu0 0.0
    %924 = vmatpush1.msra.mxu0 0.0
    %925 = vmatprep.subr.mxu0 0.0
    %926 = vmatpush1.msra.mxu0 0.0
    %927 = vmatprep.subr.mxu0 0.0
    %928 = vmatpush1.msra.mxu0 0.0
    %929 = vmatprep.subr.mxu0 0.0
    %930 = vmatpush1.msra.mxu0 0.0
    %931 = vmatprep.subr.mxu0 0.0
    %932 = vmatpush1.msra.mxu0 0.0
    %933 = vmatprep.subr.mxu0 0.0
    %934 = vmatpush1.msra.mxu0 0.0
    %935 = vmatprep.subr.mxu0 0.0
    %936 = vmatpush1.msra.mxu0 0.0
    %937 = vmatprep.subr.mxu0 0.0
    %938 = vmatpush1.msra.mxu0 0.0
    %939 = vmatprep.subr.mxu0 0.0
    %940 = vmatpush1.msra.mxu0 0.0
    %941 = vmatprep.subr.mxu0 0.0
    %942 = vmatpush1.msra.mxu0 0.0
    %943 = vmatprep.subr.mxu0 0.0
    %944 = vmatpush1.msra.mxu0 0.0
    %945 = vmatprep.subr.mxu0 0.0
    %946 = vmatpush1.msra.mxu0 0.0
    %947 = vmatprep.subr.mxu0 0.0
    %948 = vmatpush1.msra.mxu0 0.0
    %949 = vmatprep.subr.mxu0 0.0
    %950 = vmatpush1.msra.mxu0 0.0
    %951 = vmatprep.subr.mxu0 0.0
    %952 = vmatpush1.msra.mxu0 0.0
    %953 = vmatprep.subr.mxu0 0.0
    %954 = vmatpush1.msra.mxu0 0.0
    %955 = vmatprep.subr.mxu0 0.0
    %956 = vmatpush1.msra.mxu0 0.0
    %957 = vmatprep.subr.mxu0 0.0
    %958 = vmatpush1.msra.mxu0 0.0
    %959 = vmatprep.subr.mxu0 0.0
    %960 = vmatpush1.msra.mxu0 0.0
    %961 = vmatprep.mubr.f32.mxu0 0.0
    %962 = vmatmul.mubr.f32.gmra.mrb[0].mxu0 %v893
    %v963 = vpop.f32.mrb[0].mxu0
    %v964 = vadd.f32 %v847, %v963
    %v965 = vpop.f32.mrb[0].mxu0
    %966 = vmatprep.mubr.f32.mxu0 0.0
    %967 = vmatmul.mubr.f32.gmra.mrb[0].mxu0 %v895
    %v968 = vpop.f32.mrb[0].mxu0
    %v969 = vadd.f32 %v847, %v968
    %v970 = vpop.f32.mrb[0].mxu0
    %971 = vdwg.mxu0
    %v972 = vsel %vm290, 1, 0
    %vm973 = vcmp.eq.s32.totalorder %v972, 1
    %v974 = vsel %vm973, %v835, 0.0
    %v975 = vsel %vm973, %v840, 0.0
    %v977 = vsel %vm393, %v754, 0
    %v980 = vsel %vm393, %v759, 0
    %v983 = vsel %vm393, %v974, 0
    %v986 = vsel %vm393, %v975, 0
    %988 = vmatprep.subr.mxu0 0.0
    %989 = vmatpush1.xpose.msra.mxu0 %v983
    %990 = vmatprep.subr.mxu0 0.0
    %991 = vmatpush1.xpose.msra.mxu0 %v986
    %992 = vmatprep.subr.mxu0 0.0
    %993 = vmatpush1.xpose.msra.mxu0 0.0
    %994 = vmatprep.subr.mxu0 0.0
    %995 = vmatpush1.xpose.msra.mxu0 0.0
    %996 = vmatprep.subr.mxu0 0.0
    %997 = vmatpush1.xpose.msra.mxu0 0.0
    %998 = vmatprep.subr.mxu0 0.0
    %999 = vmatpush1.xpose.msra.mxu0 0.0
    %1000 = vmatprep.subr.mxu0 0.0
    %1001 = vmatpush1.xpose.msra.mxu0 0.0
    %1002 = vmatprep.subr.mxu0 0.0
    %1003 = vmatpush1.xpose.msra.mxu0 0.0
    %1004 = vmatprep.subr.mxu0 0.0
    %1005 = vmatpush1.xpose.msra.mxu0 0.0
    %1006 = vmatprep.subr.mxu0 0.0
    %1007 = vmatpush1.xpose.msra.mxu0 0.0
    %1008 = vmatprep.subr.mxu0 0.0
    %1009 = vmatpush1.xpose.msra.mxu0 0.0
    %1010 = vmatprep.subr.mxu0 0.0
    %1011 = vmatpush1.xpose.msra.mxu0 0.0
    %1012 = vmatprep.subr.mxu0 0.0
    %1013 = vmatpush1.xpose.msra.mxu0 0.0
    %1014 = vmatprep.subr.mxu0 0.0
    %1015 = vmatpush1.xpose.msra.mxu0 0.0
    %1016 = vmatprep.subr.mxu0 0.0
    %1017 = vmatpush1.xpose.msra.mxu0 0.0
    %1018 = vmatprep.subr.mxu0 0.0
    %1019 = vmatpush1.xpose.msra.mxu0 0.0
    %1020 = vmatprep.subr.mxu0 0.0
    %1021 = vmatpush1.xpose.msra.mxu0 0.0
    %1022 = vmatprep.subr.mxu0 0.0
    %1023 = vmatpush1.xpose.msra.mxu0 0.0
    %1024 = vmatprep.subr.mxu0 0.0
    %1025 = vmatpush1.xpose.msra.mxu0 0.0
    %1026 = vmatprep.subr.mxu0 0.0
    %1027 = vmatpush1.xpose.msra.mxu0 0.0
    %1028 = vmatprep.subr.mxu0 0.0
    %1029 = vmatpush1.xpose.msra.mxu0 0.0
    %1030 = vmatprep.subr.mxu0 0.0
    %1031 = vmatpush1.xpose.msra.mxu0 0.0
    %1032 = vmatprep.subr.mxu0 0.0
    %1033 = vmatpush1.xpose.msra.mxu0 0.0
    %1034 = vmatprep.subr.mxu0 0.0
    %1035 = vmatpush1.xpose.msra.mxu0 0.0
    %1036 = vmatprep.subr.mxu0 0.0
    %1037 = vmatpush1.xpose.msra.mxu0 0.0
    %1038 = vmatprep.subr.mxu0 0.0
    %1039 = vmatpush1.xpose.msra.mxu0 0.0
    %1040 = vmatprep.subr.mxu0 0.0
    %1041 = vmatpush1.xpose.msra.mxu0 0.0
    %1042 = vmatprep.subr.mxu0 0.0
    %1043 = vmatpush1.xpose.msra.mxu0 0.0
    %1044 = vmatprep.subr.mxu0 0.0
    %1045 = vmatpush1.xpose.msra.mxu0 0.0
    %1046 = vmatprep.subr.mxu0 0.0
    %1047 = vmatpush1.xpose.msra.mxu0 0.0
    %1048 = vmatprep.subr.mxu0 0.0
    %1049 = vmatpush1.xpose.msra.mxu0 0.0
    %1050 = vmatprep.subr.mxu0 0.0
    %1051 = vmatpush1.xpose.msra.mxu0 0.0
    %1052 = vmatprep.mubr.f32.mxu0 0.0
    %1053 = vmatmul.mubr.f32.gmra.mrb[0].mxu0 %v977
    %v1054 = vpop.f32.mrb[0].mxu0
    %v1055 = vadd.f32 0.0, %v1054
    %v1056 = vpop.f32.mrb[0].mxu0
    %1057 = vmatprep.mubr.f32.mxu0 0.0
    %1058 = vmatmul.mubr.f32.gmra.mrb[0].mxu0 %v980
    %v1059 = vpop.f32.mrb[0].mxu0
    %v1060 = vadd.f32 0.0, %v1059
    %v1061 = vpop.f32.mrb[0].mxu0
    %1062 = vdwg.mxu0
    %vm1063 = vcmask 130048
    %v1064 = vsel %vm1063, %v1055, -inf
    %1065 = vmax.xlane.f32.xlu0 %v1064
    %v1066 = vpop.xlane.xlu0 %1065
    %v1067 = vsel %vm1063, %v1060, -inf
    %1068 = vmax.xlane.f32.xlu0 %v1067
    %v1069 = vpop.xlane.xlu0 %1068
    %v1070 = vsub.f32 %v1055, %v1066
    %v1071 = vsub.f32 %v1060, %v1069
    %v1072 = vmul.f32 %v1070, 1.442695
    %v1073 = vpow.pop %v1072
    %v1074 = vmul.f32 %v1071, 1.442695
    %v1075 = vpow.pop %v1074
    %v1076 = vsel %vm1063, %v1073, 0.0
    %1077 = vadd.xlane.f32.xlu0 %v1076
    %v1078 = vpop.xlane.xlu0 %1077
    %v1079 = vsel %vm1063, %v1075, 0.0
    %1080 = vadd.xlane.f32.xlu0 %v1079
    %v1081 = vpop.xlane.xlu0 %1080
    %v1082 = vrcp.pop %v1078
    %v1083 = vrcp.pop %v1081
    %v1084 = vmul.f32 %v1073, %v1082
    %v1085 = vmul.f32 %v1075, %v1083
    %v1086 = vsel %vm973, %v964, 0.0
    %v1087 = vsel %vm973, %v969, 0.0
    %v1088 = vsel %vm293, 1, 0
    %vm1089 = vcmp.eq.s32.totalorder %v1088, 1
    %v1090 = vsel %vm1089, %v835, 0.0
    %v1091 = vsel %vm1089, %v840, 0.0
    %v1093 = vsel %vm393, %v1090, 0
    %v1096 = vsel %vm393, %v1091, 0
    %1098 = vmatprep.subr.mxu0 0.0
    %1099 = vmatpush1.xpose.msra.mxu0 %v1093
    %1100 = vmatprep.subr.mxu0 0.0
    %1101 = vmatpush1.xpose.msra.mxu0 %v1096
    %1102 = vmatprep.subr.mxu0 0.0
    %1103 = vmatpush1.xpose.msra.mxu0 0.0
    %1104 = vmatprep.subr.mxu0 0.0
    %1105 = vmatpush1.xpose.msra.mxu0 0.0
    %1106 = vmatprep.subr.mxu0 0.0
    %1107 = vmatpush1.xpose.msra.mxu0 0.0
    %1108 = vmatprep.subr.mxu0 0.0
    %1109 = vmatpush1.xpose.msra.mxu0 0.0
    %1110 = vmatprep.subr.mxu0 0.0
    %1111 = vmatpush1.xpose.msra.mxu0 0.0
    %1112 = vmatprep.subr.mxu0 0.0
    %1113 = vmatpush1.xpose.msra.mxu0 0.0
    %1114 = vmatprep.subr.mxu0 0.0
    %1115 = vmatpush1.xpose.msra.mxu0 0.0
    %1116 = vmatprep.subr.mxu0 0.0
    %1117 = vmatpush1.xpose.msra.mxu0 0.0
    %1118 = vmatprep.subr.mxu0 0.0
    %1119 = vmatpush1.xpose.msra.mxu0 0.0
    %1120 = vmatprep.subr.mxu0 0.0
    %1121 = vmatpush1.xpose.msra.mxu0 0.0
    %1122 = vmatprep.subr.mxu0 0.0
    %1123 = vmatpush1.xpose.msra.mxu0 0.0
    %1124 = vmatprep.subr.mxu0 0.0
    %1125 = vmatpush1.xpose.msra.mxu0 0.0
    %1126 = vmatprep.subr.mxu0 0.0
    %1127 = vmatpush1.xpose.msra.mxu0 0.0
    %1128 = vmatprep.subr.mxu0 0.0
    %1129 = vmatpush1.xpose.msra.mxu0 0.0
    %1130 = vmatprep.subr.mxu0 0.0
    %1131 = vmatpush1.xpose.msra.mxu0 0.0
    %1132 = vmatprep.subr.mxu0 0.0
    %1133 = vmatpush1.xpose.msra.mxu0 0.0
    %1134 = vmatprep.subr.mxu0 0.0
    %1135 = vmatpush1.xpose.msra.mxu0 0.0
    %1136 = vmatprep.subr.mxu0 0.0
    %1137 = vmatpush1.xpose.msra.mxu0 0.0
    %1138 = vmatprep.subr.mxu0 0.0
    %1139 = vmatpush1.xpose.msra.mxu0 0.0
    %1140 = vmatprep.subr.mxu0 0.0
    %1141 = vmatpush1.xpose.msra.mxu0 0.0
    %1142 = vmatprep.subr.mxu0 0.0
    %1143 = vmatpush1.xpose.msra.mxu0 0.0
    %1144 = vmatprep.subr.mxu0 0.0
    %1145 = vmatpush1.xpose.msra.mxu0 0.0
    %1146 = vmatprep.subr.mxu0 0.0
    %1147 = vmatpush1.xpose.msra.mxu0 0.0
    %1148 = vmatprep.subr.mxu0 0.0
    %1149 = vmatpush1.xpose.msra.mxu0 0.0
    %1150 = vmatprep.subr.mxu0 0.0
    %1151 = vmatpush1.xpose.msra.mxu0 0.0
    %1152 = vmatprep.subr.mxu0 0.0
    %1153 = vmatpush1.xpose.msra.mxu0 0.0
    %1154 = vmatprep.subr.mxu0 0.0
    %1155 = vmatpush1.xpose.msra.mxu0 0.0
    %1156 = vmatprep.subr.mxu0 0.0
    %1157 = vmatpush1.xpose.msra.mxu0 0.0
    %1158 = vmatprep.subr.mxu0 0.0
    %1159 = vmatpush1.xpose.msra.mxu0 0.0
    %1160 = vmatprep.subr.mxu0 0.0
    %1161 = vmatpush1.xpose.msra.mxu0 0.0
    %1162 = vmatprep.mubr.f32.mxu0 0.0
    %1163 = vmatmul.mubr.f32.gmra.mrb[0].mxu0 %v977
    %v1164 = vpop.f32.mrb[0].mxu0
    %v1165 = vadd.f32 0.0, %v1164
    %v1166 = vpop.f32.mrb[0].mxu0
    %1167 = vmatprep.mubr.f32.mxu0 0.0
    %1168 = vmatmul.mubr.f32.gmra.mrb[0].mxu0 %v980
    %v1169 = vpop.f32.mrb[0].mxu0
    %v1170 = vadd.f32 0.0, %v1169
    %v1171 = vpop.f32.mrb[0].mxu0
    %1172 = vdwg.mxu0
    %v1173 = vsel %vm1063, %v1165, -inf
    %1174 = vmax.xlane.f32.xlu0 %v1173
    %v1175 = vpop.xlane.xlu0 %1174
    %v1176 = vsel %vm1063, %v1170, -inf
    %1177 = vmax.xlane.f32.xlu0 %v1176
    %v1178 = vpop.xlane.xlu0 %1177
    %v1179 = vsub.f32 %v1165, %v1175
    %v1180 = vsub.f32 %v1170, %v1178
    %v1181 = vmul.f32 %v1179, 1.442695
    %v1182 = vpow.pop %v1181
    %v1183 = vmul.f32 %v1180, 1.442695
    %v1184 = vpow.pop %v1183
    %v1185 = vsel %vm1063, %v1182, 0.0
    %1186 = vadd.xlane.f32.xlu0 %v1185
    %v1187 = vpop.xlane.xlu0 %1186
    %v1188 = vsel %vm1063, %v1184, 0.0
    %1189 = vadd.xlane.f32.xlu0 %v1188
    %v1190 = vpop.xlane.xlu0 %1189
    %v1191 = vrcp.pop %v1187
    %v1192 = vrcp.pop %v1190
    %v1193 = vmul.f32 %v1182, %v1191
    %v1194 = vmul.f32 %v1184, %v1192
    %v1195 = vsel %vm1089, %v964, 0.0
    %v1196 = vsel %vm1089, %v969, 0.0
    %v1198 = vsel %vm1063, %v1193, 0
    %v1201 = vsel %vm1063, %v1194, 0
    %1203 = vmatprep.subr.mxu0 0.0
    %1204 = vmatpush1.msra.mxu0 %v1195
    %1205 = vmatprep.subr.mxu0 0.0
    %1206 = vmatpush1.msra.mxu0 %v1196
    %1207 = vmatprep.subr.mxu0 0.0
    %1208 = vmatpush1.msra.mxu0 0.0
    %1209 = vmatprep.subr.mxu0 0.0
    %1210 = vmatpush1.msra.mxu0 0.0
    %1211 = vmatprep.subr.mxu0 0.0
    %1212 = vmatpush1.msra.mxu0 0.0
    %1213 = vmatprep.subr.mxu0 0.0
    %1214 = vmatpush1.msra.mxu0 0.0
    %1215 = vmatprep.subr.mxu0 0.0
    %1216 = vmatpush1.msra.mxu0 0.0
    %1217 = vmatprep.subr.mxu0 0.0
    %1218 = vmatpush1.msra.mxu0 0.0
    %1219 = vmatprep.subr.mxu0 0.0
    %1220 = vmatpush1.msra.mxu0 0.0
    %1221 = vmatprep.subr.mxu0 0.0
    %1222 = vmatpush1.msra.mxu0 0.0
    %1223 = vmatprep.subr.mxu0 0.0
    %1224 = vmatpush1.msra.mxu0 0.0
    %1225 = vmatprep.subr.mxu0 0.0
    %1226 = vmatpush1.msra.mxu0 0.0
    %1227 = vmatprep.subr.mxu0 0.0
    %1228 = vmatpush1.msra.mxu0 0.0
    %1229 = vmatprep.subr.mxu0 0.0
    %1230 = vmatpush1.msra.mxu0 0.0
    %1231 = vmatprep.subr.mxu0 0.0
    %1232 = vmatpush1.msra.mxu0 0.0
    %1233 = vmatprep.subr.mxu0 0.0
    %1234 = vmatpush1.msra.mxu0 0.0
    %1235 = vmatprep.subr.mxu0 0.0
    %1236 = vmatpush1.msra.mxu0 0.0
    %1237 = vmatprep.subr.mxu0 0.0
    %1238 = vmatpush1.msra.mxu0 0.0
    %1239 = vmatprep.subr.mxu0 0.0
    %1240 = vmatpush1.msra.mxu0 0.0
    %1241 = vmatprep.subr.mxu0 0.0
    %1242 = vmatpush1.msra.mxu0 0.0
    %1243 = vmatprep.subr.mxu0 0.0
    %1244 = vmatpush1.msra.mxu0 0.0
    %1245 = vmatprep.subr.mxu0 0.0
    %1246 = vmatpush1.msra.mxu0 0.0
    %1247 = vmatprep.subr.mxu0 0.0
    %1248 = vmatpush1.msra.mxu0 0.0
    %1249 = vmatprep.subr.mxu0 0.0
    %1250 = vmatpush1.msra.mxu0 0.0
    %1251 = vmatprep.subr.mxu0 0.0
    %1252 = vmatpush1.msra.mxu0 0.0
    %1253 = vmatprep.subr.mxu0 0.0
    %1254 = vmatpush1.msra.mxu0 0.0
    %1255 = vmatprep.subr.mxu0 0.0
    %1256 = vmatpush1.msra.mxu0 0.0
    %1257 = vmatprep.subr.mxu0 0.0
    %1258 = vmatpush1.msra.mxu0 0.0
    %1259 = vmatprep.subr.mxu0 0.0
    %1260 = vmatpush1.msra.mxu0 0.0
    %1261 = vmatprep.subr.mxu0 0.0
    %1262 = vmatpush1.msra.mxu0 0.0
    %1263 = vmatprep.subr.mxu0 0.0
    %1264 = vmatpush1.msra.mxu0 0.0
    %1265 = vmatprep.subr.mxu0 0.0
    %1266 = vmatpush1.msra.mxu0 0.0
    %1267 = vmatprep.mubr.f32.mxu0 0.0
    %1268 = vmatmul.mubr.f32.gmra.mrb[0].mxu0 %v1198
    %v1269 = vpop.f32.mrb[0].mxu0
    %v1270 = vadd.f32 0.0, %v1269
    %v1271 = vpop.f32.mrb[0].mxu0
    %1272 = vmatprep.mubr.f32.mxu0 0.0
    %1273 = vmatmul.mubr.f32.gmra.mrb[0].mxu0 %v1201
    %v1274 = vpop.f32.mrb[0].mxu0
    %v1275 = vadd.f32 0.0, %v1274
    %v1276 = vpop.f32.mrb[0].mxu0
    %1277 = vdwg.mxu0
    %v1279 = vsel %vm1063, %v1084, 0
    %v1282 = vsel %vm1063, %v1085, 0
    %1284 = vmatprep.subr.mxu0 0.0
    %1285 = vmatpush1.msra.mxu0 %v1086
    %1286 = vmatprep.subr.mxu0 0.0
    %1287 = vmatpush1.msra.mxu0 %v1087
    %1288 = vmatprep.subr.mxu0 0.0
    %1289 = vmatpush1.msra.mxu0 0.0
    %1290 = vmatprep.subr.mxu0 0.0
    %1291 = vmatpush1.msra.mxu0 0.0
    %1292 = vmatprep.subr.mxu0 0.0
    %1293 = vmatpush1.msra.mxu0 0.0
    %1294 = vmatprep.subr.mxu0 0.0
    %1295 = vmatpush1.msra.mxu0 0.0
    %1296 = vmatprep.subr.mxu0 0.0
    %1297 = vmatpush1.msra.mxu0 0.0
    %1298 = vmatprep.subr.mxu0 0.0
    %1299 = vmatpush1.msra.mxu0 0.0
    %1300 = vmatprep.subr.mxu0 0.0
    %1301 = vmatpush1.msra.mxu0 0.0
    %1302 = vmatprep.subr.mxu0 0.0
    %1303 = vmatpush1.msra.mxu0 0.0
    %1304 = vmatprep.subr.mxu0 0.0
    %1305 = vmatpush1.msra.mxu0 0.0
    %1306 = vmatprep.subr.mxu0 0.0
    %1307 = vmatpush1.msra.mxu0 0.0
    %1308 = vmatprep.subr.mxu0 0.0
    %1309 = vmatpush1.msra.mxu0 0.0
    %1310 = vmatprep.subr.mxu0 0.0
    %1311 = vmatpush1.msra.mxu0 0.0
    %1312 = vmatprep.subr.mxu0 0.0
    %1313 = vmatpush1.msra.mxu0 0.0
    %1314 = vmatprep.subr.mxu0 0.0
    %1315 = vmatpush1.msra.mxu0 0.0
    %1316 = vmatprep.subr.mxu0 0.0
    %1317 = vmatpush1.msra.mxu0 0.0
    %1318 = vmatprep.subr.mxu0 0.0
    %1319 = vmatpush1.msra.mxu0 0.0
    %1320 = vmatprep.subr.mxu0 0.0
    %1321 = vmatpush1.msra.mxu0 0.0
    %1322 = vmatprep.subr.mxu0 0.0
    %1323 = vmatpush1.msra.mxu0 0.0
    %1324 = vmatprep.subr.mxu0 0.0
    %1325 = vmatpush1.msra.mxu0 0.0
    %1326 = vmatprep.subr.mxu0 0.0
    %1327 = vmatpush1.msra.mxu0 0.0
    %1328 = vmatprep.subr.mxu0 0.0
    %1329 = vmatpush1.msra.mxu0 0.0
    %1330 = vmatprep.subr.mxu0 0.0
    %1331 = vmatpush1.msra.mxu0 0.0
    %1332 = vmatprep.subr.mxu0 0.0
    %1333 = vmatpush1.msra.mxu0 0.0
    %1334 = vmatprep.subr.mxu0 0.0
    %1335 = vmatpush1.msra.mxu0 0.0
    %1336 = vmatprep.subr.mxu0 0.0
    %1337 = vmatpush1.msra.mxu0 0.0
    %1338 = vmatprep.subr.mxu0 0.0
    %1339 = vmatpush1.msra.mxu0 0.0
    %1340 = vmatprep.subr.mxu0 0.0
    %1341 = vmatpush1.msra.mxu0 0.0
    %1342 = vmatprep.subr.mxu0 0.0
    %1343 = vmatpush1.msra.mxu0 0.0
    %1344 = vmatprep.subr.mxu0 0.0
    %1345 = vmatpush1.msra.mxu0 0.0
    %1346 = vmatprep.subr.mxu0 0.0
    %1347 = vmatpush1.msra.mxu0 0.0
    %1348 = vmatprep.mubr.f32.mxu0 0.0
    %1349 = vmatmul.mubr.f32.gmra.mrb[0].mxu0 %v1279
    %v1350 = vpop.f32.mrb[0].mxu0
    %v1351 = vadd.f32 %v1270, %v1350
    %v1352 = vpop.f32.mrb[0].mxu0
    %1353 = vmatprep.mubr.f32.mxu0 0.0
    %1354 = vmatmul.mubr.f32.gmra.mrb[0].mxu0 %v1282
    %v1355 = vpop.f32.mrb[0].mxu0
    %v1356 = vadd.f32 %v1275, %v1355
    %v1357 = vpop.f32.mrb[0].mxu0
    %1358 = vdwg.mxu0
    %v1359 = vsel %vm296, 1, 0
    %vm1360 = vcmp.eq.s32.totalorder %v1359, 1
    %v1361 = vsel %vm1360, %v835, 0.0
    %v1362 = vsel %vm1360, %v840, 0.0
    %v1364 = vsel %vm393, %v1361, 0
    %v1367 = vsel %vm393, %v1362, 0
    %1369 = vmatprep.subr.mxu0 0.0
    %1370 = vmatpush1.xpose.msra.mxu0 %v1364
    %1371 = vmatprep.subr.mxu0 0.0
    %1372 = vmatpush1.xpose.msra.mxu0 %v1367
    %1373 = vmatprep.subr.mxu0 0.0
    %1374 = vmatpush1.xpose.msra.mxu0 0.0
    %1375 = vmatprep.subr.mxu0 0.0
    %1376 = vmatpush1.xpose.msra.mxu0 0.0
    %1377 = vmatprep.subr.mxu0 0.0
    %1378 = vmatpush1.xpose.msra.mxu0 0.0
    %1379 = vmatprep.subr.mxu0 0.0
    %1380 = vmatpush1.xpose.msra.mxu0 0.0
    %1381 = vmatprep.subr.mxu0 0.0
    %1382 = vmatpush1.xpose.msra.mxu0 0.0
    %1383 = vmatprep.subr.mxu0 0.0
    %1384 = vmatpush1.xpose.msra.mxu0 0.0
    %1385 = vmatprep.subr.mxu0 0.0
    %1386 = vmatpush1.xpose.msra.mxu0 0.0
    %1387 = vmatprep.subr.mxu0 0.0
    %1388 = vmatpush1.xpose.msra.mxu0 0.0
    %1389 = vmatprep.subr.mxu0 0.0
    %1390 = vmatpush1.xpose.msra.mxu0 0.0
    %1391 = vmatprep.subr.mxu0 0.0
    %1392 = vmatpush1.xpose.msra.mxu0 0.0
    %1393 = vmatprep.subr.mxu0 0.0
    %1394 = vmatpush1.xpose.msra.mxu0 0.0
    %1395 = vmatprep.subr.mxu0 0.0
    %1396 = vmatpush1.xpose.msra.mxu0 0.0
    %1397 = vmatprep.subr.mxu0 0.0
    %1398 = vmatpush1.xpose.msra.mxu0 0.0
    %1399 = vmatprep.subr.mxu0 0.0
    %1400 = vmatpush1.xpose.msra.mxu0 0.0
    %1401 = vmatprep.subr.mxu0 0.0
    %1402 = vmatpush1.xpose.msra.mxu0 0.0
    %1403 = vmatprep.subr.mxu0 0.0
    %1404 = vmatpush1.xpose.msra.mxu0 0.0
    %1405 = vmatprep.subr.mxu0 0.0
    %1406 = vmatpush1.xpose.msra.mxu0 0.0
    %1407 = vmatprep.subr.mxu0 0.0
    %1408 = vmatpush1.xpose.msra.mxu0 0.0
    %1409 = vmatprep.subr.mxu0 0.0
    %1410 = vmatpush1.xpose.msra.mxu0 0.0
    %1411 = vmatprep.subr.mxu0 0.0
    %1412 = vmatpush1.xpose.msra.mxu0 0.0
    %1413 = vmatprep.subr.mxu0 0.0
    %1414 = vmatpush1.xpose.msra.mxu0 0.0
    %1415 = vmatprep.subr.mxu0 0.0
    %1416 = vmatpush1.xpose.msra.mxu0 0.0
    %1417 = vmatprep.subr.mxu0 0.0
    %1418 = vmatpush1.xpose.msra.mxu0 0.0
    %1419 = vmatprep.subr.mxu0 0.0
    %1420 = vmatpush1.xpose.msra.mxu0 0.0
    %1421 = vmatprep.subr.mxu0 0.0
    %1422 = vmatpush1.xpose.msra.mxu0 0.0
    %1423 = vmatprep.subr.mxu0 0.0
    %1424 = vmatpush1.xpose.msra.mxu0 0.0
    %1425 = vmatprep.subr.mxu0 0.0
    %1426 = vmatpush1.xpose.msra.mxu0 0.0
    %1427 = vmatprep.subr.mxu0 0.0
    %1428 = vmatpush1.xpose.msra.mxu0 0.0
    %1429 = vmatprep.subr.mxu0 0.0
    %1430 = vmatpush1.xpose.msra.mxu0 0.0
    %1431 = vmatprep.subr.mxu0 0.0
    %1432 = vmatpush1.xpose.msra.mxu0 0.0
    %1433 = vmatprep.mubr.f32.mxu0 0.0
    %1434 = vmatmul.mubr.f32.gmra.mrb[0].mxu0 %v977
    %v1435 = vpop.f32.mrb[0].mxu0
    %v1436 = vadd.f32 0.0, %v1435
    %v1437 = vpop.f32.mrb[0].mxu0
    %1438 = vmatprep.mubr.f32.mxu0 0.0
    %1439 = vmatmul.mubr.f32.gmra.mrb[0].mxu0 %v980
    %v1440 = vpop.f32.mrb[0].mxu0
    %v1441 = vadd.f32 0.0, %v1440
    %v1442 = vpop.f32.mrb[0].mxu0
    %1443 = vdwg.mxu0
    %v1444 = vsel %vm1063, %v1436, -inf
    %1445 = vmax.xlane.f32.xlu0 %v1444
    %v1446 = vpop.xlane.xlu0 %1445
    %v1447 = vsel %vm1063, %v1441, -inf
    %1448 = vmax.xlane.f32.xlu0 %v1447
    %v1449 = vpop.xlane.xlu0 %1448
    %v1450 = vsub.f32 %v1436, %v1446
    %v1451 = vsub.f32 %v1441, %v1449
    %v1452 = vmul.f32 %v1450, 1.442695
    %v1453 = vpow.pop %v1452
    %v1454 = vmul.f32 %v1451, 1.442695
    %v1455 = vpow.pop %v1454
    %v1456 = vsel %vm1063, %v1453, 0.0
    %1457 = vadd.xlane.f32.xlu0 %v1456
    %v1458 = vpop.xlane.xlu0 %1457
    %v1459 = vsel %vm1063, %v1455, 0.0
    %1460 = vadd.xlane.f32.xlu0 %v1459
    %v1461 = vpop.xlane.xlu0 %1460
    %v1462 = vrcp.pop %v1458
    %v1463 = vrcp.pop %v1461
    %v1464 = vmul.f32 %v1453, %v1462
    %v1465 = vmul.f32 %v1455, %v1463
    %v1466 = vsel %vm1360, %v964, 0.0
    %v1467 = vsel %vm1360, %v969, 0.0
    %v1469 = vsel %vm1063, %v1464, 0
    %v1472 = vsel %vm1063, %v1465, 0
    %1474 = vmatprep.subr.mxu0 0.0
    %1475 = vmatpush1.msra.mxu0 %v1466
    %1476 = vmatprep.subr.mxu0 0.0
    %1477 = vmatpush1.msra.mxu0 %v1467
    %1478 = vmatprep.subr.mxu0 0.0
    %1479 = vmatpush1.msra.mxu0 0.0
    %1480 = vmatprep.subr.mxu0 0.0
    %1481 = vmatpush1.msra.mxu0 0.0
    %1482 = vmatprep.subr.mxu0 0.0
    %1483 = vmatpush1.msra.mxu0 0.0
    %1484 = vmatprep.subr.mxu0 0.0
    %1485 = vmatpush1.msra.mxu0 0.0
    %1486 = vmatprep.subr.mxu0 0.0
    %1487 = vmatpush1.msra.mxu0 0.0
    %1488 = vmatprep.subr.mxu0 0.0
    %1489 = vmatpush1.msra.mxu0 0.0
    %1490 = vmatprep.subr.mxu0 0.0
    %1491 = vmatpush1.msra.mxu0 0.0
    %1492 = vmatprep.subr.mxu0 0.0
    %1493 = vmatpush1.msra.mxu0 0.0
    %1494 = vmatprep.subr.mxu0 0.0
    %1495 = vmatpush1.msra.mxu0 0.0
    %1496 = vmatprep.subr.mxu0 0.0
    %1497 = vmatpush1.msra.mxu0 0.0
    %1498 = vmatprep.subr.mxu0 0.0
    %1499 = vmatpush1.msra.mxu0 0.0
    %1500 = vmatprep.subr.mxu0 0.0
    %1501 = vmatpush1.msra.mxu0 0.0
    %1502 = vmatprep.subr.mxu0 0.0
    %1503 = vmatpush1.msra.mxu0 0.0
    %1504 = vmatprep.subr.mxu0 0.0
    %1505 = vmatpush1.msra.mxu0 0.0
    %1506 = vmatprep.subr.mxu0 0.0
    %1507 = vmatpush1.msra.mxu0 0.0
    %1508 = vmatprep.subr.mxu0 0.0
    %1509 = vmatpush1.msra.mxu0 0.0
    %1510 = vmatprep.subr.mxu0 0.0
    %1511 = vmatpush1.msra.mxu0 0.0
    %1512 = vmatprep.subr.mxu0 0.0
    %1513 = vmatpush1.msra.mxu0 0.0
    %1514 = vmatprep.subr.mxu0 0.0
    %1515 = vmatpush1.msra.mxu0 0.0
    %1516 = vmatprep.subr.mxu0 0.0
    %1517 = vmatpush1.msra.mxu0 0.0
    %1518 = vmatprep.subr.mxu0 0.0
    %1519 = vmatpush1.msra.mxu0 0.0
    %1520 = vmatprep.subr.mxu0 0.0
    %1521 = vmatpush1.msra.mxu0 0.0
    %1522 = vmatprep.subr.mxu0 0.0
    %1523 = vmatpush1.msra.mxu0 0.0
    %1524 = vmatprep.subr.mxu0 0.0
    %1525 = vmatpush1.msra.mxu0 0.0
    %1526 = vmatprep.subr.mxu0 0.0
    %1527 = vmatpush1.msra.mxu0 0.0
    %1528 = vmatprep.subr.mxu0 0.0
    %1529 = vmatpush1.msra.mxu0 0.0
    %1530 = vmatprep.subr.mxu0 0.0
    %1531 = vmatpush1.msra.mxu0 0.0
    %1532 = vmatprep.subr.mxu0 0.0
    %1533 = vmatpush1.msra.mxu0 0.0
    %1534 = vmatprep.subr.mxu0 0.0
    %1535 = vmatpush1.msra.mxu0 0.0
    %1536 = vmatprep.subr.mxu0 0.0
    %1537 = vmatpush1.msra.mxu0 0.0
    %1538 = vmatprep.mubr.f32.mxu0 0.0
    %1539 = vmatmul.mubr.f32.gmra.mrb[0].mxu0 %v1469
    %v1540 = vpop.f32.mrb[0].mxu0
    %v1541 = vadd.f32 0.0, %v1540
    %v1542 = vpop.f32.mrb[0].mxu0
    %1543 = vmatprep.mubr.f32.mxu0 0.0
    %1544 = vmatmul.mubr.f32.gmra.mrb[0].mxu0 %v1472
    %v1545 = vpop.f32.mrb[0].mxu0
    %v1546 = vadd.f32 0.0, %v1545
    %v1547 = vpop.f32.mrb[0].mxu0
    %1548 = vdwg.mxu0
    %v1549 = vadd.f32 %v1351, %v1541
    %v1550 = vadd.f32 %v1356, %v1546
    %v1551 = vsel %vm299, 1, 0
    %vm1552 = vcmp.eq.s32.totalorder %v1551, 1
    %v1553 = vsel %vm1552, %v835, 0.0
    %v1554 = vsel %vm1552, %v840, 0.0
    %v1556 = vsel %vm393, %v1553, 0
    %v1559 = vsel %vm393, %v1554, 0
    %1561 = vmatprep.subr.mxu0 0.0
    %1562 = vmatpush1.xpose.msra.mxu0 %v1556
    %1563 = vmatprep.subr.mxu0 0.0
    %1564 = vmatpush1.xpose.msra.mxu0 %v1559
    %1565 = vmatprep.subr.mxu0 0.0
    %1566 = vmatpush1.xpose.msra.mxu0 0.0
    %1567 = vmatprep.subr.mxu0 0.0
    %1568 = vmatpush1.xpose.msra.mxu0 0.0
    %1569 = vmatprep.subr.mxu0 0.0
    %1570 = vmatpush1.xpose.msra.mxu0 0.0
    %1571 = vmatprep.subr.mxu0 0.0
    %1572 = vmatpush1.xpose.msra.mxu0 0.0
    %1573 = vmatprep.subr.mxu0 0.0
    %1574 = vmatpush1.xpose.msra.mxu0 0.0
    %1575 = vmatprep.subr.mxu0 0.0
    %1576 = vmatpush1.xpose.msra.mxu0 0.0
    %1577 = vmatprep.subr.mxu0 0.0
    %1578 = vmatpush1.xpose.msra.mxu0 0.0
    %1579 = vmatprep.subr.mxu0 0.0
    %1580 = vmatpush1.xpose.msra.mxu0 0.0
    %1581 = vmatprep.subr.mxu0 0.0
    %1582 = vmatpush1.xpose.msra.mxu0 0.0
    %1583 = vmatprep.subr.mxu0 0.0
    %1584 = vmatpush1.xpose.msra.mxu0 0.0
    %1585 = vmatprep.subr.mxu0 0.0
    %1586 = vmatpush1.xpose.msra.mxu0 0.0
    %1587 = vmatprep.subr.mxu0 0.0
    %1588 = vmatpush1.xpose.msra.mxu0 0.0
    %1589 = vmatprep.subr.mxu0 0.0
    %1590 = vmatpush1.xpose.msra.mxu0 0.0
    %1591 = vmatprep.subr.mxu0 0.0
    %1592 = vmatpush1.xpose.msra.mxu0 0.0
    %1593 = vmatprep.subr.mxu0 0.0
    %1594 = vmatpush1.xpose.msra.mxu0 0.0
    %1595 = vmatprep.subr.mxu0 0.0
    %1596 = vmatpush1.xpose.msra.mxu0 0.0
    %1597 = vmatprep.subr.mxu0 0.0
    %1598 = vmatpush1.xpose.msra.mxu0 0.0
    %1599 = vmatprep.subr.mxu0 0.0
    %1600 = vmatpush1.xpose.msra.mxu0 0.0
    %1601 = vmatprep.subr.mxu0 0.0
    %1602 = vmatpush1.xpose.msra.mxu0 0.0
    %1603 = vmatprep.subr.mxu0 0.0
    %1604 = vmatpush1.xpose.msra.mxu0 0.0
    %1605 = vmatprep.subr.mxu0 0.0
    %1606 = vmatpush1.xpose.msra.mxu0 0.0
    %1607 = vmatprep.subr.mxu0 0.0
    %1608 = vmatpush1.xpose.msra.mxu0 0.0
    %1609 = vmatprep.subr.mxu0 0.0
    %1610 = vmatpush1.xpose.msra.mxu0 0.0
    %1611 = vmatprep.subr.mxu0 0.0
    %1612 = vmatpush1.xpose.msra.mxu0 0.0
    %1613 = vmatprep.subr.mxu0 0.0
    %1614 = vmatpush1.xpose.msra.mxu0 0.0
    %1615 = vmatprep.subr.mxu0 0.0
    %1616 = vmatpush1.xpose.msra.mxu0 0.0
    %1617 = vmatprep.subr.mxu0 0.0
    %1618 = vmatpush1.xpose.msra.mxu0 0.0
    %1619 = vmatprep.subr.mxu0 0.0
    %1620 = vmatpush1.xpose.msra.mxu0 0.0
    %1621 = vmatprep.subr.mxu0 0.0
    %1622 = vmatpush1.xpose.msra.mxu0 0.0
    %1623 = vmatprep.subr.mxu0 0.0
    %1624 = vmatpush1.xpose.msra.mxu0 0.0
    %1625 = vmatprep.mubr.f32.mxu0 0.0
    %1626 = vmatmul.mubr.f32.gmra.mrb[0].mxu0 %v977
    %v1627 = vpop.f32.mrb[0].mxu0
    %v1628 = vadd.f32 0.0, %v1627
    %v1629 = vpop.f32.mrb[0].mxu0
    %1630 = vmatprep.mubr.f32.mxu0 0.0
    %1631 = vmatmul.mubr.f32.gmra.mrb[0].mxu0 %v980
    %v1632 = vpop.f32.mrb[0].mxu0
    %v1633 = vadd.f32 0.0, %v1632
    %v1634 = vpop.f32.mrb[0].mxu0
    %1635 = vdwg.mxu0
    %v1636 = vsel %vm1063, %v1628, -inf
    %1637 = vmax.xlane.f32.xlu0 %v1636
    %v1638 = vpop.xlane.xlu0 %1637
    %v1639 = vsel %vm1063, %v1633, -inf
    %1640 = vmax.xlane.f32.xlu0 %v1639
    %v1641 = vpop.xlane.xlu0 %1640
    %v1642 = vsub.f32 %v1628, %v1638
    %v1643 = vsub.f32 %v1633, %v1641
    %v1644 = vmul.f32 %v1642, 1.442695
    %v1645 = vpow.pop %v1644
    %v1646 = vmul.f32 %v1643, 1.442695
    %v1647 = vpow.pop %v1646
    %v1648 = vsel %vm1063, %v1645, 0.0
    %1649 = vadd.xlane.f32.xlu0 %v1648
    %v1650 = vpop.xlane.xlu0 %1649
    %v1651 = vsel %vm1063, %v1647, 0.0
    %1652 = vadd.xlane.f32.xlu0 %v1651
    %v1653 = vpop.xlane.xlu0 %1652
    %v1654 = vrcp.pop %v1650
    %v1655 = vrcp.pop %v1653
    %v1656 = vmul.f32 %v1645, %v1654
    %v1657 = vmul.f32 %v1647, %v1655
    %v1658 = vsel %vm1552, %v964, 0.0
    %v1659 = vsel %vm1552, %v969, 0.0
    %v1661 = vsel %vm1063, %v1656, 0
    %v1664 = vsel %vm1063, %v1657, 0
    %1666 = vmatprep.subr.mxu0 0.0
    %1667 = vmatpush1.msra.mxu0 %v1658
    %1668 = vmatprep.subr.mxu0 0.0
    %1669 = vmatpush1.msra.mxu0 %v1659
    %1670 = vmatprep.subr.mxu0 0.0
    %1671 = vmatpush1.msra.mxu0 0.0
    %1672 = vmatprep.subr.mxu0 0.0
    %1673 = vmatpush1.msra.mxu0 0.0
    %1674 = vmatprep.subr.mxu0 0.0
    %1675 = vmatpush1.msra.mxu0 0.0
    %1676 = vmatprep.subr.mxu0 0.0
    %1677 = vmatpush1.msra.mxu0 0.0
    %1678 = vmatprep.subr.mxu0 0.0
    %1679 = vmatpush1.msra.mxu0 0.0
    %1680 = vmatprep.subr.mxu0 0.0
    %1681 = vmatpush1.msra.mxu0 0.0
    %1682 = vmatprep.subr.mxu0 0.0
    %1683 = vmatpush1.msra.mxu0 0.0
    %1684 = vmatprep.subr.mxu0 0.0
    %1685 = vmatpush1.msra.mxu0 0.0
    %1686 = vmatprep.subr.mxu0 0.0
    %1687 = vmatpush1.msra.mxu0 0.0
    %1688 = vmatprep.subr.mxu0 0.0
    %1689 = vmatpush1.msra.mxu0 0.0
    %1690 = vmatprep.subr.mxu0 0.0
    %1691 = vmatpush1.msra.mxu0 0.0
    %1692 = vmatprep.subr.mxu0 0.0
    %1693 = vmatpush1.msra.mxu0 0.0
    %1694 = vmatprep.subr.mxu0 0.0
    %1695 = vmatpush1.msra.mxu0 0.0
    %1696 = vmatprep.subr.mxu0 0.0
    %1697 = vmatpush1.msra.mxu0 0.0
    %1698 = vmatprep.subr.mxu0 0.0
    %1699 = vmatpush1.msra.mxu0 0.0
    %1700 = vmatprep.subr.mxu0 0.0
    %1701 = vmatpush1.msra.mxu0 0.0
    %1702 = vmatprep.subr.mxu0 0.0
    %1703 = vmatpush1.msra.mxu0 0.0
    %1704 = vmatprep.subr.mxu0 0.0
    %1705 = vmatpush1.msra.mxu0 0.0
    %1706 = vmatprep.subr.mxu0 0.0
    %1707 = vmatpush1.msra.mxu0 0.0
    %1708 = vmatprep.subr.mxu0 0.0
    %1709 = vmatpush1.msra.mxu0 0.0
    %1710 = vmatprep.subr.mxu0 0.0
    %1711 = vmatpush1.msra.mxu0 0.0
    %1712 = vmatprep.subr.mxu0 0.0
    %1713 = vmatpush1.msra.mxu0 0.0
    %1714 = vmatprep.subr.mxu0 0.0
    %1715 = vmatpush1.msra.mxu0 0.0
    %1716 = vmatprep.subr.mxu0 0.0
    %1717 = vmatpush1.msra.mxu0 0.0
    %1718 = vmatprep.subr.mxu0 0.0
    %1719 = vmatpush1.msra.mxu0 0.0
    %1720 = vmatprep.subr.mxu0 0.0
    %1721 = vmatpush1.msra.mxu0 0.0
    %1722 = vmatprep.subr.mxu0 0.0
    %1723 = vmatpush1.msra.mxu0 0.0
    %1724 = vmatprep.subr.mxu0 0.0
    %1725 = vmatpush1.msra.mxu0 0.0
    %1726 = vmatprep.subr.mxu0 0.0
    %1727 = vmatpush1.msra.mxu0 0.0
    %1728 = vmatprep.subr.mxu0 0.0
    %1729 = vmatpush1.msra.mxu0 0.0
    %1730 = vmatprep.mubr.f32.mxu0 0.0
    %1731 = vmatmul.mubr.f32.gmra.mrb[0].mxu0 %v1661
    %v1732 = vpop.f32.mrb[0].mxu0
    %v1733 = vadd.f32 0.0, %v1732
    %v1734 = vpop.f32.mrb[0].mxu0
    %1735 = vmatprep.mubr.f32.mxu0 0.0
    %1736 = vmatmul.mubr.f32.gmra.mrb[0].mxu0 %v1664
    %v1737 = vpop.f32.mrb[0].mxu0
    %v1738 = vadd.f32 0.0, %v1737
    %v1739 = vpop.f32.mrb[0].mxu0
    %1740 = vdwg.mxu0
    %v1741 = vadd.f32 %v1549, %v1733
    %v1742 = vadd.f32 %v1550, %v1738
    %v1744 = vlaneseq
    %v1745 = vshrl.u32 %v1744, 7
    %v1746 = vsub.s32 0, %v1745
    %v1747 = vrot.slane %v155, %v1746
    %v1750 = vsel %vm393, %v1741, 0
    %v1753 = vsel %vm393, %v1742, 0
    %1755 = vmatprep.subr.mxu0 0.0
    %1756 = vmatpush1.msra.mxu0 %v151
    %1757 = vmatprep.subr.mxu0 0.0
    %1758 = vmatpush1.msra.mxu0 %v152
    %1759 = vmatprep.subr.mxu0 0.0
    %1760 = vmatpush1.msra.mxu0 %v153
    %1761 = vmatprep.subr.mxu0 0.0
    %1762 = vmatpush1.msra.mxu0 %v154
    %1763 = vmatprep.subr.mxu0 0.0
    %1764 = vmatpush1.msra.mxu0 0.0
    %1765 = vmatprep.subr.mxu0 0.0
    %1766 = vmatpush1.msra.mxu0 0.0
    %1767 = vmatprep.subr.mxu0 0.0
    %1768 = vmatpush1.msra.mxu0 0.0
    %1769 = vmatprep.subr.mxu0 0.0
    %1770 = vmatpush1.msra.mxu0 0.0
    %1771 = vmatprep.subr.mxu0 0.0
    %1772 = vmatpush1.msra.mxu0 0.0
    %1773 = vmatprep.subr.mxu0 0.0
    %1774 = vmatpush1.msra.mxu0 0.0
    %1775 = vmatprep.subr.mxu0 0.0
    %1776 = vmatpush1.msra.mxu0 0.0
    %1777 = vmatprep.subr.mxu0 0.0
    %1778 = vmatpush1.msra.mxu0 0.0
    %1779 = vmatprep.subr.mxu0 0.0
    %1780 = vmatpush1.msra.mxu0 0.0
    %1781 = vmatprep.subr.mxu0 0.0
    %1782 = vmatpush1.msra.mxu0 0.0
    %1783 = vmatprep.subr.mxu0 0.0
    %1784 = vmatpush1.msra.mxu0 0.0
    %1785 = vmatprep.subr.mxu0 0.0
    %1786 = vmatpush1.msra.mxu0 0.0
    %1787 = vmatprep.subr.mxu0 0.0
    %1788 = vmatpush1.msra.mxu0 0.0
    %1789 = vmatprep.subr.mxu0 0.0
    %1790 = vmatpush1.msra.mxu0 0.0
    %1791 = vmatprep.subr.mxu0 0.0
    %1792 = vmatpush1.msra.mxu0 0.0
    %1793 = vmatprep.subr.mxu0 0.0
    %1794 = vmatpush1.msra.mxu0 0.0
    %1795 = vmatprep.subr.mxu0 0.0
    %1796 = vmatpush1.msra.mxu0 0.0
    %1797 = vmatprep.subr.mxu0 0.0
    %1798 = vmatpush1.msra.mxu0 0.0
    %1799 = vmatprep.subr.mxu0 0.0
    %1800 = vmatpush1.msra.mxu0 0.0
    %1801 = vmatprep.subr.mxu0 0.0
    %1802 = vmatpush1.msra.mxu0 0.0
    %1803 = vmatprep.subr.mxu0 0.0
    %1804 = vmatpush1.msra.mxu0 0.0
    %1805 = vmatprep.subr.mxu0 0.0
    %1806 = vmatpush1.msra.mxu0 0.0
    %1807 = vmatprep.subr.mxu0 0.0
    %1808 = vmatpush1.msra.mxu0 0.0
    %1809 = vmatprep.subr.mxu0 0.0
    %1810 = vmatpush1.msra.mxu0 0.0
    %1811 = vmatprep.subr.mxu0 0.0
    %1812 = vmatpush1.msra.mxu0 0.0
    %1813 = vmatprep.subr.mxu0 0.0
    %1814 = vmatpush1.msra.mxu0 0.0
    %1815 = vmatprep.subr.mxu0 0.0
    %1816 = vmatpush1.msra.mxu0 0.0
    %1817 = vmatprep.subr.mxu0 0.0
    %1818 = vmatpush1.msra.mxu0 0.0
    %1819 = vmatprep.mubr.f32.mxu0 0.0
    %1820 = vmatmul.mubr.f32.gmra.mrb[0].mxu0 %v1750
    %v1821 = vpop.f32.mrb[0].mxu0
    %v1822 = vadd.f32 %v1747, %v1821
    %v1823 = vpop.f32.mrb[0].mxu0
    %1824 = vmatprep.mubr.f32.mxu0 0.0
    %1825 = vmatmul.mubr.f32.gmra.mrb[0].mxu0 %v1753
    %v1826 = vpop.f32.mrb[0].mxu0
    %v1827 = vadd.f32 %v1747, %v1826
    %v1828 = vpop.f32.mrb[0].mxu0
    %1829 = vdwg.mxu0
    %v1832 = vrot.slane %v1822, 1
    %v1833 = vrot.slane %v1822, 2
    %v1834 = vrot.slane %v1822, 3
    %v1835 = vrot.slane %v1822, 4
    %v1836 = vrot.slane %v1822, 5
    %v1837 = vrot.slane %v1822, 6
    %v1838 = vrot.slane %v1822, 7
    %v1839 = vrot.slane %v1827, 1
    %v1840 = vrot.slane %v1827, 2
    %v1841 = vrot.slane %v1827, 3
    %v1842 = vrot.slane %v1827, 4
    %v1843 = vrot.slane %v1827, 5
    %v1844 = vrot.slane %v1827, 6
    %v1845 = vrot.slane %v1827, 7
    %v1862 = vadd.f32 %v300, %v1822
    %v1863 = vadd.f32 %v301, %v1832
    %v1864 = vadd.f32 %v302, %v1833
    %v1865 = vadd.f32 %v303, %v1834
    %v1866 = vadd.f32 %v304, %v1835
    %v1867 = vadd.f32 %v305, %v1836
    %v1868 = vadd.f32 %v306, %v1837
    %v1869 = vadd.f32 %v307, %v1838
    %v1870 = vadd.f32 %v308, %v1827
    %v1871 = vadd.f32 %v309, %v1839
    %v1872 = vadd.f32 %v310, %v1840
    %v1873 = vadd.f32 %v311, %v1841
    %v1874 = vadd.f32 %v312, %v1842
    %v1875 = vadd.f32 %v313, %v1843
    %v1876 = vadd.f32 %v314, %v1844
    %v1877 = vadd.f32 %v315, %v1845
    %v1894 = vrot.slane %v1863, 7
    %v1895 = vsel %vm357, %v1894, %v1862
    %v1896 = vrot.slane %v1864, 6
    %v1897 = vsel %vm360, %v1896, %v1895
    %v1898 = vrot.slane %v1865, 5
    %v1899 = vsel %vm363, %v1898, %v1897
    %v1900 = vrot.slane %v1866, 4
    %v1901 = vsel %vm366, %v1900, %v1899
    %v1902 = vrot.slane %v1867, 3
    %v1903 = vsel %vm369, %v1902, %v1901
    %v1904 = vrot.slane %v1868, 2
    %v1905 = vsel %vm372, %v1904, %v1903
    %v1906 = vrot.slane %v1869, 1
    %v1907 = vsel %vm375, %v1906, %v1905
    %v1908 = vrot.slane %v1871, 7
    %v1909 = vsel %vm357, %v1908, %v1870
    %v1910 = vrot.slane %v1872, 6
    %v1911 = vsel %vm360, %v1910, %v1909
    %v1912 = vrot.slane %v1873, 5
    %v1913 = vsel %vm363, %v1912, %v1911
    %v1914 = vrot.slane %v1874, 4
    %v1915 = vsel %vm366, %v1914, %v1913
    %v1916 = vrot.slane %v1875, 3
    %v1917 = vsel %vm369, %v1916, %v1915
    %v1918 = vrot.slane %v1876, 2
    %v1919 = vsel %vm372, %v1918, %v1917
    %v1920 = vrot.slane %v1877, 1
    %v1921 = vsel %vm375, %v1920, %v1919
    %v1924 = vsel %vm393, %v1907, 0.0
    %1925 = vadd.xlane.f32.xlu0 %v1924
    %v1926 = vpop.xlane.xlu0 %1925
    %v1927 = vsel %vm393, %v1921, 0.0
    %1928 = vadd.xlane.f32.xlu0 %v1927
    %v1929 = vpop.xlane.xlu0 %1928
    %v1930 = vmul.f32 %v1926, %v400
    %v1931 = vmul.f32 %v1929, %v400
    %v1934 = vrot.slane %v1930, 1
    %v1935 = vrot.slane %v1930, 2
    %v1936 = vrot.slane %v1930, 3
    %v1937 = vrot.slane %v1930, 4
    %v1938 = vrot.slane %v1930, 5
    %v1939 = vrot.slane %v1930, 6
    %v1940 = vrot.slane %v1930, 7
    %v1941 = vrot.slane %v1931, 1
    %v1942 = vrot.slane %v1931, 2
    %v1943 = vrot.slane %v1931, 3
    %v1944 = vrot.slane %v1931, 4
    %v1945 = vrot.slane %v1931, 5
    %v1946 = vrot.slane %v1931, 6
    %v1947 = vrot.slane %v1931, 7
    %v1964 = vsub.f32 %v1862, %v1930
    %v1965 = vsub.f32 %v1863, %v1934
    %v1966 = vsub.f32 %v1864, %v1935
    %v1967 = vsub.f32 %v1865, %v1936
    %v1968 = vsub.f32 %v1866, %v1937
    %v1969 = vsub.f32 %v1867, %v1938
    %v1970 = vsub.f32 %v1868, %v1939
    %v1971 = vsub.f32 %v1869, %v1940
    %v1972 = vsub.f32 %v1870, %v1931
    %v1973 = vsub.f32 %v1871, %v1941
    %v1974 = vsub.f32 %v1872, %v1942
    %v1975 = vsub.f32 %v1873, %v1943
    %v1976 = vsub.f32 %v1874, %v1944
    %v1977 = vsub.f32 %v1875, %v1945
    %v1978 = vsub.f32 %v1876, %v1946
    %v1979 = vsub.f32 %v1877, %v1947
    %v1980 = vmul.f32 %v1964, %v1964
    %v1981 = vmul.f32 %v1965, %v1965
    %v1982 = vmul.f32 %v1966, %v1966
    %v1983 = vmul.f32 %v1967, %v1967
    %v1984 = vmul.f32 %v1968, %v1968
    %v1985 = vmul.f32 %v1969, %v1969
    %v1986 = vmul.f32 %v1970, %v1970
    %v1987 = vmul.f32 %v1971, %v1971
    %v1988 = vmul.f32 %v1972, %v1972
    %v1989 = vmul.f32 %v1973, %v1973
    %v1990 = vmul.f32 %v1974, %v1974
    %v1991 = vmul.f32 %v1975, %v1975
    %v1992 = vmul.f32 %v1976, %v1976
    %v1993 = vmul.f32 %v1977, %v1977
    %v1994 = vmul.f32 %v1978, %v1978
    %v1995 = vmul.f32 %v1979, %v1979
    %v2012 = vrot.slane %v1981, 7
    %v2013 = vsel %vm357, %v2012, %v1980
    %v2014 = vrot.slane %v1982, 6
    %v2015 = vsel %vm360, %v2014, %v2013
    %v2016 = vrot.slane %v1983, 5
    %v2017 = vsel %vm363, %v2016, %v2015
    %v2018 = vrot.slane %v1984, 4
    %v2019 = vsel %vm366, %v2018, %v2017
    %v2020 = vrot.slane %v1985, 3
    %v2021 = vsel %vm369, %v2020, %v2019
    %v2022 = vrot.slane %v1986, 2
    %v2023 = vsel %vm372, %v2022, %v2021
    %v2024 = vrot.slane %v1987, 1
    %v2025 = vsel %vm375, %v2024, %v2023
    %v2026 = vrot.slane %v1989, 7
    %v2027 = vsel %vm357, %v2026, %v1988
    %v2028 = vrot.slane %v1990, 6
    %v2029 = vsel %vm360, %v2028, %v2027
    %v2030 = vrot.slane %v1991, 5
    %v2031 = vsel %vm363, %v2030, %v2029
    %v2032 = vrot.slane %v1992, 4
    %v2033 = vsel %vm366, %v2032, %v2031
    %v2034 = vrot.slane %v1993, 3
    %v2035 = vsel %vm369, %v2034, %v2033
    %v2036 = vrot.slane %v1994, 2
    %v2037 = vsel %vm372, %v2036, %v2035
    %v2038 = vrot.slane %v1995, 1
    %v2039 = vsel %vm375, %v2038, %v2037
    %v2042 = vsel %vm393, %v2025, 0.0
    %2043 = vadd.xlane.f32.xlu0 %v2042
    %v2044 = vpop.xlane.xlu0 %2043
    %v2045 = vsel %vm393, %v2039, 0.0
    %2046 = vadd.xlane.f32.xlu0 %v2045
    %v2047 = vpop.xlane.xlu0 %2046
    %v2048 = vmul.f32 %v2044, %v400
    %v2049 = vmul.f32 %v2047, %v400
    %v2050 = vadd.f32 %v2048, 1e-05
    %v2051 = vadd.f32 %v2049, 1e-05
    %v2052 = vrsqrt.pop %v2050
    %v2053 = vrsqrt.pop %v2051
    %v2056 = vrot.slane %v2052, 1
    %v2057 = vrot.slane %v2052, 2
    %v2058 = vrot.slane %v2052, 3
    %v2059 = vrot.slane %v2052, 4
    %v2060 = vrot.slane %v2052, 5
    %v2061 = vrot.slane %v2052, 6
    %v2062 = vrot.slane %v2052, 7
    %v2063 = vrot.slane %v2053, 1
    %v2064 = vrot.slane %v2053, 2
    %v2065 = vrot.slane %v2053, 3
    %v2066 = vrot.slane %v2053, 4
    %v2067 = vrot.slane %v2053, 5
    %v2068 = vrot.slane %v2053, 6
    %v2069 = vrot.slane %v2053, 7
    %v2086 = vmul.f32 %v1964, %v2052
    %v2087 = vmul.f32 %v1965, %v2056
    %v2088 = vmul.f32 %v1966, %v2057
    %v2089 = vmul.f32 %v1967, %v2058
    %v2090 = vmul.f32 %v1968, %v2059
    %v2091 = vmul.f32 %v1969, %v2060
    %v2092 = vmul.f32 %v1970, %v2061
    %v2093 = vmul.f32 %v1971, %v2062
    %v2094 = vmul.f32 %v1972, %v2053
    %v2095 = vmul.f32 %v1973, %v2063
    %v2096 = vmul.f32 %v1974, %v2064
    %v2097 = vmul.f32 %v1975, %v2065
    %v2098 = vmul.f32 %v1976, %v2066
    %v2099 = vmul.f32 %v1977, %v2067
    %v2100 = vmul.f32 %v1978, %v2068
    %v2101 = vmul.f32 %v1979, %v2069
    %v2103 = vlaneseq
    %v2104 = vshrl.u32 %v2103, 7
    %v2105 = vsub.s32 0, %v2104
    %v2106 = vrot.slane %v132, %v2105
    %v2108 = vmul.f32 %v2086, %v2106
    %v2109 = vmul.f32 %v2087, %v2106
    %v2110 = vmul.f32 %v2088, %v2106
    %v2111 = vmul.f32 %v2089, %v2106
    %v2112 = vmul.f32 %v2090, %v2106
    %v2113 = vmul.f32 %v2091, %v2106
    %v2114 = vmul.f32 %v2092, %v2106
    %v2115 = vmul.f32 %v2093, %v2106
    %v2116 = vmul.f32 %v2094, %v2106
    %v2117 = vmul.f32 %v2095, %v2106
    %v2118 = vmul.f32 %v2096, %v2106
    %v2119 = vmul.f32 %v2097, %v2106
    %v2120 = vmul.f32 %v2098, %v2106
    %v2121 = vmul.f32 %v2099, %v2106
    %v2122 = vmul.f32 %v2100, %v2106
    %v2123 = vmul.f32 %v2101, %v2106
    %v2125 = vlaneseq
    %v2126 = vshrl.u32 %v2125, 7
    %v2127 = vsub.s32 0, %v2126
    %v2128 = vrot.slane %v133, %v2127
    %v2130 = vadd.f32 %v2108, %v2128
    %v2131 = vadd.f32 %v2109, %v2128
    %v2132 = vadd.f32 %v2110, %v2128
    %v2133 = vadd.f32 %v2111, %v2128
    %v2134 = vadd.f32 %v2112, %v2128
    %v2135 = vadd.f32 %v2113, %v2128
    %v2136 = vadd.f32 %v2114, %v2128
    %v2137 = vadd.f32 %v2115, %v2128
    %v2138 = vadd.f32 %v2116, %v2128
    %v2139 = vadd.f32 %v2117, %v2128
    %v2140 = vadd.f32 %v2118, %v2128
    %v2141 = vadd.f32 %v2119, %v2128
    %v2142 = vadd.f32 %v2120, %v2128
    %v2143 = vadd.f32 %v2121, %v2128
    %v2144 = vadd.f32 %v2122, %v2128
    %v2145 = vadd.f32 %v2123, %v2128
    %v2146 = vadd.f32 %v2130, %v316
    %v2147 = vadd.f32 %v2131, %v317
    %v2148 = vadd.f32 %v2132, %v318
    %v2149 = vadd.f32 %v2133, %v319
    %v2150 = vadd.f32 %v2134, %v320
    %v2151 = vadd.f32 %v2135, %v321
    %v2152 = vadd.f32 %v2136, %v322
    %v2153 = vadd.f32 %v2137, %v323
    %v2154 = vadd.f32 %v2138, %v324
    %v2155 = vadd.f32 %v2139, %v325
    %v2156 = vadd.f32 %v2140, %v326
    %v2157 = vadd.f32 %v2141, %v327
    %v2158 = vadd.f32 %v2142, %v328
    %v2159 = vadd.f32 %v2143, %v329
    %v2160 = vadd.f32 %v2144, %v330
    %v2161 = vadd.f32 %v2145, %v331
    %v2163 = vlaneseq
    %v2164 = vshrl.u32 %v2163, 7
    %v2165 = vsub.s32 0, %v2164
    %v2166 = vrot.slane %v160, %v2165
    %v2184 = vrot.slane %v2147, 7
    %v2185 = vsel %vm357, %v2184, %v2146
    %v2186 = vrot.slane %v2148, 6
    %v2187 = vsel %vm360, %v2186, %v2185
    %v2188 = vrot.slane %v2149, 5
    %v2189 = vsel %vm363, %v2188, %v2187
    %v2190 = vrot.slane %v2150, 4
    %v2191 = vsel %vm366, %v2190, %v2189
    %v2192 = vrot.slane %v2151, 3
    %v2193 = vsel %vm369, %v2192, %v2191
    %v2194 = vrot.slane %v2152, 2
    %v2195 = vsel %vm372, %v2194, %v2193
    %v2196 = vrot.slane %v2153, 1
    %v2197 = vsel %vm375, %v2196, %v2195
    %v2198 = vrot.slane %v2155, 7
    %v2199 = vsel %vm357, %v2198, %v2154
    %v2200 = vrot.slane %v2156, 6
    %v2201 = vsel %vm360, %v2200, %v2199
    %v2202 = vrot.slane %v2157, 5
    %v2203 = vsel %vm363, %v2202, %v2201
    %v2204 = vrot.slane %v2158, 4
    %v2205 = vsel %vm366, %v2204, %v2203
    %v2206 = vrot.slane %v2159, 3
    %v2207 = vsel %vm369, %v2206, %v2205
    %v2208 = vrot.slane %v2160, 2
    %v2209 = vsel %vm372, %v2208, %v2207
    %v2210 = vrot.slane %v2161, 1
    %v2211 = vsel %vm375, %v2210, %v2209
    %v2212 = vsel %vm393, %v2197, 0
    %v2214 = vsel %vm393, %v2211, 0
    %2216 = vmatprep.subr.mxu0 0.0
    %2217 = vmatpush1.msra.mxu0 %v156
    %2218 = vmatprep.subr.mxu0 0.0
    %2219 = vmatpush1.msra.mxu0 %v157
    %2220 = vmatprep.subr.mxu0 0.0
    %2221 = vmatpush1.msra.mxu0 %v158
    %2222 = vmatprep.subr.mxu0 0.0
    %2223 = vmatpush1.msra.mxu0 %v159
    %2224 = vmatprep.subr.mxu0 0.0
    %2225 = vmatpush1.msra.mxu0 0.0
    %2226 = vmatprep.subr.mxu0 0.0
    %2227 = vmatpush1.msra.mxu0 0.0
    %2228 = vmatprep.subr.mxu0 0.0
    %2229 = vmatpush1.msra.mxu0 0.0
    %2230 = vmatprep.subr.mxu0 0.0
    %2231 = vmatpush1.msra.mxu0 0.0
    %2232 = vmatprep.subr.mxu0 0.0
    %2233 = vmatpush1.msra.mxu0 0.0
    %2234 = vmatprep.subr.mxu0 0.0
    %2235 = vmatpush1.msra.mxu0 0.0
    %2236 = vmatprep.subr.mxu0 0.0
    %2237 = vmatpush1.msra.mxu0 0.0
    %2238 = vmatprep.subr.mxu0 0.0
    %2239 = vmatpush1.msra.mxu0 0.0
    %2240 = vmatprep.subr.mxu0 0.0
    %2241 = vmatpush1.msra.mxu0 0.0
    %2242 = vmatprep.subr.mxu0 0.0
    %2243 = vmatpush1.msra.mxu0 0.0
    %2244 = vmatprep.subr.mxu0 0.0
    %2245 = vmatpush1.msra.mxu0 0.0
    %2246 = vmatprep.subr.mxu0 0.0
    %2247 = vmatpush1.msra.mxu0 0.0
    %2248 = vmatprep.subr.mxu0 0.0
    %2249 = vmatpush1.msra.mxu0 0.0
    %2250 = vmatprep.subr.mxu0 0.0
    %2251 = vmatpush1.msra.mxu0 0.0
    %2252 = vmatprep.subr.mxu0 0.0
    %2253 = vmatpush1.msra.mxu0 0.0
    %2254 = vmatprep.subr.mxu0 0.0
    %2255 = vmatpush1.msra.mxu0 0.0
    %2256 = vmatprep.subr.mxu0 0.0
    %2257 = vmatpush1.msra.mxu0 0.0
    %2258 = vmatprep.subr.mxu0 0.0
    %2259 = vmatpush1.msra.mxu0 0.0
    %2260 = vmatprep.subr.mxu0 0.0
    %2261 = vmatpush1.msra.mxu0 0.0
    %2262 = vmatprep.subr.mxu0 0.0
    %2263 = vmatpush1.msra.mxu0 0.0
    %2264 = vmatprep.subr.mxu0 0.0
    %2265 = vmatpush1.msra.mxu0 0.0
    %2266 = vmatprep.subr.mxu0 0.0
    %2267 = vmatpush1.msra.mxu0 0.0
    %2268 = vmatprep.subr.mxu0 0.0
    %2269 = vmatpush1.msra.mxu0 0.0
    %2270 = vmatprep.subr.mxu0 0.0
    %2271 = vmatpush1.msra.mxu0 0.0
    %2272 = vmatprep.subr.mxu0 0.0
    %2273 = vmatpush1.msra.mxu0 0.0
    %2274 = vmatprep.subr.mxu0 0.0
    %2275 = vmatpush1.msra.mxu0 0.0
    %2276 = vmatprep.subr.mxu0 0.0
    %2277 = vmatpush1.msra.mxu0 0.0
    %2278 = vmatprep.subr.mxu0 0.0
    %2279 = vmatpush1.msra.mxu0 0.0
    %2280 = vmatprep.mubr.f32.mxu0 0.0
    %2281 = vmatmul.mubr.f32.gmra.mrb[0].mxu0 %v2212
    %v2282 = vpop.f32.mrb[0].mxu0
    %v2283 = vadd.f32 %v2166, %v2282
    %v2284 = vpop.f32.mrb[0].mxu0
    %2285 = vmatprep.mubr.f32.mxu0 0.0
    %2286 = vmatmul.mubr.f32.gmra.mrb[0].mxu0 %v2214
    %v2287 = vpop.f32.mrb[0].mxu0
    %v2288 = vadd.f32 %v2166, %v2287
    %v2289 = vpop.f32.mrb[0].mxu0
    %2290 = vdwg.mxu0
    %v2292 = vlaneseq
    %v2293 = vshrl.u32 %v2292, 7
    %v2294 = vsub.s32 0, %v2293
    %v2295 = vrot.slane %v165, %v2294
    %v2305 = vrot.slane %v333, 7
    %v2306 = vsel %vm357, %v2305, %v332
    %v2307 = vrot.slane %v334, 6
    %v2308 = vsel %vm360, %v2307, %v2306
    %v2309 = vrot.slane %v335, 5
    %v2310 = vsel %vm363, %v2309, %v2308
    %v2311 = vrot.slane %v336, 4
    %v2312 = vsel %vm366, %v2311, %v2310
    %v2313 = vrot.slane %v337, 3
    %v2314 = vsel %vm369, %v2313, %v2312
    %v2315 = vrot.slane %v338, 2
    %v2316 = vsel %vm372, %v2315, %v2314
    %v2317 = vrot.slane %v339, 1
    %v2318 = vsel %vm375, %v2317, %v2316
    %v2319 = vsel %vm393, %v2318, 0
    %2321 = vmatprep.subr.mxu0 0.0
    %2322 = vmatpush1.msra.mxu0 %v161
    %2323 = vmatprep.subr.mxu0 0.0
    %2324 = vmatpush1.msra.mxu0 %v162
    %2325 = vmatprep.subr.mxu0 0.0
    %2326 = vmatpush1.msra.mxu0 %v163
    %2327 = vmatprep.subr.mxu0 0.0
    %2328 = vmatpush1.msra.mxu0 %v164
    %2329 = vmatprep.subr.mxu0 0.0
    %2330 = vmatpush1.msra.mxu0 0.0
    %2331 = vmatprep.subr.mxu0 0.0
    %2332 = vmatpush1.msra.mxu0 0.0
    %2333 = vmatprep.subr.mxu0 0.0
    %2334 = vmatpush1.msra.mxu0 0.0
    %2335 = vmatprep.subr.mxu0 0.0
    %2336 = vmatpush1.msra.mxu0 0.0
    %2337 = vmatprep.subr.mxu0 0.0
    %2338 = vmatpush1.msra.mxu0 0.0
    %2339 = vmatprep.subr.mxu0 0.0
    %2340 = vmatpush1.msra.mxu0 0.0
    %2341 = vmatprep.subr.mxu0 0.0
    %2342 = vmatpush1.msra.mxu0 0.0
    %2343 = vmatprep.subr.mxu0 0.0
    %2344 = vmatpush1.msra.mxu0 0.0
    %2345 = vmatprep.subr.mxu0 0.0
    %2346 = vmatpush1.msra.mxu0 0.0
    %2347 = vmatprep.subr.mxu0 0.0
    %2348 = vmatpush1.msra.mxu0 0.0
    %2349 = vmatprep.subr.mxu0 0.0
    %2350 = vmatpush1.msra.mxu0 0.0
    %2351 = vmatprep.subr.mxu0 0.0
    %2352 = vmatpush1.msra.mxu0 0.0
    %2353 = vmatprep.subr.mxu0 0.0
    %2354 = vmatpush1.msra.mxu0 0.0
    %2355 = vmatprep.subr.mxu0 0.0
    %2356 = vmatpush1.msra.mxu0 0.0
    %2357 = vmatprep.subr.mxu0 0.0
    %2358 = vmatpush1.msra.mxu0 0.0
    %2359 = vmatprep.subr.mxu0 0.0
    %2360 = vmatpush1.msra.mxu0 0.0
    %2361 = vmatprep.subr.mxu0 0.0
    %2362 = vmatpush1.msra.mxu0 0.0
    %2363 = vmatprep.subr.mxu0 0.0
    %2364 = vmatpush1.msra.mxu0 0.0
    %2365 = vmatprep.subr.mxu0 0.0
    %2366 = vmatpush1.msra.mxu0 0.0
    %2367 = vmatprep.subr.mxu0 0.0
    %2368 = vmatpush1.msra.mxu0 0.0
    %2369 = vmatprep.subr.mxu0 0.0
    %2370 = vmatpush1.msra.mxu0 0.0
    %2371 = vmatprep.subr.mxu0 0.0
    %2372 = vmatpush1.msra.mxu0 0.0
    %2373 = vmatprep.subr.mxu0 0.0
    %2374 = vmatpush1.msra.mxu0 0.0
    %2375 = vmatprep.subr.mxu0 0.0
    %2376 = vmatpush1.msra.mxu0 0.0
    %2377 = vmatprep.subr.mxu0 0.0
    %2378 = vmatpush1.msra.mxu0 0.0
    %2379 = vmatprep.subr.mxu0 0.0
    %2380 = vmatpush1.msra.mxu0 0.0
    %2381 = vmatprep.subr.mxu0 0.0
    %2382 = vmatpush1.msra.mxu0 0.0
    %2383 = vmatprep.subr.mxu0 0.0
    %2384 = vmatpush1.msra.mxu0 0.0
    %2385 = vmatprep.mubr.f32.mxu0 0.0
    %2386 = vmatmul.mubr.f32.gmra.mrb[0].mxu0 %v2319
    %v2387 = vpop.f32.mrb[0].mxu0
    %v2388 = vadd.f32 %v2295, %v2387
    %v2389 = vpop.f32.mrb[0].mxu0
    %2390 = vdwg.mxu0
    %v2392 = vlaneseq
    %v2393 = vshrl.u32 %v2392, 7
    %v2394 = vsub.s32 0, %v2393
    %v2395 = vrot.slane %v170, %v2394
    %2397 = vmatprep.subr.mxu0 0.0
    %2398 = vmatpush1.msra.mxu0 %v166
    %2399 = vmatprep.subr.mxu0 0.0
    %2400 = vmatpush1.msra.mxu0 %v167
    %2401 = vmatprep.subr.mxu0 0.0
    %2402 = vmatpush1.msra.mxu0 %v168
    %2403 = vmatprep.subr.mxu0 0.0
    %2404 = vmatpush1.msra.mxu0 %v169
    %2405 = vmatprep.subr.mxu0 0.0
    %2406 = vmatpush1.msra.mxu0 0.0
    %2407 = vmatprep.subr.mxu0 0.0
    %2408 = vmatpush1.msra.mxu0 0.0
    %2409 = vmatprep.subr.mxu0 0.0
    %2410 = vmatpush1.msra.mxu0 0.0
    %2411 = vmatprep.subr.mxu0 0.0
    %2412 = vmatpush1.msra.mxu0 0.0
    %2413 = vmatprep.subr.mxu0 0.0
    %2414 = vmatpush1.msra.mxu0 0.0
    %2415 = vmatprep.subr.mxu0 0.0
    %2416 = vmatpush1.msra.mxu0 0.0
    %2417 = vmatprep.subr.mxu0 0.0
    %2418 = vmatpush1.msra.mxu0 0.0
    %2419 = vmatprep.subr.mxu0 0.0
    %2420 = vmatpush1.msra.mxu0 0.0
    %2421 = vmatprep.subr.mxu0 0.0
    %2422 = vmatpush1.msra.mxu0 0.0
    %2423 = vmatprep.subr.mxu0 0.0
    %2424 = vmatpush1.msra.mxu0 0.0
    %2425 = vmatprep.subr.mxu0 0.0
    %2426 = vmatpush1.msra.mxu0 0.0
    %2427 = vmatprep.subr.mxu0 0.0
    %2428 = vmatpush1.msra.mxu0 0.0
    %2429 = vmatprep.subr.mxu0 0.0
    %2430 = vmatpush1.msra.mxu0 0.0
    %2431 = vmatprep.subr.mxu0 0.0
    %2432 = vmatpush1.msra.mxu0 0.0
    %2433 = vmatprep.subr.mxu0 0.0
    %2434 = vmatpush1.msra.mxu0 0.0
    %2435 = vmatprep.subr.mxu0 0.0
    %2436 = vmatpush1.msra.mxu0 0.0
    %2437 = vmatprep.subr.mxu0 0.0
    %2438 = vmatpush1.msra.mxu0 0.0
    %2439 = vmatprep.subr.mxu0 0.0
    %2440 = vmatpush1.msra.mxu0 0.0
    %2441 = vmatprep.subr.mxu0 0.0
    %2442 = vmatpush1.msra.mxu0 0.0
    %2443 = vmatprep.subr.mxu0 0.0
    %2444 = vmatpush1.msra.mxu0 0.0
    %2445 = vmatprep.subr.mxu0 0.0
    %2446 = vmatpush1.msra.mxu0 0.0
    %2447 = vmatprep.subr.mxu0 0.0
    %2448 = vmatpush1.msra.mxu0 0.0
    %2449 = vmatprep.subr.mxu0 0.0
    %2450 = vmatpush1.msra.mxu0 0.0
    %2451 = vmatprep.subr.mxu0 0.0
    %2452 = vmatpush1.msra.mxu0 0.0
    %2453 = vmatprep.subr.mxu0 0.0
    %2454 = vmatpush1.msra.mxu0 0.0
    %2455 = vmatprep.subr.mxu0 0.0
    %2456 = vmatpush1.msra.mxu0 0.0
    %2457 = vmatprep.subr.mxu0 0.0
    %2458 = vmatpush1.msra.mxu0 0.0
    %2459 = vmatprep.subr.mxu0 0.0
    %2460 = vmatpush1.msra.mxu0 0.0
    %2461 = vmatprep.mubr.f32.mxu0 0.0
    %2462 = vmatmul.mubr.f32.gmra.mrb[0].mxu0 %v2319
    %v2463 = vpop.f32.mrb[0].mxu0
    %v2464 = vadd.f32 %v2395, %v2463
    %v2465 = vpop.f32.mrb[0].mxu0
    %2466 = vdwg.mxu0
    %v2467 = vsel %vm973, %v2388, 0.0
    %v2469 = vsel %vm393, %v2283, 0
    %v2472 = vsel %vm393, %v2288, 0
    %v2475 = vsel %vm393, %v2467, 0
    %2477 = vmatprep.subr.mxu0 0.0
    %2478 = vmatpush1.xpose.msra.mxu0 %v2475
    %2479 = vmatprep.subr.mxu0 0.0
    %2480 = vmatpush1.xpose.msra.mxu0 0.0
    %2481 = vmatprep.subr.mxu0 0.0
    %2482 = vmatpush1.xpose.msra.mxu0 0.0
    %2483 = vmatprep.subr.mxu0 0.0
    %2484 = vmatpush1.xpose.msra.mxu0 0.0
    %2485 = vmatprep.subr.mxu0 0.0
    %2486 = vmatpush1.xpose.msra.mxu0 0.0
    %2487 = vmatprep.subr.mxu0 0.0
    %2488 = vmatpush1.xpose.msra.mxu0 0.0
    %2489 = vmatprep.subr.mxu0 0.0
    %2490 = vmatpush1.xpose.msra.mxu0 0.0
    %2491 = vmatprep.subr.mxu0 0.0
    %2492 = vmatpush1.xpose.msra.mxu0 0.0
    %2493 = vmatprep.subr.mxu0 0.0
    %2494 = vmatpush1.xpose.msra.mxu0 0.0
    %2495 = vmatprep.subr.mxu0 0.0
    %2496 = vmatpush1.xpose.msra.mxu0 0.0
    %2497 = vmatprep.subr.mxu0 0.0
    %2498 = vmatpush1.xpose.msra.mxu0 0.0
    %2499 = vmatprep.subr.mxu0 0.0
    %2500 = vmatpush1.xpose.msra.mxu0 0.0
    %2501 = vmatprep.subr.mxu0 0.0
    %2502 = vmatpush1.xpose.msra.mxu0 0.0
    %2503 = vmatprep.subr.mxu0 0.0
    %2504 = vmatpush1.xpose.msra.mxu0 0.0
    %2505 = vmatprep.subr.mxu0 0.0
    %2506 = vmatpush1.xpose.msra.mxu0 0.0
    %2507 = vmatprep.subr.mxu0 0.0
    %2508 = vmatpush1.xpose.msra.mxu0 0.0
    %2509 = vmatprep.subr.mxu0 0.0
    %2510 = vmatpush1.xpose.msra.mxu0 0.0
    %2511 = vmatprep.subr.mxu0 0.0
    %2512 = vmatpush1.xpose.msra.mxu0 0.0
    %2513 = vmatprep.subr.mxu0 0.0
    %2514 = vmatpush1.xpose.msra.mxu0 0.0
    %2515 = vmatprep.subr.mxu0 0.0
    %2516 = vmatpush1.xpose.msra.mxu0 0.0
    %2517 = vmatprep.subr.mxu0 0.0
    %2518 = vmatpush1.xpose.msra.mxu0 0.0
    %2519 = vmatprep.subr.mxu0 0.0
    %2520 = vmatpush1.xpose.msra.mxu0 0.0
    %2521 = vmatprep.subr.mxu0 0.0
    %2522 = vmatpush1.xpose.msra.mxu0 0.0
    %2523 = vmatprep.subr.mxu0 0.0
    %2524 = vmatpush1.xpose.msra.mxu0 0.0
    %2525 = vmatprep.subr.mxu0 0.0
    %2526 = vmatpush1.xpose.msra.mxu0 0.0
    %2527 = vmatprep.subr.mxu0 0.0
    %2528 = vmatpush1.xpose.msra.mxu0 0.0
    %2529 = vmatprep.subr.mxu0 0.0
    %2530 = vmatpush1.xpose.msra.mxu0 0.0
    %2531 = vmatprep.subr.mxu0 0.0
    %2532 = vmatpush1.xpose.msra.mxu0 0.0
    %2533 = vmatprep.subr.mxu0 0.0
    %2534 = vmatpush1.xpose.msra.mxu0 0.0
    %2535 = vmatprep.subr.mxu0 0.0
    %2536 = vmatpush1.xpose.msra.mxu0 0.0
    %2537 = vmatprep.subr.mxu0 0.0
    %2538 = vmatpush1.xpose.msra.mxu0 0.0
    %2539 = vmatprep.subr.mxu0 0.0
    %2540 = vmatpush1.xpose.msra.mxu0 0.0
    %2541 = vmatprep.mubr.f32.mxu0 0.0
    %2542 = vmatmul.mubr.f32.gmra.mrb[0].mxu0 %v2469
    %v2543 = vpop.f32.mrb[0].mxu0
    %v2544 = vadd.f32 0.0, %v2543
    %v2545 = vpop.f32.mrb[0].mxu0
    %2546 = vmatprep.mubr.f32.mxu0 0.0
    %2547 = vmatmul.mubr.f32.gmra.mrb[0].mxu0 %v2472
    %v2548 = vpop.f32.mrb[0].mxu0
    %v2549 = vadd.f32 0.0, %v2548
    %v2550 = vpop.f32.mrb[0].mxu0
    %2551 = vdwg.mxu0
    %vm2552 = vcmask 64512
    %v2553 = vsel %vm2552, %v2544, -inf
    %2554 = vmax.xlane.f32.xlu0 %v2553
    %v2555 = vpop.xlane.xlu0 %2554
    %v2556 = vsel %vm2552, %v2549, -inf
    %2557 = vmax.xlane.f32.xlu0 %v2556
    %v2558 = vpop.xlane.xlu0 %2557
    %v2559 = vsub.f32 %v2544, %v2555
    %v2560 = vsub.f32 %v2549, %v2558
    %v2561 = vmul.f32 %v2559, 1.442695
    %v2562 = vpow.pop %v2561
    %v2563 = vmul.f32 %v2560, 1.442695
    %v2564 = vpow.pop %v2563
    %v2565 = vsel %vm2552, %v2562, 0.0
    %2566 = vadd.xlane.f32.xlu0 %v2565
    %v2567 = vpop.xlane.xlu0 %2566
    %v2568 = vsel %vm2552, %v2564, 0.0
    %2569 = vadd.xlane.f32.xlu0 %v2568
    %v2570 = vpop.xlane.xlu0 %2569
    %v2571 = vrcp.pop %v2567
    %v2572 = vrcp.pop %v2570
    %v2573 = vmul.f32 %v2562, %v2571
    %v2574 = vmul.f32 %v2564, %v2572
    %v2575 = vsel %vm973, %v2464, 0.0
    %v2576 = vsel %vm1089, %v2388, 0.0
    %v2578 = vsel %vm393, %v2576, 0
    %2580 = vmatprep.subr.mxu0 0.0
    %2581 = vmatpush1.xpose.msra.mxu0 %v2578
    %2582 = vmatprep.subr.mxu0 0.0
    %2583 = vmatpush1.xpose.msra.mxu0 0.0
    %2584 = vmatprep.subr.mxu0 0.0
    %2585 = vmatpush1.xpose.msra.mxu0 0.0
    %2586 = vmatprep.subr.mxu0 0.0
    %2587 = vmatpush1.xpose.msra.mxu0 0.0
    %2588 = vmatprep.subr.mxu0 0.0
    %2589 = vmatpush1.xpose.msra.mxu0 0.0
    %2590 = vmatprep.subr.mxu0 0.0
    %2591 = vmatpush1.xpose.msra.mxu0 0.0
    %2592 = vmatprep.subr.mxu0 0.0
    %2593 = vmatpush1.xpose.msra.mxu0 0.0
    %2594 = vmatprep.subr.mxu0 0.0
    %2595 = vmatpush1.xpose.msra.mxu0 0.0
    %2596 = vmatprep.subr.mxu0 0.0
    %2597 = vmatpush1.xpose.msra.mxu0 0.0
    %2598 = vmatprep.subr.mxu0 0.0
    %2599 = vmatpush1.xpose.msra.mxu0 0.0
    %2600 = vmatprep.subr.mxu0 0.0
    %2601 = vmatpush1.xpose.msra.mxu0 0.0
    %2602 = vmatprep.subr.mxu0 0.0
    %2603 = vmatpush1.xpose.msra.mxu0 0.0
    %2604 = vmatprep.subr.mxu0 0.0
    %2605 = vmatpush1.xpose.msra.mxu0 0.0
    %2606 = vmatprep.subr.mxu0 0.0
    %2607 = vmatpush1.xpose.msra.mxu0 0.0
    %2608 = vmatprep.subr.mxu0 0.0
    %2609 = vmatpush1.xpose.msra.mxu0 0.0
    %2610 = vmatprep.subr.mxu0 0.0
    %2611 = vmatpush1.xpose.msra.mxu0 0.0
    %2612 = vmatprep.subr.mxu0 0.0
    %2613 = vmatpush1.xpose.msra.mxu0 0.0
    %2614 = vmatprep.subr.mxu0 0.0
    %2615 = vmatpush1.xpose.msra.mxu0 0.0
    %2616 = vmatprep.subr.mxu0 0.0
    %2617 = vmatpush1.xpose.msra.mxu0 0.0
    %2618 = vmatprep.subr.mxu0 0.0
    %2619 = vmatpush1.xpose.msra.mxu0 0.0
    %2620 = vmatprep.subr.mxu0 0.0
    %2621 = vmatpush1.xpose.msra.mxu0 0.0
    %2622 = vmatprep.subr.mxu0 0.0
    %2623 = vmatpush1.xpose.msra.mxu0 0.0
    %2624 = vmatprep.subr.mxu0 0.0
    %2625 = vmatpush1.xpose.msra.mxu0 0.0
    %2626 = vmatprep.subr.mxu0 0.0
    %2627 = vmatpush1.xpose.msra.mxu0 0.0
    %2628 = vmatprep.subr.mxu0 0.0
    %2629 = vmatpush1.xpose.msra.mxu0 0.0
    %2630 = vmatprep.subr.mxu0 0.0
    %2631 = vmatpush1.xpose.msra.mxu0 0.0
    %2632 = vmatprep.subr.mxu0 0.0
    %2633 = vmatpush1.xpose.msra.mxu0 0.0
    %2634 = vmatprep.subr.mxu0 0.0
    %2635 = vmatpush1.xpose.msra.mxu0 0.0
    %2636 = vmatprep.subr.mxu0 0.0
    %2637 = vmatpush1.xpose.msra.mxu0 0.0
    %2638 = vmatprep.subr.mxu0 0.0
    %2639 = vmatpush1.xpose.msra.mxu0 0.0
    %2640 = vmatprep.subr.mxu0 0.0
    %2641 = vmatpush1.xpose.msra.mxu0 0.0
    %2642 = vmatprep.subr.mxu0 0.0
    %2643 = vmatpush1.xpose.msra.mxu0 0.0
    %2644 = vmatprep.mubr.f32.mxu0 0.0
    %2645 = vmatmul.mubr.f32.gmra.mrb[0].mxu0 %v2469
    %v2646 = vpop.f32.mrb[0].mxu0
    %v2647 = vadd.f32 0.0, %v2646
    %v2648 = vpop.f32.mrb[0].mxu0
    %2649 = vmatprep.mubr.f32.mxu0 0.0
    %2650 = vmatmul.mubr.f32.gmra.mrb[0].mxu0 %v2472
    %v2651 = vpop.f32.mrb[0].mxu0
    %v2652 = vadd.f32 0.0, %v2651
    %v2653 = vpop.f32.mrb[0].mxu0
    %2654 = vdwg.mxu0
    %v2655 = vsel %vm2552, %v2647, -inf
    %2656 = vmax.xlane.f32.xlu0 %v2655
    %v2657 = vpop.xlane.xlu0 %2656
    %v2658 = vsel %vm2552, %v2652, -inf
    %2659 = vmax.xlane.f32.xlu0 %v2658
    %v2660 = vpop.xlane.xlu0 %2659
    %v2661 = vsub.f32 %v2647, %v2657
    %v2662 = vsub.f32 %v2652, %v2660
    %v2663 = vmul.f32 %v2661, 1.442695
    %v2664 = vpow.pop %v2663
    %v2665 = vmul.f32 %v2662, 1.442695
    %v2666 = vpow.pop %v2665
    %v2667 = vsel %vm2552, %v2664, 0.0
    %2668 = vadd.xlane.f32.xlu0 %v2667
    %v2669 = vpop.xlane.xlu0 %2668
    %v2670 = vsel %vm2552, %v2666, 0.0
    %2671 = vadd.xlane.f32.xlu0 %v2670
    %v2672 = vpop.xlane.xlu0 %2671
    %v2673 = vrcp.pop %v2669
    %v2674 = vrcp.pop %v2672
    %v2675 = vmul.f32 %v2664, %v2673
    %v2676 = vmul.f32 %v2666, %v2674
    %v2677 = vsel %vm1089, %v2464, 0.0
    %v2679 = vsel %vm2552, %v2675, 0
    %v2682 = vsel %vm2552, %v2676, 0
    %2684 = vmatprep.subr.mxu0 0.0
    %2685 = vmatpush1.msra.mxu0 %v2677
    %2686 = vmatprep.subr.mxu0 0.0
    %2687 = vmatpush1.msra.mxu0 0.0
    %2688 = vmatprep.subr.mxu0 0.0
    %2689 = vmatpush1.msra.mxu0 0.0
    %2690 = vmatprep.subr.mxu0 0.0
    %2691 = vmatpush1.msra.mxu0 0.0
    %2692 = vmatprep.subr.mxu0 0.0
    %2693 = vmatpush1.msra.mxu0 0.0
    %2694 = vmatprep.subr.mxu0 0.0
    %2695 = vmatpush1.msra.mxu0 0.0
    %2696 = vmatprep.subr.mxu0 0.0
    %2697 = vmatpush1.msra.mxu0 0.0
    %2698 = vmatprep.subr.mxu0 0.0
    %2699 = vmatpush1.msra.mxu0 0.0
    %2700 = vmatprep.subr.mxu0 0.0
    %2701 = vmatpush1.msra.mxu0 0.0
    %2702 = vmatprep.subr.mxu0 0.0
    %2703 = vmatpush1.msra.mxu0 0.0
    %2704 = vmatprep.subr.mxu0 0.0
    %2705 = vmatpush1.msra.mxu0 0.0
    %2706 = vmatprep.subr.mxu0 0.0
    %2707 = vmatpush1.msra.mxu0 0.0
    %2708 = vmatprep.subr.mxu0 0.0
    %2709 = vmatpush1.msra.mxu0 0.0
    %2710 = vmatprep.subr.mxu0 0.0
    %2711 = vmatpush1.msra.mxu0 0.0
    %2712 = vmatprep.subr.mxu0 0.0
    %2713 = vmatpush1.msra.mxu0 0.0
    %2714 = vmatprep.subr.mxu0 0.0
    %2715 = vmatpush1.msra.mxu0 0.0
    %2716 = vmatprep.subr.mxu0 0.0
    %2717 = vmatpush1.msra.mxu0 0.0
    %2718 = vmatprep.subr.mxu0 0.0
    %2719 = vmatpush1.msra.mxu0 0.0
    %2720 = vmatprep.subr.mxu0 0.0
    %2721 = vmatpush1.msra.mxu0 0.0
    %2722 = vmatprep.subr.mxu0 0.0
    %2723 = vmatpush1.msra.mxu0 0.0
    %2724 = vmatprep.subr.mxu0 0.0
    %2725 = vmatpush1.msra.mxu0 0.0
    %2726 = vmatprep.subr.mxu0 0.0
    %2727 = vmatpush1.msra.mxu0 0.0
    %2728 = vmatprep.subr.mxu0 0.0
    %2729 = vmatpush1.msra.mxu0 0.0
    %2730 = vmatprep.subr.mxu0 0.0
    %2731 = vmatpush1.msra.mxu0 0.0
    %2732 = vmatprep.subr.mxu0 0.0
    %2733 = vmatpush1.msra.mxu0 0.0
    %2734 = vmatprep.subr.mxu0 0.0
    %2735 = vmatpush1.msra.mxu0 0.0
    %2736 = vmatprep.subr.mxu0 0.0
    %2737 = vmatpush1.msra.mxu0 0.0
    %2738 = vmatprep.subr.mxu0 0.0
    %2739 = vmatpush1.msra.mxu0 0.0
    %2740 = vmatprep.subr.mxu0 0.0
    %2741 = vmatpush1.msra.mxu0 0.0
    %2742 = vmatprep.subr.mxu0 0.0
    %2743 = vmatpush1.msra.mxu0 0.0
    %2744 = vmatprep.subr.mxu0 0.0
    %2745 = vmatpush1.msra.mxu0 0.0
    %2746 = vmatprep.subr.mxu0 0.0
    %2747 = vmatpush1.msra.mxu0 0.0
    %2748 = vmatprep.mubr.f32.mxu0 0.0
    %2749 = vmatmul.mubr.f32.gmra.mrb[0].mxu0 %v2679
    %v2750 = vpop.f32.mrb[0].mxu0
    %v2751 = vadd.f32 0.0, %v2750
    %v2752 = vpop.f32.mrb[0].mxu0
    %2753 = vmatprep.mubr.f32.mxu0 0.0
    %2754 = vmatmul.mubr.f32.gmra.mrb[0].mxu0 %v2682
    %v2755 = vpop.f32.mrb[0].mxu0
    %v2756 = vadd.f32 0.0, %v2755
    %v2757 = vpop.f32.mrb[0].mxu0
    %2758 = vdwg.mxu0
    %v2760 = vsel %vm2552, %v2573, 0
    %v2763 = vsel %vm2552, %v2574, 0
    %2765 = vmatprep.subr.mxu0 0.0
    %2766 = vmatpush1.msra.mxu0 %v2575
    %2767 = vmatprep.subr.mxu0 0.0
    %2768 = vmatpush1.msra.mxu0 0.0
    %2769 = vmatprep.subr.mxu0 0.0
    %2770 = vmatpush1.msra.mxu0 0.0
    %2771 = vmatprep.subr.mxu0 0.0
    %2772 = vmatpush1.msra.mxu0 0.0
    %2773 = vmatprep.subr.mxu0 0.0
    %2774 = vmatpush1.msra.mxu0 0.0
    %2775 = vmatprep.subr.mxu0 0.0
    %2776 = vmatpush1.msra.mxu0 0.0
    %2777 = vmatprep.subr.mxu0 0.0
    %2778 = vmatpush1.msra.mxu0 0.0
    %2779 = vmatprep.subr.mxu0 0.0
    %2780 = vmatpush1.msra.mxu0 0.0
    %2781 = vmatprep.subr.mxu0 0.0
    %2782 = vmatpush1.msra.mxu0 0.0
    %2783 = vmatprep.subr.mxu0 0.0
    %2784 = vmatpush1.msra.mxu0 0.0
    %2785 = vmatprep.subr.mxu0 0.0
    %2786 = vmatpush1.msra.mxu0 0.0
    %2787 = vmatprep.subr.mxu0 0.0
    %2788 = vmatpush1.msra.mxu0 0.0
    %2789 = vmatprep.subr.mxu0 0.0
    %2790 = vmatpush1.msra.mxu0 0.0
    %2791 = vmatprep.subr.mxu0 0.0
    %2792 = vmatpush1.msra.mxu0 0.0
    %2793 = vmatprep.subr.mxu0 0.0
    %2794 = vmatpush1.msra.mxu0 0.0
    %2795 = vmatprep.subr.mxu0 0.0
    %2796 = vmatpush1.msra.mxu0 0.0
    %2797 = vmatprep.subr.mxu0 0.0
    %2798 = vmatpush1.msra.mxu0 0.0
    %2799 = vmatprep.subr.mxu0 0.0
    %2800 = vmatpush1.msra.mxu0 0.0
    %2801 = vmatprep.subr.mxu0 0.0
    %2802 = vmatpush1.msra.mxu0 0.0
    %2803 = vmatprep.subr.mxu0 0.0
    %2804 = vmatpush1.msra.mxu0 0.0
    %2805 = vmatprep.subr.mxu0 0.0
    %2806 = vmatpush1.msra.mxu0 0.0
    %2807 = vmatprep.subr.mxu0 0.0
    %2808 = vmatpush1.msra.mxu0 0.0
    %2809 = vmatprep.subr.mxu0 0.0
    %2810 = vmatpush1.msra.mxu0 0.0
    %2811 = vmatprep.subr.mxu0 0.0
    %2812 = vmatpush1.msra.mxu0 0.0
    %2813 = vmatprep.subr.mxu0 0.0
    %2814 = vmatpush1.msra.mxu0 0.0
    %2815 = vmatprep.subr.mxu0 0.0
    %2816 = vmatpush1.msra.mxu0 0.0
    %2817 = vmatprep.subr.mxu0 0.0
    %2818 = vmatpush1.msra.mxu0 0.0
    %2819 = vmatprep.subr.mxu0 0.0
    %2820 = vmatpush1.msra.mxu0 0.0
    %2821 = vmatprep.subr.mxu0 0.0
    %2822 = vmatpush1.msra.mxu0 0.0
    %2823 = vmatprep.subr.mxu0 0.0
    %2824 = vmatpush1.msra.mxu0 0.0
    %2825 = vmatprep.subr.mxu0 0.0
    %2826 = vmatpush1.msra.mxu0 0.0
    %2827 = vmatprep.subr.mxu0 0.0
    %2828 = vmatpush1.msra.mxu0 0.0
    %2829 = vmatprep.mubr.f32.mxu0 0.0
    %2830 = vmatmul.mubr.f32.gmra.mrb[0].mxu0 %v2760
    %v2831 = vpop.f32.mrb[0].mxu0
    %v2832 = vadd.f32 %v2751, %v2831
    %v2833 = vpop.f32.mrb[0].mxu0
    %2834 = vmatprep.mubr.f32.mxu0 0.0
    %2835 = vmatmul.mubr.f32.gmra.mrb[0].mxu0 %v2763
    %v2836 = vpop.f32.mrb[0].mxu0
    %v2837 = vadd.f32 %v2756, %v2836
    %v2838 = vpop.f32.mrb[0].mxu0
    %2839 = vdwg.mxu0
    %v2840 = vsel %vm1360, %v2388, 0.0
    %v2842 = vsel %vm393, %v2840, 0
    %2844 = vmatprep.subr.mxu0 0.0
    %2845 = vmatpush1.xpose.msra.mxu0 %v2842
    %2846 = vmatprep.subr.mxu0 0.0
    %2847 = vmatpush1.xpose.msra.mxu0 0.0
    %2848 = vmatprep.subr.mxu0 0.0
    %2849 = vmatpush1.xpose.msra.mxu0 0.0
    %2850 = vmatprep.subr.mxu0 0.0
    %2851 = vmatpush1.xpose.msra.mxu0 0.0
    %2852 = vmatprep.subr.mxu0 0.0
    %2853 = vmatpush1.xpose.msra.mxu0 0.0
    %2854 = vmatprep.subr.mxu0 0.0
    %2855 = vmatpush1.xpose.msra.mxu0 0.0
    %2856 = vmatprep.subr.mxu0 0.0
    %2857 = vmatpush1.xpose.msra.mxu0 0.0
    %2858 = vmatprep.subr.mxu0 0.0
    %2859 = vmatpush1.xpose.msra.mxu0 0.0
    %2860 = vmatprep.subr.mxu0 0.0
    %2861 = vmatpush1.xpose.msra.mxu0 0.0
    %2862 = vmatprep.subr.mxu0 0.0
    %2863 = vmatpush1.xpose.msra.mxu0 0.0
    %2864 = vmatprep.subr.mxu0 0.0
    %2865 = vmatpush1.xpose.msra.mxu0 0.0
    %2866 = vmatprep.subr.mxu0 0.0
    %2867 = vmatpush1.xpose.msra.mxu0 0.0
    %2868 = vmatprep.subr.mxu0 0.0
    %2869 = vmatpush1.xpose.msra.mxu0 0.0
    %2870 = vmatprep.subr.mxu0 0.0
    %2871 = vmatpush1.xpose.msra.mxu0 0.0
    %2872 = vmatprep.subr.mxu0 0.0
    %2873 = vmatpush1.xpose.msra.mxu0 0.0
    %2874 = vmatprep.subr.mxu0 0.0
    %2875 = vmatpush1.xpose.msra.mxu0 0.0
    %2876 = vmatprep.subr.mxu0 0.0
    %2877 = vmatpush1.xpose.msra.mxu0 0.0
    %2878 = vmatprep.subr.mxu0 0.0
    %2879 = vmatpush1.xpose.msra.mxu0 0.0
    %2880 = vmatprep.subr.mxu0 0.0
    %2881 = vmatpush1.xpose.msra.mxu0 0.0
    %2882 = vmatprep.subr.mxu0 0.0
    %2883 = vmatpush1.xpose.msra.mxu0 0.0
    %2884 = vmatprep.subr.mxu0 0.0
    %2885 = vmatpush1.xpose.msra.mxu0 0.0
    %2886 = vmatprep.subr.mxu0 0.0
    %2887 = vmatpush1.xpose.msra.mxu0 0.0
    %2888 = vmatprep.subr.mxu0 0.0
    %2889 = vmatpush1.xpose.msra.mxu0 0.0
    %2890 = vmatprep.subr.mxu0 0.0
    %2891 = vmatpush1.xpose.msra.mxu0 0.0
    %2892 = vmatprep.subr.mxu0 0.0
    %2893 = vmatpush1.xpose.msra.mxu0 0.0
    %2894 = vmatprep.subr.mxu0 0.0
    %2895 = vmatpush1.xpose.msra.mxu0 0.0
    %2896 = vmatprep.subr.mxu0 0.0
    %2897 = vmatpush1.xpose.msra.mxu0 0.0
    %2898 = vmatprep.subr.mxu0 0.0
    %2899 = vmatpush1.xpose.msra.mxu0 0.0
    %2900 = vmatprep.subr.mxu0 0.0
    %2901 = vmatpush1.xpose.msra.mxu0 0.0
    %2902 = vmatprep.subr.mxu0 0.0
    %2903 = vmatpush1.xpose.msra.mxu0 0.0
    %2904 = vmatprep.subr.mxu0 0.0
    %2905 = vmatpush1.xpose.msra.mxu0 0.0
    %2906 = vmatprep.subr.mxu0 0.0
    %2907 = vmatpush1.xpose.msra.mxu0 0.0
    %2908 = vmatprep.mubr.f32.mxu0 0.0
    %2909 = vmatmul.mubr.f32.gmra.mrb[0].mxu0 %v2469
    %v2910 = vpop.f32.mrb[0].mxu0
    %v2911 = vadd.f32 0.0, %v2910
    %v2912 = vpop.f32.mrb[0].mxu0
    %2913 = vmatprep.mubr.f32.mxu0 0.0
    %2914 = vmatmul.mubr.f32.gmra.mrb[0].mxu0 %v2472
    %v2915 = vpop.f32.mrb[0].mxu0
    %v2916 = vadd.f32 0.0, %v2915
    %v2917 = vpop.f32.mrb[0].mxu0
    %2918 = vdwg.mxu0
    %v2919 = vsel %vm2552, %v2911, -inf
    %2920 = vmax.xlane.f32.xlu0 %v2919
    %v2921 = vpop.xlane.xlu0 %2920
    %v2922 = vsel %vm2552, %v2916, -inf
    %2923 = vmax.xlane.f32.xlu0 %v2922
    %v2924 = vpop.xlane.xlu0 %2923
    %v2925 = vsub.f32 %v2911, %v2921
    %v2926 = vsub.f32 %v2916, %v2924
    %v2927 = vmul.f32 %v2925, 1.442695
    %v2928 = vpow.pop %v2927
    %v2929 = vmul.f32 %v2926, 1.442695
    %v2930 = vpow.pop %v2929
    %v2931 = vsel %vm2552, %v2928, 0.0
    %2932 = vadd.xlane.f32.xlu0 %v2931
    %v2933 = vpop.xlane.xlu0 %2932
    %v2934 = vsel %vm2552, %v2930, 0.0
    %2935 = vadd.xlane.f32.xlu0 %v2934
    %v2936 = vpop.xlane.xlu0 %2935
    %v2937 = vrcp.pop %v2933
    %v2938 = vrcp.pop %v2936
    %v2939 = vmul.f32 %v2928, %v2937
    %v2940 = vmul.f32 %v2930, %v2938
    %v2941 = vsel %vm1360, %v2464, 0.0
    %v2943 = vsel %vm2552, %v2939, 0
    %v2946 = vsel %vm2552, %v2940, 0
    %2948 = vmatprep.subr.mxu0 0.0
    %2949 = vmatpush1.msra.mxu0 %v2941
    %2950 = vmatprep.subr.mxu0 0.0
    %2951 = vmatpush1.msra.mxu0 0.0
    %2952 = vmatprep.subr.mxu0 0.0
    %2953 = vmatpush1.msra.mxu0 0.0
    %2954 = vmatprep.subr.mxu0 0.0
    %2955 = vmatpush1.msra.mxu0 0.0
    %2956 = vmatprep.subr.mxu0 0.0
    %2957 = vmatpush1.msra.mxu0 0.0
    %2958 = vmatprep.subr.mxu0 0.0
    %2959 = vmatpush1.msra.mxu0 0.0
    %2960 = vmatprep.subr.mxu0 0.0
    %2961 = vmatpush1.msra.mxu0 0.0
    %2962 = vmatprep.subr.mxu0 0.0
    %2963 = vmatpush1.msra.mxu0 0.0
    %2964 = vmatprep.subr.mxu0 0.0
    %2965 = vmatpush1.msra.mxu0 0.0
    %2966 = vmatprep.subr.mxu0 0.0
    %2967 = vmatpush1.msra.mxu0 0.0
    %2968 = vmatprep.subr.mxu0 0.0
    %2969 = vmatpush1.msra.mxu0 0.0
    %2970 = vmatprep.subr.mxu0 0.0
    %2971 = vmatpush1.msra.mxu0 0.0
    %2972 = vmatprep.subr.mxu0 0.0
    %2973 = vmatpush1.msra.mxu0 0.0
    %2974 = vmatprep.subr.mxu0 0.0
    %2975 = vmatpush1.msra.mxu0 0.0
    %2976 = vmatprep.subr.mxu0 0.0
    %2977 = vmatpush1.msra.mxu0 0.0
    %2978 = vmatprep.subr.mxu0 0.0
    %2979 = vmatpush1.msra.mxu0 0.0
    %2980 = vmatprep.subr.mxu0 0.0
    %2981 = vmatpush1.msra.mxu0 0.0
    %2982 = vmatprep.subr.mxu0 0.0
    %2983 = vmatpush1.msra.mxu0 0.0
    %2984 = vmatprep.subr.mxu0 0.0
    %2985 = vmatpush1.msra.mxu0 0.0
    %2986 = vmatprep.subr.mxu0 0.0
    %2987 = vmatpush1.msra.mxu0 0.0
    %2988 = vmatprep.subr.mxu0 0.0
    %2989 = vmatpush1.msra.mxu0 0.0
    %2990 = vmatprep.subr.mxu0 0.0
    %2991 = vmatpush1.msra.mxu0 0.0
    %2992 = vmatprep.subr.mxu0 0.0
    %2993 = vmatpush1.msra.mxu0 0.0
    %2994 = vmatprep.subr.mxu0 0.0
    %2995 = vmatpush1.msra.mxu0 0.0
    %2996 = vmatprep.subr.mxu0 0.0
    %2997 = vmatpush1.msra.mxu0 0.0
    %2998 = vmatprep.subr.mxu0 0.0
    %2999 = vmatpush1.msra.mxu0 0.0
    %3000 = vmatprep.subr.mxu0 0.0
    %3001 = vmatpush1.msra.mxu0 0.0
    %3002 = vmatprep.subr.mxu0 0.0
    %3003 = vmatpush1.msra.mxu0 0.0
    %3004 = vmatprep.subr.mxu0 0.0
    %3005 = vmatpush1.msra.mxu0 0.0
    %3006 = vmatprep.subr.mxu0 0.0
    %3007 = vmatpush1.msra.mxu0 0.0
    %3008 = vmatprep.subr.mxu0 0.0
    %3009 = vmatpush1.msra.mxu0 0.0
    %3010 = vmatprep.subr.mxu0 0.0
    %3011 = vmatpush1.msra.mxu0 0.0
    %3012 = vmatprep.mubr.f32.mxu0 0.0
    %3013 = vmatmul.mubr.f32.gmra.mrb[0].mxu0 %v2943
    %v3014 = vpop.f32.mrb[0].mxu0
    %v3015 = vadd.f32 0.0, %v3014
    %v3016 = vpop.f32.mrb[0].mxu0
    %3017 = vmatprep.mubr.f32.mxu0 0.0
    %3018 = vmatmul.mubr.f32.gmra.mrb[0].mxu0 %v2946
    %v3019 = vpop.f32.mrb[0].mxu0
    %v3020 = vadd.f32 0.0, %v3019
    %v3021 = vpop.f32.mrb[0].mxu0
    %3022 = vdwg.mxu0
    %v3023 = vadd.f32 %v2832, %v3015
    %v3024 = vadd.f32 %v2837, %v3020
    %v3025 = vsel %vm1552, %v2388, 0.0
    %v3027 = vsel %vm393, %v3025, 0
    %3029 = vmatprep.subr.mxu0 0.0
    %3030 = vmatpush1.xpose.msra.mxu0 %v3027
    %3031 = vmatprep.subr.mxu0 0.0
    %3032 = vmatpush1.xpose.msra.mxu0 0.0
    %3033 = vmatprep.subr.mxu0 0.0
    %3034 = vmatpush1.xpose.msra.mxu0 0.0
    %3035 = vmatprep.subr.mxu0 0.0
    %3036 = vmatpush1.xpose.msra.mxu0 0.0
    %3037 = vmatprep.subr.mxu0 0.0
    %3038 = vmatpush1.xpose.msra.mxu0 0.0
    %3039 = vmatprep.subr.mxu0 0.0
    %3040 = vmatpush1.xpose.msra.mxu0 0.0
    %3041 = vmatprep.subr.mxu0 0.0
    %3042 = vmatpush1.xpose.msra.mxu0 0.0
    %3043 = vmatprep.subr.mxu0 0.0
    %3044 = vmatpush1.xpose.msra.mxu0 0.0
    %3045 = vmatprep.subr.mxu0 0.0
    %3046 = vmatpush1.xpose.msra.mxu0 0.0
    %3047 = vmatprep.subr.mxu0 0.0
    %3048 = vmatpush1.xpose.msra.mxu0 0.0
    %3049 = vmatprep.subr.mxu0 0.0
    %3050 = vmatpush1.xpose.msra.mxu0 0.0
    %3051 = vmatprep.subr.mxu0 0.0
    %3052 = vmatpush1.xpose.msra.mxu0 0.0
    %3053 = vmatprep.subr.mxu0 0.0
    %3054 = vmatpush1.xpose.msra.mxu0 0.0
    %3055 = vmatprep.subr.mxu0 0.0
    %3056 = vmatpush1.xpose.msra.mxu0 0.0
    %3057 = vmatprep.subr.mxu0 0.0
    %3058 = vmatpush1.xpose.msra.mxu0 0.0
    %3059 = vmatprep.subr.mxu0 0.0
    %3060 = vmatpush1.xpose.msra.mxu0 0.0
    %3061 = vmatprep.subr.mxu0 0.0
    %3062 = vmatpush1.xpose.msra.mxu0 0.0
    %3063 = vmatprep.subr.mxu0 0.0
    %3064 = vmatpush1.xpose.msra.mxu0 0.0
    %3065 = vmatprep.subr.mxu0 0.0
    %3066 = vmatpush1.xpose.msra.mxu0 0.0
    %3067 = vmatprep.subr.mxu0 0.0
    %3068 = vmatpush1.xpose.msra.mxu0 0.0
    %3069 = vmatprep.subr.mxu0 0.0
    %3070 = vmatpush1.xpose.msra.mxu0 0.0
    %3071 = vmatprep.subr.mxu0 0.0
    %3072 = vmatpush1.xpose.msra.mxu0 0.0
    %3073 = vmatprep.subr.mxu0 0.0
    %3074 = vmatpush1.xpose.msra.mxu0 0.0
    %3075 = vmatprep.subr.mxu0 0.0
    %3076 = vmatpush1.xpose.msra.mxu0 0.0
    %3077 = vmatprep.subr.mxu0 0.0
    %3078 = vmatpush1.xpose.msra.mxu0 0.0
    %3079 = vmatprep.subr.mxu0 0.0
    %3080 = vmatpush1.xpose.msra.mxu0 0.0
    %3081 = vmatprep.subr.mxu0 0.0
    %3082 = vmatpush1.xpose.msra.mxu0 0.0
    %3083 = vmatprep.subr.mxu0 0.0
    %3084 = vmatpush1.xpose.msra.mxu0 0.0
    %3085 = vmatprep.subr.mxu0 0.0
    %3086 = vmatpush1.xpose.msra.mxu0 0.0
    %3087 = vmatprep.subr.mxu0 0.0
    %3088 = vmatpush1.xpose.msra.mxu0 0.0
    %3089 = vmatprep.subr.mxu0 0.0
    %3090 = vmatpush1.xpose.msra.mxu0 0.0
    %3091 = vmatprep.subr.mxu0 0.0
    %3092 = vmatpush1.xpose.msra.mxu0 0.0
    %3093 = vmatprep.mubr.f32.mxu0 0.0
    %3094 = vmatmul.mubr.f32.gmra.mrb[0].mxu0 %v2469
    %v3095 = vpop.f32.mrb[0].mxu0
    %v3096 = vadd.f32 0.0, %v3095
    %v3097 = vpop.f32.mrb[0].mxu0
    %3098 = vmatprep.mubr.f32.mxu0 0.0
    %3099 = vmatmul.mubr.f32.gmra.mrb[0].mxu0 %v2472
    %v3100 = vpop.f32.mrb[0].mxu0
    %v3101 = vadd.f32 0.0, %v3100
    %v3102 = vpop.f32.mrb[0].mxu0
    %3103 = vdwg.mxu0
    %v3104 = vsel %vm2552, %v3096, -inf
    %3105 = vmax.xlane.f32.xlu0 %v3104
    %v3106 = vpop.xlane.xlu0 %3105
    %v3107 = vsel %vm2552, %v3101, -inf
    %3108 = vmax.xlane.f32.xlu0 %v3107
    %v3109 = vpop.xlane.xlu0 %3108
    %v3110 = vsub.f32 %v3096, %v3106
    %v3111 = vsub.f32 %v3101, %v3109
    %v3112 = vmul.f32 %v3110, 1.442695
    %v3113 = vpow.pop %v3112
    %v3114 = vmul.f32 %v3111, 1.442695
    %v3115 = vpow.pop %v3114
    %v3116 = vsel %vm2552, %v3113, 0.0
    %3117 = vadd.xlane.f32.xlu0 %v3116
    %v3118 = vpop.xlane.xlu0 %3117
    %v3119 = vsel %vm2552, %v3115, 0.0
    %3120 = vadd.xlane.f32.xlu0 %v3119
    %v3121 = vpop.xlane.xlu0 %3120
    %v3122 = vrcp.pop %v3118
    %v3123 = vrcp.pop %v3121
    %v3124 = vmul.f32 %v3113, %v3122
    %v3125 = vmul.f32 %v3115, %v3123
    %v3126 = vsel %vm1552, %v2464, 0.0
    %v3128 = vsel %vm2552, %v3124, 0
    %v3131 = vsel %vm2552, %v3125, 0
    %3133 = vmatprep.subr.mxu0 0.0
    %3134 = vmatpush1.msra.mxu0 %v3126
    %3135 = vmatprep.subr.mxu0 0.0
    %3136 = vmatpush1.msra.mxu0 0.0
    %3137 = vmatprep.subr.mxu0 0.0
    %3138 = vmatpush1.msra.mxu0 0.0
    %3139 = vmatprep.subr.mxu0 0.0
    %3140 = vmatpush1.msra.mxu0 0.0
    %3141 = vmatprep.subr.mxu0 0.0
    %3142 = vmatpush1.msra.mxu0 0.0
    %3143 = vmatprep.subr.mxu0 0.0
    %3144 = vmatpush1.msra.mxu0 0.0
    %3145 = vmatprep.subr.mxu0 0.0
    %3146 = vmatpush1.msra.mxu0 0.0
    %3147 = vmatprep.subr.mxu0 0.0
    %3148 = vmatpush1.msra.mxu0 0.0
    %3149 = vmatprep.subr.mxu0 0.0
    %3150 = vmatpush1.msra.mxu0 0.0
    %3151 = vmatprep.subr.mxu0 0.0
    %3152 = vmatpush1.msra.mxu0 0.0
    %3153 = vmatprep.subr.mxu0 0.0
    %3154 = vmatpush1.msra.mxu0 0.0
    %3155 = vmatprep.subr.mxu0 0.0
    %3156 = vmatpush1.msra.mxu0 0.0
    %3157 = vmatprep.subr.mxu0 0.0
    %3158 = vmatpush1.msra.mxu0 0.0
    %3159 = vmatprep.subr.mxu0 0.0
    %3160 = vmatpush1.msra.mxu0 0.0
    %3161 = vmatprep.subr.mxu0 0.0
    %3162 = vmatpush1.msra.mxu0 0.0
    %3163 = vmatprep.subr.mxu0 0.0
    %3164 = vmatpush1.msra.mxu0 0.0
    %3165 = vmatprep.subr.mxu0 0.0
    %3166 = vmatpush1.msra.mxu0 0.0
    %3167 = vmatprep.subr.mxu0 0.0
    %3168 = vmatpush1.msra.mxu0 0.0
    %3169 = vmatprep.subr.mxu0 0.0
    %3170 = vmatpush1.msra.mxu0 0.0
    %3171 = vmatprep.subr.mxu0 0.0
    %3172 = vmatpush1.msra.mxu0 0.0
    %3173 = vmatprep.subr.mxu0 0.0
    %3174 = vmatpush1.msra.mxu0 0.0
    %3175 = vmatprep.subr.mxu0 0.0
    %3176 = vmatpush1.msra.mxu0 0.0
    %3177 = vmatprep.subr.mxu0 0.0
    %3178 = vmatpush1.msra.mxu0 0.0
    %3179 = vmatprep.subr.mxu0 0.0
    %3180 = vmatpush1.msra.mxu0 0.0
    %3181 = vmatprep.subr.mxu0 0.0
    %3182 = vmatpush1.msra.mxu0 0.0
    %3183 = vmatprep.subr.mxu0 0.0
    %3184 = vmatpush1.msra.mxu0 0.0
    %3185 = vmatprep.subr.mxu0 0.0
    %3186 = vmatpush1.msra.mxu0 0.0
    %3187 = vmatprep.subr.mxu0 0.0
    %3188 = vmatpush1.msra.mxu0 0.0
    %3189 = vmatprep.subr.mxu0 0.0
    %3190 = vmatpush1.msra.mxu0 0.0
    %3191 = vmatprep.subr.mxu0 0.0
    %3192 = vmatpush1.msra.mxu0 0.0
    %3193 = vmatprep.subr.mxu0 0.0
    %3194 = vmatpush1.msra.mxu0 0.0
    %3195 = vmatprep.subr.mxu0 0.0
    %3196 = vmatpush1.msra.mxu0 0.0
    %3197 = vmatprep.mubr.f32.mxu0 0.0
    %3198 = vmatmul.mubr.f32.gmra.mrb[0].mxu0 %v3128
    %v3199 = vpop.f32.mrb[0].mxu0
    %v3200 = vadd.f32 0.0, %v3199
    %v3201 = vpop.f32.mrb[0].mxu0
    %3202 = vmatprep.mubr.f32.mxu0 0.0
    %3203 = vmatmul.mubr.f32.gmra.mrb[0].mxu0 %v3131
    %v3204 = vpop.f32.mrb[0].mxu0
    %v3205 = vadd.f32 0.0, %v3204
    %v3206 = vpop.f32.mrb[0].mxu0
    %3207 = vdwg.mxu0
    %v3208 = vadd.f32 %v3023, %v3200
    %v3209 = vadd.f32 %v3024, %v3205
    %v3211 = vlaneseq
    %v3212 = vshrl.u32 %v3211, 7
    %v3213 = vsub.s32 0, %v3212
    %v3214 = vrot.slane %v175, %v3213
    %v3217 = vsel %vm393, %v3208, 0
    %v3220 = vsel %vm393, %v3209, 0
    %3222 = vmatprep.subr.mxu0 0.0
    %3223 = vmatpush1.msra.mxu0 %v171
    %3224 = vmatprep.subr.mxu0 0.0
    %3225 = vmatpush1.msra.mxu0 %v172
    %3226 = vmatprep.subr.mxu0 0.0
    %3227 = vmatpush1.msra.mxu0 %v173
    %3228 = vmatprep.subr.mxu0 0.0
    %3229 = vmatpush1.msra.mxu0 %v174
    %3230 = vmatprep.subr.mxu0 0.0
    %3231 = vmatpush1.msra.mxu0 0.0
    %3232 = vmatprep.subr.mxu0 0.0
    %3233 = vmatpush1.msra.mxu0 0.0
    %3234 = vmatprep.subr.mxu0 0.0
    %3235 = vmatpush1.msra.mxu0 0.0
    %3236 = vmatprep.subr.mxu0 0.0
    %3237 = vmatpush1.msra.mxu0 0.0
    %3238 = vmatprep.subr.mxu0 0.0
    %3239 = vmatpush1.msra.mxu0 0.0
    %3240 = vmatprep.subr.mxu0 0.0
    %3241 = vmatpush1.msra.mxu0 0.0
    %3242 = vmatprep.subr.mxu0 0.0
    %3243 = vmatpush1.msra.mxu0 0.0
    %3244 = vmatprep.subr.mxu0 0.0
    %3245 = vmatpush1.msra.mxu0 0.0
    %3246 = vmatprep.subr.mxu0 0.0
    %3247 = vmatpush1.msra.mxu0 0.0
    %3248 = vmatprep.subr.mxu0 0.0
    %3249 = vmatpush1.msra.mxu0 0.0
    %3250 = vmatprep.subr.mxu0 0.0
    %3251 = vmatpush1.msra.mxu0 0.0
    %3252 = vmatprep.subr.mxu0 0.0
    %3253 = vmatpush1.msra.mxu0 0.0
    %3254 = vmatprep.subr.mxu0 0.0
    %3255 = vmatpush1.msra.mxu0 0.0
    %3256 = vmatprep.subr.mxu0 0.0
    %3257 = vmatpush1.msra.mxu0 0.0
    %3258 = vmatprep.subr.mxu0 0.0
    %3259 = vmatpush1.msra.mxu0 0.0
    %3260 = vmatprep.subr.mxu0 0.0
    %3261 = vmatpush1.msra.mxu0 0.0
    %3262 = vmatprep.subr.mxu0 0.0
    %3263 = vmatpush1.msra.mxu0 0.0
    %3264 = vmatprep.subr.mxu0 0.0
    %3265 = vmatpush1.msra.mxu0 0.0
    %3266 = vmatprep.subr.mxu0 0.0
    %3267 = vmatpush1.msra.mxu0 0.0
    %3268 = vmatprep.subr.mxu0 0.0
    %3269 = vmatpush1.msra.mxu0 0.0
    %3270 = vmatprep.subr.mxu0 0.0
    %3271 = vmatpush1.msra.mxu0 0.0
    %3272 = vmatprep.subr.mxu0 0.0
    %3273 = vmatpush1.msra.mxu0 0.0
    %3274 = vmatprep.subr.mxu0 0.0
    %3275 = vmatpush1.msra.mxu0 0.0
    %3276 = vmatprep.subr.mxu0 0.0
    %3277 = vmatpush1.msra.mxu0 0.0
    %3278 = vmatprep.subr.mxu0 0.0
    %3279 = vmatpush1.msra.mxu0 0.0
    %3280 = vmatprep.subr.mxu0 0.0
    %3281 = vmatpush1.msra.mxu0 0.0
    %3282 = vmatprep.subr.mxu0 0.0
    %3283 = vmatpush1.msra.mxu0 0.0
    %3284 = vmatprep.subr.mxu0 0.0
    %3285 = vmatpush1.msra.mxu0 0.0
    %3286 = vmatprep.mubr.f32.mxu0 0.0
    %3287 = vmatmul.mubr.f32.gmra.mrb[0].mxu0 %v3217
    %v3288 = vpop.f32.mrb[0].mxu0
    %v3289 = vadd.f32 %v3214, %v3288
    %v3290 = vpop.f32.mrb[0].mxu0
    %3291 = vmatprep.mubr.f32.mxu0 0.0
    %3292 = vmatmul.mubr.f32.gmra.mrb[0].mxu0 %v3220
    %v3293 = vpop.f32.mrb[0].mxu0
    %v3294 = vadd.f32 %v3214, %v3293
    %v3295 = vpop.f32.mrb[0].mxu0
    %3296 = vdwg.mxu0
    %v3299 = vrot.slane %v3289, 1
    %v3300 = vrot.slane %v3289, 2
    %v3301 = vrot.slane %v3289, 3
    %v3302 = vrot.slane %v3289, 4
    %v3303 = vrot.slane %v3289, 5
    %v3304 = vrot.slane %v3289, 6
    %v3305 = vrot.slane %v3289, 7
    %v3306 = vrot.slane %v3294, 1
    %v3307 = vrot.slane %v3294, 2
    %v3308 = vrot.slane %v3294, 3
    %v3309 = vrot.slane %v3294, 4
    %v3310 = vrot.slane %v3294, 5
    %v3311 = vrot.slane %v3294, 6
    %v3312 = vrot.slane %v3294, 7
    %v3329 = vadd.f32 %v1862, %v3289
    %v3330 = vadd.f32 %v1863, %v3299
    %v3331 = vadd.f32 %v1864, %v3300
    %v3332 = vadd.f32 %v1865, %v3301
    %v3333 = vadd.f32 %v1866, %v3302
    %v3334 = vadd.f32 %v1867, %v3303
    %v3335 = vadd.f32 %v1868, %v3304
    %v3336 = vadd.f32 %v1869, %v3305
    %v3337 = vadd.f32 %v1870, %v3294
    %v3338 = vadd.f32 %v1871, %v3306
    %v3339 = vadd.f32 %v1872, %v3307
    %v3340 = vadd.f32 %v1873, %v3308
    %v3341 = vadd.f32 %v1874, %v3309
    %v3342 = vadd.f32 %v1875, %v3310
    %v3343 = vadd.f32 %v1876, %v3311
    %v3344 = vadd.f32 %v1877, %v3312
    %v3361 = vrot.slane %v3330, 7
    %v3362 = vsel %vm357, %v3361, %v3329
    %v3363 = vrot.slane %v3331, 6
    %v3364 = vsel %vm360, %v3363, %v3362
    %v3365 = vrot.slane %v3332, 5
    %v3366 = vsel %vm363, %v3365, %v3364
    %v3367 = vrot.slane %v3333, 4
    %v3368 = vsel %vm366, %v3367, %v3366
    %v3369 = vrot.slane %v3334, 3
    %v3370 = vsel %vm369, %v3369, %v3368
    %v3371 = vrot.slane %v3335, 2
    %v3372 = vsel %vm372, %v3371, %v3370
    %v3373 = vrot.slane %v3336, 1
    %v3374 = vsel %vm375, %v3373, %v3372
    %v3375 = vrot.slane %v3338, 7
    %v3376 = vsel %vm357, %v3375, %v3337
    %v3377 = vrot.slane %v3339, 6
    %v3378 = vsel %vm360, %v3377, %v3376
    %v3379 = vrot.slane %v3340, 5
    %v3380 = vsel %vm363, %v3379, %v3378
    %v3381 = vrot.slane %v3341, 4
    %v3382 = vsel %vm366, %v3381, %v3380
    %v3383 = vrot.slane %v3342, 3
    %v3384 = vsel %vm369, %v3383, %v3382
    %v3385 = vrot.slane %v3343, 2
    %v3386 = vsel %vm372, %v3385, %v3384
    %v3387 = vrot.slane %v3344, 1
    %v3388 = vsel %vm375, %v3387, %v3386
    %v3391 = vsel %vm393, %v3374, 0.0
    %3392 = vadd.xlane.f32.xlu0 %v3391
    %v3393 = vpop.xlane.xlu0 %3392
    %v3394 = vsel %vm393, %v3388, 0.0
    %3395 = vadd.xlane.f32.xlu0 %v3394
    %v3396 = vpop.xlane.xlu0 %3395
    %v3397 = vmul.f32 %v3393, %v400
    %v3398 = vmul.f32 %v3396, %v400
    %v3401 = vrot.slane %v3397, 1
    %v3402 = vrot.slane %v3397, 2
    %v3403 = vrot.slane %v3397, 3
    %v3404 = vrot.slane %v3397, 4
    %v3405 = vrot.slane %v3397, 5
    %v3406 = vrot.slane %v3397, 6
    %v3407 = vrot.slane %v3397, 7
    %v3408 = vrot.slane %v3398, 1
    %v3409 = vrot.slane %v3398, 2
    %v3410 = vrot.slane %v3398, 3
    %v3411 = vrot.slane %v3398, 4
    %v3412 = vrot.slane %v3398, 5
    %v3413 = vrot.slane %v3398, 6
    %v3414 = vrot.slane %v3398, 7
    %v3431 = vsub.f32 %v3329, %v3397
    %v3432 = vsub.f32 %v3330, %v3401
    %v3433 = vsub.f32 %v3331, %v3402
    %v3434 = vsub.f32 %v3332, %v3403
    %v3435 = vsub.f32 %v3333, %v3404
    %v3436 = vsub.f32 %v3334, %v3405
    %v3437 = vsub.f32 %v3335, %v3406
    %v3438 = vsub.f32 %v3336, %v3407
    %v3439 = vsub.f32 %v3337, %v3398
    %v3440 = vsub.f32 %v3338, %v3408
    %v3441 = vsub.f32 %v3339, %v3409
    %v3442 = vsub.f32 %v3340, %v3410
    %v3443 = vsub.f32 %v3341, %v3411
    %v3444 = vsub.f32 %v3342, %v3412
    %v3445 = vsub.f32 %v3343, %v3413
    %v3446 = vsub.f32 %v3344, %v3414
    %v3447 = vmul.f32 %v3431, %v3431
    %v3448 = vmul.f32 %v3432, %v3432
    %v3449 = vmul.f32 %v3433, %v3433
    %v3450 = vmul.f32 %v3434, %v3434
    %v3451 = vmul.f32 %v3435, %v3435
    %v3452 = vmul.f32 %v3436, %v3436
    %v3453 = vmul.f32 %v3437, %v3437
    %v3454 = vmul.f32 %v3438, %v3438
    %v3455 = vmul.f32 %v3439, %v3439
    %v3456 = vmul.f32 %v3440, %v3440
    %v3457 = vmul.f32 %v3441, %v3441
    %v3458 = vmul.f32 %v3442, %v3442
    %v3459 = vmul.f32 %v3443, %v3443
    %v3460 = vmul.f32 %v3444, %v3444
    %v3461 = vmul.f32 %v3445, %v3445
    %v3462 = vmul.f32 %v3446, %v3446
    %v3479 = vrot.slane %v3448, 7
    %v3480 = vsel %vm357, %v3479, %v3447
    %v3481 = vrot.slane %v3449, 6
    %v3482 = vsel %vm360, %v3481, %v3480
    %v3483 = vrot.slane %v3450, 5
    %v3484 = vsel %vm363, %v3483, %v3482
    %v3485 = vrot.slane %v3451, 4
    %v3486 = vsel %vm366, %v3485, %v3484
    %v3487 = vrot.slane %v3452, 3
    %v3488 = vsel %vm369, %v3487, %v3486
    %v3489 = vrot.slane %v3453, 2
    %v3490 = vsel %vm372, %v3489, %v3488
    %v3491 = vrot.slane %v3454, 1
    %v3492 = vsel %vm375, %v3491, %v3490
    %v3493 = vrot.slane %v3456, 7
    %v3494 = vsel %vm357, %v3493, %v3455
    %v3495 = vrot.slane %v3457, 6
    %v3496 = vsel %vm360, %v3495, %v3494
    %v3497 = vrot.slane %v3458, 5
    %v3498 = vsel %vm363, %v3497, %v3496
    %v3499 = vrot.slane %v3459, 4
    %v3500 = vsel %vm366, %v3499, %v3498
    %v3501 = vrot.slane %v3460, 3
    %v3502 = vsel %vm369, %v3501, %v3500
    %v3503 = vrot.slane %v3461, 2
    %v3504 = vsel %vm372, %v3503, %v3502
    %v3505 = vrot.slane %v3462, 1
    %v3506 = vsel %vm375, %v3505, %v3504
    %v3509 = vsel %vm393, %v3492, 0.0
    %3510 = vadd.xlane.f32.xlu0 %v3509
    %v3511 = vpop.xlane.xlu0 %3510
    %v3512 = vsel %vm393, %v3506, 0.0
    %3513 = vadd.xlane.f32.xlu0 %v3512
    %v3514 = vpop.xlane.xlu0 %3513
    %v3515 = vmul.f32 %v3511, %v400
    %v3516 = vmul.f32 %v3514, %v400
    %v3517 = vadd.f32 %v3515, 1e-05
    %v3518 = vadd.f32 %v3516, 1e-05
    %v3519 = vrsqrt.pop %v3517
    %v3520 = vrsqrt.pop %v3518
    %v3523 = vrot.slane %v3519, 1
    %v3524 = vrot.slane %v3519, 2
    %v3525 = vrot.slane %v3519, 3
    %v3526 = vrot.slane %v3519, 4
    %v3527 = vrot.slane %v3519, 5
    %v3528 = vrot.slane %v3519, 6
    %v3529 = vrot.slane %v3519, 7
    %v3530 = vrot.slane %v3520, 1
    %v3531 = vrot.slane %v3520, 2
    %v3532 = vrot.slane %v3520, 3
    %v3533 = vrot.slane %v3520, 4
    %v3534 = vrot.slane %v3520, 5
    %v3535 = vrot.slane %v3520, 6
    %v3536 = vrot.slane %v3520, 7
    %v3553 = vmul.f32 %v3431, %v3519
    %v3554 = vmul.f32 %v3432, %v3523
    %v3555 = vmul.f32 %v3433, %v3524
    %v3556 = vmul.f32 %v3434, %v3525
    %v3557 = vmul.f32 %v3435, %v3526
    %v3558 = vmul.f32 %v3436, %v3527
    %v3559 = vmul.f32 %v3437, %v3528
    %v3560 = vmul.f32 %v3438, %v3529
    %v3561 = vmul.f32 %v3439, %v3520
    %v3562 = vmul.f32 %v3440, %v3530
    %v3563 = vmul.f32 %v3441, %v3531
    %v3564 = vmul.f32 %v3442, %v3532
    %v3565 = vmul.f32 %v3443, %v3533
    %v3566 = vmul.f32 %v3444, %v3534
    %v3567 = vmul.f32 %v3445, %v3535
    %v3568 = vmul.f32 %v3446, %v3536
    %v3570 = vlaneseq
    %v3571 = vshrl.u32 %v3570, 7
    %v3572 = vsub.s32 0, %v3571
    %v3573 = vrot.slane %v134, %v3572
    %v3575 = vmul.f32 %v3553, %v3573
    %v3576 = vmul.f32 %v3554, %v3573
    %v3577 = vmul.f32 %v3555, %v3573
    %v3578 = vmul.f32 %v3556, %v3573
    %v3579 = vmul.f32 %v3557, %v3573
    %v3580 = vmul.f32 %v3558, %v3573
    %v3581 = vmul.f32 %v3559, %v3573
    %v3582 = vmul.f32 %v3560, %v3573
    %v3583 = vmul.f32 %v3561, %v3573
    %v3584 = vmul.f32 %v3562, %v3573
    %v3585 = vmul.f32 %v3563, %v3573
    %v3586 = vmul.f32 %v3564, %v3573
    %v3587 = vmul.f32 %v3565, %v3573
    %v3588 = vmul.f32 %v3566, %v3573
    %v3589 = vmul.f32 %v3567, %v3573
    %v3590 = vmul.f32 %v3568, %v3573
    %v3592 = vlaneseq
    %v3593 = vshrl.u32 %v3592, 7
    %v3594 = vsub.s32 0, %v3593
    %v3595 = vrot.slane %v135, %v3594
    %v3597 = vadd.f32 %v3575, %v3595
    %v3598 = vadd.f32 %v3576, %v3595
    %v3599 = vadd.f32 %v3577, %v3595
    %v3600 = vadd.f32 %v3578, %v3595
    %v3601 = vadd.f32 %v3579, %v3595
    %v3602 = vadd.f32 %v3580, %v3595
    %v3603 = vadd.f32 %v3581, %v3595
    %v3604 = vadd.f32 %v3582, %v3595
    %v3605 = vadd.f32 %v3583, %v3595
    %v3606 = vadd.f32 %v3584, %v3595
    %v3607 = vadd.f32 %v3585, %v3595
    %v3608 = vadd.f32 %v3586, %v3595
    %v3609 = vadd.f32 %v3587, %v3595
    %v3610 = vadd.f32 %v3588, %v3595
    %v3611 = vadd.f32 %v3589, %v3595
    %v3612 = vadd.f32 %v3590, %v3595
    %v3629 = vrot.slane %v3598, 7
    %v3630 = vsel %vm357, %v3629, %v3597
    %v3631 = vrot.slane %v3599, 6
    %v3632 = vsel %vm360, %v3631, %v3630
    %v3633 = vrot.slane %v3600, 5
    %v3634 = vsel %vm363, %v3633, %v3632
    %v3635 = vrot.slane %v3602, 7
    %v3636 = vsel %vm357, %v3635, %v3601
    %v3637 = vrot.slane %v3603, 6
    %v3638 = vsel %vm360, %v3637, %v3636
    %v3639 = vrot.slane %v3604, 5
    %v3640 = vsel %vm363, %v3639, %v3638
    %v3641 = vrot.slane %v3606, 7
    %v3642 = vsel %vm357, %v3641, %v3605
    %v3643 = vrot.slane %v3607, 6
    %v3644 = vsel %vm360, %v3643, %v3642
    %v3645 = vrot.slane %v3608, 5
    %v3646 = vsel %vm363, %v3645, %v3644
    %v3647 = vrot.slane %v3610, 7
    %v3648 = vsel %vm357, %v3647, %v3609
    %v3649 = vrot.slane %v3611, 6
    %v3650 = vsel %vm360, %v3649, %v3648
    %v3651 = vrot.slane %v3612, 5
    %v3652 = vsel %vm363, %v3651, %v3650
    %s3657 = scalar_lea.vmem [#allocation2], 8
    %vm3658 = vcmask 257024
    %3659 = vst.msk [vmem:[%s3657 + $0x1] sm:$0xf] %vm3658, %v3634
    %3660 = vst.msk [vmem:[%s3657 + $0x9] sm:$0xf] %vm3658, %v3640
    %3661 = vst.msk [vmem:[%s3657 + $0x11] sm:$0xf] %vm3658, %v3646
    %3662 = vst.msk [vmem:[%s3657 + $0x19] sm:$0xf] %vm3658, %v3652
    %v3663 = vld [vmem:[#allocation2] sm:$0xff]
    %v3664 = vld [vmem:[#allocation2 + $0x8] sm:$0xff]
    %v3665 = vld [vmem:[#allocation2 + $0x10] sm:$0xff]
    %v3666 = vld [vmem:[#allocation2 + $0x18] sm:$0xff]
    %v3667 = vld [vmem:[#allocation2 + $0x20] sm:$0xff]
    %v3668 = vld [vmem:[#allocation2 + $0x28] sm:$0xff]
    %v3673 = vcombine.high %v3663, %v3663
    %v3674 = vcombine.high %v3664, %v3664
    %v3675 = vcombine.high %v3665, %v3665
    %v3676 = vcombine.high %v3666, %v3666
    %vm3677 = vcmask 1042432
    %vm3678 = vcmask 1046532
    %vm3679 = vmor %vm3677, %vm3678
    %v3680 = vrot.slane %v3663, 5
    %v3681 = vrot.slane %v3680, 4
    %v3682 = vrot.slane %v3673, 5
    %v3683 = vsel %vm3679, %v3681, %v3682
    %v3684 = vrot.slane %v3664, 5
    %v3685 = vrot.slane %v3684, 4
    %v3686 = vrot.slane %v3674, 5
    %v3687 = vsel %vm3679, %v3685, %v3686
    %v3688 = vrot.slane %v3665, 5
    %v3689 = vrot.slane %v3688, 4
    %v3690 = vrot.slane %v3675, 5
    %v3691 = vsel %vm3679, %v3689, %v3690
    %v3692 = vrot.slane %v3666, 5
    %v3693 = vrot.slane %v3692, 4
    %v3694 = vrot.slane %v3676, 5
    %v3695 = vsel %vm3679, %v3693, %v3694
    %v3696 = vcombine.low %v3683, %v3687
    %v3697 = vcombine.low %v3691, %v3695
    %v3698 = vsel %vm393, %v3696, 0
    %v3700 = vsel %vm393, %v3697, 0
    %3702 = vmatprep.subr.mxu0 0.0
    %3703 = vmatpush1.msra.mxu0 %v180
    %3704 = vmatprep.subr.mxu0 0.0
    %3705 = vmatpush1.msra.mxu0 %v181
    %3706 = vmatprep.subr.mxu0 0.0
    %3707 = vmatpush1.msra.mxu0 %v182
    %3708 = vmatprep.subr.mxu0 0.0
    %3709 = vmatpush1.msra.mxu0 %v183
    %3710 = vmatprep.subr.mxu0 0.0
    %3711 = vmatpush1.msra.mxu0 0.0
    %3712 = vmatprep.subr.mxu0 0.0
    %3713 = vmatpush1.msra.mxu0 0.0
    %3714 = vmatprep.subr.mxu0 0.0
    %3715 = vmatpush1.msra.mxu0 0.0
    %3716 = vmatprep.subr.mxu0 0.0
    %3717 = vmatpush1.msra.mxu0 0.0
    %3718 = vmatprep.subr.mxu0 0.0
    %3719 = vmatpush1.msra.mxu0 0.0
    %3720 = vmatprep.subr.mxu0 0.0
    %3721 = vmatpush1.msra.mxu0 0.0
    %3722 = vmatprep.subr.mxu0 0.0
    %3723 = vmatpush1.msra.mxu0 0.0
    %3724 = vmatprep.subr.mxu0 0.0
    %3725 = vmatpush1.msra.mxu0 0.0
    %3726 = vmatprep.subr.mxu0 0.0
    %3727 = vmatpush1.msra.mxu0 0.0
    %3728 = vmatprep.subr.mxu0 0.0
    %3729 = vmatpush1.msra.mxu0 0.0
    %3730 = vmatprep.subr.mxu0 0.0
    %3731 = vmatpush1.msra.mxu0 0.0
    %3732 = vmatprep.subr.mxu0 0.0
    %3733 = vmatpush1.msra.mxu0 0.0
    %3734 = vmatprep.subr.mxu0 0.0
    %3735 = vmatpush1.msra.mxu0 0.0
    %3736 = vmatprep.subr.mxu0 0.0
    %3737 = vmatpush1.msra.mxu0 0.0
    %3738 = vmatprep.subr.mxu0 0.0
    %3739 = vmatpush1.msra.mxu0 0.0
    %3740 = vmatprep.subr.mxu0 0.0
    %3741 = vmatpush1.msra.mxu0 0.0
    %3742 = vmatprep.subr.mxu0 0.0
    %3743 = vmatpush1.msra.mxu0 0.0
    %3744 = vmatprep.subr.mxu0 0.0
    %3745 = vmatpush1.msra.mxu0 0.0
    %3746 = vmatprep.subr.mxu0 0.0
    %3747 = vmatpush1.msra.mxu0 0.0
    %3748 = vmatprep.subr.mxu0 0.0
    %3749 = vmatpush1.msra.mxu0 0.0
    %3750 = vmatprep.subr.mxu0 0.0
    %3751 = vmatpush1.msra.mxu0 0.0
    %3752 = vmatprep.subr.mxu0 0.0
    %3753 = vmatpush1.msra.mxu0 0.0
    %3754 = vmatprep.subr.mxu0 0.0
    %3755 = vmatpush1.msra.mxu0 0.0
    %3756 = vmatprep.subr.mxu0 0.0
    %3757 = vmatpush1.msra.mxu0 0.0
    %3758 = vmatprep.subr.mxu0 0.0
    %3759 = vmatpush1.msra.mxu0 0.0
    %3760 = vmatprep.subr.mxu0 0.0
    %3761 = vmatpush1.msra.mxu0 0.0
    %3762 = vmatprep.subr.mxu0 0.0
    %3763 = vmatpush1.msra.mxu0 0.0
    %3764 = vmatprep.subr.mxu0 0.0
    %3765 = vmatpush1.msra.mxu0 0.0
    %3766 = vmatprep.mubr.f32.mxu0 0.0
    %3767 = vmatmul.mubr.f32.gmra.mrb[0].mxu0 %v3698
    %v3768 = vpop.f32.mrb[0].mxu0
    %v3769 = vadd.f32 0.0, %v3768
    %v3770 = vpop.f32.mrb[0].mxu0
    %3771 = vmatprep.mubr.f32.mxu0 0.0
    %3772 = vmatmul.mubr.f32.gmra.mrb[0].mxu0 %v3700
    %v3773 = vpop.f32.mrb[0].mxu0
    %v3774 = vadd.f32 0.0, %v3773
    %v3775 = vpop.f32.mrb[0].mxu0
    %3776 = vdwg.mxu0
    %v3777 = vcombine.low %v3663, %v3664
    %v3778 = vcombine.low %v3665, %v3666
    %v3779 = vsel %vm393, %v3777, 0
    %v3781 = vsel %vm393, %v3778, 0
    %3783 = vmatprep.subr.mxu0 0.0
    %3784 = vmatpush1.msra.mxu0 %v176
    %3785 = vmatprep.subr.mxu0 0.0
    %3786 = vmatpush1.msra.mxu0 %v177
    %3787 = vmatprep.subr.mxu0 0.0
    %3788 = vmatpush1.msra.mxu0 %v178
    %3789 = vmatprep.subr.mxu0 0.0
    %3790 = vmatpush1.msra.mxu0 %v179
    %3791 = vmatprep.subr.mxu0 0.0
    %3792 = vmatpush1.msra.mxu0 0.0
    %3793 = vmatprep.subr.mxu0 0.0
    %3794 = vmatpush1.msra.mxu0 0.0
    %3795 = vmatprep.subr.mxu0 0.0
    %3796 = vmatpush1.msra.mxu0 0.0
    %3797 = vmatprep.subr.mxu0 0.0
    %3798 = vmatpush1.msra.mxu0 0.0
    %3799 = vmatprep.subr.mxu0 0.0
    %3800 = vmatpush1.msra.mxu0 0.0
    %3801 = vmatprep.subr.mxu0 0.0
    %3802 = vmatpush1.msra.mxu0 0.0
    %3803 = vmatprep.subr.mxu0 0.0
    %3804 = vmatpush1.msra.mxu0 0.0
    %3805 = vmatprep.subr.mxu0 0.0
    %3806 = vmatpush1.msra.mxu0 0.0
    %3807 = vmatprep.subr.mxu0 0.0
    %3808 = vmatpush1.msra.mxu0 0.0
    %3809 = vmatprep.subr.mxu0 0.0
    %3810 = vmatpush1.msra.mxu0 0.0
    %3811 = vmatprep.subr.mxu0 0.0
    %3812 = vmatpush1.msra.mxu0 0.0
    %3813 = vmatprep.subr.mxu0 0.0
    %3814 = vmatpush1.msra.mxu0 0.0
    %3815 = vmatprep.subr.mxu0 0.0
    %3816 = vmatpush1.msra.mxu0 0.0
    %3817 = vmatprep.subr.mxu0 0.0
    %3818 = vmatpush1.msra.mxu0 0.0
    %3819 = vmatprep.subr.mxu0 0.0
    %3820 = vmatpush1.msra.mxu0 0.0
    %3821 = vmatprep.subr.mxu0 0.0
    %3822 = vmatpush1.msra.mxu0 0.0
    %3823 = vmatprep.subr.mxu0 0.0
    %3824 = vmatpush1.msra.mxu0 0.0
    %3825 = vmatprep.subr.mxu0 0.0
    %3826 = vmatpush1.msra.mxu0 0.0
    %3827 = vmatprep.subr.mxu0 0.0
    %3828 = vmatpush1.msra.mxu0 0.0
    %3829 = vmatprep.subr.mxu0 0.0
    %3830 = vmatpush1.msra.mxu0 0.0
    %3831 = vmatprep.subr.mxu0 0.0
    %3832 = vmatpush1.msra.mxu0 0.0
    %3833 = vmatprep.subr.mxu0 0.0
    %3834 = vmatpush1.msra.mxu0 0.0
    %3835 = vmatprep.subr.mxu0 0.0
    %3836 = vmatpush1.msra.mxu0 0.0
    %3837 = vmatprep.subr.mxu0 0.0
    %3838 = vmatpush1.msra.mxu0 0.0
    %3839 = vmatprep.subr.mxu0 0.0
    %3840 = vmatpush1.msra.mxu0 0.0
    %3841 = vmatprep.subr.mxu0 0.0
    %3842 = vmatpush1.msra.mxu0 0.0
    %3843 = vmatprep.subr.mxu0 0.0
    %3844 = vmatpush1.msra.mxu0 0.0
    %3845 = vmatprep.subr.mxu0 0.0
    %3846 = vmatpush1.msra.mxu0 0.0
    %3847 = vmatprep.mubr.f32.mxu0 0.0
    %3848 = vmatmul.mubr.f32.gmra.mrb[0].mxu0 %v3779
    %v3849 = vpop.f32.mrb[0].mxu0
    %v3850 = vadd.f32 %v3769, %v3849
    %v3851 = vpop.f32.mrb[0].mxu0
    %3852 = vmatprep.mubr.f32.mxu0 0.0
    %3853 = vmatmul.mubr.f32.gmra.mrb[0].mxu0 %v3781
    %v3854 = vpop.f32.mrb[0].mxu0
    %v3855 = vadd.f32 %v3774, %v3854
    %v3856 = vpop.f32.mrb[0].mxu0
    %3857 = vdwg.mxu0
    %vm3858 = vcmask 1041408
    %vm3859 = vcmask 1045508
    %vm3860 = vmor %vm3858, %vm3859
    %v3861 = vrot.slane %v3663, 6
    %v3862 = vrot.slane %v3861, 4
    %v3863 = vrot.slane %v3673, 6
    %v3864 = vsel %vm3860, %v3862, %v3863
    %v3865 = vrot.slane %v3664, 6
    %v3866 = vrot.slane %v3865, 4
    %v3867 = vrot.slane %v3674, 6
    %v3868 = vsel %vm3860, %v3866, %v3867
    %v3869 = vrot.slane %v3665, 6
    %v3870 = vrot.slane %v3869, 4
    %v3871 = vrot.slane %v3675, 6
    %v3872 = vsel %vm3860, %v3870, %v3871
    %v3873 = vrot.slane %v3666, 6
    %v3874 = vrot.slane %v3873, 4
    %v3875 = vrot.slane %v3676, 6
    %v3876 = vsel %vm3860, %v3874, %v3875
    %v3877 = vcombine.low %v3864, %v3868
    %v3878 = vcombine.low %v3872, %v3876
    %v3879 = vsel %vm393, %v3877, 0
    %v3881 = vsel %vm393, %v3878, 0
    %3883 = vmatprep.subr.mxu0 0.0
    %3884 = vmatpush1.msra.mxu0 %v184
    %3885 = vmatprep.subr.mxu0 0.0
    %3886 = vmatpush1.msra.mxu0 %v185
    %3887 = vmatprep.subr.mxu0 0.0
    %3888 = vmatpush1.msra.mxu0 %v186
    %3889 = vmatprep.subr.mxu0 0.0
    %3890 = vmatpush1.msra.mxu0 %v187
    %3891 = vmatprep.subr.mxu0 0.0
    %3892 = vmatpush1.msra.mxu0 0.0
    %3893 = vmatprep.subr.mxu0 0.0
    %3894 = vmatpush1.msra.mxu0 0.0
    %3895 = vmatprep.subr.mxu0 0.0
    %3896 = vmatpush1.msra.mxu0 0.0
    %3897 = vmatprep.subr.mxu0 0.0
    %3898 = vmatpush1.msra.mxu0 0.0
    %3899 = vmatprep.subr.mxu0 0.0
    %3900 = vmatpush1.msra.mxu0 0.0
    %3901 = vmatprep.subr.mxu0 0.0
    %3902 = vmatpush1.msra.mxu0 0.0
    %3903 = vmatprep.subr.mxu0 0.0
    %3904 = vmatpush1.msra.mxu0 0.0
    %3905 = vmatprep.subr.mxu0 0.0
    %3906 = vmatpush1.msra.mxu0 0.0
    %3907 = vmatprep.subr.mxu0 0.0
    %3908 = vmatpush1.msra.mxu0 0.0
    %3909 = vmatprep.subr.mxu0 0.0
    %3910 = vmatpush1.msra.mxu0 0.0
    %3911 = vmatprep.subr.mxu0 0.0
    %3912 = vmatpush1.msra.mxu0 0.0
    %3913 = vmatprep.subr.mxu0 0.0
    %3914 = vmatpush1.msra.mxu0 0.0
    %3915 = vmatprep.subr.mxu0 0.0
    %3916 = vmatpush1.msra.mxu0 0.0
    %3917 = vmatprep.subr.mxu0 0.0
    %3918 = vmatpush1.msra.mxu0 0.0
    %3919 = vmatprep.subr.mxu0 0.0
    %3920 = vmatpush1.msra.mxu0 0.0
    %3921 = vmatprep.subr.mxu0 0.0
    %3922 = vmatpush1.msra.mxu0 0.0
    %3923 = vmatprep.subr.mxu0 0.0
    %3924 = vmatpush1.msra.mxu0 0.0
    %3925 = vmatprep.subr.mxu0 0.0
    %3926 = vmatpush1.msra.mxu0 0.0
    %3927 = vmatprep.subr.mxu0 0.0
    %3928 = vmatpush1.msra.mxu0 0.0
    %3929 = vmatprep.subr.mxu0 0.0
    %3930 = vmatpush1.msra.mxu0 0.0
    %3931 = vmatprep.subr.mxu0 0.0
    %3932 = vmatpush1.msra.mxu0 0.0
    %3933 = vmatprep.subr.mxu0 0.0
    %3934 = vmatpush1.msra.mxu0 0.0
    %3935 = vmatprep.subr.mxu0 0.0
    %3936 = vmatpush1.msra.mxu0 0.0
    %3937 = vmatprep.subr.mxu0 0.0
    %3938 = vmatpush1.msra.mxu0 0.0
    %3939 = vmatprep.subr.mxu0 0.0
    %3940 = vmatpush1.msra.mxu0 0.0
    %3941 = vmatprep.subr.mxu0 0.0
    %3942 = vmatpush1.msra.mxu0 0.0
    %3943 = vmatprep.subr.mxu0 0.0
    %3944 = vmatpush1.msra.mxu0 0.0
    %3945 = vmatprep.subr.mxu0 0.0
    %3946 = vmatpush1.msra.mxu0 0.0
    %3947 = vmatprep.mubr.f32.mxu0 0.0
    %3948 = vmatmul.mubr.f32.gmra.mrb[0].mxu0 %v3879
    %v3949 = vpop.f32.mrb[0].mxu0
    %v3950 = vadd.f32 0.0, %v3949
    %v3951 = vpop.f32.mrb[0].mxu0
    %3952 = vmatprep.mubr.f32.mxu0 0.0
    %3953 = vmatmul.mubr.f32.gmra.mrb[0].mxu0 %v3881
    %v3954 = vpop.f32.mrb[0].mxu0
    %v3955 = vadd.f32 0.0, %v3954
    %v3956 = vpop.f32.mrb[0].mxu0
    %3957 = vdwg.mxu0
    %v3958 = vadd.f32 %v3850, %v3950
    %v3959 = vadd.f32 %v3855, %v3955
    %v3961 = vcombine.low %v3664, %v3665
    %v3962 = vcombine.low %v3666, %v3667
    %v3963 = vsel %vm393, %v3961, 0
    %v3965 = vsel %vm393, %v3962, 0
    %3967 = vmatprep.subr.mxu0 0.0
    %3968 = vmatpush1.msra.mxu0 %v188
    %3969 = vmatprep.subr.mxu0 0.0
    %3970 = vmatpush1.msra.mxu0 %v189
    %3971 = vmatprep.subr.mxu0 0.0
    %3972 = vmatpush1.msra.mxu0 %v190
    %3973 = vmatprep.subr.mxu0 0.0
    %3974 = vmatpush1.msra.mxu0 %v191
    %3975 = vmatprep.subr.mxu0 0.0
    %3976 = vmatpush1.msra.mxu0 0.0
    %3977 = vmatprep.subr.mxu0 0.0
    %3978 = vmatpush1.msra.mxu0 0.0
    %3979 = vmatprep.subr.mxu0 0.0
    %3980 = vmatpush1.msra.mxu0 0.0
    %3981 = vmatprep.subr.mxu0 0.0
    %3982 = vmatpush1.msra.mxu0 0.0
    %3983 = vmatprep.subr.mxu0 0.0
    %3984 = vmatpush1.msra.mxu0 0.0
    %3985 = vmatprep.subr.mxu0 0.0
    %3986 = vmatpush1.msra.mxu0 0.0
    %3987 = vmatprep.subr.mxu0 0.0
    %3988 = vmatpush1.msra.mxu0 0.0
    %3989 = vmatprep.subr.mxu0 0.0
    %3990 = vmatpush1.msra.mxu0 0.0
    %3991 = vmatprep.subr.mxu0 0.0
    %3992 = vmatpush1.msra.mxu0 0.0
    %3993 = vmatprep.subr.mxu0 0.0
    %3994 = vmatpush1.msra.mxu0 0.0
    %3995 = vmatprep.subr.mxu0 0.0
    %3996 = vmatpush1.msra.mxu0 0.0
    %3997 = vmatprep.subr.mxu0 0.0
    %3998 = vmatpush1.msra.mxu0 0.0
    %3999 = vmatprep.subr.mxu0 0.0
    %4000 = vmatpush1.msra.mxu0 0.0
    %4001 = vmatprep.subr.mxu0 0.0
    %4002 = vmatpush1.msra.mxu0 0.0
    %4003 = vmatprep.subr.mxu0 0.0
    %4004 = vmatpush1.msra.mxu0 0.0
    %4005 = vmatprep.subr.mxu0 0.0
    %4006 = vmatpush1.msra.mxu0 0.0
    %4007 = vmatprep.subr.mxu0 0.0
    %4008 = vmatpush1.msra.mxu0 0.0
    %4009 = vmatprep.subr.mxu0 0.0
    %4010 = vmatpush1.msra.mxu0 0.0
    %4011 = vmatprep.subr.mxu0 0.0
    %4012 = vmatpush1.msra.mxu0 0.0
    %4013 = vmatprep.subr.mxu0 0.0
    %4014 = vmatpush1.msra.mxu0 0.0
    %4015 = vmatprep.subr.mxu0 0.0
    %4016 = vmatpush1.msra.mxu0 0.0
    %4017 = vmatprep.subr.mxu0 0.0
    %4018 = vmatpush1.msra.mxu0 0.0
    %4019 = vmatprep.subr.mxu0 0.0
    %4020 = vmatpush1.msra.mxu0 0.0
    %4021 = vmatprep.subr.mxu0 0.0
    %4022 = vmatpush1.msra.mxu0 0.0
    %4023 = vmatprep.subr.mxu0 0.0
    %4024 = vmatpush1.msra.mxu0 0.0
    %4025 = vmatprep.subr.mxu0 0.0
    %4026 = vmatpush1.msra.mxu0 0.0
    %4027 = vmatprep.subr.mxu0 0.0
    %4028 = vmatpush1.msra.mxu0 0.0
    %4029 = vmatprep.subr.mxu0 0.0
    %4030 = vmatpush1.msra.mxu0 0.0
    %4031 = vmatprep.mubr.f32.mxu0 0.0
    %4032 = vmatmul.mubr.f32.gmra.mrb[0].mxu0 %v3963
    %v4033 = vpop.f32.mrb[0].mxu0
    %v4034 = vadd.f32 0.0, %v4033
    %v4035 = vpop.f32.mrb[0].mxu0
    %4036 = vmatprep.mubr.f32.mxu0 0.0
    %4037 = vmatmul.mubr.f32.gmra.mrb[0].mxu0 %v3965
    %v4038 = vpop.f32.mrb[0].mxu0
    %v4039 = vadd.f32 0.0, %v4038
    %v4040 = vpop.f32.mrb[0].mxu0
    %4041 = vdwg.mxu0
    %v4042 = vadd.f32 %v3958, %v4034
    %v4043 = vadd.f32 %v3959, %v4039
    %v4044 = vcombine.high %v3667, %v3667
    %v4045 = vrot.slane %v3667, 5
    %v4046 = vrot.slane %v4045, 4
    %v4047 = vrot.slane %v4044, 5
    %v4048 = vsel %vm3679, %v4046, %v4047
    %v4049 = vcombine.low %v3687, %v3691
    %v4050 = vcombine.low %v3695, %v4048
    %v4051 = vsel %vm393, %v4049, 0
    %v4053 = vsel %vm393, %v4050, 0
    %4055 = vmatprep.subr.mxu0 0.0
    %4056 = vmatpush1.msra.mxu0 %v192
    %4057 = vmatprep.subr.mxu0 0.0
    %4058 = vmatpush1.msra.mxu0 %v193
    %4059 = vmatprep.subr.mxu0 0.0
    %4060 = vmatpush1.msra.mxu0 %v194
    %4061 = vmatprep.subr.mxu0 0.0
    %4062 = vmatpush1.msra.mxu0 %v195
    %4063 = vmatprep.subr.mxu0 0.0
    %4064 = vmatpush1.msra.mxu0 0.0
    %4065 = vmatprep.subr.mxu0 0.0
    %4066 = vmatpush1.msra.mxu0 0.0
    %4067 = vmatprep.subr.mxu0 0.0
    %4068 = vmatpush1.msra.mxu0 0.0
    %4069 = vmatprep.subr.mxu0 0.0
    %4070 = vmatpush1.msra.mxu0 0.0
    %4071 = vmatprep.subr.mxu0 0.0
    %4072 = vmatpush1.msra.mxu0 0.0
    %4073 = vmatprep.subr.mxu0 0.0
    %4074 = vmatpush1.msra.mxu0 0.0
    %4075 = vmatprep.subr.mxu0 0.0
    %4076 = vmatpush1.msra.mxu0 0.0
    %4077 = vmatprep.subr.mxu0 0.0
    %4078 = vmatpush1.msra.mxu0 0.0
    %4079 = vmatprep.subr.mxu0 0.0
    %4080 = vmatpush1.msra.mxu0 0.0
    %4081 = vmatprep.subr.mxu0 0.0
    %4082 = vmatpush1.msra.mxu0 0.0
    %4083 = vmatprep.subr.mxu0 0.0
    %4084 = vmatpush1.msra.mxu0 0.0
    %4085 = vmatprep.subr.mxu0 0.0
    %4086 = vmatpush1.msra.mxu0 0.0
    %4087 = vmatprep.subr.mxu0 0.0
    %4088 = vmatpush1.msra.mxu0 0.0
    %4089 = vmatprep.subr.mxu0 0.0
    %4090 = vmatpush1.msra.mxu0 0.0
    %4091 = vmatprep.subr.mxu0 0.0
    %4092 = vmatpush1.msra.mxu0 0.0
    %4093 = vmatprep.subr.mxu0 0.0
    %4094 = vmatpush1.msra.mxu0 0.0
    %4095 = vmatprep.subr.mxu0 0.0
    %4096 = vmatpush1.msra.mxu0 0.0
    %4097 = vmatprep.subr.mxu0 0.0
    %4098 = vmatpush1.msra.mxu0 0.0
    %4099 = vmatprep.subr.mxu0 0.0
    %4100 = vmatpush1.msra.mxu0 0.0
    %4101 = vmatprep.subr.mxu0 0.0
    %4102 = vmatpush1.msra.mxu0 0.0
    %4103 = vmatprep.subr.mxu0 0.0
    %4104 = vmatpush1.msra.mxu0 0.0
    %4105 = vmatprep.subr.mxu0 0.0
    %4106 = vmatpush1.msra.mxu0 0.0
    %4107 = vmatprep.subr.mxu0 0.0
    %4108 = vmatpush1.msra.mxu0 0.0
    %4109 = vmatprep.subr.mxu0 0.0
    %4110 = vmatpush1.msra.mxu0 0.0
    %4111 = vmatprep.subr.mxu0 0.0
    %4112 = vmatpush1.msra.mxu0 0.0
    %4113 = vmatprep.subr.mxu0 0.0
    %4114 = vmatpush1.msra.mxu0 0.0
    %4115 = vmatprep.subr.mxu0 0.0
    %4116 = vmatpush1.msra.mxu0 0.0
    %4117 = vmatprep.subr.mxu0 0.0
    %4118 = vmatpush1.msra.mxu0 0.0
    %4119 = vmatprep.mubr.f32.mxu0 0.0
    %4120 = vmatmul.mubr.f32.gmra.mrb[0].mxu0 %v4051
    %v4121 = vpop.f32.mrb[0].mxu0
    %v4122 = vadd.f32 0.0, %v4121
    %v4123 = vpop.f32.mrb[0].mxu0
    %4124 = vmatprep.mubr.f32.mxu0 0.0
    %4125 = vmatmul.mubr.f32.gmra.mrb[0].mxu0 %v4053
    %v4126 = vpop.f32.mrb[0].mxu0
    %v4127 = vadd.f32 0.0, %v4126
    %v4128 = vpop.f32.mrb[0].mxu0
    %4129 = vdwg.mxu0
    %v4130 = vadd.f32 %v4042, %v4122
    %v4131 = vadd.f32 %v4043, %v4127
    %v4132 = vrot.slane %v3667, 6
    %v4133 = vrot.slane %v4132, 4
    %v4134 = vrot.slane %v4044, 6
    %v4135 = vsel %vm3860, %v4133, %v4134
    %v4136 = vcombine.low %v3868, %v3872
    %v4137 = vcombine.low %v3876, %v4135
    %v4138 = vsel %vm393, %v4136, 0
    %v4140 = vsel %vm393, %v4137, 0
    %4142 = vmatprep.subr.mxu0 0.0
    %4143 = vmatpush1.msra.mxu0 %v196
    %4144 = vmatprep.subr.mxu0 0.0
    %4145 = vmatpush1.msra.mxu0 %v197
    %4146 = vmatprep.subr.mxu0 0.0
    %4147 = vmatpush1.msra.mxu0 %v198
    %4148 = vmatprep.subr.mxu0 0.0
    %4149 = vmatpush1.msra.mxu0 %v199
    %4150 = vmatprep.subr.mxu0 0.0
    %4151 = vmatpush1.msra.mxu0 0.0
    %4152 = vmatprep.subr.mxu0 0.0
    %4153 = vmatpush1.msra.mxu0 0.0
    %4154 = vmatprep.subr.mxu0 0.0
    %4155 = vmatpush1.msra.mxu0 0.0
    %4156 = vmatprep.subr.mxu0 0.0
    %4157 = vmatpush1.msra.mxu0 0.0
    %4158 = vmatprep.subr.mxu0 0.0
    %4159 = vmatpush1.msra.mxu0 0.0
    %4160 = vmatprep.subr.mxu0 0.0
    %4161 = vmatpush1.msra.mxu0 0.0
    %4162 = vmatprep.subr.mxu0 0.0
    %4163 = vmatpush1.msra.mxu0 0.0
    %4164 = vmatprep.subr.mxu0 0.0
    %4165 = vmatpush1.msra.mxu0 0.0
    %4166 = vmatprep.subr.mxu0 0.0
    %4167 = vmatpush1.msra.mxu0 0.0
    %4168 = vmatprep.subr.mxu0 0.0
    %4169 = vmatpush1.msra.mxu0 0.0
    %4170 = vmatprep.subr.mxu0 0.0
    %4171 = vmatpush1.msra.mxu0 0.0
    %4172 = vmatprep.subr.mxu0 0.0
    %4173 = vmatpush1.msra.mxu0 0.0
    %4174 = vmatprep.subr.mxu0 0.0
    %4175 = vmatpush1.msra.mxu0 0.0
    %4176 = vmatprep.subr.mxu0 0.0
    %4177 = vmatpush1.msra.mxu0 0.0
    %4178 = vmatprep.subr.mxu0 0.0
    %4179 = vmatpush1.msra.mxu0 0.0
    %4180 = vmatprep.subr.mxu0 0.0
    %4181 = vmatpush1.msra.mxu0 0.0
    %4182 = vmatprep.subr.mxu0 0.0
    %4183 = vmatpush1.msra.mxu0 0.0
    %4184 = vmatprep.subr.mxu0 0.0
    %4185 = vmatpush1.msra.mxu0 0.0
    %4186 = vmatprep.subr.mxu0 0.0
    %4187 = vmatpush1.msra.mxu0 0.0
    %4188 = vmatprep.subr.mxu0 0.0
    %4189 = vmatpush1.msra.mxu0 0.0
    %4190 = vmatprep.subr.mxu0 0.0
    %4191 = vmatpush1.msra.mxu0 0.0
    %4192 = vmatprep.subr.mxu0 0.0
    %4193 = vmatpush1.msra.mxu0 0.0
    %4194 = vmatprep.subr.mxu0 0.0
    %4195 = vmatpush1.msra.mxu0 0.0
    %4196 = vmatprep.subr.mxu0 0.0
    %4197 = vmatpush1.msra.mxu0 0.0
    %4198 = vmatprep.subr.mxu0 0.0
    %4199 = vmatpush1.msra.mxu0 0.0
    %4200 = vmatprep.subr.mxu0 0.0
    %4201 = vmatpush1.msra.mxu0 0.0
    %4202 = vmatprep.subr.mxu0 0.0
    %4203 = vmatpush1.msra.mxu0 0.0
    %4204 = vmatprep.subr.mxu0 0.0
    %4205 = vmatpush1.msra.mxu0 0.0
    %4206 = vmatprep.mubr.f32.mxu0 0.0
    %4207 = vmatmul.mubr.f32.gmra.mrb[0].mxu0 %v4138
    %v4208 = vpop.f32.mrb[0].mxu0
    %v4209 = vadd.f32 0.0, %v4208
    %v4210 = vpop.f32.mrb[0].mxu0
    %4211 = vmatprep.mubr.f32.mxu0 0.0
    %4212 = vmatmul.mubr.f32.gmra.mrb[0].mxu0 %v4140
    %v4213 = vpop.f32.mrb[0].mxu0
    %v4214 = vadd.f32 0.0, %v4213
    %v4215 = vpop.f32.mrb[0].mxu0
    %4216 = vdwg.mxu0
    %v4217 = vadd.f32 %v4130, %v4209
    %v4218 = vadd.f32 %v4131, %v4214
    %v4220 = vcombine.low %v3667, %v3668
    %v4221 = vsel %vm393, %v4220, 0
    %4223 = vmatprep.subr.mxu0 0.0
    %4224 = vmatpush1.msra.mxu0 %v200
    %4225 = vmatprep.subr.mxu0 0.0
    %4226 = vmatpush1.msra.mxu0 %v201
    %4227 = vmatprep.subr.mxu0 0.0
    %4228 = vmatpush1.msra.mxu0 %v202
    %4229 = vmatprep.subr.mxu0 0.0
    %4230 = vmatpush1.msra.mxu0 %v203
    %4231 = vmatprep.subr.mxu0 0.0
    %4232 = vmatpush1.msra.mxu0 0.0
    %4233 = vmatprep.subr.mxu0 0.0
    %4234 = vmatpush1.msra.mxu0 0.0
    %4235 = vmatprep.subr.mxu0 0.0
    %4236 = vmatpush1.msra.mxu0 0.0
    %4237 = vmatprep.subr.mxu0 0.0
    %4238 = vmatpush1.msra.mxu0 0.0
    %4239 = vmatprep.subr.mxu0 0.0
    %4240 = vmatpush1.msra.mxu0 0.0
    %4241 = vmatprep.subr.mxu0 0.0
    %4242 = vmatpush1.msra.mxu0 0.0
    %4243 = vmatprep.subr.mxu0 0.0
    %4244 = vmatpush1.msra.mxu0 0.0
    %4245 = vmatprep.subr.mxu0 0.0
    %4246 = vmatpush1.msra.mxu0 0.0
    %4247 = vmatprep.subr.mxu0 0.0
    %4248 = vmatpush1.msra.mxu0 0.0
    %4249 = vmatprep.subr.mxu0 0.0
    %4250 = vmatpush1.msra.mxu0 0.0
    %4251 = vmatprep.subr.mxu0 0.0
    %4252 = vmatpush1.msra.mxu0 0.0
    %4253 = vmatprep.subr.mxu0 0.0
    %4254 = vmatpush1.msra.mxu0 0.0
    %4255 = vmatprep.subr.mxu0 0.0
    %4256 = vmatpush1.msra.mxu0 0.0
    %4257 = vmatprep.subr.mxu0 0.0
    %4258 = vmatpush1.msra.mxu0 0.0
    %4259 = vmatprep.subr.mxu0 0.0
    %4260 = vmatpush1.msra.mxu0 0.0
    %4261 = vmatprep.subr.mxu0 0.0
    %4262 = vmatpush1.msra.mxu0 0.0
    %4263 = vmatprep.subr.mxu0 0.0
    %4264 = vmatpush1.msra.mxu0 0.0
    %4265 = vmatprep.subr.mxu0 0.0
    %4266 = vmatpush1.msra.mxu0 0.0
    %4267 = vmatprep.subr.mxu0 0.0
    %4268 = vmatpush1.msra.mxu0 0.0
    %4269 = vmatprep.subr.mxu0 0.0
    %4270 = vmatpush1.msra.mxu0 0.0
    %4271 = vmatprep.subr.mxu0 0.0
    %4272 = vmatpush1.msra.mxu0 0.0
    %4273 = vmatprep.subr.mxu0 0.0
    %4274 = vmatpush1.msra.mxu0 0.0
    %4275 = vmatprep.subr.mxu0 0.0
    %4276 = vmatpush1.msra.mxu0 0.0
    %4277 = vmatprep.subr.mxu0 0.0
    %4278 = vmatpush1.msra.mxu0 0.0
    %4279 = vmatprep.subr.mxu0 0.0
    %4280 = vmatpush1.msra.mxu0 0.0
    %4281 = vmatprep.subr.mxu0 0.0
    %4282 = vmatpush1.msra.mxu0 0.0
    %4283 = vmatprep.subr.mxu0 0.0
    %4284 = vmatpush1.msra.mxu0 0.0
    %4285 = vmatprep.subr.mxu0 0.0
    %4286 = vmatpush1.msra.mxu0 0.0
    %4287 = vmatprep.mubr.f32.mxu0 0.0
    %4288 = vmatmul.mubr.f32.gmra.mrb[0].mxu0 %v3781
    %v4289 = vpop.f32.mrb[0].mxu0
    %v4290 = vadd.f32 0.0, %v4289
    %v4291 = vpop.f32.mrb[0].mxu0
    %4292 = vmatprep.mubr.f32.mxu0 0.0
    %4293 = vmatmul.mubr.f32.gmra.mrb[0].mxu0 %v4221
    %v4294 = vpop.f32.mrb[0].mxu0
    %v4295 = vadd.f32 0.0, %v4294
    %v4296 = vpop.f32.mrb[0].mxu0
    %4297 = vdwg.mxu0
    %v4298 = vadd.f32 %v4217, %v4290
    %v4299 = vadd.f32 %v4218, %v4295
    %v4300 = vcombine.high %v3668, %v3668
    %v4301 = vrot.slane %v3668, 5
    %v4302 = vrot.slane %v4301, 4
    %v4303 = vrot.slane %v4300, 5
    %v4304 = vsel %vm3679, %v4302, %v4303
    %v4305 = vcombine.low %v4048, %v4304
    %v4306 = vsel %vm393, %v4305, 0
    %4308 = vmatprep.subr.mxu0 0.0
    %4309 = vmatpush1.msra.mxu0 %v204
    %4310 = vmatprep.subr.mxu0 0.0
    %4311 = vmatpush1.msra.mxu0 %v205
    %4312 = vmatprep.subr.mxu0 0.0
    %4313 = vmatpush1.msra.mxu0 %v206
    %4314 = vmatprep.subr.mxu0 0.0
    %4315 = vmatpush1.msra.mxu0 %v207
    %4316 = vmatprep.subr.mxu0 0.0
    %4317 = vmatpush1.msra.mxu0 0.0
    %4318 = vmatprep.subr.mxu0 0.0
    %4319 = vmatpush1.msra.mxu0 0.0
    %4320 = vmatprep.subr.mxu0 0.0
    %4321 = vmatpush1.msra.mxu0 0.0
    %4322 = vmatprep.subr.mxu0 0.0
    %4323 = vmatpush1.msra.mxu0 0.0
    %4324 = vmatprep.subr.mxu0 0.0
    %4325 = vmatpush1.msra.mxu0 0.0
    %4326 = vmatprep.subr.mxu0 0.0
    %4327 = vmatpush1.msra.mxu0 0.0
    %4328 = vmatprep.subr.mxu0 0.0
    %4329 = vmatpush1.msra.mxu0 0.0
    %4330 = vmatprep.subr.mxu0 0.0
    %4331 = vmatpush1.msra.mxu0 0.0
    %4332 = vmatprep.subr.mxu0 0.0
    %4333 = vmatpush1.msra.mxu0 0.0
    %4334 = vmatprep.subr.mxu0 0.0
    %4335 = vmatpush1.msra.mxu0 0.0
    %4336 = vmatprep.subr.mxu0 0.0
    %4337 = vmatpush1.msra.mxu0 0.0
    %4338 = vmatprep.subr.mxu0 0.0
    %4339 = vmatpush1.msra.mxu0 0.0
    %4340 = vmatprep.subr.mxu0 0.0
    %4341 = vmatpush1.msra.mxu0 0.0
    %4342 = vmatprep.subr.mxu0 0.0
    %4343 = vmatpush1.msra.mxu0 0.0
    %4344 = vmatprep.subr.mxu0 0.0
    %4345 = vmatpush1.msra.mxu0 0.0
    %4346 = vmatprep.subr.mxu0 0.0
    %4347 = vmatpush1.msra.mxu0 0.0
    %4348 = vmatprep.subr.mxu0 0.0
    %4349 = vmatpush1.msra.mxu0 0.0
    %4350 = vmatprep.subr.mxu0 0.0
    %4351 = vmatpush1.msra.mxu0 0.0
    %4352 = vmatprep.subr.mxu0 0.0
    %4353 = vmatpush1.msra.mxu0 0.0
    %4354 = vmatprep.subr.mxu0 0.0
    %4355 = vmatpush1.msra.mxu0 0.0
    %4356 = vmatprep.subr.mxu0 0.0
    %4357 = vmatpush1.msra.mxu0 0.0
    %4358 = vmatprep.subr.mxu0 0.0
    %4359 = vmatpush1.msra.mxu0 0.0
    %4360 = vmatprep.subr.mxu0 0.0
    %4361 = vmatpush1.msra.mxu0 0.0
    %4362 = vmatprep.subr.mxu0 0.0
    %4363 = vmatpush1.msra.mxu0 0.0
    %4364 = vmatprep.subr.mxu0 0.0
    %4365 = vmatpush1.msra.mxu0 0.0
    %4366 = vmatprep.subr.mxu0 0.0
    %4367 = vmatpush1.msra.mxu0 0.0
    %4368 = vmatprep.subr.mxu0 0.0
    %4369 = vmatpush1.msra.mxu0 0.0
    %4370 = vmatprep.subr.mxu0 0.0
    %4371 = vmatpush1.msra.mxu0 0.0
    %4372 = vmatprep.mubr.f32.mxu0 0.0
    %4373 = vmatmul.mubr.f32.gmra.mrb[0].mxu0 %v3700
    %v4374 = vpop.f32.mrb[0].mxu0
    %v4375 = vadd.f32 0.0, %v4374
    %v4376 = vpop.f32.mrb[0].mxu0
    %4377 = vmatprep.mubr.f32.mxu0 0.0
    %4378 = vmatmul.mubr.f32.gmra.mrb[0].mxu0 %v4306
    %v4379 = vpop.f32.mrb[0].mxu0
    %v4380 = vadd.f32 0.0, %v4379
    %v4381 = vpop.f32.mrb[0].mxu0
    %4382 = vdwg.mxu0
    %v4383 = vadd.f32 %v4298, %v4375
    %v4384 = vadd.f32 %v4299, %v4380
    %v4385 = vrot.slane %v3668, 6
    %v4386 = vrot.slane %v4385, 4
    %v4387 = vrot.slane %v4300, 6
    %v4388 = vsel %vm3860, %v4386, %v4387
    %v4389 = vcombine.low %v4135, %v4388
    %v4390 = vsel %vm393, %v4389, 0
    %4392 = vmatprep.subr.mxu0 0.0
    %4393 = vmatpush1.msra.mxu0 %v208
    %4394 = vmatprep.subr.mxu0 0.0
    %4395 = vmatpush1.msra.mxu0 %v209
    %4396 = vmatprep.subr.mxu0 0.0
    %4397 = vmatpush1.msra.mxu0 %v210
    %4398 = vmatprep.subr.mxu0 0.0
    %4399 = vmatpush1.msra.mxu0 %v211
    %4400 = vmatprep.subr.mxu0 0.0
    %4401 = vmatpush1.msra.mxu0 0.0
    %4402 = vmatprep.subr.mxu0 0.0
    %4403 = vmatpush1.msra.mxu0 0.0
    %4404 = vmatprep.subr.mxu0 0.0
    %4405 = vmatpush1.msra.mxu0 0.0
    %4406 = vmatprep.subr.mxu0 0.0
    %4407 = vmatpush1.msra.mxu0 0.0
    %4408 = vmatprep.subr.mxu0 0.0
    %4409 = vmatpush1.msra.mxu0 0.0
    %4410 = vmatprep.subr.mxu0 0.0
    %4411 = vmatpush1.msra.mxu0 0.0
    %4412 = vmatprep.subr.mxu0 0.0
    %4413 = vmatpush1.msra.mxu0 0.0
    %4414 = vmatprep.subr.mxu0 0.0
    %4415 = vmatpush1.msra.mxu0 0.0
    %4416 = vmatprep.subr.mxu0 0.0
    %4417 = vmatpush1.msra.mxu0 0.0
    %4418 = vmatprep.subr.mxu0 0.0
    %4419 = vmatpush1.msra.mxu0 0.0
    %4420 = vmatprep.subr.mxu0 0.0
    %4421 = vmatpush1.msra.mxu0 0.0
    %4422 = vmatprep.subr.mxu0 0.0
    %4423 = vmatpush1.msra.mxu0 0.0
    %4424 = vmatprep.subr.mxu0 0.0
    %4425 = vmatpush1.msra.mxu0 0.0
    %4426 = vmatprep.subr.mxu0 0.0
    %4427 = vmatpush1.msra.mxu0 0.0
    %4428 = vmatprep.subr.mxu0 0.0
    %4429 = vmatpush1.msra.mxu0 0.0
    %4430 = vmatprep.subr.mxu0 0.0
    %4431 = vmatpush1.msra.mxu0 0.0
    %4432 = vmatprep.subr.mxu0 0.0
    %4433 = vmatpush1.msra.mxu0 0.0
    %4434 = vmatprep.subr.mxu0 0.0
    %4435 = vmatpush1.msra.mxu0 0.0
    %4436 = vmatprep.subr.mxu0 0.0
    %4437 = vmatpush1.msra.mxu0 0.0
    %4438 = vmatprep.subr.mxu0 0.0
    %4439 = vmatpush1.msra.mxu0 0.0
    %4440 = vmatprep.subr.mxu0 0.0
    %4441 = vmatpush1.msra.mxu0 0.0
    %4442 = vmatprep.subr.mxu0 0.0
    %4443 = vmatpush1.msra.mxu0 0.0
    %4444 = vmatprep.subr.mxu0 0.0
    %4445 = vmatpush1.msra.mxu0 0.0
    %4446 = vmatprep.subr.mxu0 0.0
    %4447 = vmatpush1.msra.mxu0 0.0
    %4448 = vmatprep.subr.mxu0 0.0
    %4449 = vmatpush1.msra.mxu0 0.0
    %4450 = vmatprep.subr.mxu0 0.0
    %4451 = vmatpush1.msra.mxu0 0.0
    %4452 = vmatprep.subr.mxu0 0.0
    %4453 = vmatpush1.msra.mxu0 0.0
    %4454 = vmatprep.subr.mxu0 0.0
    %4455 = vmatpush1.msra.mxu0 0.0
    %4456 = vmatprep.mubr.f32.mxu0 0.0
    %4457 = vmatmul.mubr.f32.gmra.mrb[0].mxu0 %v3881
    %v4458 = vpop.f32.mrb[0].mxu0
    %v4459 = vadd.f32 0.0, %v4458
    %v4460 = vpop.f32.mrb[0].mxu0
    %4461 = vmatprep.mubr.f32.mxu0 0.0
    %4462 = vmatmul.mubr.f32.gmra.mrb[0].mxu0 %v4390
    %v4463 = vpop.f32.mrb[0].mxu0
    %v4464 = vadd.f32 0.0, %v4463
    %v4465 = vpop.f32.mrb[0].mxu0
    %4466 = vdwg.mxu0
    %v4467 = vadd.f32 %v4383, %v4459
    %v4468 = vadd.f32 %v4384, %v4464
    %v4470 = vlaneseq
    %v4471 = vshrl.u32 %v4470, 7
    %v4472 = vsub.s32 0, %v4471
    %v4473 = vrot.slane %v212, %v4472
    %v4475 = vadd.f32 %v4467, %v4473
    %v4476 = vadd.f32 %v4468, %v4473
    %v4477 = vmul.f32 %v4475, 0.5
    %v4478 = vmul.f32 %v4476, 0.5
    %v4479 = vmul.f32 %v4475, 0.70710677
    %v4480 = vmul.f32 %v4476, 0.70710677
    %v4481 = vand.u32 2147483647, %v4479
    %v4482 = vand.u32 2147483647, %v4480
    %v4483 = vmul.f32 %v4481, 0.3275911
    %v4484 = vmul.f32 %v4482, 0.3275911
    %v4485 = vadd.f32 %v4483, 1.0
    %v4486 = vadd.f32 %v4484, 1.0
    %v4487 = vrcp.pop %v4485
    %v4488 = vmul.f32 1.0, %v4487
    %v4489 = vrcp.pop %v4486
    %v4490 = vmul.f32 1.0, %v4489
    %v4491 = vmul.f32 %v4488, 1.0614054
    %v4492 = vmul.f32 %v4490, 1.0614054
    %v4493 = vadd.f32 %v4491, -1.4531521
    %v4494 = vadd.f32 %v4492, -1.4531521
    %v4495 = vmul.f32 %v4493, %v4488
    %v4496 = vmul.f32 %v4494, %v4490
    %v4497 = vadd.f32 %v4495, 1.4214138
    %v4498 = vadd.f32 %v4496, 1.4214138
    %v4499 = vmul.f32 %v4497, %v4488
    %v4500 = vmul.f32 %v4498, %v4490
    %v4501 = vadd.f32 %v4499, -0.28449672
    %v4502 = vadd.f32 %v4500, -0.28449672
    %v4503 = vmul.f32 %v4501, %v4488
    %v4504 = vmul.f32 %v4502, %v4490
    %v4505 = vadd.f32 %v4503, 0.2548296
    %v4506 = vadd.f32 %v4504, 0.2548296
    %v4507 = vmul.f32 %v4505, %v4488
    %v4508 = vmul.f32 %v4506, %v4490
    %v4509 = vsub.f32 0.0, %v4481
    %v4510 = vsub.f32 0.0, %v4482
    %v4511 = vmul.f32 %v4509, %v4481
    %v4512 = vmul.f32 %v4510, %v4482
    %v4513 = vmul.f32 %v4511, 1.442695
    %v4514 = vpow.pop %v4513
    %v4515 = vmul.f32 %v4512, 1.442695
    %v4516 = vpow.pop %v4515
    %v4517 = vmul.f32 %v4507, %v4514
    %v4518 = vmul.f32 %v4508, %v4516
    %v4519 = vsub.f32 1.0, %v4517
    %v4520 = vsub.f32 1.0, %v4518
    %vm4521 = vcmp.ge.f32.partialorder %v4479, 0.0
    %vm4522 = vcmp.ge.f32.partialorder %v4480, 0.0
    %v4523 = vsub.f32 0.0, %v4519
    %v4524 = vsub.f32 0.0, %v4520
    %v4525 = vsel %vm4521, %v4519, %v4523
    %v4526 = vsel %vm4522, %v4520, %v4524
    %v4527 = vadd.f32 %v4525, 1.0
    %v4528 = vadd.f32 %v4526, 1.0
    %v4529 = vmul.f32 %v4477, %v4527
    %v4530 = vmul.f32 %v4478, %v4528
    %v4533 = vcombine.high %v4529, %v4529
    %v4534 = vcombine.high %v4530, %v4530
    %vm4537 = vcmask 519168
    %4538 = vst.msk [vmem:[%s3657 + $0x1] sm:$0xf] %vm4537, %v4529
    %4539 = vst.msk [vmem:[%s3657 + $0x9] sm:$0xf] %vm4537, %v4533
    %4540 = vst.msk [vmem:[%s3657 + $0x11] sm:$0xf] %vm4537, %v4530
    %4541 = vst.msk [vmem:[%s3657 + $0x19] sm:$0xf] %vm4537, %v4534
    %v4542 = vld [vmem:[#allocation2] sm:$0xff]
    %v4543 = vld [vmem:[#allocation2 + $0x8] sm:$0xff]
    %v4544 = vld [vmem:[#allocation2 + $0x10] sm:$0xff]
    %v4545 = vld [vmem:[#allocation2 + $0x18] sm:$0xff]
    %v4546 = vld [vmem:[#allocation2 + $0x20] sm:$0xff]
    %v4547 = vld [vmem:[#allocation2 + $0x28] sm:$0xff]
    %v4552 = vcombine.high %v4542, %v4542
    %v4553 = vcombine.high %v4543, %v4543
    %v4554 = vcombine.high %v4544, %v4544
    %v4555 = vcombine.high %v4545, %v4545
    %v4556 = vrot.slane %v4542, 5
    %v4557 = vrot.slane %v4556, 4
    %v4558 = vrot.slane %v4552, 5
    %v4559 = vsel %vm3679, %v4557, %v4558
    %v4560 = vrot.slane %v4543, 5
    %v4561 = vrot.slane %v4560, 4
    %v4562 = vrot.slane %v4553, 5
    %v4563 = vsel %vm3679, %v4561, %v4562
    %v4564 = vrot.slane %v4544, 5
    %v4565 = vrot.slane %v4564, 4
    %v4566 = vrot.slane %v4554, 5
    %v4567 = vsel %vm3679, %v4565, %v4566
    %v4568 = vrot.slane %v4545, 5
    %v4569 = vrot.slane %v4568, 4
    %v4570 = vrot.slane %v4555, 5
    %v4571 = vsel %vm3679, %v4569, %v4570
    %v4572 = vcombine.low %v4559, %v4563
    %v4573 = vcombine.low %v4567, %v4571
    %v4574 = vsel %vm123, %v4572, 0
    %v4576 = vsel %vm123, %v4573, 0
    %4578 = vmatprep.subr.mxu0 0.0
    %4579 = vmatpush1.msra.mxu0 %v221
    %4580 = vmatprep.subr.mxu0 0.0
    %4581 = vmatpush1.msra.mxu0 %v222
    %4582 = vmatprep.subr.mxu0 0.0
    %4583 = vmatpush1.msra.mxu0 %v223
    %4584 = vmatprep.subr.mxu0 0.0
    %4585 = vmatpush1.msra.mxu0 %v224
    %4586 = vmatprep.subr.mxu0 0.0
    %4587 = vmatpush1.msra.mxu0 %v225
    %4588 = vmatprep.subr.mxu0 0.0
    %4589 = vmatpush1.msra.mxu0 %v226
    %4590 = vmatprep.subr.mxu0 0.0
    %4591 = vmatpush1.msra.mxu0 %v227
    %4592 = vmatprep.subr.mxu0 0.0
    %4593 = vmatpush1.msra.mxu0 %v228
    %4594 = vmatprep.subr.mxu0 0.0
    %4595 = vmatpush1.msra.mxu0 0.0
    %4596 = vmatprep.subr.mxu0 0.0
    %4597 = vmatpush1.msra.mxu0 0.0
    %4598 = vmatprep.subr.mxu0 0.0
    %4599 = vmatpush1.msra.mxu0 0.0
    %4600 = vmatprep.subr.mxu0 0.0
    %4601 = vmatpush1.msra.mxu0 0.0
    %4602 = vmatprep.subr.mxu0 0.0
    %4603 = vmatpush1.msra.mxu0 0.0
    %4604 = vmatprep.subr.mxu0 0.0
    %4605 = vmatpush1.msra.mxu0 0.0
    %4606 = vmatprep.subr.mxu0 0.0
    %4607 = vmatpush1.msra.mxu0 0.0
    %4608 = vmatprep.subr.mxu0 0.0
    %4609 = vmatpush1.msra.mxu0 0.0
    %4610 = vmatprep.subr.mxu0 0.0
    %4611 = vmatpush1.msra.mxu0 0.0
    %4612 = vmatprep.subr.mxu0 0.0
    %4613 = vmatpush1.msra.mxu0 0.0
    %4614 = vmatprep.subr.mxu0 0.0
    %4615 = vmatpush1.msra.mxu0 0.0
    %4616 = vmatprep.subr.mxu0 0.0
    %4617 = vmatpush1.msra.mxu0 0.0
    %4618 = vmatprep.subr.mxu0 0.0
    %4619 = vmatpush1.msra.mxu0 0.0
    %4620 = vmatprep.subr.mxu0 0.0
    %4621 = vmatpush1.msra.mxu0 0.0
    %4622 = vmatprep.subr.mxu0 0.0
    %4623 = vmatpush1.msra.mxu0 0.0
    %4624 = vmatprep.subr.mxu0 0.0
    %4625 = vmatpush1.msra.mxu0 0.0
    %4626 = vmatprep.subr.mxu0 0.0
    %4627 = vmatpush1.msra.mxu0 0.0
    %4628 = vmatprep.subr.mxu0 0.0
    %4629 = vmatpush1.msra.mxu0 0.0
    %4630 = vmatprep.subr.mxu0 0.0
    %4631 = vmatpush1.msra.mxu0 0.0
    %4632 = vmatprep.subr.mxu0 0.0
    %4633 = vmatpush1.msra.mxu0 0.0
    %4634 = vmatprep.subr.mxu0 0.0
    %4635 = vmatpush1.msra.mxu0 0.0
    %4636 = vmatprep.subr.mxu0 0.0
    %4637 = vmatpush1.msra.mxu0 0.0
    %4638 = vmatprep.subr.mxu0 0.0
    %4639 = vmatpush1.msra.mxu0 0.0
    %4640 = vmatprep.subr.mxu0 0.0
    %4641 = vmatpush1.msra.mxu0 0.0
    %4642 = vmatprep.mubr.f32.mxu0 0.0
    %4643 = vmatmul.mubr.f32.gmra.mrb[0].mxu0 %v4574
    %v4644 = vpop.f32.mrb[0].mxu0
    %v4645 = vadd.f32 0.0, %v4644
    %v4646 = vpop.f32.mrb[0].mxu0
    %4647 = vmatprep.mubr.f32.mxu0 0.0
    %4648 = vmatmul.mubr.f32.gmra.mrb[0].mxu0 %v4576
    %v4649 = vpop.f32.mrb[0].mxu0
    %v4650 = vadd.f32 0.0, %v4649
    %v4651 = vpop.f32.mrb[0].mxu0
    %4652 = vdwg.mxu0
    %v4653 = vcombine.low %v4542, %v4543
    %v4654 = vcombine.low %v4544, %v4545
    %v4655 = vsel %vm123, %v4653, 0
    %v4657 = vsel %vm123, %v4654, 0
    %4659 = vmatprep.subr.mxu0 0.0
    %4660 = vmatpush1.msra.mxu0 %v213
    %4661 = vmatprep.subr.mxu0 0.0
    %4662 = vmatpush1.msra.mxu0 %v214
    %4663 = vmatprep.subr.mxu0 0.0
    %4664 = vmatpush1.msra.mxu0 %v215
    %4665 = vmatprep.subr.mxu0 0.0
    %4666 = vmatpush1.msra.mxu0 %v216
    %4667 = vmatprep.subr.mxu0 0.0
    %4668 = vmatpush1.msra.mxu0 %v217
    %4669 = vmatprep.subr.mxu0 0.0
    %4670 = vmatpush1.msra.mxu0 %v218
    %4671 = vmatprep.subr.mxu0 0.0
    %4672 = vmatpush1.msra.mxu0 %v219
    %4673 = vmatprep.subr.mxu0 0.0
    %4674 = vmatpush1.msra.mxu0 %v220
    %4675 = vmatprep.subr.mxu0 0.0
    %4676 = vmatpush1.msra.mxu0 0.0
    %4677 = vmatprep.subr.mxu0 0.0
    %4678 = vmatpush1.msra.mxu0 0.0
    %4679 = vmatprep.subr.mxu0 0.0
    %4680 = vmatpush1.msra.mxu0 0.0
    %4681 = vmatprep.subr.mxu0 0.0
    %4682 = vmatpush1.msra.mxu0 0.0
    %4683 = vmatprep.subr.mxu0 0.0
    %4684 = vmatpush1.msra.mxu0 0.0
    %4685 = vmatprep.subr.mxu0 0.0
    %4686 = vmatpush1.msra.mxu0 0.0
    %4687 = vmatprep.subr.mxu0 0.0
    %4688 = vmatpush1.msra.mxu0 0.0
    %4689 = vmatprep.subr.mxu0 0.0
    %4690 = vmatpush1.msra.mxu0 0.0
    %4691 = vmatprep.subr.mxu0 0.0
    %4692 = vmatpush1.msra.mxu0 0.0
    %4693 = vmatprep.subr.mxu0 0.0
    %4694 = vmatpush1.msra.mxu0 0.0
    %4695 = vmatprep.subr.mxu0 0.0
    %4696 = vmatpush1.msra.mxu0 0.0
    %4697 = vmatprep.subr.mxu0 0.0
    %4698 = vmatpush1.msra.mxu0 0.0
    %4699 = vmatprep.subr.mxu0 0.0
    %4700 = vmatpush1.msra.mxu0 0.0
    %4701 = vmatprep.subr.mxu0 0.0
    %4702 = vmatpush1.msra.mxu0 0.0
    %4703 = vmatprep.subr.mxu0 0.0
    %4704 = vmatpush1.msra.mxu0 0.0
    %4705 = vmatprep.subr.mxu0 0.0
    %4706 = vmatpush1.msra.mxu0 0.0
    %4707 = vmatprep.subr.mxu0 0.0
    %4708 = vmatpush1.msra.mxu0 0.0
    %4709 = vmatprep.subr.mxu0 0.0
    %4710 = vmatpush1.msra.mxu0 0.0
    %4711 = vmatprep.subr.mxu0 0.0
    %4712 = vmatpush1.msra.mxu0 0.0
    %4713 = vmatprep.subr.mxu0 0.0
    %4714 = vmatpush1.msra.mxu0 0.0
    %4715 = vmatprep.subr.mxu0 0.0
    %4716 = vmatpush1.msra.mxu0 0.0
    %4717 = vmatprep.subr.mxu0 0.0
    %4718 = vmatpush1.msra.mxu0 0.0
    %4719 = vmatprep.subr.mxu0 0.0
    %4720 = vmatpush1.msra.mxu0 0.0
    %4721 = vmatprep.subr.mxu0 0.0
    %4722 = vmatpush1.msra.mxu0 0.0
    %4723 = vmatprep.mubr.f32.mxu0 0.0
    %4724 = vmatmul.mubr.f32.gmra.mrb[0].mxu0 %v4655
    %v4725 = vpop.f32.mrb[0].mxu0
    %v4726 = vadd.f32 %v4645, %v4725
    %v4727 = vpop.f32.mrb[0].mxu0
    %4728 = vmatprep.mubr.f32.mxu0 0.0
    %4729 = vmatmul.mubr.f32.gmra.mrb[0].mxu0 %v4657
    %v4730 = vpop.f32.mrb[0].mxu0
    %v4731 = vadd.f32 %v4650, %v4730
    %v4732 = vpop.f32.mrb[0].mxu0
    %4733 = vdwg.mxu0
    %v4734 = vrot.slane %v4542, 6
    %v4735 = vrot.slane %v4734, 4
    %v4736 = vrot.slane %v4552, 6
    %v4737 = vsel %vm3860, %v4735, %v4736
    %v4738 = vrot.slane %v4543, 6
    %v4739 = vrot.slane %v4738, 4
    %v4740 = vrot.slane %v4553, 6
    %v4741 = vsel %vm3860, %v4739, %v4740
    %v4742 = vrot.slane %v4544, 6
    %v4743 = vrot.slane %v4742, 4
    %v4744 = vrot.slane %v4554, 6
    %v4745 = vsel %vm3860, %v4743, %v4744
    %v4746 = vrot.slane %v4545, 6
    %v4747 = vrot.slane %v4746, 4
    %v4748 = vrot.slane %v4555, 6
    %v4749 = vsel %vm3860, %v4747, %v4748
    %v4750 = vcombine.low %v4737, %v4741
    %v4751 = vcombine.low %v4745, %v4749
    %v4752 = vsel %vm123, %v4750, 0
    %v4754 = vsel %vm123, %v4751, 0
    %4756 = vmatprep.subr.mxu0 0.0
    %4757 = vmatpush1.msra.mxu0 %v229
    %4758 = vmatprep.subr.mxu0 0.0
    %4759 = vmatpush1.msra.mxu0 %v230
    %4760 = vmatprep.subr.mxu0 0.0
    %4761 = vmatpush1.msra.mxu0 %v231
    %4762 = vmatprep.subr.mxu0 0.0
    %4763 = vmatpush1.msra.mxu0 %v232
    %4764 = vmatprep.subr.mxu0 0.0
    %4765 = vmatpush1.msra.mxu0 %v233
    %4766 = vmatprep.subr.mxu0 0.0
    %4767 = vmatpush1.msra.mxu0 %v234
    %4768 = vmatprep.subr.mxu0 0.0
    %4769 = vmatpush1.msra.mxu0 %v235
    %4770 = vmatprep.subr.mxu0 0.0
    %4771 = vmatpush1.msra.mxu0 %v236
    %4772 = vmatprep.subr.mxu0 0.0
    %4773 = vmatpush1.msra.mxu0 0.0
    %4774 = vmatprep.subr.mxu0 0.0
    %4775 = vmatpush1.msra.mxu0 0.0
    %4776 = vmatprep.subr.mxu0 0.0
    %4777 = vmatpush1.msra.mxu0 0.0
    %4778 = vmatprep.subr.mxu0 0.0
    %4779 = vmatpush1.msra.mxu0 0.0
    %4780 = vmatprep.subr.mxu0 0.0
    %4781 = vmatpush1.msra.mxu0 0.0
    %4782 = vmatprep.subr.mxu0 0.0
    %4783 = vmatpush1.msra.mxu0 0.0
    %4784 = vmatprep.subr.mxu0 0.0
    %4785 = vmatpush1.msra.mxu0 0.0
    %4786 = vmatprep.subr.mxu0 0.0
    %4787 = vmatpush1.msra.mxu0 0.0
    %4788 = vmatprep.subr.mxu0 0.0
    %4789 = vmatpush1.msra.mxu0 0.0
    %4790 = vmatprep.subr.mxu0 0.0
    %4791 = vmatpush1.msra.mxu0 0.0
    %4792 = vmatprep.subr.mxu0 0.0
    %4793 = vmatpush1.msra.mxu0 0.0
    %4794 = vmatprep.subr.mxu0 0.0
    %4795 = vmatpush1.msra.mxu0 0.0
    %4796 = vmatprep.subr.mxu0 0.0
    %4797 = vmatpush1.msra.mxu0 0.0
    %4798 = vmatprep.subr.mxu0 0.0
    %4799 = vmatpush1.msra.mxu0 0.0
    %4800 = vmatprep.subr.mxu0 0.0
    %4801 = vmatpush1.msra.mxu0 0.0
    %4802 = vmatprep.subr.mxu0 0.0
    %4803 = vmatpush1.msra.mxu0 0.0
    %4804 = vmatprep.subr.mxu0 0.0
    %4805 = vmatpush1.msra.mxu0 0.0
    %4806 = vmatprep.subr.mxu0 0.0
    %4807 = vmatpush1.msra.mxu0 0.0
    %4808 = vmatprep.subr.mxu0 0.0
    %4809 = vmatpush1.msra.mxu0 0.0
    %4810 = vmatprep.subr.mxu0 0.0
    %4811 = vmatpush1.msra.mxu0 0.0
    %4812 = vmatprep.subr.mxu0 0.0
    %4813 = vmatpush1.msra.mxu0 0.0
    %4814 = vmatprep.subr.mxu0 0.0
    %4815 = vmatpush1.msra.mxu0 0.0
    %4816 = vmatprep.subr.mxu0 0.0
    %4817 = vmatpush1.msra.mxu0 0.0
    %4818 = vmatprep.subr.mxu0 0.0
    %4819 = vmatpush1.msra.mxu0 0.0
    %4820 = vmatprep.mubr.f32.mxu0 0.0
    %4821 = vmatmul.mubr.f32.gmra.mrb[0].mxu0 %v4752
    %v4822 = vpop.f32.mrb[0].mxu0
    %v4823 = vadd.f32 0.0, %v4822
    %v4824 = vpop.f32.mrb[0].mxu0
    %4825 = vmatprep.mubr.f32.mxu0 0.0
    %4826 = vmatmul.mubr.f32.gmra.mrb[0].mxu0 %v4754
    %v4827 = vpop.f32.mrb[0].mxu0
    %v4828 = vadd.f32 0.0, %v4827
    %v4829 = vpop.f32.mrb[0].mxu0
    %4830 = vdwg.mxu0
    %v4831 = vadd.f32 %v4726, %v4823
    %v4832 = vadd.f32 %v4731, %v4828
    %v4834 = vcombine.low %v4543, %v4544
    %v4835 = vcombine.low %v4545, %v4546
    %v4836 = vsel %vm123, %v4834, 0
    %v4838 = vsel %vm123, %v4835, 0
    %4840 = vmatprep.subr.mxu0 0.0
    %4841 = vmatpush1.msra.mxu0 %v237
    %4842 = vmatprep.subr.mxu0 0.0
    %4843 = vmatpush1.msra.mxu0 %v238
    %4844 = vmatprep.subr.mxu0 0.0
    %4845 = vmatpush1.msra.mxu0 %v239
    %4846 = vmatprep.subr.mxu0 0.0
    %4847 = vmatpush1.msra.mxu0 %v240
    %4848 = vmatprep.subr.mxu0 0.0
    %4849 = vmatpush1.msra.mxu0 %v241
    %4850 = vmatprep.subr.mxu0 0.0
    %4851 = vmatpush1.msra.mxu0 %v242
    %4852 = vmatprep.subr.mxu0 0.0
    %4853 = vmatpush1.msra.mxu0 %v243
    %4854 = vmatprep.subr.mxu0 0.0
    %4855 = vmatpush1.msra.mxu0 %v244
    %4856 = vmatprep.subr.mxu0 0.0
    %4857 = vmatpush1.msra.mxu0 0.0
    %4858 = vmatprep.subr.mxu0 0.0
    %4859 = vmatpush1.msra.mxu0 0.0
    %4860 = vmatprep.subr.mxu0 0.0
    %4861 = vmatpush1.msra.mxu0 0.0
    %4862 = vmatprep.subr.mxu0 0.0
    %4863 = vmatpush1.msra.mxu0 0.0
    %4864 = vmatprep.subr.mxu0 0.0
    %4865 = vmatpush1.msra.mxu0 0.0
    %4866 = vmatprep.subr.mxu0 0.0
    %4867 = vmatpush1.msra.mxu0 0.0
    %4868 = vmatprep.subr.mxu0 0.0
    %4869 = vmatpush1.msra.mxu0 0.0
    %4870 = vmatprep.subr.mxu0 0.0
    %4871 = vmatpush1.msra.mxu0 0.0
    %4872 = vmatprep.subr.mxu0 0.0
    %4873 = vmatpush1.msra.mxu0 0.0
    %4874 = vmatprep.subr.mxu0 0.0
    %4875 = vmatpush1.msra.mxu0 0.0
    %4876 = vmatprep.subr.mxu0 0.0
    %4877 = vmatpush1.msra.mxu0 0.0
    %4878 = vmatprep.subr.mxu0 0.0
    %4879 = vmatpush1.msra.mxu0 0.0
    %4880 = vmatprep.subr.mxu0 0.0
    %4881 = vmatpush1.msra.mxu0 0.0
    %4882 = vmatprep.subr.mxu0 0.0
    %4883 = vmatpush1.msra.mxu0 0.0
    %4884 = vmatprep.subr.mxu0 0.0
    %4885 = vmatpush1.msra.mxu0 0.0
    %4886 = vmatprep.subr.mxu0 0.0
    %4887 = vmatpush1.msra.mxu0 0.0
    %4888 = vmatprep.subr.mxu0 0.0
    %4889 = vmatpush1.msra.mxu0 0.0
    %4890 = vmatprep.subr.mxu0 0.0
    %4891 = vmatpush1.msra.mxu0 0.0
    %4892 = vmatprep.subr.mxu0 0.0
    %4893 = vmatpush1.msra.mxu0 0.0
    %4894 = vmatprep.subr.mxu0 0.0
    %4895 = vmatpush1.msra.mxu0 0.0
    %4896 = vmatprep.subr.mxu0 0.0
    %4897 = vmatpush1.msra.mxu0 0.0
    %4898 = vmatprep.subr.mxu0 0.0
    %4899 = vmatpush1.msra.mxu0 0.0
    %4900 = vmatprep.subr.mxu0 0.0
    %4901 = vmatpush1.msra.mxu0 0.0
    %4902 = vmatprep.subr.mxu0 0.0
    %4903 = vmatpush1.msra.mxu0 0.0
    %4904 = vmatprep.mubr.f32.mxu0 0.0
    %4905 = vmatmul.mubr.f32.gmra.mrb[0].mxu0 %v4836
    %v4906 = vpop.f32.mrb[0].mxu0
    %v4907 = vadd.f32 0.0, %v4906
    %v4908 = vpop.f32.mrb[0].mxu0
    %4909 = vmatprep.mubr.f32.mxu0 0.0
    %4910 = vmatmul.mubr.f32.gmra.mrb[0].mxu0 %v4838
    %v4911 = vpop.f32.mrb[0].mxu0
    %v4912 = vadd.f32 0.0, %v4911
    %v4913 = vpop.f32.mrb[0].mxu0
    %4914 = vdwg.mxu0
    %v4915 = vadd.f32 %v4831, %v4907
    %v4916 = vadd.f32 %v4832, %v4912
    %v4917 = vcombine.high %v4546, %v4546
    %v4918 = vrot.slane %v4546, 5
    %v4919 = vrot.slane %v4918, 4
    %v4920 = vrot.slane %v4917, 5
    %v4921 = vsel %vm3679, %v4919, %v4920
    %v4922 = vcombine.low %v4563, %v4567
    %v4923 = vcombine.low %v4571, %v4921
    %v4924 = vsel %vm123, %v4922, 0
    %v4926 = vsel %vm123, %v4923, 0
    %4928 = vmatprep.subr.mxu0 0.0
    %4929 = vmatpush1.msra.mxu0 %v245
    %4930 = vmatprep.subr.mxu0 0.0
    %4931 = vmatpush1.msra.mxu0 %v246
    %4932 = vmatprep.subr.mxu0 0.0
    %4933 = vmatpush1.msra.mxu0 %v247
    %4934 = vmatprep.subr.mxu0 0.0
    %4935 = vmatpush1.msra.mxu0 %v248
    %4936 = vmatprep.subr.mxu0 0.0
    %4937 = vmatpush1.msra.mxu0 %v249
    %4938 = vmatprep.subr.mxu0 0.0
    %4939 = vmatpush1.msra.mxu0 %v250
    %4940 = vmatprep.subr.mxu0 0.0
    %4941 = vmatpush1.msra.mxu0 %v251
    %4942 = vmatprep.subr.mxu0 0.0
    %4943 = vmatpush1.msra.mxu0 %v252
    %4944 = vmatprep.subr.mxu0 0.0
    %4945 = vmatpush1.msra.mxu0 0.0
    %4946 = vmatprep.subr.mxu0 0.0
    %4947 = vmatpush1.msra.mxu0 0.0
    %4948 = vmatprep.subr.mxu0 0.0
    %4949 = vmatpush1.msra.mxu0 0.0
    %4950 = vmatprep.subr.mxu0 0.0
    %4951 = vmatpush1.msra.mxu0 0.0
    %4952 = vmatprep.subr.mxu0 0.0
    %4953 = vmatpush1.msra.mxu0 0.0
    %4954 = vmatprep.subr.mxu0 0.0
    %4955 = vmatpush1.msra.mxu0 0.0
    %4956 = vmatprep.subr.mxu0 0.0
    %4957 = vmatpush1.msra.mxu0 0.0
    %4958 = vmatprep.subr.mxu0 0.0
    %4959 = vmatpush1.msra.mxu0 0.0
    %4960 = vmatprep.subr.mxu0 0.0
    %4961 = vmatpush1.msra.mxu0 0.0
    %4962 = vmatprep.subr.mxu0 0.0
    %4963 = vmatpush1.msra.mxu0 0.0
    %4964 = vmatprep.subr.mxu0 0.0
    %4965 = vmatpush1.msra.mxu0 0.0
    %4966 = vmatprep.subr.mxu0 0.0
    %4967 = vmatpush1.msra.mxu0 0.0
    %4968 = vmatprep.subr.mxu0 0.0
    %4969 = vmatpush1.msra.mxu0 0.0
    %4970 = vmatprep.subr.mxu0 0.0
    %4971 = vmatpush1.msra.mxu0 0.0
    %4972 = vmatprep.subr.mxu0 0.0
    %4973 = vmatpush1.msra.mxu0 0.0
    %4974 = vmatprep.subr.mxu0 0.0
    %4975 = vmatpush1.msra.mxu0 0.0
    %4976 = vmatprep.subr.mxu0 0.0
    %4977 = vmatpush1.msra.mxu0 0.0
    %4978 = vmatprep.subr.mxu0 0.0
    %4979 = vmatpush1.msra.mxu0 0.0
    %4980 = vmatprep.subr.mxu0 0.0
    %4981 = vmatpush1.msra.mxu0 0.0
    %4982 = vmatprep.subr.mxu0 0.0
    %4983 = vmatpush1.msra.mxu0 0.0
    %4984 = vmatprep.subr.mxu0 0.0
    %4985 = vmatpush1.msra.mxu0 0.0
    %4986 = vmatprep.subr.mxu0 0.0
    %4987 = vmatpush1.msra.mxu0 0.0
    %4988 = vmatprep.subr.mxu0 0.0
    %4989 = vmatpush1.msra.mxu0 0.0
    %4990 = vmatprep.subr.mxu0 0.0
    %4991 = vmatpush1.msra.mxu0 0.0
    %4992 = vmatprep.mubr.f32.mxu0 0.0
    %4993 = vmatmul.mubr.f32.gmra.mrb[0].mxu0 %v4924
    %v4994 = vpop.f32.mrb[0].mxu0
    %v4995 = vadd.f32 0.0, %v4994
    %v4996 = vpop.f32.mrb[0].mxu0
    %4997 = vmatprep.mubr.f32.mxu0 0.0
    %4998 = vmatmul.mubr.f32.gmra.mrb[0].mxu0 %v4926
    %v4999 = vpop.f32.mrb[0].mxu0
    %v5000 = vadd.f32 0.0, %v4999
    %v5001 = vpop.f32.mrb[0].mxu0
    %5002 = vdwg.mxu0
    %v5003 = vadd.f32 %v4915, %v4995
    %v5004 = vadd.f32 %v4916, %v5000
    %v5005 = vrot.slane %v4546, 6
    %v5006 = vrot.slane %v5005, 4
    %v5007 = vrot.slane %v4917, 6
    %v5008 = vsel %vm3860, %v5006, %v5007
    %v5009 = vcombine.low %v4741, %v4745
    %v5010 = vcombine.low %v4749, %v5008
    %v5011 = vsel %vm123, %v5009, 0
    %v5013 = vsel %vm123, %v5010, 0
    %5015 = vmatprep.subr.mxu0 0.0
    %5016 = vmatpush1.msra.mxu0 %v253
    %5017 = vmatprep.subr.mxu0 0.0
    %5018 = vmatpush1.msra.mxu0 %v254
    %5019 = vmatprep.subr.mxu0 0.0
    %5020 = vmatpush1.msra.mxu0 %v255
    %5021 = vmatprep.subr.mxu0 0.0
    %5022 = vmatpush1.msra.mxu0 %v256
    %5023 = vmatprep.subr.mxu0 0.0
    %5024 = vmatpush1.msra.mxu0 %v257
    %5025 = vmatprep.subr.mxu0 0.0
    %5026 = vmatpush1.msra.mxu0 %v258
    %5027 = vmatprep.subr.mxu0 0.0
    %5028 = vmatpush1.msra.mxu0 %v259
    %5029 = vmatprep.subr.mxu0 0.0
    %5030 = vmatpush1.msra.mxu0 %v260
    %5031 = vmatprep.subr.mxu0 0.0
    %5032 = vmatpush1.msra.mxu0 0.0
    %5033 = vmatprep.subr.mxu0 0.0
    %5034 = vmatpush1.msra.mxu0 0.0
    %5035 = vmatprep.subr.mxu0 0.0
    %5036 = vmatpush1.msra.mxu0 0.0
    %5037 = vmatprep.subr.mxu0 0.0
    %5038 = vmatpush1.msra.mxu0 0.0
    %5039 = vmatprep.subr.mxu0 0.0
    %5040 = vmatpush1.msra.mxu0 0.0
    %5041 = vmatprep.subr.mxu0 0.0
    %5042 = vmatpush1.msra.mxu0 0.0
    %5043 = vmatprep.subr.mxu0 0.0
    %5044 = vmatpush1.msra.mxu0 0.0
    %5045 = vmatprep.subr.mxu0 0.0
    %5046 = vmatpush1.msra.mxu0 0.0
    %5047 = vmatprep.subr.mxu0 0.0
    %5048 = vmatpush1.msra.mxu0 0.0
    %5049 = vmatprep.subr.mxu0 0.0
    %5050 = vmatpush1.msra.mxu0 0.0
    %5051 = vmatprep.subr.mxu0 0.0
    %5052 = vmatpush1.msra.mxu0 0.0
    %5053 = vmatprep.subr.mxu0 0.0
    %5054 = vmatpush1.msra.mxu0 0.0
    %5055 = vmatprep.subr.mxu0 0.0
    %5056 = vmatpush1.msra.mxu0 0.0
    %5057 = vmatprep.subr.mxu0 0.0
    %5058 = vmatpush1.msra.mxu0 0.0
    %5059 = vmatprep.subr.mxu0 0.0
    %5060 = vmatpush1.msra.mxu0 0.0
    %5061 = vmatprep.subr.mxu0 0.0
    %5062 = vmatpush1.msra.mxu0 0.0
    %5063 = vmatprep.subr.mxu0 0.0
    %5064 = vmatpush1.msra.mxu0 0.0
    %5065 = vmatprep.subr.mxu0 0.0
    %5066 = vmatpush1.msra.mxu0 0.0
    %5067 = vmatprep.subr.mxu0 0.0
    %5068 = vmatpush1.msra.mxu0 0.0
    %5069 = vmatprep.subr.mxu0 0.0
    %5070 = vmatpush1.msra.mxu0 0.0
    %5071 = vmatprep.subr.mxu0 0.0
    %5072 = vmatpush1.msra.mxu0 0.0
    %5073 = vmatprep.subr.mxu0 0.0
    %5074 = vmatpush1.msra.mxu0 0.0
    %5075 = vmatprep.subr.mxu0 0.0
    %5076 = vmatpush1.msra.mxu0 0.0
    %5077 = vmatprep.subr.mxu0 0.0
    %5078 = vmatpush1.msra.mxu0 0.0
    %5079 = vmatprep.mubr.f32.mxu0 0.0
    %5080 = vmatmul.mubr.f32.gmra.mrb[0].mxu0 %v5011
    %v5081 = vpop.f32.mrb[0].mxu0
    %v5082 = vadd.f32 0.0, %v5081
    %v5083 = vpop.f32.mrb[0].mxu0
    %5084 = vmatprep.mubr.f32.mxu0 0.0
    %5085 = vmatmul.mubr.f32.gmra.mrb[0].mxu0 %v5013
    %v5086 = vpop.f32.mrb[0].mxu0
    %v5087 = vadd.f32 0.0, %v5086
    %v5088 = vpop.f32.mrb[0].mxu0
    %5089 = vdwg.mxu0
    %v5090 = vadd.f32 %v5003, %v5082
    %v5091 = vadd.f32 %v5004, %v5087
    %v5093 = vcombine.low %v4546, %v4547
    %v5094 = vsel %vm123, %v5093, 0
    %5096 = vmatprep.subr.mxu0 0.0
    %5097 = vmatpush1.msra.mxu0 %v261
    %5098 = vmatprep.subr.mxu0 0.0
    %5099 = vmatpush1.msra.mxu0 %v262
    %5100 = vmatprep.subr.mxu0 0.0
    %5101 = vmatpush1.msra.mxu0 %v263
    %5102 = vmatprep.subr.mxu0 0.0
    %5103 = vmatpush1.msra.mxu0 %v264
    %5104 = vmatprep.subr.mxu0 0.0
    %5105 = vmatpush1.msra.mxu0 %v265
    %5106 = vmatprep.subr.mxu0 0.0
    %5107 = vmatpush1.msra.mxu0 %v266
    %5108 = vmatprep.subr.mxu0 0.0
    %5109 = vmatpush1.msra.mxu0 %v267
    %5110 = vmatprep.subr.mxu0 0.0
    %5111 = vmatpush1.msra.mxu0 %v268
    %5112 = vmatprep.subr.mxu0 0.0
    %5113 = vmatpush1.msra.mxu0 0.0
    %5114 = vmatprep.subr.mxu0 0.0
    %5115 = vmatpush1.msra.mxu0 0.0
    %5116 = vmatprep.subr.mxu0 0.0
    %5117 = vmatpush1.msra.mxu0 0.0
    %5118 = vmatprep.subr.mxu0 0.0
    %5119 = vmatpush1.msra.mxu0 0.0
    %5120 = vmatprep.subr.mxu0 0.0
    %5121 = vmatpush1.msra.mxu0 0.0
    %5122 = vmatprep.subr.mxu0 0.0
    %5123 = vmatpush1.msra.mxu0 0.0
    %5124 = vmatprep.subr.mxu0 0.0
    %5125 = vmatpush1.msra.mxu0 0.0
    %5126 = vmatprep.subr.mxu0 0.0
    %5127 = vmatpush1.msra.mxu0 0.0
    %5128 = vmatprep.subr.mxu0 0.0
    %5129 = vmatpush1.msra.mxu0 0.0
    %5130 = vmatprep.subr.mxu0 0.0
    %5131 = vmatpush1.msra.mxu0 0.0
    %5132 = vmatprep.subr.mxu0 0.0
    %5133 = vmatpush1.msra.mxu0 0.0
    %5134 = vmatprep.subr.mxu0 0.0
    %5135 = vmatpush1.msra.mxu0 0.0
    %5136 = vmatprep.subr.mxu0 0.0
    %5137 = vmatpush1.msra.mxu0 0.0
    %5138 = vmatprep.subr.mxu0 0.0
    %5139 = vmatpush1.msra.mxu0 0.0
    %5140 = vmatprep.subr.mxu0 0.0
    %5141 = vmatpush1.msra.mxu0 0.0
    %5142 = vmatprep.subr.mxu0 0.0
    %5143 = vmatpush1.msra.mxu0 0.0
    %5144 = vmatprep.subr.mxu0 0.0
    %5145 = vmatpush1.msra.mxu0 0.0
    %5146 = vmatprep.subr.mxu0 0.0
    %5147 = vmatpush1.msra.mxu0 0.0
    %5148 = vmatprep.subr.mxu0 0.0
    %5149 = vmatpush1.msra.mxu0 0.0
    %5150 = vmatprep.subr.mxu0 0.0
    %5151 = vmatpush1.msra.mxu0 0.0
    %5152 = vmatprep.subr.mxu0 0.0
    %5153 = vmatpush1.msra.mxu0 0.0
    %5154 = vmatprep.subr.mxu0 0.0
    %5155 = vmatpush1.msra.mxu0 0.0
    %5156 = vmatprep.subr.mxu0 0.0
    %5157 = vmatpush1.msra.mxu0 0.0
    %5158 = vmatprep.subr.mxu0 0.0
    %5159 = vmatpush1.msra.mxu0 0.0
    %5160 = vmatprep.mubr.f32.mxu0 0.0
    %5161 = vmatmul.mubr.f32.gmra.mrb[0].mxu0 %v4657
    %v5162 = vpop.f32.mrb[0].mxu0
    %v5163 = vadd.f32 0.0, %v5162
    %v5164 = vpop.f32.mrb[0].mxu0
    %5165 = vmatprep.mubr.f32.mxu0 0.0
    %5166 = vmatmul.mubr.f32.gmra.mrb[0].mxu0 %v5094
    %v5167 = vpop.f32.mrb[0].mxu0
    %v5168 = vadd.f32 0.0, %v5167
    %v5169 = vpop.f32.mrb[0].mxu0
    %5170 = vdwg.mxu0
    %v5171 = vadd.f32 %v5090, %v5163
    %v5172 = vadd.f32 %v5091, %v5168
    %v5173 = vcombine.high %v4547, %v4547
    %v5174 = vrot.slane %v4547, 5
    %v5175 = vrot.slane %v5174, 4
    %v5176 = vrot.slane %v5173, 5
    %v5177 = vsel %vm3679, %v5175, %v5176
    %v5178 = vcombine.low %v4921, %v5177
    %v5179 = vsel %vm123, %v5178, 0
    %5181 = vmatprep.subr.mxu0 0.0
    %5182 = vmatpush1.msra.mxu0 %v269
    %5183 = vmatprep.subr.mxu0 0.0
    %5184 = vmatpush1.msra.mxu0 %v270
    %5185 = vmatprep.subr.mxu0 0.0
    %5186 = vmatpush1.msra.mxu0 %v271
    %5187 = vmatprep.subr.mxu0 0.0
    %5188 = vmatpush1.msra.mxu0 %v272
    %5189 = vmatprep.subr.mxu0 0.0
    %5190 = vmatpush1.msra.mxu0 %v273
    %5191 = vmatprep.subr.mxu0 0.0
    %5192 = vmatpush1.msra.mxu0 %v274
    %5193 = vmatprep.subr.mxu0 0.0
    %5194 = vmatpush1.msra.mxu0 %v275
    %5195 = vmatprep.subr.mxu0 0.0
    %5196 = vmatpush1.msra.mxu0 %v276
    %5197 = vmatprep.subr.mxu0 0.0
    %5198 = vmatpush1.msra.mxu0 0.0
    %5199 = vmatprep.subr.mxu0 0.0
    %5200 = vmatpush1.msra.mxu0 0.0
    %5201 = vmatprep.subr.mxu0 0.0
    %5202 = vmatpush1.msra.mxu0 0.0
    %5203 = vmatprep.subr.mxu0 0.0
    %5204 = vmatpush1.msra.mxu0 0.0
    %5205 = vmatprep.subr.mxu0 0.0
    %5206 = vmatpush1.msra.mxu0 0.0
    %5207 = vmatprep.subr.mxu0 0.0
    %5208 = vmatpush1.msra.mxu0 0.0
    %5209 = vmatprep.subr.mxu0 0.0
    %5210 = vmatpush1.msra.mxu0 0.0
    %5211 = vmatprep.subr.mxu0 0.0
    %5212 = vmatpush1.msra.mxu0 0.0
    %5213 = vmatprep.subr.mxu0 0.0
    %5214 = vmatpush1.msra.mxu0 0.0
    %5215 = vmatprep.subr.mxu0 0.0
    %5216 = vmatpush1.msra.mxu0 0.0
    %5217 = vmatprep.subr.mxu0 0.0
    %5218 = vmatpush1.msra.mxu0 0.0
    %5219 = vmatprep.subr.mxu0 0.0
    %5220 = vmatpush1.msra.mxu0 0.0
    %5221 = vmatprep.subr.mxu0 0.0
    %5222 = vmatpush1.msra.mxu0 0.0
    %5223 = vmatprep.subr.mxu0 0.0
    %5224 = vmatpush1.msra.mxu0 0.0
    %5225 = vmatprep.subr.mxu0 0.0
    %5226 = vmatpush1.msra.mxu0 0.0
    %5227 = vmatprep.subr.mxu0 0.0
    %5228 = vmatpush1.msra.mxu0 0.0
    %5229 = vmatprep.subr.mxu0 0.0
    %5230 = vmatpush1.msra.mxu0 0.0
    %5231 = vmatprep.subr.mxu0 0.0
    %5232 = vmatpush1.msra.mxu0 0.0
    %5233 = vmatprep.subr.mxu0 0.0
    %5234 = vmatpush1.msra.mxu0 0.0
    %5235 = vmatprep.subr.mxu0 0.0
    %5236 = vmatpush1.msra.mxu0 0.0
    %5237 = vmatprep.subr.mxu0 0.0
    %5238 = vmatpush1.msra.mxu0 0.0
    %5239 = vmatprep.subr.mxu0 0.0
    %5240 = vmatpush1.msra.mxu0 0.0
    %5241 = vmatprep.subr.mxu0 0.0
    %5242 = vmatpush1.msra.mxu0 0.0
    %5243 = vmatprep.subr.mxu0 0.0
    %5244 = vmatpush1.msra.mxu0 0.0
    %5245 = vmatprep.mubr.f32.mxu0 0.0
    %5246 = vmatmul.mubr.f32.gmra.mrb[0].mxu0 %v4576
    %v5247 = vpop.f32.mrb[0].mxu0
    %v5248 = vadd.f32 0.0, %v5247
    %v5249 = vpop.f32.mrb[0].mxu0
    %5250 = vmatprep.mubr.f32.mxu0 0.0
    %5251 = vmatmul.mubr.f32.gmra.mrb[0].mxu0 %v5179
    %v5252 = vpop.f32.mrb[0].mxu0
    %v5253 = vadd.f32 0.0, %v5252
    %v5254 = vpop.f32.mrb[0].mxu0
    %5255 = vdwg.mxu0
    %v5256 = vadd.f32 %v5171, %v5248
    %v5257 = vadd.f32 %v5172, %v5253
    %v5258 = vrot.slane %v4547, 6
    %v5259 = vrot.slane %v5258, 4
    %v5260 = vrot.slane %v5173, 6
    %v5261 = vsel %vm3860, %v5259, %v5260
    %v5262 = vcombine.low %v5008, %v5261
    %v5263 = vsel %vm123, %v5262, 0
    %5265 = vmatprep.subr.mxu0 0.0
    %5266 = vmatpush1.msra.mxu0 %v277
    %5267 = vmatprep.subr.mxu0 0.0
    %5268 = vmatpush1.msra.mxu0 %v278
    %5269 = vmatprep.subr.mxu0 0.0
    %5270 = vmatpush1.msra.mxu0 %v279
    %5271 = vmatprep.subr.mxu0 0.0
    %5272 = vmatpush1.msra.mxu0 %v280
    %5273 = vmatprep.subr.mxu0 0.0
    %5274 = vmatpush1.msra.mxu0 %v281
    %5275 = vmatprep.subr.mxu0 0.0
    %5276 = vmatpush1.msra.mxu0 %v282
    %5277 = vmatprep.subr.mxu0 0.0
    %5278 = vmatpush1.msra.mxu0 %v283
    %5279 = vmatprep.subr.mxu0 0.0
    %5280 = vmatpush1.msra.mxu0 %v284
    %5281 = vmatprep.subr.mxu0 0.0
    %5282 = vmatpush1.msra.mxu0 0.0
    %5283 = vmatprep.subr.mxu0 0.0
    %5284 = vmatpush1.msra.mxu0 0.0
    %5285 = vmatprep.subr.mxu0 0.0
    %5286 = vmatpush1.msra.mxu0 0.0
    %5287 = vmatprep.subr.mxu0 0.0
    %5288 = vmatpush1.msra.mxu0 0.0
    %5289 = vmatprep.subr.mxu0 0.0
    %5290 = vmatpush1.msra.mxu0 0.0
    %5291 = vmatprep.subr.mxu0 0.0
    %5292 = vmatpush1.msra.mxu0 0.0
    %5293 = vmatprep.subr.mxu0 0.0
    %5294 = vmatpush1.msra.mxu0 0.0
    %5295 = vmatprep.subr.mxu0 0.0
    %5296 = vmatpush1.msra.mxu0 0.0
    %5297 = vmatprep.subr.mxu0 0.0
    %5298 = vmatpush1.msra.mxu0 0.0
    %5299 = vmatprep.subr.mxu0 0.0
    %5300 = vmatpush1.msra.mxu0 0.0
    %5301 = vmatprep.subr.mxu0 0.0
    %5302 = vmatpush1.msra.mxu0 0.0
    %5303 = vmatprep.subr.mxu0 0.0
    %5304 = vmatpush1.msra.mxu0 0.0
    %5305 = vmatprep.subr.mxu0 0.0
    %5306 = vmatpush1.msra.mxu0 0.0
    %5307 = vmatprep.subr.mxu0 0.0
    %5308 = vmatpush1.msra.mxu0 0.0
    %5309 = vmatprep.subr.mxu0 0.0
    %5310 = vmatpush1.msra.mxu0 0.0
    %5311 = vmatprep.subr.mxu0 0.0
    %5312 = vmatpush1.msra.mxu0 0.0
    %5313 = vmatprep.subr.mxu0 0.0
    %5314 = vmatpush1.msra.mxu0 0.0
    %5315 = vmatprep.subr.mxu0 0.0
    %5316 = vmatpush1.msra.mxu0 0.0
    %5317 = vmatprep.subr.mxu0 0.0
    %5318 = vmatpush1.msra.mxu0 0.0
    %5319 = vmatprep.subr.mxu0 0.0
    %5320 = vmatpush1.msra.mxu0 0.0
    %5321 = vmatprep.subr.mxu0 0.0
    %5322 = vmatpush1.msra.mxu0 0.0
    %5323 = vmatprep.subr.mxu0 0.0
    %5324 = vmatpush1.msra.mxu0 0.0
    %5325 = vmatprep.subr.mxu0 0.0
    %5326 = vmatpush1.msra.mxu0 0.0
    %5327 = vmatprep.subr.mxu0 0.0
    %5328 = vmatpush1.msra.mxu0 0.0
    %5329 = vmatprep.mubr.f32.mxu0 0.0
    %5330 = vmatmul.mubr.f32.gmra.mrb[0].mxu0 %v4754
    %v5331 = vpop.f32.mrb[0].mxu0
    %v5332 = vadd.f32 0.0, %v5331
    %v5333 = vpop.f32.mrb[0].mxu0
    %5334 = vmatprep.mubr.f32.mxu0 0.0
    %5335 = vmatmul.mubr.f32.gmra.mrb[0].mxu0 %v5263
    %v5336 = vpop.f32.mrb[0].mxu0
    %v5337 = vadd.f32 0.0, %v5336
    %v5338 = vpop.f32.mrb[0].mxu0
    %5339 = vdwg.mxu0
    %v5340 = vadd.f32 %v5256, %v5332
    %v5341 = vadd.f32 %v5257, %v5337
    %v5344 = vrot.slane %v5340, 1
    %v5345 = vrot.slane %v5340, 2
    %v5346 = vrot.slane %v5340, 3
    %v5347 = vrot.slane %v5340, 4
    %v5348 = vrot.slane %v5340, 5
    %v5349 = vrot.slane %v5340, 6
    %v5350 = vrot.slane %v5340, 7
    %v5351 = vrot.slane %v5341, 1
    %v5352 = vrot.slane %v5341, 2
    %v5353 = vrot.slane %v5341, 3
    %v5354 = vrot.slane %v5341, 4
    %v5355 = vrot.slane %v5341, 5
    %v5356 = vrot.slane %v5341, 6
    %v5357 = vrot.slane %v5341, 7
    %v5374 = vadd.f32 %v3329, %v5340
    %v5375 = vadd.f32 %v3330, %v5344
    %v5376 = vadd.f32 %v3331, %v5345
    %v5377 = vadd.f32 %v3332, %v5346
    %v5378 = vadd.f32 %v3333, %v5347
    %v5379 = vadd.f32 %v3334, %v5348
    %v5380 = vadd.f32 %v3335, %v5349
    %v5381 = vadd.f32 %v3336, %v5350
    %v5382 = vadd.f32 %v3337, %v5341
    %v5383 = vadd.f32 %v3338, %v5351
    %v5384 = vadd.f32 %v3339, %v5352
    %v5385 = vadd.f32 %v3340, %v5353
    %v5386 = vadd.f32 %v3341, %v5354
    %v5387 = vadd.f32 %v3342, %v5355
    %v5388 = vadd.f32 %v3343, %v5356
    %v5389 = vadd.f32 %v3344, %v5357
    %v5391 = vlaneseq
    %v5392 = vshrl.u32 %v5391, 7
    %v5393 = vsub.s32 0, %v5392
    %v5394 = vrot.slane %v285, %v5393
    %v5396 = vadd.f32 %v5374, %v5394
    %v5397 = vadd.f32 %v5375, %v5394
    %v5398 = vadd.f32 %v5376, %v5394
    %v5399 = vadd.f32 %v5377, %v5394
    %v5400 = vadd.f32 %v5378, %v5394
    %v5401 = vadd.f32 %v5379, %v5394
    %v5402 = vadd.f32 %v5380, %v5394
    %v5403 = vadd.f32 %v5381, %v5394
    %v5404 = vadd.f32 %v5382, %v5394
    %v5405 = vadd.f32 %v5383, %v5394
    %v5406 = vadd.f32 %v5384, %v5394
    %v5407 = vadd.f32 %v5385, %v5394
    %v5408 = vadd.f32 %v5386, %v5394
    %v5409 = vadd.f32 %v5387, %v5394
    %v5410 = vadd.f32 %v5388, %v5394
    %v5411 = vadd.f32 %v5389, %v5394
    %vm5412 = vcmask 253952
    %5413 = vst.msk [vmem:[#allocation3] sm:$0x1] %vm5412, %v5396
    %5414 = vst.msk [vmem:[#allocation3 + $0x2] sm:$0x1] %vm5412, %v5397
    %5415 = vst.msk [vmem:[#allocation3 + $0x4] sm:$0x1] %vm5412, %v5398
    %5416 = vst.msk [vmem:[#allocation3 + $0x6] sm:$0x1] %vm5412, %v5399
    %5417 = vst.msk [vmem:[#allocation3 + $0x8] sm:$0x1] %vm5412, %v5400
    %5418 = vst.msk [vmem:[#allocation3 + $0xa] sm:$0x1] %vm5412, %v5401
    %5419 = vst.msk [vmem:[#allocation3 + $0xc] sm:$0x1] %vm5412, %v5402
    %5420 = vst.msk [vmem:[#allocation3 + $0xe] sm:$0x1] %vm5412, %v5403
    %5421 = vst.msk [vmem:[#allocation3 + $0x10] sm:$0x1] %vm5412, %v5404
    %5422 = vst.msk [vmem:[#allocation3 + $0x12] sm:$0x1] %vm5412, %v5405
    %5423 = vst.msk [vmem:[#allocation3 + $0x14] sm:$0x1] %vm5412, %v5406
    %5424 = vst.msk [vmem:[#allocation3 + $0x16] sm:$0x1] %vm5412, %v5407
    %5425 = vst.msk [vmem:[#allocation3 + $0x18] sm:$0x1] %vm5412, %v5408
    %5426 = vst.msk [vmem:[#allocation3 + $0x1a] sm:$0x1] %vm5412, %v5409
    %5427 = vst.msk [vmem:[#allocation3 + $0x1c] sm:$0x1] %vm5412, %v5410
    %5428 = vst.msk [vmem:[#allocation3 + $0x1e] sm:$0x1] %vm5412, %v5411
    %v5429 = vsel %vm360, %v356, %v300
    %v5430 = vsel %vm363, %v359, %v5429
    %v5431 = vsel %vm366, %v362, %v5430
    %v5432 = vsel %vm369, %v365, %v5431
    %v5433 = vsel %vm372, %v368, %v5432
    %v5434 = vsel %vm375, %v371, %v5433
    %v5435 = vsel %vm357, %v308, %v374
    %v5436 = vsel %vm360, %v377, %v5435
    %v5437 = vsel %vm363, %v379, %v5436
    %v5438 = vsel %vm366, %v381, %v5437
    %v5439 = vsel %vm369, %v383, %v5438
    %v5440 = vsel %vm372, %v385, %v5439
    %v5441 = vsel %vm375, %v387, %v5440
    %vm5445 = vcmask 261121
    %v5446 = vsel %vm5445, %v5434, 0.0
    %5447 = vadd.xlane.f32.xlu0 %v5446
    %v5448 = vpop.xlane.xlu0 %5447
    %v5449 = vsel %vm393, %v5441, 0.0
    %5450 = vadd.xlane.f32.xlu0 %v5449
    %v5451 = vpop.xlane.xlu0 %5450
    %v5452 = vsel %vm5412, %v389, 0.0
    %5453 = vadd.xlane.f32.xlu0 %v5452
    %v5454 = vpop.xlane.xlu0 %5453
    %v5455 = vmul.f32 %v5448, %v400
    %v5456 = vmul.f32 %v5451, %v400
    %v5457 = vmul.f32 %v5454, %v400
    %v5461 = vrot.slane %v5455, 1
    %v5462 = vrot.slane %v5455, 2
    %v5463 = vrot.slane %v5455, 3
    %v5464 = vrot.slane %v5455, 4
    %v5465 = vrot.slane %v5455, 5
    %v5466 = vrot.slane %v5455, 6
    %v5467 = vrot.slane %v5456, 7
    %v5468 = vrot.slane %v5456, 1
    %v5469 = vrot.slane %v5456, 2
    %v5470 = vrot.slane %v5456, 3
    %v5471 = vrot.slane %v5456, 4
    %v5472 = vrot.slane %v5456, 5
    %v5473 = vrot.slane %v5456, 6
    %v5474 = vrot.slane %v5457, 7
    %v5491 = vsub.f32 %v300, %v5455
    %v5492 = vsub.f32 %v301, %v5461
    %v5493 = vsub.f32 %v302, %v5462
    %v5494 = vsub.f32 %v303, %v5463
    %v5495 = vsub.f32 %v304, %v5464
    %v5496 = vsub.f32 %v305, %v5465
    %v5497 = vsub.f32 %v306, %v5466
    %v5498 = vsub.f32 %v307, %v5467
    %v5499 = vsub.f32 %v308, %v5456
    %v5500 = vsub.f32 %v309, %v5468
    %v5501 = vsub.f32 %v310, %v5469
    %v5502 = vsub.f32 %v311, %v5470
    %v5503 = vsub.f32 %v312, %v5471
    %v5504 = vsub.f32 %v313, %v5472
    %v5505 = vsub.f32 %v314, %v5473
    %v5506 = vsub.f32 %v315, %v5474
    %v5507 = vmul.f32 %v5491, %v5491
    %v5508 = vmul.f32 %v5492, %v5492
    %v5509 = vmul.f32 %v5493, %v5493
    %v5510 = vmul.f32 %v5494, %v5494
    %v5511 = vmul.f32 %v5495, %v5495
    %v5512 = vmul.f32 %v5496, %v5496
    %v5513 = vmul.f32 %v5497, %v5497
    %v5514 = vmul.f32 %v5498, %v5498
    %v5515 = vmul.f32 %v5499, %v5499
    %v5516 = vmul.f32 %v5500, %v5500
    %v5517 = vmul.f32 %v5501, %v5501
    %v5518 = vmul.f32 %v5502, %v5502
    %v5519 = vmul.f32 %v5503, %v5503
    %v5520 = vmul.f32 %v5504, %v5504
    %v5521 = vmul.f32 %v5505, %v5505
    %v5522 = vmul.f32 %v5506, %v5506
    %v5539 = vrot.slane %v5508, 7
    %v5540 = vsel %vm360, %v5539, %v5507
    %v5541 = vrot.slane %v5509, 6
    %v5542 = vsel %vm363, %v5541, %v5540
    %v5543 = vrot.slane %v5510, 5
    %v5544 = vsel %vm366, %v5543, %v5542
    %v5545 = vrot.slane %v5511, 4
    %v5546 = vsel %vm369, %v5545, %v5544
    %v5547 = vrot.slane %v5512, 3
    %v5548 = vsel %vm372, %v5547, %v5546
    %v5549 = vrot.slane %v5513, 2
    %v5550 = vsel %vm375, %v5549, %v5548
    %v5551 = vrot.slane %v5514, 1
    %v5552 = vsel %vm357, %v5515, %v5551
    %v5553 = vrot.slane %v5516, 7
    %v5554 = vsel %vm360, %v5553, %v5552
    %v5555 = vrot.slane %v5517, 6
    %v5556 = vsel %vm363, %v5555, %v5554
    %v5557 = vrot.slane %v5518, 5
    %v5558 = vsel %vm366, %v5557, %v5556
    %v5559 = vrot.slane %v5519, 4
    %v5560 = vsel %vm369, %v5559, %v5558
    %v5561 = vrot.slane %v5520, 3
    %v5562 = vsel %vm372, %v5561, %v5560
    %v5563 = vrot.slane %v5521, 2
    %v5564 = vsel %vm375, %v5563, %v5562
    %v5565 = vrot.slane %v5522, 1
    %v5569 = vsel %vm5445, %v5550, 0.0
    %5570 = vadd.xlane.f32.xlu0 %v5569
    %v5571 = vpop.xlane.xlu0 %5570
    %v5572 = vsel %vm393, %v5564, 0.0
    %5573 = vadd.xlane.f32.xlu0 %v5572
    %v5574 = vpop.xlane.xlu0 %5573
    %v5575 = vsel %vm5412, %v5565, 0.0
    %5576 = vadd.xlane.f32.xlu0 %v5575
    %v5577 = vpop.xlane.xlu0 %5576
    %v5578 = vmul.f32 %v5571, %v400
    %v5579 = vmul.f32 %v5574, %v400
    %v5580 = vmul.f32 %v5577, %v400
    %v5581 = vadd.f32 %v5578, 1e-05
    %v5582 = vadd.f32 %v5579, 1e-05
    %v5583 = vadd.f32 %v5580, 1e-05
    %v5584 = vrsqrt.pop %v5581
    %v5585 = vrsqrt.pop %v5582
    %v5586 = vrsqrt.pop %v5583
    %v5590 = vrot.slane %v5584, 1
    %v5591 = vrot.slane %v5584, 2
    %v5592 = vrot.slane %v5584, 3
    %v5593 = vrot.slane %v5584, 4
    %v5594 = vrot.slane %v5584, 5
    %v5595 = vrot.slane %v5584, 6
    %v5596 = vrot.slane %v5585, 7
    %v5597 = vrot.slane %v5585, 1
    %v5598 = vrot.slane %v5585, 2
    %v5599 = vrot.slane %v5585, 3
    %v5600 = vrot.slane %v5585, 4
    %v5601 = vrot.slane %v5585, 5
    %v5602 = vrot.slane %v5585, 6
    %v5603 = vrot.slane %v5586, 7
    %v5620 = vmul.f32 %v5491, %v5584
    %v5621 = vmul.f32 %v5492, %v5590
    %v5622 = vmul.f32 %v5493, %v5591
    %v5623 = vmul.f32 %v5494, %v5592
    %v5624 = vmul.f32 %v5495, %v5593
    %v5625 = vmul.f32 %v5496, %v5594
    %v5626 = vmul.f32 %v5497, %v5595
    %v5627 = vmul.f32 %v5498, %v5596
    %v5628 = vmul.f32 %v5499, %v5585
    %v5629 = vmul.f32 %v5500, %v5597
    %v5630 = vmul.f32 %v5501, %v5598
    %v5631 = vmul.f32 %v5502, %v5599
    %v5632 = vmul.f32 %v5503, %v5600
    %v5633 = vmul.f32 %v5504, %v5601
    %v5634 = vmul.f32 %v5505, %v5602
    %v5635 = vmul.f32 %v5506, %v5603
    %v5636 = vmul.f32 %v5620, %v577
    %v5637 = vmul.f32 %v5621, %v577
    %v5638 = vmul.f32 %v5622, %v577
    %v5639 = vmul.f32 %v5623, %v577
    %v5640 = vmul.f32 %v5624, %v577
    %v5641 = vmul.f32 %v5625, %v577
    %v5642 = vmul.f32 %v5626, %v577
    %v5643 = vmul.f32 %v5627, %v577
    %v5644 = vmul.f32 %v5628, %v577
    %v5645 = vmul.f32 %v5629, %v577
    %v5646 = vmul.f32 %v5630, %v577
    %v5647 = vmul.f32 %v5631, %v577
    %v5648 = vmul.f32 %v5632, %v577
    %v5649 = vmul.f32 %v5633, %v577
    %v5650 = vmul.f32 %v5634, %v577
    %v5651 = vmul.f32 %v5635, %v577
    %v5652 = vadd.f32 %v5636, %v599
    %v5653 = vadd.f32 %v5637, %v599
    %v5654 = vadd.f32 %v5638, %v599
    %v5655 = vadd.f32 %v5639, %v599
    %v5656 = vadd.f32 %v5640, %v599
    %v5657 = vadd.f32 %v5641, %v599
    %v5658 = vadd.f32 %v5642, %v599
    %v5659 = vadd.f32 %v5643, %v599
    %v5660 = vadd.f32 %v5644, %v599
    %v5661 = vadd.f32 %v5645, %v599
    %v5662 = vadd.f32 %v5646, %v599
    %v5663 = vadd.f32 %v5647, %v599
    %v5664 = vadd.f32 %v5648, %v599
    %v5665 = vadd.f32 %v5649, %v599
    %v5666 = vadd.f32 %v5650, %v599
    %v5667 = vadd.f32 %v5651, %v599
    %v5668 = vadd.f32 %v5652, %v316
    %v5669 = vadd.f32 %v5653, %v317
    %v5670 = vadd.f32 %v5654, %v318
    %v5671 = vadd.f32 %v5655, %v319
    %v5672 = vadd.f32 %v5656, %v320
    %v5673 = vadd.f32 %v5657, %v321
    %v5674 = vadd.f32 %v5658, %v322
    %v5675 = vadd.f32 %v5659, %v323
    %v5676 = vadd.f32 %v5660, %v324
    %v5677 = vadd.f32 %v5661, %v325
    %v5678 = vadd.f32 %v5662, %v326
    %v5679 = vadd.f32 %v5663, %v327
    %v5680 = vadd.f32 %v5664, %v328
    %v5681 = vadd.f32 %v5665, %v329
    %v5682 = vadd.f32 %v5666, %v330
    %v5683 = vadd.f32 %v5667, %v331
    %v5700 = vrot.slane %v5668, 1
    %v5701 = vsel %vm357, %v5669, %v5700
    %v5702 = vrot.slane %v5670, 7
    %v5703 = vsel %vm360, %v5702, %v5701
    %v5704 = vrot.slane %v5671, 6
    %v5705 = vsel %vm363, %v5704, %v5703
    %v5706 = vrot.slane %v5672, 5
    %v5707 = vsel %vm366, %v5706, %v5705
    %v5708 = vrot.slane %v5673, 4
    %v5709 = vsel %vm369, %v5708, %v5707
    %v5710 = vrot.slane %v5674, 3
    %v5711 = vsel %vm372, %v5710, %v5709
    %v5712 = vrot.slane %v5675, 2
    %v5713 = vsel %vm375, %v5712, %v5711
    %v5714 = vrot.slane %v5676, 1
    %v5715 = vsel %vm357, %v5677, %v5714
    %v5716 = vrot.slane %v5678, 7
    %v5717 = vsel %vm360, %v5716, %v5715
    %v5718 = vrot.slane %v5679, 6
    %v5719 = vsel %vm363, %v5718, %v5717
    %v5720 = vrot.slane %v5680, 5
    %v5721 = vsel %vm366, %v5720, %v5719
    %v5722 = vrot.slane %v5681, 4
    %v5723 = vsel %vm369, %v5722, %v5721
    %v5724 = vrot.slane %v5682, 3
    %v5725 = vsel %vm372, %v5724, %v5723
    %v5726 = vrot.slane %v5683, 2
    %v5727 = vsel %vm375, %v5726, %v5725
    %v5728 = vsel %vm393, %v5713, 0
    %v5730 = vsel %vm393, %v5727, 0
    %5732 = vmatprep.subr.mxu0 0.0
    %5733 = vmatpush1.msra.mxu0 %v136
    %5734 = vmatprep.subr.mxu0 0.0
    %5735 = vmatpush1.msra.mxu0 %v137
    %5736 = vmatprep.subr.mxu0 0.0
    %5737 = vmatpush1.msra.mxu0 %v138
    %5738 = vmatprep.subr.mxu0 0.0
    %5739 = vmatpush1.msra.mxu0 %v139
    %5740 = vmatprep.subr.mxu0 0.0
    %5741 = vmatpush1.msra.mxu0 0.0
    %5742 = vmatprep.subr.mxu0 0.0
    %5743 = vmatpush1.msra.mxu0 0.0
    %5744 = vmatprep.subr.mxu0 0.0
    %5745 = vmatpush1.msra.mxu0 0.0
    %5746 = vmatprep.subr.mxu0 0.0
    %5747 = vmatpush1.msra.mxu0 0.0
    %5748 = vmatprep.subr.mxu0 0.0
    %5749 = vmatpush1.msra.mxu0 0.0
    %5750 = vmatprep.subr.mxu0 0.0
    %5751 = vmatpush1.msra.mxu0 0.0
    %5752 = vmatprep.subr.mxu0 0.0
    %5753 = vmatpush1.msra.mxu0 0.0
    %5754 = vmatprep.subr.mxu0 0.0
    %5755 = vmatpush1.msra.mxu0 0.0
    %5756 = vmatprep.subr.mxu0 0.0
    %5757 = vmatpush1.msra.mxu0 0.0
    %5758 = vmatprep.subr.mxu0 0.0
    %5759 = vmatpush1.msra.mxu0 0.0
    %5760 = vmatprep.subr.mxu0 0.0
    %5761 = vmatpush1.msra.mxu0 0.0
    %5762 = vmatprep.subr.mxu0 0.0
    %5763 = vmatpush1.msra.mxu0 0.0
    %5764 = vmatprep.subr.mxu0 0.0
    %5765 = vmatpush1.msra.mxu0 0.0
    %5766 = vmatprep.subr.mxu0 0.0
    %5767 = vmatpush1.msra.mxu0 0.0
    %5768 = vmatprep.subr.mxu0 0.0
    %5769 = vmatpush1.msra.mxu0 0.0
    %5770 = vmatprep.subr.mxu0 0.0
    %5771 = vmatpush1.msra.mxu0 0.0
    %5772 = vmatprep.subr.mxu0 0.0
    %5773 = vmatpush1.msra.mxu0 0.0
    %5774 = vmatprep.subr.mxu0 0.0
    %5775 = vmatpush1.msra.mxu0 0.0
    %5776 = vmatprep.subr.mxu0 0.0
    %5777 = vmatpush1.msra.mxu0 0.0
    %5778 = vmatprep.subr.mxu0 0.0
    %5779 = vmatpush1.msra.mxu0 0.0
    %5780 = vmatprep.subr.mxu0 0.0
    %5781 = vmatpush1.msra.mxu0 0.0
    %5782 = vmatprep.subr.mxu0 0.0
    %5783 = vmatpush1.msra.mxu0 0.0
    %5784 = vmatprep.subr.mxu0 0.0
    %5785 = vmatpush1.msra.mxu0 0.0
    %5786 = vmatprep.subr.mxu0 0.0
    %5787 = vmatpush1.msra.mxu0 0.0
    %5788 = vmatprep.subr.mxu0 0.0
    %5789 = vmatpush1.msra.mxu0 0.0
    %5790 = vmatprep.subr.mxu0 0.0
    %5791 = vmatpush1.msra.mxu0 0.0
    %5792 = vmatprep.subr.mxu0 0.0
    %5793 = vmatpush1.msra.mxu0 0.0
    %5794 = vmatprep.subr.mxu0 0.0
    %5795 = vmatpush1.msra.mxu0 0.0
    %5796 = vmatprep.mubr.f32.mxu0 0.0
    %5797 = vmatmul.mubr.f32.gmra.mrb[0].mxu0 %v5728
    %v5798 = vpop.f32.mrb[0].mxu0
    %v5799 = vadd.f32 %v637, %v5798
    %v5800 = vpop.f32.mrb[0].mxu0
    %5801 = vmatprep.mubr.f32.mxu0 0.0
    %5802 = vmatmul.mubr.f32.gmra.mrb[0].mxu0 %v5730
    %v5803 = vpop.f32.mrb[0].mxu0
    %v5804 = vadd.f32 %v637, %v5803
    %v5805 = vpop.f32.mrb[0].mxu0
    %5806 = vdwg.mxu0
    %5807 = vmatprep.subr.mxu0 0.0
    %5808 = vmatpush1.msra.mxu0 %v141
    %5809 = vmatprep.subr.mxu0 0.0
    %5810 = vmatpush1.msra.mxu0 %v142
    %5811 = vmatprep.subr.mxu0 0.0
    %5812 = vmatpush1.msra.mxu0 %v143
    %5813 = vmatprep.subr.mxu0 0.0
    %5814 = vmatpush1.msra.mxu0 %v144
    %5815 = vmatprep.subr.mxu0 0.0
    %5816 = vmatpush1.msra.mxu0 0.0
    %5817 = vmatprep.subr.mxu0 0.0
    %5818 = vmatpush1.msra.mxu0 0.0
    %5819 = vmatprep.subr.mxu0 0.0
    %5820 = vmatpush1.msra.mxu0 0.0
    %5821 = vmatprep.subr.mxu0 0.0
    %5822 = vmatpush1.msra.mxu0 0.0
    %5823 = vmatprep.subr.mxu0 0.0
    %5824 = vmatpush1.msra.mxu0 0.0
    %5825 = vmatprep.subr.mxu0 0.0
    %5826 = vmatpush1.msra.mxu0 0.0
    %5827 = vmatprep.subr.mxu0 0.0
    %5828 = vmatpush1.msra.mxu0 0.0
    %5829 = vmatprep.subr.mxu0 0.0
    %5830 = vmatpush1.msra.mxu0 0.0
    %5831 = vmatprep.subr.mxu0 0.0
    %5832 = vmatpush1.msra.mxu0 0.0
    %5833 = vmatprep.subr.mxu0 0.0
    %5834 = vmatpush1.msra.mxu0 0.0
    %5835 = vmatprep.subr.mxu0 0.0
    %5836 = vmatpush1.msra.mxu0 0.0
    %5837 = vmatprep.subr.mxu0 0.0
    %5838 = vmatpush1.msra.mxu0 0.0
    %5839 = vmatprep.subr.mxu0 0.0
    %5840 = vmatpush1.msra.mxu0 0.0
    %5841 = vmatprep.subr.mxu0 0.0
    %5842 = vmatpush1.msra.mxu0 0.0
    %5843 = vmatprep.subr.mxu0 0.0
    %5844 = vmatpush1.msra.mxu0 0.0
    %5845 = vmatprep.subr.mxu0 0.0
    %5846 = vmatpush1.msra.mxu0 0.0
    %5847 = vmatprep.subr.mxu0 0.0
    %5848 = vmatpush1.msra.mxu0 0.0
    %5849 = vmatprep.subr.mxu0 0.0
    %5850 = vmatpush1.msra.mxu0 0.0
    %5851 = vmatprep.subr.mxu0 0.0
    %5852 = vmatpush1.msra.mxu0 0.0
    %5853 = vmatprep.subr.mxu0 0.0
    %5854 = vmatpush1.msra.mxu0 0.0
    %5855 = vmatprep.subr.mxu0 0.0
    %5856 = vmatpush1.msra.mxu0 0.0
    %5857 = vmatprep.subr.mxu0 0.0
    %5858 = vmatpush1.msra.mxu0 0.0
    %5859 = vmatprep.subr.mxu0 0.0
    %5860 = vmatpush1.msra.mxu0 0.0
    %5861 = vmatprep.subr.mxu0 0.0
    %5862 = vmatpush1.msra.mxu0 0.0
    %5863 = vmatprep.subr.mxu0 0.0
    %5864 = vmatpush1.msra.mxu0 0.0
    %5865 = vmatprep.subr.mxu0 0.0
    %5866 = vmatpush1.msra.mxu0 0.0
    %5867 = vmatprep.subr.mxu0 0.0
    %5868 = vmatpush1.msra.mxu0 0.0
    %5869 = vmatprep.subr.mxu0 0.0
    %5870 = vmatpush1.msra.mxu0 0.0
    %5871 = vmatprep.mubr.f32.mxu0 0.0
    %5872 = vmatmul.mubr.f32.gmra.mrb[0].mxu0 %v5728
    %v5873 = vpop.f32.mrb[0].mxu0
    %v5874 = vadd.f32 %v766, %v5873
    %v5875 = vpop.f32.mrb[0].mxu0
    %5876 = vmatprep.mubr.f32.mxu0 0.0
    %5877 = vmatmul.mubr.f32.gmra.mrb[0].mxu0 %v5730
    %v5878 = vpop.f32.mrb[0].mxu0
    %v5879 = vadd.f32 %v766, %v5878
    %v5880 = vpop.f32.mrb[0].mxu0
    %5881 = vdwg.mxu0
    %v5898 = vrot.slane %v5652, 1
    %v5899 = vsel %vm357, %v5653, %v5898
    %v5900 = vrot.slane %v5654, 7
    %v5901 = vsel %vm360, %v5900, %v5899
    %v5902 = vrot.slane %v5655, 6
    %v5903 = vsel %vm363, %v5902, %v5901
    %v5904 = vrot.slane %v5656, 5
    %v5905 = vsel %vm366, %v5904, %v5903
    %v5906 = vrot.slane %v5657, 4
    %v5907 = vsel %vm369, %v5906, %v5905
    %v5908 = vrot.slane %v5658, 3
    %v5909 = vsel %vm372, %v5908, %v5907
    %v5910 = vrot.slane %v5659, 2
    %v5911 = vsel %vm375, %v5910, %v5909
    %v5912 = vrot.slane %v5660, 1
    %v5913 = vsel %vm357, %v5661, %v5912
    %v5914 = vrot.slane %v5662, 7
    %v5915 = vsel %vm360, %v5914, %v5913
    %v5916 = vrot.slane %v5663, 6
    %v5917 = vsel %vm363, %v5916, %v5915
    %v5918 = vrot.slane %v5664, 5
    %v5919 = vsel %vm366, %v5918, %v5917
    %v5920 = vrot.slane %v5665, 4
    %v5921 = vsel %vm369, %v5920, %v5919
    %v5922 = vrot.slane %v5666, 3
    %v5923 = vsel %vm372, %v5922, %v5921
    %v5924 = vrot.slane %v5667, 2
    %v5925 = vsel %vm375, %v5924, %v5923
    %v5926 = vsel %vm393, %v5911, 0
    %v5928 = vsel %vm393, %v5925, 0
    %5930 = vmatprep.subr.mxu0 0.0
    %5931 = vmatpush1.msra.mxu0 %v146
    %5932 = vmatprep.subr.mxu0 0.0
    %5933 = vmatpush1.msra.mxu0 %v147
    %5934 = vmatprep.subr.mxu0 0.0
    %5935 = vmatpush1.msra.mxu0 %v148
    %5936 = vmatprep.subr.mxu0 0.0
    %5937 = vmatpush1.msra.mxu0 %v149
    %5938 = vmatprep.subr.mxu0 0.0
    %5939 = vmatpush1.msra.mxu0 0.0
    %5940 = vmatprep.subr.mxu0 0.0
    %5941 = vmatpush1.msra.mxu0 0.0
    %5942 = vmatprep.subr.mxu0 0.0
    %5943 = vmatpush1.msra.mxu0 0.0
    %5944 = vmatprep.subr.mxu0 0.0
    %5945 = vmatpush1.msra.mxu0 0.0
    %5946 = vmatprep.subr.mxu0 0.0
    %5947 = vmatpush1.msra.mxu0 0.0
    %5948 = vmatprep.subr.mxu0 0.0
    %5949 = vmatpush1.msra.mxu0 0.0
    %5950 = vmatprep.subr.mxu0 0.0
    %5951 = vmatpush1.msra.mxu0 0.0
    %5952 = vmatprep.subr.mxu0 0.0
    %5953 = vmatpush1.msra.mxu0 0.0
    %5954 = vmatprep.subr.mxu0 0.0
    %5955 = vmatpush1.msra.mxu0 0.0
    %5956 = vmatprep.subr.mxu0 0.0
    %5957 = vmatpush1.msra.mxu0 0.0
    %5958 = vmatprep.subr.mxu0 0.0
    %5959 = vmatpush1.msra.mxu0 0.0
    %5960 = vmatprep.subr.mxu0 0.0
    %5961 = vmatpush1.msra.mxu0 0.0
    %5962 = vmatprep.subr.mxu0 0.0
    %5963 = vmatpush1.msra.mxu0 0.0
    %5964 = vmatprep.subr.mxu0 0.0
    %5965 = vmatpush1.msra.mxu0 0.0
    %5966 = vmatprep.subr.mxu0 0.0
    %5967 = vmatpush1.msra.mxu0 0.0
    %5968 = vmatprep.subr.mxu0 0.0
    %5969 = vmatpush1.msra.mxu0 0.0
    %5970 = vmatprep.subr.mxu0 0.0
    %5971 = vmatpush1.msra.mxu0 0.0
    %5972 = vmatprep.subr.mxu0 0.0
    %5973 = vmatpush1.msra.mxu0 0.0
    %5974 = vmatprep.subr.mxu0 0.0
    %5975 = vmatpush1.msra.mxu0 0.0
    %5976 = vmatprep.subr.mxu0 0.0
    %5977 = vmatpush1.msra.mxu0 0.0
    %5978 = vmatprep.subr.mxu0 0.0
    %5979 = vmatpush1.msra.mxu0 0.0
    %5980 = vmatprep.subr.mxu0 0.0
    %5981 = vmatpush1.msra.mxu0 0.0
    %5982 = vmatprep.subr.mxu0 0.0
    %5983 = vmatpush1.msra.mxu0 0.0
    %5984 = vmatprep.subr.mxu0 0.0
    %5985 = vmatpush1.msra.mxu0 0.0
    %5986 = vmatprep.subr.mxu0 0.0
    %5987 = vmatpush1.msra.mxu0 0.0
    %5988 = vmatprep.subr.mxu0 0.0
    %5989 = vmatpush1.msra.mxu0 0.0
    %5990 = vmatprep.subr.mxu0 0.0
    %5991 = vmatpush1.msra.mxu0 0.0
    %5992 = vmatprep.subr.mxu0 0.0
    %5993 = vmatpush1.msra.mxu0 0.0
    %5994 = vmatprep.mubr.f32.mxu0 0.0
    %5995 = vmatmul.mubr.f32.gmra.mrb[0].mxu0 %v5926
    %v5996 = vpop.f32.mrb[0].mxu0
    %v5997 = vadd.f32 %v847, %v5996
    %v5998 = vpop.f32.mrb[0].mxu0
    %5999 = vmatprep.mubr.f32.mxu0 0.0
    %6000 = vmatmul.mubr.f32.gmra.mrb[0].mxu0 %v5928
    %v6001 = vpop.f32.mrb[0].mxu0
    %v6002 = vadd.f32 %v847, %v6001
    %v6003 = vpop.f32.mrb[0].mxu0
    %6004 = vdwg.mxu0
    %v6005 = vsel %vm973, %v5874, 0.0
    %v6006 = vsel %vm973, %v5879, 0.0
    %v6008 = vsel %vm393, %v5799, 0
    %v6011 = vsel %vm393, %v5804, 0
    %v6014 = vsel %vm393, %v6005, 0
    %v6017 = vsel %vm393, %v6006, 0
    %6019 = vmatprep.subr.mxu0 0.0
    %6020 = vmatpush1.xpose.msra.mxu0 %v6014
    %6021 = vmatprep.subr.mxu0 0.0
    %6022 = vmatpush1.xpose.msra.mxu0 %v6017
    %6023 = vmatprep.subr.mxu0 0.0
    %6024 = vmatpush1.xpose.msra.mxu0 0.0
    %6025 = vmatprep.subr.mxu0 0.0
    %6026 = vmatpush1.xpose.msra.mxu0 0.0
    %6027 = vmatprep.subr.mxu0 0.0
    %6028 = vmatpush1.xpose.msra.mxu0 0.0
    %6029 = vmatprep.subr.mxu0 0.0
    %6030 = vmatpush1.xpose.msra.mxu0 0.0
    %6031 = vmatprep.subr.mxu0 0.0
    %6032 = vmatpush1.xpose.msra.mxu0 0.0
    %6033 = vmatprep.subr.mxu0 0.0
    %6034 = vmatpush1.xpose.msra.mxu0 0.0
    %6035 = vmatprep.subr.mxu0 0.0
    %6036 = vmatpush1.xpose.msra.mxu0 0.0
    %6037 = vmatprep.subr.mxu0 0.0
    %6038 = vmatpush1.xpose.msra.mxu0 0.0
    %6039 = vmatprep.subr.mxu0 0.0
    %6040 = vmatpush1.xpose.msra.mxu0 0.0
    %6041 = vmatprep.subr.mxu0 0.0
    %6042 = vmatpush1.xpose.msra.mxu0 0.0
    %6043 = vmatprep.subr.mxu0 0.0
    %6044 = vmatpush1.xpose.msra.mxu0 0.0
    %6045 = vmatprep.subr.mxu0 0.0
    %6046 = vmatpush1.xpose.msra.mxu0 0.0
    %6047 = vmatprep.subr.mxu0 0.0
    %6048 = vmatpush1.xpose.msra.mxu0 0.0
    %6049 = vmatprep.subr.mxu0 0.0
    %6050 = vmatpush1.xpose.msra.mxu0 0.0
    %6051 = vmatprep.subr.mxu0 0.0
    %6052 = vmatpush1.xpose.msra.mxu0 0.0
    %6053 = vmatprep.subr.mxu0 0.0
    %6054 = vmatpush1.xpose.msra.mxu0 0.0
    %6055 = vmatprep.subr.mxu0 0.0
    %6056 = vmatpush1.xpose.msra.mxu0 0.0
    %6057 = vmatprep.subr.mxu0 0.0
    %6058 = vmatpush1.xpose.msra.mxu0 0.0
    %6059 = vmatprep.subr.mxu0 0.0
    %6060 = vmatpush1.xpose.msra.mxu0 0.0
    %6061 = vmatprep.subr.mxu0 0.0
    %6062 = vmatpush1.xpose.msra.mxu0 0.0
    %6063 = vmatprep.subr.mxu0 0.0
    %6064 = vmatpush1.xpose.msra.mxu0 0.0
    %6065 = vmatprep.subr.mxu0 0.0
    %6066 = vmatpush1.xpose.msra.mxu0 0.0
    %6067 = vmatprep.subr.mxu0 0.0
    %6068 = vmatpush1.xpose.msra.mxu0 0.0
    %6069 = vmatprep.subr.mxu0 0.0
    %6070 = vmatpush1.xpose.msra.mxu0 0.0
    %6071 = vmatprep.subr.mxu0 0.0
    %6072 = vmatpush1.xpose.msra.mxu0 0.0
    %6073 = vmatprep.subr.mxu0 0.0
    %6074 = vmatpush1.xpose.msra.mxu0 0.0
    %6075 = vmatprep.subr.mxu0 0.0
    %6076 = vmatpush1.xpose.msra.mxu0 0.0
    %6077 = vmatprep.subr.mxu0 0.0
    %6078 = vmatpush1.xpose.msra.mxu0 0.0
    %6079 = vmatprep.subr.mxu0 0.0
    %6080 = vmatpush1.xpose.msra.mxu0 0.0
    %6081 = vmatprep.subr.mxu0 0.0
    %6082 = vmatpush1.xpose.msra.mxu0 0.0
    %6083 = vmatprep.mubr.f32.mxu0 0.0
    %6084 = vmatmul.mubr.f32.gmra.mrb[0].mxu0 %v6008
    %v6085 = vpop.f32.mrb[0].mxu0
    %v6086 = vadd.f32 0.0, %v6085
    %v6087 = vpop.f32.mrb[0].mxu0
    %6088 = vmatprep.mubr.f32.mxu0 0.0
    %6089 = vmatmul.mubr.f32.gmra.mrb[0].mxu0 %v6011
    %v6090 = vpop.f32.mrb[0].mxu0
    %v6091 = vadd.f32 0.0, %v6090
    %v6092 = vpop.f32.mrb[0].mxu0
    %6093 = vdwg.mxu0
    %v6094 = vsel %vm1063, %v6086, -inf
    %6095 = vmax.xlane.f32.xlu0 %v6094
    %v6096 = vpop.xlane.xlu0 %6095
    %v6097 = vsel %vm1063, %v6091, -inf
    %6098 = vmax.xlane.f32.xlu0 %v6097
    %v6099 = vpop.xlane.xlu0 %6098
    %v6100 = vsub.f32 %v6086, %v6096
    %v6101 = vsub.f32 %v6091, %v6099
    %v6102 = vmul.f32 %v6100, 1.442695
    %v6103 = vpow.pop %v6102
    %v6104 = vmul.f32 %v6101, 1.442695
    %v6105 = vpow.pop %v6104
    %v6106 = vsel %vm1063, %v6103, 0.0
    %6107 = vadd.xlane.f32.xlu0 %v6106
    %v6108 = vpop.xlane.xlu0 %6107
    %v6109 = vsel %vm1063, %v6105, 0.0
    %6110 = vadd.xlane.f32.xlu0 %v6109
    %v6111 = vpop.xlane.xlu0 %6110
    %v6112 = vrcp.pop %v6108
    %v6113 = vrcp.pop %v6111
    %v6114 = vmul.f32 %v6103, %v6112
    %v6115 = vmul.f32 %v6105, %v6113
    %v6116 = vsel %vm973, %v5997, 0.0
    %v6117 = vsel %vm973, %v6002, 0.0
    %v6118 = vsel %vm1089, %v5874, 0.0
    %v6119 = vsel %vm1089, %v5879, 0.0
    %v6121 = vsel %vm393, %v6118, 0
    %v6124 = vsel %vm393, %v6119, 0
    %6126 = vmatprep.subr.mxu0 0.0
    %6127 = vmatpush1.xpose.msra.mxu0 %v6121
    %6128 = vmatprep.subr.mxu0 0.0
    %6129 = vmatpush1.xpose.msra.mxu0 %v6124
    %6130 = vmatprep.subr.mxu0 0.0
    %6131 = vmatpush1.xpose.msra.mxu0 0.0
    %6132 = vmatprep.subr.mxu0 0.0
    %6133 = vmatpush1.xpose.msra.mxu0 0.0
    %6134 = vmatprep.subr.mxu0 0.0
    %6135 = vmatpush1.xpose.msra.mxu0 0.0
    %6136 = vmatprep.subr.mxu0 0.0
    %6137 = vmatpush1.xpose.msra.mxu0 0.0
    %6138 = vmatprep.subr.mxu0 0.0
    %6139 = vmatpush1.xpose.msra.mxu0 0.0
    %6140 = vmatprep.subr.mxu0 0.0
    %6141 = vmatpush1.xpose.msra.mxu0 0.0
    %6142 = vmatprep.subr.mxu0 0.0
    %6143 = vmatpush1.xpose.msra.mxu0 0.0
    %6144 = vmatprep.subr.mxu0 0.0
    %6145 = vmatpush1.xpose.msra.mxu0 0.0
    %6146 = vmatprep.subr.mxu0 0.0
    %6147 = vmatpush1.xpose.msra.mxu0 0.0
    %6148 = vmatprep.subr.mxu0 0.0
    %6149 = vmatpush1.xpose.msra.mxu0 0.0
    %6150 = vmatprep.subr.mxu0 0.0
    %6151 = vmatpush1.xpose.msra.mxu0 0.0
    %6152 = vmatprep.subr.mxu0 0.0
    %6153 = vmatpush1.xpose.msra.mxu0 0.0
    %6154 = vmatprep.subr.mxu0 0.0
    %6155 = vmatpush1.xpose.msra.mxu0 0.0
    %6156 = vmatprep.subr.mxu0 0.0
    %6157 = vmatpush1.xpose.msra.mxu0 0.0
    %6158 = vmatprep.subr.mxu0 0.0
    %6159 = vmatpush1.xpose.msra.mxu0 0.0
    %6160 = vmatprep.subr.mxu0 0.0
    %6161 = vmatpush1.xpose.msra.mxu0 0.0
    %6162 = vmatprep.subr.mxu0 0.0
    %6163 = vmatpush1.xpose.msra.mxu0 0.0
    %6164 = vmatprep.subr.mxu0 0.0
    %6165 = vmatpush1.xpose.msra.mxu0 0.0
    %6166 = vmatprep.subr.mxu0 0.0
    %6167 = vmatpush1.xpose.msra.mxu0 0.0
    %6168 = vmatprep.subr.mxu0 0.0
    %6169 = vmatpush1.xpose.msra.mxu0 0.0
    %6170 = vmatprep.subr.mxu0 0.0
    %6171 = vmatpush1.xpose.msra.mxu0 0.0
    %6172 = vmatprep.subr.mxu0 0.0
    %6173 = vmatpush1.xpose.msra.mxu0 0.0
    %6174 = vmatprep.subr.mxu0 0.0
    %6175 = vmatpush1.xpose.msra.mxu0 0.0
    %6176 = vmatprep.subr.mxu0 0.0
    %6177 = vmatpush1.xpose.msra.mxu0 0.0
    %6178 = vmatprep.subr.mxu0 0.0
    %6179 = vmatpush1.xpose.msra.mxu0 0.0
    %6180 = vmatprep.subr.mxu0 0.0
    %6181 = vmatpush1.xpose.msra.mxu0 0.0
    %6182 = vmatprep.subr.mxu0 0.0
    %6183 = vmatpush1.xpose.msra.mxu0 0.0
    %6184 = vmatprep.subr.mxu0 0.0
    %6185 = vmatpush1.xpose.msra.mxu0 0.0
    %6186 = vmatprep.subr.mxu0 0.0
    %6187 = vmatpush1.xpose.msra.mxu0 0.0
    %6188 = vmatprep.subr.mxu0 0.0
    %6189 = vmatpush1.xpose.msra.mxu0 0.0
    %6190 = vmatprep.mubr.f32.mxu0 0.0
    %6191 = vmatmul.mubr.f32.gmra.mrb[0].mxu0 %v6008
    %v6192 = vpop.f32.mrb[0].mxu0
    %v6193 = vadd.f32 0.0, %v6192
    %v6194 = vpop.f32.mrb[0].mxu0
    %6195 = vmatprep.mubr.f32.mxu0 0.0
    %6196 = vmatmul.mubr.f32.gmra.mrb[0].mxu0 %v6011
    %v6197 = vpop.f32.mrb[0].mxu0
    %v6198 = vadd.f32 0.0, %v6197
    %v6199 = vpop.f32.mrb[0].mxu0
    %6200 = vdwg.mxu0
    %v6201 = vsel %vm1063, %v6193, -inf
    %6202 = vmax.xlane.f32.xlu0 %v6201
    %v6203 = vpop.xlane.xlu0 %6202
    %v6204 = vsel %vm1063, %v6198, -inf
    %6205 = vmax.xlane.f32.xlu0 %v6204
    %v6206 = vpop.xlane.xlu0 %6205
    %v6207 = vsub.f32 %v6193, %v6203
    %v6208 = vsub.f32 %v6198, %v6206
    %v6209 = vmul.f32 %v6207, 1.442695
    %v6210 = vpow.pop %v6209
    %v6211 = vmul.f32 %v6208, 1.442695
    %v6212 = vpow.pop %v6211
    %v6213 = vsel %vm1063, %v6210, 0.0
    %6214 = vadd.xlane.f32.xlu0 %v6213
    %v6215 = vpop.xlane.xlu0 %6214
    %v6216 = vsel %vm1063, %v6212, 0.0
    %6217 = vadd.xlane.f32.xlu0 %v6216
    %v6218 = vpop.xlane.xlu0 %6217
    %v6219 = vrcp.pop %v6215
    %v6220 = vrcp.pop %v6218
    %v6221 = vmul.f32 %v6210, %v6219
    %v6222 = vmul.f32 %v6212, %v6220
    %v6223 = vsel %vm1089, %v5997, 0.0
    %v6224 = vsel %vm1089, %v6002, 0.0
    %v6226 = vsel %vm1063, %v6221, 0
    %v6229 = vsel %vm1063, %v6222, 0
    %6231 = vmatprep.subr.mxu0 0.0
    %6232 = vmatpush1.msra.mxu0 %v6223
    %6233 = vmatprep.subr.mxu0 0.0
    %6234 = vmatpush1.msra.mxu0 %v6224
    %6235 = vmatprep.subr.mxu0 0.0
    %6236 = vmatpush1.msra.mxu0 0.0
    %6237 = vmatprep.subr.mxu0 0.0
    %6238 = vmatpush1.msra.mxu0 0.0
    %6239 = vmatprep.subr.mxu0 0.0
    %6240 = vmatpush1.msra.mxu0 0.0
    %6241 = vmatprep.subr.mxu0 0.0
    %6242 = vmatpush1.msra.mxu0 0.0
    %6243 = vmatprep.subr.mxu0 0.0
    %6244 = vmatpush1.msra.mxu0 0.0
    %6245 = vmatprep.subr.mxu0 0.0
    %6246 = vmatpush1.msra.mxu0 0.0
    %6247 = vmatprep.subr.mxu0 0.0
    %6248 = vmatpush1.msra.mxu0 0.0
    %6249 = vmatprep.subr.mxu0 0.0
    %6250 = vmatpush1.msra.mxu0 0.0
    %6251 = vmatprep.subr.mxu0 0.0
    %6252 = vmatpush1.msra.mxu0 0.0
    %6253 = vmatprep.subr.mxu0 0.0
    %6254 = vmatpush1.msra.mxu0 0.0
    %6255 = vmatprep.subr.mxu0 0.0
    %6256 = vmatpush1.msra.mxu0 0.0
    %6257 = vmatprep.subr.mxu0 0.0
    %6258 = vmatpush1.msra.mxu0 0.0
    %6259 = vmatprep.subr.mxu0 0.0
    %6260 = vmatpush1.msra.mxu0 0.0
    %6261 = vmatprep.subr.mxu0 0.0
    %6262 = vmatpush1.msra.mxu0 0.0
    %6263 = vmatprep.subr.mxu0 0.0
    %6264 = vmatpush1.msra.mxu0 0.0
    %6265 = vmatprep.subr.mxu0 0.0
    %6266 = vmatpush1.msra.mxu0 0.0
    %6267 = vmatprep.subr.mxu0 0.0
    %6268 = vmatpush1.msra.mxu0 0.0
    %6269 = vmatprep.subr.mxu0 0.0
    %6270 = vmatpush1.msra.mxu0 0.0
    %6271 = vmatprep.subr.mxu0 0.0
    %6272 = vmatpush1.msra.mxu0 0.0
    %6273 = vmatprep.subr.mxu0 0.0
    %6274 = vmatpush1.msra.mxu0 0.0
    %6275 = vmatprep.subr.mxu0 0.0
    %6276 = vmatpush1.msra.mxu0 0.0
    %6277 = vmatprep.subr.mxu0 0.0
    %6278 = vmatpush1.msra.mxu0 0.0
    %6279 = vmatprep.subr.mxu0 0.0
    %6280 = vmatpush1.msra.mxu0 0.0
    %6281 = vmatprep.subr.mxu0 0.0
    %6282 = vmatpush1.msra.mxu0 0.0
    %6283 = vmatprep.subr.mxu0 0.0
    %6284 = vmatpush1.msra.mxu0 0.0
    %6285 = vmatprep.subr.mxu0 0.0
    %6286 = vmatpush1.msra.mxu0 0.0
    %6287 = vmatprep.subr.mxu0 0.0
    %6288 = vmatpush1.msra.mxu0 0.0
    %6289 = vmatprep.subr.mxu0 0.0
    %6290 = vmatpush1.msra.mxu0 0.0
    %6291 = vmatprep.subr.mxu0 0.0
    %6292 = vmatpush1.msra.mxu0 0.0
    %6293 = vmatprep.subr.mxu0 0.0
    %6294 = vmatpush1.msra.mxu0 0.0
    %6295 = vmatprep.mubr.f32.mxu0 0.0
    %6296 = vmatmul.mubr.f32.gmra.mrb[0].mxu0 %v6226
    %v6297 = vpop.f32.mrb[0].mxu0
    %v6298 = vadd.f32 0.0, %v6297
    %v6299 = vpop.f32.mrb[0].mxu0
    %6300 = vmatprep.mubr.f32.mxu0 0.0
    %6301 = vmatmul.mubr.f32.gmra.mrb[0].mxu0 %v6229
    %v6302 = vpop.f32.mrb[0].mxu0
    %v6303 = vadd.f32 0.0, %v6302
    %v6304 = vpop.f32.mrb[0].mxu0
    %6305 = vdwg.mxu0
    %v6307 = vsel %vm1063, %v6114, 0
    %v6310 = vsel %vm1063, %v6115, 0
    %6312 = vmatprep.subr.mxu0 0.0
    %6313 = vmatpush1.msra.mxu0 %v6116
    %6314 = vmatprep.subr.mxu0 0.0
    %6315 = vmatpush1.msra.mxu0 %v6117
    %6316 = vmatprep.subr.mxu0 0.0
    %6317 = vmatpush1.msra.mxu0 0.0
    %6318 = vmatprep.subr.mxu0 0.0
    %6319 = vmatpush1.msra.mxu0 0.0
    %6320 = vmatprep.subr.mxu0 0.0
    %6321 = vmatpush1.msra.mxu0 0.0
    %6322 = vmatprep.subr.mxu0 0.0
    %6323 = vmatpush1.msra.mxu0 0.0
    %6324 = vmatprep.subr.mxu0 0.0
    %6325 = vmatpush1.msra.mxu0 0.0
    %6326 = vmatprep.subr.mxu0 0.0
    %6327 = vmatpush1.msra.mxu0 0.0
    %6328 = vmatprep.subr.mxu0 0.0
    %6329 = vmatpush1.msra.mxu0 0.0
    %6330 = vmatprep.subr.mxu0 0.0
    %6331 = vmatpush1.msra.mxu0 0.0
    %6332 = vmatprep.subr.mxu0 0.0
    %6333 = vmatpush1.msra.mxu0 0.0
    %6334 = vmatprep.subr.mxu0 0.0
    %6335 = vmatpush1.msra.mxu0 0.0
    %6336 = vmatprep.subr.mxu0 0.0
    %6337 = vmatpush1.msra.mxu0 0.0
    %6338 = vmatprep.subr.mxu0 0.0
    %6339 = vmatpush1.msra.mxu0 0.0
    %6340 = vmatprep.subr.mxu0 0.0
    %6341 = vmatpush1.msra.mxu0 0.0
    %6342 = vmatprep.subr.mxu0 0.0
    %6343 = vmatpush1.msra.mxu0 0.0
    %6344 = vmatprep.subr.mxu0 0.0
    %6345 = vmatpush1.msra.mxu0 0.0
    %6346 = vmatprep.subr.mxu0 0.0
    %6347 = vmatpush1.msra.mxu0 0.0
    %6348 = vmatprep.subr.mxu0 0.0
    %6349 = vmatpush1.msra.mxu0 0.0
    %6350 = vmatprep.subr.mxu0 0.0
    %6351 = vmatpush1.msra.mxu0 0.0
    %6352 = vmatprep.subr.mxu0 0.0
    %6353 = vmatpush1.msra.mxu0 0.0
    %6354 = vmatprep.subr.mxu0 0.0
    %6355 = vmatpush1.msra.mxu0 0.0
    %6356 = vmatprep.subr.mxu0 0.0
    %6357 = vmatpush1.msra.mxu0 0.0
    %6358 = vmatprep.subr.mxu0 0.0
    %6359 = vmatpush1.msra.mxu0 0.0
    %6360 = vmatprep.subr.mxu0 0.0
    %6361 = vmatpush1.msra.mxu0 0.0
    %6362 = vmatprep.subr.mxu0 0.0
    %6363 = vmatpush1.msra.mxu0 0.0
    %6364 = vmatprep.subr.mxu0 0.0
    %6365 = vmatpush1.msra.mxu0 0.0
    %6366 = vmatprep.subr.mxu0 0.0
    %6367 = vmatpush1.msra.mxu0 0.0
    %6368 = vmatprep.subr.mxu0 0.0
    %6369 = vmatpush1.msra.mxu0 0.0
    %6370 = vmatprep.subr.mxu0 0.0
    %6371 = vmatpush1.msra.mxu0 0.0
    %6372 = vmatprep.subr.mxu0 0.0
    %6373 = vmatpush1.msra.mxu0 0.0
    %6374 = vmatprep.subr.mxu0 0.0
    %6375 = vmatpush1.msra.mxu0 0.0
    %6376 = vmatprep.mubr.f32.mxu0 0.0
    %6377 = vmatmul.mubr.f32.gmra.mrb[0].mxu0 %v6307
    %v6378 = vpop.f32.mrb[0].mxu0
    %v6379 = vadd.f32 %v6298, %v6378
    %v6380 = vpop.f32.mrb[0].mxu0
    %6381 = vmatprep.mubr.f32.mxu0 0.0
    %6382 = vmatmul.mubr.f32.gmra.mrb[0].mxu0 %v6310
    %v6383 = vpop.f32.mrb[0].mxu0
    %v6384 = vadd.f32 %v6303, %v6383
    %v6385 = vpop.f32.mrb[0].mxu0
    %6386 = vdwg.mxu0
    %v6387 = vsel %vm1360, %v5874, 0.0
    %v6388 = vsel %vm1360, %v5879, 0.0
    %v6390 = vsel %vm393, %v6387, 0
    %v6393 = vsel %vm393, %v6388, 0
    %6395 = vmatprep.subr.mxu0 0.0
    %6396 = vmatpush1.xpose.msra.mxu0 %v6390
    %6397 = vmatprep.subr.mxu0 0.0
    %6398 = vmatpush1.xpose.msra.mxu0 %v6393
    %6399 = vmatprep.subr.mxu0 0.0
    %6400 = vmatpush1.xpose.msra.mxu0 0.0
    %6401 = vmatprep.subr.mxu0 0.0
    %6402 = vmatpush1.xpose.msra.mxu0 0.0
    %6403 = vmatprep.subr.mxu0 0.0
    %6404 = vmatpush1.xpose.msra.mxu0 0.0
    %6405 = vmatprep.subr.mxu0 0.0
    %6406 = vmatpush1.xpose.msra.mxu0 0.0
    %6407 = vmatprep.subr.mxu0 0.0
    %6408 = vmatpush1.xpose.msra.mxu0 0.0
    %6409 = vmatprep.subr.mxu0 0.0
    %6410 = vmatpush1.xpose.msra.mxu0 0.0
    %6411 = vmatprep.subr.mxu0 0.0
    %6412 = vmatpush1.xpose.msra.mxu0 0.0
    %6413 = vmatprep.subr.mxu0 0.0
    %6414 = vmatpush1.xpose.msra.mxu0 0.0
    %6415 = vmatprep.subr.mxu0 0.0
    %6416 = vmatpush1.xpose.msra.mxu0 0.0
    %6417 = vmatprep.subr.mxu0 0.0
    %6418 = vmatpush1.xpose.msra.mxu0 0.0
    %6419 = vmatprep.subr.mxu0 0.0
    %6420 = vmatpush1.xpose.msra.mxu0 0.0
    %6421 = vmatprep.subr.mxu0 0.0
    %6422 = vmatpush1.xpose.msra.mxu0 0.0
    %6423 = vmatprep.subr.mxu0 0.0
    %6424 = vmatpush1.xpose.msra.mxu0 0.0
    %6425 = vmatprep.subr.mxu0 0.0
    %6426 = vmatpush1.xpose.msra.mxu0 0.0
    %6427 = vmatprep.subr.mxu0 0.0
    %6428 = vmatpush1.xpose.msra.mxu0 0.0
    %6429 = vmatprep.subr.mxu0 0.0
    %6430 = vmatpush1.xpose.msra.mxu0 0.0
    %6431 = vmatprep.subr.mxu0 0.0
    %6432 = vmatpush1.xpose.msra.mxu0 0.0
    %6433 = vmatprep.subr.mxu0 0.0
    %6434 = vmatpush1.xpose.msra.mxu0 0.0
    %6435 = vmatprep.subr.mxu0 0.0
    %6436 = vmatpush1.xpose.msra.mxu0 0.0
    %6437 = vmatprep.subr.mxu0 0.0
    %6438 = vmatpush1.xpose.msra.mxu0 0.0
    %6439 = vmatprep.subr.mxu0 0.0
    %6440 = vmatpush1.xpose.msra.mxu0 0.0
    %6441 = vmatprep.subr.mxu0 0.0
    %6442 = vmatpush1.xpose.msra.mxu0 0.0
    %6443 = vmatprep.subr.mxu0 0.0
    %6444 = vmatpush1.xpose.msra.mxu0 0.0
    %6445 = vmatprep.subr.mxu0 0.0
    %6446 = vmatpush1.xpose.msra.mxu0 0.0
    %6447 = vmatprep.subr.mxu0 0.0
    %6448 = vmatpush1.xpose.msra.mxu0 0.0
    %6449 = vmatprep.subr.mxu0 0.0
    %6450 = vmatpush1.xpose.msra.mxu0 0.0
    %6451 = vmatprep.subr.mxu0 0.0
    %6452 = vmatpush1.xpose.msra.mxu0 0.0
    %6453 = vmatprep.subr.mxu0 0.0
    %6454 = vmatpush1.xpose.msra.mxu0 0.0
    %6455 = vmatprep.subr.mxu0 0.0
    %6456 = vmatpush1.xpose.msra.mxu0 0.0
    %6457 = vmatprep.subr.mxu0 0.0
    %6458 = vmatpush1.xpose.msra.mxu0 0.0
    %6459 = vmatprep.mubr.f32.mxu0 0.0
    %6460 = vmatmul.mubr.f32.gmra.mrb[0].mxu0 %v6008
    %v6461 = vpop.f32.mrb[0].mxu0
    %v6462 = vadd.f32 0.0, %v6461
    %v6463 = vpop.f32.mrb[0].mxu0
    %6464 = vmatprep.mubr.f32.mxu0 0.0
    %6465 = vmatmul.mubr.f32.gmra.mrb[0].mxu0 %v6011
    %v6466 = vpop.f32.mrb[0].mxu0
    %v6467 = vadd.f32 0.0, %v6466
    %v6468 = vpop.f32.mrb[0].mxu0
    %6469 = vdwg.mxu0
    %v6470 = vsel %vm1063, %v6462, -inf
    %6471 = vmax.xlane.f32.xlu0 %v6470
    %v6472 = vpop.xlane.xlu0 %6471
    %v6473 = vsel %vm1063, %v6467, -inf
    %6474 = vmax.xlane.f32.xlu0 %v6473
    %v6475 = vpop.xlane.xlu0 %6474
    %v6476 = vsub.f32 %v6462, %v6472
    %v6477 = vsub.f32 %v6467, %v6475
    %v6478 = vmul.f32 %v6476, 1.442695
    %v6479 = vpow.pop %v6478
    %v6480 = vmul.f32 %v6477, 1.442695
    %v6481 = vpow.pop %v6480
    %v6482 = vsel %vm1063, %v6479, 0.0
    %6483 = vadd.xlane.f32.xlu0 %v6482
    %v6484 = vpop.xlane.xlu0 %6483
    %v6485 = vsel %vm1063, %v6481, 0.0
    %6486 = vadd.xlane.f32.xlu0 %v6485
    %v6487 = vpop.xlane.xlu0 %6486
    %v6488 = vrcp.pop %v6484
    %v6489 = vrcp.pop %v6487
    %v6490 = vmul.f32 %v6479, %v6488
    %v6491 = vmul.f32 %v6481, %v6489
    %v6492 = vsel %vm1360, %v5997, 0.0
    %v6493 = vsel %vm1360, %v6002, 0.0
    %v6495 = vsel %vm1063, %v6490, 0
    %v6498 = vsel %vm1063, %v6491, 0
    %6500 = vmatprep.subr.mxu0 0.0
    %6501 = vmatpush1.msra.mxu0 %v6492
    %6502 = vmatprep.subr.mxu0 0.0
    %6503 = vmatpush1.msra.mxu0 %v6493
    %6504 = vmatprep.subr.mxu0 0.0
    %6505 = vmatpush1.msra.mxu0 0.0
    %6506 = vmatprep.subr.mxu0 0.0
    %6507 = vmatpush1.msra.mxu0 0.0
    %6508 = vmatprep.subr.mxu0 0.0
    %6509 = vmatpush1.msra.mxu0 0.0
    %6510 = vmatprep.subr.mxu0 0.0
    %6511 = vmatpush1.msra.mxu0 0.0
    %6512 = vmatprep.subr.mxu0 0.0
    %6513 = vmatpush1.msra.mxu0 0.0
    %6514 = vmatprep.subr.mxu0 0.0
    %6515 = vmatpush1.msra.mxu0 0.0
    %6516 = vmatprep.subr.mxu0 0.0
    %6517 = vmatpush1.msra.mxu0 0.0
    %6518 = vmatprep.subr.mxu0 0.0
    %6519 = vmatpush1.msra.mxu0 0.0
    %6520 = vmatprep.subr.mxu0 0.0
    %6521 = vmatpush1.msra.mxu0 0.0
    %6522 = vmatprep.subr.mxu0 0.0
    %6523 = vmatpush1.msra.mxu0 0.0
    %6524 = vmatprep.subr.mxu0 0.0
    %6525 = vmatpush1.msra.mxu0 0.0
    %6526 = vmatprep.subr.mxu0 0.0
    %6527 = vmatpush1.msra.mxu0 0.0
    %6528 = vmatprep.subr.mxu0 0.0
    %6529 = vmatpush1.msra.mxu0 0.0
    %6530 = vmatprep.subr.mxu0 0.0
    %6531 = vmatpush1.msra.mxu0 0.0
    %6532 = vmatprep.subr.mxu0 0.0
    %6533 = vmatpush1.msra.mxu0 0.0
    %6534 = vmatprep.subr.mxu0 0.0
    %6535 = vmatpush1.msra.mxu0 0.0
    %6536 = vmatprep.subr.mxu0 0.0
    %6537 = vmatpush1.msra.mxu0 0.0
    %6538 = vmatprep.subr.mxu0 0.0
    %6539 = vmatpush1.msra.mxu0 0.0
    %6540 = vmatprep.subr.mxu0 0.0
    %6541 = vmatpush1.msra.mxu0 0.0
    %6542 = vmatprep.subr.mxu0 0.0
    %6543 = vmatpush1.msra.mxu0 0.0
    %6544 = vmatprep.subr.mxu0 0.0
    %6545 = vmatpush1.msra.mxu0 0.0
    %6546 = vmatprep.subr.mxu0 0.0
    %6547 = vmatpush1.msra.mxu0 0.0
    %6548 = vmatprep.subr.mxu0 0.0
    %6549 = vmatpush1.msra.mxu0 0.0
    %6550 = vmatprep.subr.mxu0 0.0
    %6551 = vmatpush1.msra.mxu0 0.0
    %6552 = vmatprep.subr.mxu0 0.0
    %6553 = vmatpush1.msra.mxu0 0.0
    %6554 = vmatprep.subr.mxu0 0.0
    %6555 = vmatpush1.msra.mxu0 0.0
    %6556 = vmatprep.subr.mxu0 0.0
    %6557 = vmatpush1.msra.mxu0 0.0
    %6558 = vmatprep.subr.mxu0 0.0
    %6559 = vmatpush1.msra.mxu0 0.0
    %6560 = vmatprep.subr.mxu0 0.0
    %6561 = vmatpush1.msra.mxu0 0.0
    %6562 = vmatprep.subr.mxu0 0.0
    %6563 = vmatpush1.msra.mxu0 0.0
    %6564 = vmatprep.mubr.f32.mxu0 0.0
    %6565 = vmatmul.mubr.f32.gmra.mrb[0].mxu0 %v6495
    %v6566 = vpop.f32.mrb[0].mxu0
    %v6567 = vadd.f32 0.0, %v6566
    %v6568 = vpop.f32.mrb[0].mxu0
    %6569 = vmatprep.mubr.f32.mxu0 0.0
    %6570 = vmatmul.mubr.f32.gmra.mrb[0].mxu0 %v6498
    %v6571 = vpop.f32.mrb[0].mxu0
    %v6572 = vadd.f32 0.0, %v6571
    %v6573 = vpop.f32.mrb[0].mxu0
    %6574 = vdwg.mxu0
    %v6575 = vadd.f32 %v6379, %v6567
    %v6576 = vadd.f32 %v6384, %v6572
    %v6577 = vsel %vm1552, %v5874, 0.0
    %v6578 = vsel %vm1552, %v5879, 0.0
    %v6580 = vsel %vm393, %v6577, 0
    %v6583 = vsel %vm393, %v6578, 0
    %6585 = vmatprep.subr.mxu0 0.0
    %6586 = vmatpush1.xpose.msra.mxu0 %v6580
    %6587 = vmatprep.subr.mxu0 0.0
    %6588 = vmatpush1.xpose.msra.mxu0 %v6583
    %6589 = vmatprep.subr.mxu0 0.0
    %6590 = vmatpush1.xpose.msra.mxu0 0.0
    %6591 = vmatprep.subr.mxu0 0.0
    %6592 = vmatpush1.xpose.msra.mxu0 0.0
    %6593 = vmatprep.subr.mxu0 0.0
    %6594 = vmatpush1.xpose.msra.mxu0 0.0
    %6595 = vmatprep.subr.mxu0 0.0
    %6596 = vmatpush1.xpose.msra.mxu0 0.0
    %6597 = vmatprep.subr.mxu0 0.0
    %6598 = vmatpush1.xpose.msra.mxu0 0.0
    %6599 = vmatprep.subr.mxu0 0.0
    %6600 = vmatpush1.xpose.msra.mxu0 0.0
    %6601 = vmatprep.subr.mxu0 0.0
    %6602 = vmatpush1.xpose.msra.mxu0 0.0
    %6603 = vmatprep.subr.mxu0 0.0
    %6604 = vmatpush1.xpose.msra.mxu0 0.0
    %6605 = vmatprep.subr.mxu0 0.0
    %6606 = vmatpush1.xpose.msra.mxu0 0.0
    %6607 = vmatprep.subr.mxu0 0.0
    %6608 = vmatpush1.xpose.msra.mxu0 0.0
    %6609 = vmatprep.subr.mxu0 0.0
    %6610 = vmatpush1.xpose.msra.mxu0 0.0
    %6611 = vmatprep.subr.mxu0 0.0
    %6612 = vmatpush1.xpose.msra.mxu0 0.0
    %6613 = vmatprep.subr.mxu0 0.0
    %6614 = vmatpush1.xpose.msra.mxu0 0.0
    %6615 = vmatprep.subr.mxu0 0.0
    %6616 = vmatpush1.xpose.msra.mxu0 0.0
    %6617 = vmatprep.subr.mxu0 0.0
    %6618 = vmatpush1.xpose.msra.mxu0 0.0
    %6619 = vmatprep.subr.mxu0 0.0
    %6620 = vmatpush1.xpose.msra.mxu0 0.0
    %6621 = vmatprep.subr.mxu0 0.0
    %6622 = vmatpush1.xpose.msra.mxu0 0.0
    %6623 = vmatprep.subr.mxu0 0.0
    %6624 = vmatpush1.xpose.msra.mxu0 0.0
    %6625 = vmatprep.subr.mxu0 0.0
    %6626 = vmatpush1.xpose.msra.mxu0 0.0
    %6627 = vmatprep.subr.mxu0 0.0
    %6628 = vmatpush1.xpose.msra.mxu0 0.0
    %6629 = vmatprep.subr.mxu0 0.0
    %6630 = vmatpush1.xpose.msra.mxu0 0.0
    %6631 = vmatprep.subr.mxu0 0.0
    %6632 = vmatpush1.xpose.msra.mxu0 0.0
    %6633 = vmatprep.subr.mxu0 0.0
    %6634 = vmatpush1.xpose.msra.mxu0 0.0
    %6635 = vmatprep.subr.mxu0 0.0
    %6636 = vmatpush1.xpose.msra.mxu0 0.0
    %6637 = vmatprep.subr.mxu0 0.0
    %6638 = vmatpush1.xpose.msra.mxu0 0.0
    %6639 = vmatprep.subr.mxu0 0.0
    %6640 = vmatpush1.xpose.msra.mxu0 0.0
    %6641 = vmatprep.subr.mxu0 0.0
    %6642 = vmatpush1.xpose.msra.mxu0 0.0
    %6643 = vmatprep.subr.mxu0 0.0
    %6644 = vmatpush1.xpose.msra.mxu0 0.0
    %6645 = vmatprep.subr.mxu0 0.0
    %6646 = vmatpush1.xpose.msra.mxu0 0.0
    %6647 = vmatprep.subr.mxu0 0.0
    %6648 = vmatpush1.xpose.msra.mxu0 0.0
    %6649 = vmatprep.mubr.f32.mxu0 0.0
    %6650 = vmatmul.mubr.f32.gmra.mrb[0].mxu0 %v6008
    %v6651 = vpop.f32.mrb[0].mxu0
    %v6652 = vadd.f32 0.0, %v6651
    %v6653 = vpop.f32.mrb[0].mxu0
    %6654 = vmatprep.mubr.f32.mxu0 0.0
    %6655 = vmatmul.mubr.f32.gmra.mrb[0].mxu0 %v6011
    %v6656 = vpop.f32.mrb[0].mxu0
    %v6657 = vadd.f32 0.0, %v6656
    %v6658 = vpop.f32.mrb[0].mxu0
    %6659 = vdwg.mxu0
    %v6660 = vsel %vm1063, %v6652, -inf
    %6661 = vmax.xlane.f32.xlu0 %v6660
    %v6662 = vpop.xlane.xlu0 %6661
    %v6663 = vsel %vm1063, %v6657, -inf
    %6664 = vmax.xlane.f32.xlu0 %v6663
    %v6665 = vpop.xlane.xlu0 %6664
    %v6666 = vsub.f32 %v6652, %v6662
    %v6667 = vsub.f32 %v6657, %v6665
    %v6668 = vmul.f32 %v6666, 1.442695
    %v6669 = vpow.pop %v6668
    %v6670 = vmul.f32 %v6667, 1.442695
    %v6671 = vpow.pop %v6670
    %v6672 = vsel %vm1063, %v6669, 0.0
    %6673 = vadd.xlane.f32.xlu0 %v6672
    %v6674 = vpop.xlane.xlu0 %6673
    %v6675 = vsel %vm1063, %v6671, 0.0
    %6676 = vadd.xlane.f32.xlu0 %v6675
    %v6677 = vpop.xlane.xlu0 %6676
    %v6678 = vrcp.pop %v6674
    %v6679 = vrcp.pop %v6677
    %v6680 = vmul.f32 %v6669, %v6678
    %v6681 = vmul.f32 %v6671, %v6679
    %v6682 = vsel %vm1552, %v5997, 0.0
    %v6683 = vsel %vm1552, %v6002, 0.0
    %v6685 = vsel %vm1063, %v6680, 0
    %v6688 = vsel %vm1063, %v6681, 0
    %6690 = vmatprep.subr.mxu0 0.0
    %6691 = vmatpush1.msra.mxu0 %v6682
    %6692 = vmatprep.subr.mxu0 0.0
    %6693 = vmatpush1.msra.mxu0 %v6683
    %6694 = vmatprep.subr.mxu0 0.0
    %6695 = vmatpush1.msra.mxu0 0.0
    %6696 = vmatprep.subr.mxu0 0.0
    %6697 = vmatpush1.msra.mxu0 0.0
    %6698 = vmatprep.subr.mxu0 0.0
    %6699 = vmatpush1.msra.mxu0 0.0
    %6700 = vmatprep.subr.mxu0 0.0
    %6701 = vmatpush1.msra.mxu0 0.0
    %6702 = vmatprep.subr.mxu0 0.0
    %6703 = vmatpush1.msra.mxu0 0.0
    %6704 = vmatprep.subr.mxu0 0.0
    %6705 = vmatpush1.msra.mxu0 0.0
    %6706 = vmatprep.subr.mxu0 0.0
    %6707 = vmatpush1.msra.mxu0 0.0
    %6708 = vmatprep.subr.mxu0 0.0
    %6709 = vmatpush1.msra.mxu0 0.0
    %6710 = vmatprep.subr.mxu0 0.0
    %6711 = vmatpush1.msra.mxu0 0.0
    %6712 = vmatprep.subr.mxu0 0.0
    %6713 = vmatpush1.msra.mxu0 0.0
    %6714 = vmatprep.subr.mxu0 0.0
    %6715 = vmatpush1.msra.mxu0 0.0
    %6716 = vmatprep.subr.mxu0 0.0
    %6717 = vmatpush1.msra.mxu0 0.0
    %6718 = vmatprep.subr.mxu0 0.0
    %6719 = vmatpush1.msra.mxu0 0.0
    %6720 = vmatprep.subr.mxu0 0.0
    %6721 = vmatpush1.msra.mxu0 0.0
    %6722 = vmatprep.subr.mxu0 0.0
    %6723 = vmatpush1.msra.mxu0 0.0
    %6724 = vmatprep.subr.mxu0 0.0
    %6725 = vmatpush1.msra.mxu0 0.0
    %6726 = vmatprep.subr.mxu0 0.0
    %6727 = vmatpush1.msra.mxu0 0.0
    %6728 = vmatprep.subr.mxu0 0.0
    %6729 = vmatpush1.msra.mxu0 0.0
    %6730 = vmatprep.subr.mxu0 0.0
    %6731 = vmatpush1.msra.mxu0 0.0
    %6732 = vmatprep.subr.mxu0 0.0
    %6733 = vmatpush1.msra.mxu0 0.0
    %6734 = vmatprep.subr.mxu0 0.0
    %6735 = vmatpush1.msra.mxu0 0.0
    %6736 = vmatprep.subr.mxu0 0.0
    %6737 = vmatpush1.msra.mxu0 0.0
    %6738 = vmatprep.subr.mxu0 0.0
    %6739 = vmatpush1.msra.mxu0 0.0
    %6740 = vmatprep.subr.mxu0 0.0
    %6741 = vmatpush1.msra.mxu0 0.0
    %6742 = vmatprep.subr.mxu0 0.0
    %6743 = vmatpush1.msra.mxu0 0.0
    %6744 = vmatprep.subr.mxu0 0.0
    %6745 = vmatpush1.msra.mxu0 0.0
    %6746 = vmatprep.subr.mxu0 0.0
    %6747 = vmatpush1.msra.mxu0 0.0
    %6748 = vmatprep.subr.mxu0 0.0
    %6749 = vmatpush1.msra.mxu0 0.0
    %6750 = vmatprep.subr.mxu0 0.0
    %6751 = vmatpush1.msra.mxu0 0.0
    %6752 = vmatprep.subr.mxu0 0.0
    %6753 = vmatpush1.msra.mxu0 0.0
    %6754 = vmatprep.mubr.f32.mxu0 0.0
    %6755 = vmatmul.mubr.f32.gmra.mrb[0].mxu0 %v6685
    %v6756 = vpop.f32.mrb[0].mxu0
    %v6757 = vadd.f32 0.0, %v6756
    %v6758 = vpop.f32.mrb[0].mxu0
    %6759 = vmatprep.mubr.f32.mxu0 0.0
    %6760 = vmatmul.mubr.f32.gmra.mrb[0].mxu0 %v6688
    %v6761 = vpop.f32.mrb[0].mxu0
    %v6762 = vadd.f32 0.0, %v6761
    %v6763 = vpop.f32.mrb[0].mxu0
    %6764 = vdwg.mxu0
    %v6765 = vadd.f32 %v6575, %v6757
    %v6766 = vadd.f32 %v6576, %v6762
    %v6768 = vsel %vm393, %v6765, 0
    %v6771 = vsel %vm393, %v6766, 0
    %6773 = vmatprep.subr.mxu0 0.0
    %6774 = vmatpush1.msra.mxu0 %v151
    %6775 = vmatprep.subr.mxu0 0.0
    %6776 = vmatpush1.msra.mxu0 %v152
    %6777 = vmatprep.subr.mxu0 0.0
    %6778 = vmatpush1.msra.mxu0 %v153
    %6779 = vmatprep.subr.mxu0 0.0
    %6780 = vmatpush1.msra.mxu0 %v154
    %6781 = vmatprep.subr.mxu0 0.0
    %6782 = vmatpush1.msra.mxu0 0.0
    %6783 = vmatprep.subr.mxu0 0.0
    %6784 = vmatpush1.msra.mxu0 0.0
    %6785 = vmatprep.subr.mxu0 0.0
    %6786 = vmatpush1.msra.mxu0 0.0
    %6787 = vmatprep.subr.mxu0 0.0
    %6788 = vmatpush1.msra.mxu0 0.0
    %6789 = vmatprep.subr.mxu0 0.0
    %6790 = vmatpush1.msra.mxu0 0.0
    %6791 = vmatprep.subr.mxu0 0.0
    %6792 = vmatpush1.msra.mxu0 0.0
    %6793 = vmatprep.subr.mxu0 0.0
    %6794 = vmatpush1.msra.mxu0 0.0
    %6795 = vmatprep.subr.mxu0 0.0
    %6796 = vmatpush1.msra.mxu0 0.0
    %6797 = vmatprep.subr.mxu0 0.0
    %6798 = vmatpush1.msra.mxu0 0.0
    %6799 = vmatprep.subr.mxu0 0.0
    %6800 = vmatpush1.msra.mxu0 0.0
    %6801 = vmatprep.subr.mxu0 0.0
    %6802 = vmatpush1.msra.mxu0 0.0
    %6803 = vmatprep.subr.mxu0 0.0
    %6804 = vmatpush1.msra.mxu0 0.0
    %6805 = vmatprep.subr.mxu0 0.0
    %6806 = vmatpush1.msra.mxu0 0.0
    %6807 = vmatprep.subr.mxu0 0.0
    %6808 = vmatpush1.msra.mxu0 0.0
    %6809 = vmatprep.subr.mxu0 0.0
    %6810 = vmatpush1.msra.mxu0 0.0
    %6811 = vmatprep.subr.mxu0 0.0
    %6812 = vmatpush1.msra.mxu0 0.0
    %6813 = vmatprep.subr.mxu0 0.0
    %6814 = vmatpush1.msra.mxu0 0.0
    %6815 = vmatprep.subr.mxu0 0.0
    %6816 = vmatpush1.msra.mxu0 0.0
    %6817 = vmatprep.subr.mxu0 0.0
    %6818 = vmatpush1.msra.mxu0 0.0
    %6819 = vmatprep.subr.mxu0 0.0
    %6820 = vmatpush1.msra.mxu0 0.0
    %6821 = vmatprep.subr.mxu0 0.0
    %6822 = vmatpush1.msra.mxu0 0.0
    %6823 = vmatprep.subr.mxu0 0.0
    %6824 = vmatpush1.msra.mxu0 0.0
    %6825 = vmatprep.subr.mxu0 0.0
    %6826 = vmatpush1.msra.mxu0 0.0
    %6827 = vmatprep.subr.mxu0 0.0
    %6828 = vmatpush1.msra.mxu0 0.0
    %6829 = vmatprep.subr.mxu0 0.0
    %6830 = vmatpush1.msra.mxu0 0.0
    %6831 = vmatprep.subr.mxu0 0.0
    %6832 = vmatpush1.msra.mxu0 0.0
    %6833 = vmatprep.subr.mxu0 0.0
    %6834 = vmatpush1.msra.mxu0 0.0
    %6835 = vmatprep.subr.mxu0 0.0
    %6836 = vmatpush1.msra.mxu0 0.0
    %6837 = vmatprep.mubr.f32.mxu0 0.0
    %6838 = vmatmul.mubr.f32.gmra.mrb[0].mxu0 %v6768
    %v6839 = vpop.f32.mrb[0].mxu0
    %v6840 = vadd.f32 %v1747, %v6839
    %v6841 = vpop.f32.mrb[0].mxu0
    %6842 = vmatprep.mubr.f32.mxu0 0.0
    %6843 = vmatmul.mubr.f32.gmra.mrb[0].mxu0 %v6771
    %v6844 = vpop.f32.mrb[0].mxu0
    %v6845 = vadd.f32 %v1747, %v6844
    %v6846 = vpop.f32.mrb[0].mxu0
    %6847 = vdwg.mxu0
    %v6850 = vrot.slane %v6840, 7
    %v6851 = vrot.slane %v6840, 1
    %v6852 = vrot.slane %v6840, 2
    %v6853 = vrot.slane %v6840, 3
    %v6854 = vrot.slane %v6840, 4
    %v6855 = vrot.slane %v6840, 5
    %v6856 = vrot.slane %v6840, 6
    %v6857 = vrot.slane %v6845, 7
    %v6858 = vrot.slane %v6845, 1
    %v6859 = vrot.slane %v6845, 2
    %v6860 = vrot.slane %v6845, 3
    %v6861 = vrot.slane %v6845, 4
    %v6862 = vrot.slane %v6845, 5
    %v6863 = vrot.slane %v6845, 6
    %v6880 = vadd.f32 %v300, %v6850
    %v6881 = vadd.f32 %v301, %v6840
    %v6882 = vadd.f32 %v302, %v6851
    %v6883 = vadd.f32 %v303, %v6852
    %v6884 = vadd.f32 %v304, %v6853
    %v6885 = vadd.f32 %v305, %v6854
    %v6886 = vadd.f32 %v306, %v6855
    %v6887 = vadd.f32 %v307, %v6856
    %v6888 = vadd.f32 %v308, %v6857
    %v6889 = vadd.f32 %v309, %v6845
    %v6890 = vadd.f32 %v310, %v6858
    %v6891 = vadd.f32 %v311, %v6859
    %v6892 = vadd.f32 %v312, %v6860
    %v6893 = vadd.f32 %v313, %v6861
    %v6894 = vadd.f32 %v314, %v6862
    %v6895 = vadd.f32 %v315, %v6863
    %v6912 = vrot.slane %v6881, 7
    %v6913 = vsel %vm360, %v6912, %v6880
    %v6914 = vrot.slane %v6882, 6
    %v6915 = vsel %vm363, %v6914, %v6913
    %v6916 = vrot.slane %v6883, 5
    %v6917 = vsel %vm366, %v6916, %v6915
    %v6918 = vrot.slane %v6884, 4
    %v6919 = vsel %vm369, %v6918, %v6917
    %v6920 = vrot.slane %v6885, 3
    %v6921 = vsel %vm372, %v6920, %v6919
    %v6922 = vrot.slane %v6886, 2
    %v6923 = vsel %vm375, %v6922, %v6921
    %v6924 = vrot.slane %v6887, 1
    %v6925 = vsel %vm357, %v6888, %v6924
    %v6926 = vrot.slane %v6889, 7
    %v6927 = vsel %vm360, %v6926, %v6925
    %v6928 = vrot.slane %v6890, 6
    %v6929 = vsel %vm363, %v6928, %v6927
    %v6930 = vrot.slane %v6891, 5
    %v6931 = vsel %vm366, %v6930, %v6929
    %v6932 = vrot.slane %v6892, 4
    %v6933 = vsel %vm369, %v6932, %v6931
    %v6934 = vrot.slane %v6893, 3
    %v6935 = vsel %vm372, %v6934, %v6933
    %v6936 = vrot.slane %v6894, 2
    %v6937 = vsel %vm375, %v6936, %v6935
    %v6938 = vrot.slane %v6895, 1
    %v6942 = vsel %vm5445, %v6923, 0.0
    %6943 = vadd.xlane.f32.xlu0 %v6942
    %v6944 = vpop.xlane.xlu0 %6943
    %v6945 = vsel %vm393, %v6937, 0.0
    %6946 = vadd.xlane.f32.xlu0 %v6945
    %v6947 = vpop.xlane.xlu0 %6946
    %v6948 = vsel %vm5412, %v6938, 0.0
    %6949 = vadd.xlane.f32.xlu0 %v6948
    %v6950 = vpop.xlane.xlu0 %6949
    %v6951 = vmul.f32 %v6944, %v400
    %v6952 = vmul.f32 %v6947, %v400
    %v6953 = vmul.f32 %v6950, %v400
    %v6957 = vrot.slane %v6951, 1
    %v6958 = vrot.slane %v6951, 2
    %v6959 = vrot.slane %v6951, 3
    %v6960 = vrot.slane %v6951, 4
    %v6961 = vrot.slane %v6951, 5
    %v6962 = vrot.slane %v6951, 6
    %v6963 = vrot.slane %v6952, 7
    %v6964 = vrot.slane %v6952, 1
    %v6965 = vrot.slane %v6952, 2
    %v6966 = vrot.slane %v6952, 3
    %v6967 = vrot.slane %v6952, 4
    %v6968 = vrot.slane %v6952, 5
    %v6969 = vrot.slane %v6952, 6
    %v6970 = vrot.slane %v6953, 7
    %v6987 = vsub.f32 %v6880, %v6951
    %v6988 = vsub.f32 %v6881, %v6957
    %v6989 = vsub.f32 %v6882, %v6958
    %v6990 = vsub.f32 %v6883, %v6959
    %v6991 = vsub.f32 %v6884, %v6960
    %v6992 = vsub.f32 %v6885, %v6961
    %v6993 = vsub.f32 %v6886, %v6962
    %v6994 = vsub.f32 %v6887, %v6963
    %v6995 = vsub.f32 %v6888, %v6952
    %v6996 = vsub.f32 %v6889, %v6964
    %v6997 = vsub.f32 %v6890, %v6965
    %v6998 = vsub.f32 %v6891, %v6966
    %v6999 = vsub.f32 %v6892, %v6967
    %v7000 = vsub.f32 %v6893, %v6968
    %v7001 = vsub.f32 %v6894, %v6969
    %v7002 = vsub.f32 %v6895, %v6970
    %v7003 = vmul.f32 %v6987, %v6987
    %v7004 = vmul.f32 %v6988, %v6988
    %v7005 = vmul.f32 %v6989, %v6989
    %v7006 = vmul.f32 %v6990, %v6990
    %v7007 = vmul.f32 %v6991, %v6991
    %v7008 = vmul.f32 %v6992, %v6992
    %v7009 = vmul.f32 %v6993, %v6993
    %v7010 = vmul.f32 %v6994, %v6994
    %v7011 = vmul.f32 %v6995, %v6995
    %v7012 = vmul.f32 %v6996, %v6996
    %v7013 = vmul.f32 %v6997, %v6997
    %v7014 = vmul.f32 %v6998, %v6998
    %v7015 = vmul.f32 %v6999, %v6999
    %v7016 = vmul.f32 %v7000, %v7000
    %v7017 = vmul.f32 %v7001, %v7001
    %v7018 = vmul.f32 %v7002, %v7002
    %v7035 = vrot.slane %v7004, 7
    %v7036 = vsel %vm360, %v7035, %v7003
    %v7037 = vrot.slane %v7005, 6
    %v7038 = vsel %vm363, %v7037, %v7036
    %v7039 = vrot.slane %v7006, 5
    %v7040 = vsel %vm366, %v7039, %v7038
    %v7041 = vrot.slane %v7007, 4
    %v7042 = vsel %vm369, %v7041, %v7040
    %v7043 = vrot.slane %v7008, 3
    %v7044 = vsel %vm372, %v7043, %v7042
    %v7045 = vrot.slane %v7009, 2
    %v7046 = vsel %vm375, %v7045, %v7044
    %v7047 = vrot.slane %v7010, 1
    %v7048 = vsel %vm357, %v7011, %v7047
    %v7049 = vrot.slane %v7012, 7
    %v7050 = vsel %vm360, %v7049, %v7048
    %v7051 = vrot.slane %v7013, 6
    %v7052 = vsel %vm363, %v7051, %v7050
    %v7053 = vrot.slane %v7014, 5
    %v7054 = vsel %vm366, %v7053, %v7052
    %v7055 = vrot.slane %v7015, 4
    %v7056 = vsel %vm369, %v7055, %v7054
    %v7057 = vrot.slane %v7016, 3
    %v7058 = vsel %vm372, %v7057, %v7056
    %v7059 = vrot.slane %v7017, 2
    %v7060 = vsel %vm375, %v7059, %v7058
    %v7061 = vrot.slane %v7018, 1
    %v7065 = vsel %vm5445, %v7046, 0.0
    %7066 = vadd.xlane.f32.xlu0 %v7065
    %v7067 = vpop.xlane.xlu0 %7066
    %v7068 = vsel %vm393, %v7060, 0.0
    %7069 = vadd.xlane.f32.xlu0 %v7068
    %v7070 = vpop.xlane.xlu0 %7069
    %v7071 = vsel %vm5412, %v7061, 0.0
    %7072 = vadd.xlane.f32.xlu0 %v7071
    %v7073 = vpop.xlane.xlu0 %7072
    %v7074 = vmul.f32 %v7067, %v400
    %v7075 = vmul.f32 %v7070, %v400
    %v7076 = vmul.f32 %v7073, %v400
    %v7077 = vadd.f32 %v7074, 1e-05
    %v7078 = vadd.f32 %v7075, 1e-05
    %v7079 = vadd.f32 %v7076, 1e-05
    %v7080 = vrsqrt.pop %v7077
    %v7081 = vrsqrt.pop %v7078
    %v7082 = vrsqrt.pop %v7079
    %v7086 = vrot.slane %v7080, 1
    %v7087 = vrot.slane %v7080, 2
    %v7088 = vrot.slane %v7080, 3
    %v7089 = vrot.slane %v7080, 4
    %v7090 = vrot.slane %v7080, 5
    %v7091 = vrot.slane %v7080, 6
    %v7092 = vrot.slane %v7081, 7
    %v7093 = vrot.slane %v7081, 1
    %v7094 = vrot.slane %v7081, 2
    %v7095 = vrot.slane %v7081, 3
    %v7096 = vrot.slane %v7081, 4
    %v7097 = vrot.slane %v7081, 5
    %v7098 = vrot.slane %v7081, 6
    %v7099 = vrot.slane %v7082, 7
    %v7116 = vmul.f32 %v6987, %v7080
    %v7117 = vmul.f32 %v6988, %v7086
    %v7118 = vmul.f32 %v6989, %v7087
    %v7119 = vmul.f32 %v6990, %v7088
    %v7120 = vmul.f32 %v6991, %v7089
    %v7121 = vmul.f32 %v6992, %v7090
    %v7122 = vmul.f32 %v6993, %v7091
    %v7123 = vmul.f32 %v6994, %v7092
    %v7124 = vmul.f32 %v6995, %v7081
    %v7125 = vmul.f32 %v6996, %v7093
    %v7126 = vmul.f32 %v6997, %v7094
    %v7127 = vmul.f32 %v6998, %v7095
    %v7128 = vmul.f32 %v6999, %v7096
    %v7129 = vmul.f32 %v7000, %v7097
    %v7130 = vmul.f32 %v7001, %v7098
    %v7131 = vmul.f32 %v7002, %v7099
    %v7132 = vmul.f32 %v7116, %v2106
    %v7133 = vmul.f32 %v7117, %v2106
    %v7134 = vmul.f32 %v7118, %v2106
    %v7135 = vmul.f32 %v7119, %v2106
    %v7136 = vmul.f32 %v7120, %v2106
    %v7137 = vmul.f32 %v7121, %v2106
    %v7138 = vmul.f32 %v7122, %v2106
    %v7139 = vmul.f32 %v7123, %v2106
    %v7140 = vmul.f32 %v7124, %v2106
    %v7141 = vmul.f32 %v7125, %v2106
    %v7142 = vmul.f32 %v7126, %v2106
    %v7143 = vmul.f32 %v7127, %v2106
    %v7144 = vmul.f32 %v7128, %v2106
    %v7145 = vmul.f32 %v7129, %v2106
    %v7146 = vmul.f32 %v7130, %v2106
    %v7147 = vmul.f32 %v7131, %v2106
    %v7148 = vadd.f32 %v7132, %v2128
    %v7149 = vadd.f32 %v7133, %v2128
    %v7150 = vadd.f32 %v7134, %v2128
    %v7151 = vadd.f32 %v7135, %v2128
    %v7152 = vadd.f32 %v7136, %v2128
    %v7153 = vadd.f32 %v7137, %v2128
    %v7154 = vadd.f32 %v7138, %v2128
    %v7155 = vadd.f32 %v7139, %v2128
    %v7156 = vadd.f32 %v7140, %v2128
    %v7157 = vadd.f32 %v7141, %v2128
    %v7158 = vadd.f32 %v7142, %v2128
    %v7159 = vadd.f32 %v7143, %v2128
    %v7160 = vadd.f32 %v7144, %v2128
    %v7161 = vadd.f32 %v7145, %v2128
    %v7162 = vadd.f32 %v7146, %v2128
    %v7163 = vadd.f32 %v7147, %v2128
    %v7164 = vadd.f32 %v7148, %v316
    %v7165 = vadd.f32 %v7149, %v317
    %v7166 = vadd.f32 %v7150, %v318
    %v7167 = vadd.f32 %v7151, %v319
    %v7168 = vadd.f32 %v7152, %v320
    %v7169 = vadd.f32 %v7153, %v321
    %v7170 = vadd.f32 %v7154, %v322
    %v7171 = vadd.f32 %v7155, %v323
    %v7172 = vadd.f32 %v7156, %v324
    %v7173 = vadd.f32 %v7157, %v325
    %v7174 = vadd.f32 %v7158, %v326
    %v7175 = vadd.f32 %v7159, %v327
    %v7176 = vadd.f32 %v7160, %v328
    %v7177 = vadd.f32 %v7161, %v329
    %v7178 = vadd.f32 %v7162, %v330
    %v7179 = vadd.f32 %v7163, %v331
    %v7196 = vrot.slane %v7164, 1
    %v7197 = vsel %vm357, %v7165, %v7196
    %v7198 = vrot.slane %v7166, 7
    %v7199 = vsel %vm360, %v7198, %v7197
    %v7200 = vrot.slane %v7167, 6
    %v7201 = vsel %vm363, %v7200, %v7199
    %v7202 = vrot.slane %v7168, 5
    %v7203 = vsel %vm366, %v7202, %v7201
    %v7204 = vrot.slane %v7169, 4
    %v7205 = vsel %vm369, %v7204, %v7203
    %v7206 = vrot.slane %v7170, 3
    %v7207 = vsel %vm372, %v7206, %v7205
    %v7208 = vrot.slane %v7171, 2
    %v7209 = vsel %vm375, %v7208, %v7207
    %v7210 = vrot.slane %v7172, 1
    %v7211 = vsel %vm357, %v7173, %v7210
    %v7212 = vrot.slane %v7174, 7
    %v7213 = vsel %vm360, %v7212, %v7211
    %v7214 = vrot.slane %v7175, 6
    %v7215 = vsel %vm363, %v7214, %v7213
    %v7216 = vrot.slane %v7176, 5
    %v7217 = vsel %vm366, %v7216, %v7215
    %v7218 = vrot.slane %v7177, 4
    %v7219 = vsel %vm369, %v7218, %v7217
    %v7220 = vrot.slane %v7178, 3
    %v7221 = vsel %vm372, %v7220, %v7219
    %v7222 = vrot.slane %v7179, 2
    %v7223 = vsel %vm375, %v7222, %v7221
    %v7224 = vsel %vm393, %v7209, 0
    %v7226 = vsel %vm393, %v7223, 0
    %7228 = vmatprep.subr.mxu0 0.0
    %7229 = vmatpush1.msra.mxu0 %v156
    %7230 = vmatprep.subr.mxu0 0.0
    %7231 = vmatpush1.msra.mxu0 %v157
    %7232 = vmatprep.subr.mxu0 0.0
    %7233 = vmatpush1.msra.mxu0 %v158
    %7234 = vmatprep.subr.mxu0 0.0
    %7235 = vmatpush1.msra.mxu0 %v159
    %7236 = vmatprep.subr.mxu0 0.0
    %7237 = vmatpush1.msra.mxu0 0.0
    %7238 = vmatprep.subr.mxu0 0.0
    %7239 = vmatpush1.msra.mxu0 0.0
    %7240 = vmatprep.subr.mxu0 0.0
    %7241 = vmatpush1.msra.mxu0 0.0
    %7242 = vmatprep.subr.mxu0 0.0
    %7243 = vmatpush1.msra.mxu0 0.0
    %7244 = vmatprep.subr.mxu0 0.0
    %7245 = vmatpush1.msra.mxu0 0.0
    %7246 = vmatprep.subr.mxu0 0.0
    %7247 = vmatpush1.msra.mxu0 0.0
    %7248 = vmatprep.subr.mxu0 0.0
    %7249 = vmatpush1.msra.mxu0 0.0
    %7250 = vmatprep.subr.mxu0 0.0
    %7251 = vmatpush1.msra.mxu0 0.0
    %7252 = vmatprep.subr.mxu0 0.0
    %7253 = vmatpush1.msra.mxu0 0.0
    %7254 = vmatprep.subr.mxu0 0.0
    %7255 = vmatpush1.msra.mxu0 0.0
    %7256 = vmatprep.subr.mxu0 0.0
    %7257 = vmatpush1.msra.mxu0 0.0
    %7258 = vmatprep.subr.mxu0 0.0
    %7259 = vmatpush1.msra.mxu0 0.0
    %7260 = vmatprep.subr.mxu0 0.0
    %7261 = vmatpush1.msra.mxu0 0.0
    %7262 = vmatprep.subr.mxu0 0.0
    %7263 = vmatpush1.msra.mxu0 0.0
    %7264 = vmatprep.subr.mxu0 0.0
    %7265 = vmatpush1.msra.mxu0 0.0
    %7266 = vmatprep.subr.mxu0 0.0
    %7267 = vmatpush1.msra.mxu0 0.0
    %7268 = vmatprep.subr.mxu0 0.0
    %7269 = vmatpush1.msra.mxu0 0.0
    %7270 = vmatprep.subr.mxu0 0.0
    %7271 = vmatpush1.msra.mxu0 0.0
    %7272 = vmatprep.subr.mxu0 0.0
    %7273 = vmatpush1.msra.mxu0 0.0
    %7274 = vmatprep.subr.mxu0 0.0
    %7275 = vmatpush1.msra.mxu0 0.0
    %7276 = vmatprep.subr.mxu0 0.0
    %7277 = vmatpush1.msra.mxu0 0.0
    %7278 = vmatprep.subr.mxu0 0.0
    %7279 = vmatpush1.msra.mxu0 0.0
    %7280 = vmatprep.subr.mxu0 0.0
    %7281 = vmatpush1.msra.mxu0 0.0
    %7282 = vmatprep.subr.mxu0 0.0
    %7283 = vmatpush1.msra.mxu0 0.0
    %7284 = vmatprep.subr.mxu0 0.0
    %7285 = vmatpush1.msra.mxu0 0.0
    %7286 = vmatprep.subr.mxu0 0.0
    %7287 = vmatpush1.msra.mxu0 0.0
    %7288 = vmatprep.subr.mxu0 0.0
    %7289 = vmatpush1.msra.mxu0 0.0
    %7290 = vmatprep.subr.mxu0 0.0
    %7291 = vmatpush1.msra.mxu0 0.0
    %7292 = vmatprep.mubr.f32.mxu0 0.0
    %7293 = vmatmul.mubr.f32.gmra.mrb[0].mxu0 %v7224
    %v7294 = vpop.f32.mrb[0].mxu0
    %v7295 = vadd.f32 %v2166, %v7294
    %v7296 = vpop.f32.mrb[0].mxu0
    %7297 = vmatprep.mubr.f32.mxu0 0.0
    %7298 = vmatmul.mubr.f32.gmra.mrb[0].mxu0 %v7226
    %v7299 = vpop.f32.mrb[0].mxu0
    %v7300 = vadd.f32 %v2166, %v7299
    %v7301 = vpop.f32.mrb[0].mxu0
    %7302 = vdwg.mxu0
    %v7303 = vrot.slane %v332, 1
    %v7304 = vsel %vm357, %v333, %v7303
    %v7305 = vrot.slane %v334, 7
    %v7306 = vsel %vm360, %v7305, %v7304
    %v7307 = vrot.slane %v335, 6
    %v7308 = vsel %vm363, %v7307, %v7306
    %v7309 = vrot.slane %v336, 5
    %v7310 = vsel %vm366, %v7309, %v7308
    %v7311 = vrot.slane %v337, 4
    %v7312 = vsel %vm369, %v7311, %v7310
    %v7313 = vrot.slane %v338, 3
    %v7314 = vsel %vm372, %v7313, %v7312
    %v7315 = vrot.slane %v339, 2
    %v7316 = vsel %vm375, %v7315, %v7314
    %v7317 = vsel %vm393, %v7316, 0
    %7319 = vmatprep.subr.mxu0 0.0
    %7320 = vmatpush1.msra.mxu0 %v161
    %7321 = vmatprep.subr.mxu0 0.0
    %7322 = vmatpush1.msra.mxu0 %v162
    %7323 = vmatprep.subr.mxu0 0.0
    %7324 = vmatpush1.msra.mxu0 %v163
    %7325 = vmatprep.subr.mxu0 0.0
    %7326 = vmatpush1.msra.mxu0 %v164
    %7327 = vmatprep.subr.mxu0 0.0
    %7328 = vmatpush1.msra.mxu0 0.0
    %7329 = vmatprep.subr.mxu0 0.0
    %7330 = vmatpush1.msra.mxu0 0.0
    %7331 = vmatprep.subr.mxu0 0.0
    %7332 = vmatpush1.msra.mxu0 0.0
    %7333 = vmatprep.subr.mxu0 0.0
    %7334 = vmatpush1.msra.mxu0 0.0
    %7335 = vmatprep.subr.mxu0 0.0
    %7336 = vmatpush1.msra.mxu0 0.0
    %7337 = vmatprep.subr.mxu0 0.0
    %7338 = vmatpush1.msra.mxu0 0.0
    %7339 = vmatprep.subr.mxu0 0.0
    %7340 = vmatpush1.msra.mxu0 0.0
    %7341 = vmatprep.subr.mxu0 0.0
    %7342 = vmatpush1.msra.mxu0 0.0
    %7343 = vmatprep.subr.mxu0 0.0
    %7344 = vmatpush1.msra.mxu0 0.0
    %7345 = vmatprep.subr.mxu0 0.0
    %7346 = vmatpush1.msra.mxu0 0.0
    %7347 = vmatprep.subr.mxu0 0.0
    %7348 = vmatpush1.msra.mxu0 0.0
    %7349 = vmatprep.subr.mxu0 0.0
    %7350 = vmatpush1.msra.mxu0 0.0
    %7351 = vmatprep.subr.mxu0 0.0
    %7352 = vmatpush1.msra.mxu0 0.0
    %7353 = vmatprep.subr.mxu0 0.0
    %7354 = vmatpush1.msra.mxu0 0.0
    %7355 = vmatprep.subr.mxu0 0.0
    %7356 = vmatpush1.msra.mxu0 0.0
    %7357 = vmatprep.subr.mxu0 0.0
    %7358 = vmatpush1.msra.mxu0 0.0
    %7359 = vmatprep.subr.mxu0 0.0
    %7360 = vmatpush1.msra.mxu0 0.0
    %7361 = vmatprep.subr.mxu0 0.0
    %7362 = vmatpush1.msra.mxu0 0.0
    %7363 = vmatprep.subr.mxu0 0.0
    %7364 = vmatpush1.msra.mxu0 0.0
    %7365 = vmatprep.subr.mxu0 0.0
    %7366 = vmatpush1.msra.mxu0 0.0
    %7367 = vmatprep.subr.mxu0 0.0
    %7368 = vmatpush1.msra.mxu0 0.0
    %7369 = vmatprep.subr.mxu0 0.0
    %7370 = vmatpush1.msra.mxu0 0.0
    %7371 = vmatprep.subr.mxu0 0.0
    %7372 = vmatpush1.msra.mxu0 0.0
    %7373 = vmatprep.subr.mxu0 0.0
    %7374 = vmatpush1.msra.mxu0 0.0
    %7375 = vmatprep.subr.mxu0 0.0
    %7376 = vmatpush1.msra.mxu0 0.0
    %7377 = vmatprep.subr.mxu0 0.0
    %7378 = vmatpush1.msra.mxu0 0.0
    %7379 = vmatprep.subr.mxu0 0.0
    %7380 = vmatpush1.msra.mxu0 0.0
    %7381 = vmatprep.subr.mxu0 0.0
    %7382 = vmatpush1.msra.mxu0 0.0
    %7383 = vmatprep.mubr.f32.mxu0 0.0
    %7384 = vmatmul.mubr.f32.gmra.mrb[0].mxu0 %v7317
    %v7385 = vpop.f32.mrb[0].mxu0
    %v7386 = vadd.f32 %v2295, %v7385
    %v7387 = vpop.f32.mrb[0].mxu0
    %7388 = vdwg.mxu0
    %7389 = vmatprep.subr.mxu0 0.0
    %7390 = vmatpush1.msra.mxu0 %v166
    %7391 = vmatprep.subr.mxu0 0.0
    %7392 = vmatpush1.msra.mxu0 %v167
    %7393 = vmatprep.subr.mxu0 0.0
    %7394 = vmatpush1.msra.mxu0 %v168
    %7395 = vmatprep.subr.mxu0 0.0
    %7396 = vmatpush1.msra.mxu0 %v169
    %7397 = vmatprep.subr.mxu0 0.0
    %7398 = vmatpush1.msra.mxu0 0.0
    %7399 = vmatprep.subr.mxu0 0.0
    %7400 = vmatpush1.msra.mxu0 0.0
    %7401 = vmatprep.subr.mxu0 0.0
    %7402 = vmatpush1.msra.mxu0 0.0
    %7403 = vmatprep.subr.mxu0 0.0
    %7404 = vmatpush1.msra.mxu0 0.0
    %7405 = vmatprep.subr.mxu0 0.0
    %7406 = vmatpush1.msra.mxu0 0.0
    %7407 = vmatprep.subr.mxu0 0.0
    %7408 = vmatpush1.msra.mxu0 0.0
    %7409 = vmatprep.subr.mxu0 0.0
    %7410 = vmatpush1.msra.mxu0 0.0
    %7411 = vmatprep.subr.mxu0 0.0
    %7412 = vmatpush1.msra.mxu0 0.0
    %7413 = vmatprep.subr.mxu0 0.0
    %7414 = vmatpush1.msra.mxu0 0.0
    %7415 = vmatprep.subr.mxu0 0.0
    %7416 = vmatpush1.msra.mxu0 0.0
    %7417 = vmatprep.subr.mxu0 0.0
    %7418 = vmatpush1.msra.mxu0 0.0
    %7419 = vmatprep.subr.mxu0 0.0
    %7420 = vmatpush1.msra.mxu0 0.0
    %7421 = vmatprep.subr.mxu0 0.0
    %7422 = vmatpush1.msra.mxu0 0.0
    %7423 = vmatprep.subr.mxu0 0.0
    %7424 = vmatpush1.msra.mxu0 0.0
    %7425 = vmatprep.subr.mxu0 0.0
    %7426 = vmatpush1.msra.mxu0 0.0
    %7427 = vmatprep.subr.mxu0 0.0
    %7428 = vmatpush1.msra.mxu0 0.0
    %7429 = vmatprep.subr.mxu0 0.0
    %7430 = vmatpush1.msra.mxu0 0.0
    %7431 = vmatprep.subr.mxu0 0.0
    %7432 = vmatpush1.msra.mxu0 0.0
    %7433 = vmatprep.subr.mxu0 0.0
    %7434 = vmatpush1.msra.mxu0 0.0
    %7435 = vmatprep.subr.mxu0 0.0
    %7436 = vmatpush1.msra.mxu0 0.0
    %7437 = vmatprep.subr.mxu0 0.0
    %7438 = vmatpush1.msra.mxu0 0.0
    %7439 = vmatprep.subr.mxu0 0.0
    %7440 = vmatpush1.msra.mxu0 0.0
    %7441 = vmatprep.subr.mxu0 0.0
    %7442 = vmatpush1.msra.mxu0 0.0
    %7443 = vmatprep.subr.mxu0 0.0
    %7444 = vmatpush1.msra.mxu0 0.0
    %7445 = vmatprep.subr.mxu0 0.0
    %7446 = vmatpush1.msra.mxu0 0.0
    %7447 = vmatprep.subr.mxu0 0.0
    %7448 = vmatpush1.msra.mxu0 0.0
    %7449 = vmatprep.subr.mxu0 0.0
    %7450 = vmatpush1.msra.mxu0 0.0
    %7451 = vmatprep.subr.mxu0 0.0
    %7452 = vmatpush1.msra.mxu0 0.0
    %7453 = vmatprep.mubr.f32.mxu0 0.0
    %7454 = vmatmul.mubr.f32.gmra.mrb[0].mxu0 %v7317
    %v7455 = vpop.f32.mrb[0].mxu0
    %v7456 = vadd.f32 %v2395, %v7455
    %v7457 = vpop.f32.mrb[0].mxu0
    %7458 = vdwg.mxu0
    %v7459 = vsel %vm973, %v7386, 0.0
    %v7461 = vsel %vm393, %v7295, 0
    %v7464 = vsel %vm393, %v7300, 0
    %v7467 = vsel %vm393, %v7459, 0
    %7469 = vmatprep.subr.mxu0 0.0
    %7470 = vmatpush1.xpose.msra.mxu0 %v7467
    %7471 = vmatprep.subr.mxu0 0.0
    %7472 = vmatpush1.xpose.msra.mxu0 0.0
    %7473 = vmatprep.subr.mxu0 0.0
    %7474 = vmatpush1.xpose.msra.mxu0 0.0
    %7475 = vmatprep.subr.mxu0 0.0
    %7476 = vmatpush1.xpose.msra.mxu0 0.0
    %7477 = vmatprep.subr.mxu0 0.0
    %7478 = vmatpush1.xpose.msra.mxu0 0.0
    %7479 = vmatprep.subr.mxu0 0.0
    %7480 = vmatpush1.xpose.msra.mxu0 0.0
    %7481 = vmatprep.subr.mxu0 0.0
    %7482 = vmatpush1.xpose.msra.mxu0 0.0
    %7483 = vmatprep.subr.mxu0 0.0
    %7484 = vmatpush1.xpose.msra.mxu0 0.0
    %7485 = vmatprep.subr.mxu0 0.0
    %7486 = vmatpush1.xpose.msra.mxu0 0.0
    %7487 = vmatprep.subr.mxu0 0.0
    %7488 = vmatpush1.xpose.msra.mxu0 0.0
    %7489 = vmatprep.subr.mxu0 0.0
    %7490 = vmatpush1.xpose.msra.mxu0 0.0
    %7491 = vmatprep.subr.mxu0 0.0
    %7492 = vmatpush1.xpose.msra.mxu0 0.0
    %7493 = vmatprep.subr.mxu0 0.0
    %7494 = vmatpush1.xpose.msra.mxu0 0.0
    %7495 = vmatprep.subr.mxu0 0.0
    %7496 = vmatpush1.xpose.msra.mxu0 0.0
    %7497 = vmatprep.subr.mxu0 0.0
    %7498 = vmatpush1.xpose.msra.mxu0 0.0
    %7499 = vmatprep.subr.mxu0 0.0
    %7500 = vmatpush1.xpose.msra.mxu0 0.0
    %7501 = vmatprep.subr.mxu0 0.0
    %7502 = vmatpush1.xpose.msra.mxu0 0.0
    %7503 = vmatprep.subr.mxu0 0.0
    %7504 = vmatpush1.xpose.msra.mxu0 0.0
    %7505 = vmatprep.subr.mxu0 0.0
    %7506 = vmatpush1.xpose.msra.mxu0 0.0
    %7507 = vmatprep.subr.mxu0 0.0
    %7508 = vmatpush1.xpose.msra.mxu0 0.0
    %7509 = vmatprep.subr.mxu0 0.0
    %7510 = vmatpush1.xpose.msra.mxu0 0.0
    %7511 = vmatprep.subr.mxu0 0.0
    %7512 = vmatpush1.xpose.msra.mxu0 0.0
    %7513 = vmatprep.subr.mxu0 0.0
    %7514 = vmatpush1.xpose.msra.mxu0 0.0
    %7515 = vmatprep.subr.mxu0 0.0
    %7516 = vmatpush1.xpose.msra.mxu0 0.0
    %7517 = vmatprep.subr.mxu0 0.0
    %7518 = vmatpush1.xpose.msra.mxu0 0.0
    %7519 = vmatprep.subr.mxu0 0.0
    %7520 = vmatpush1.xpose.msra.mxu0 0.0
    %7521 = vmatprep.subr.mxu0 0.0
    %7522 = vmatpush1.xpose.msra.mxu0 0.0
    %7523 = vmatprep.subr.mxu0 0.0
    %7524 = vmatpush1.xpose.msra.mxu0 0.0
    %7525 = vmatprep.subr.mxu0 0.0
    %7526 = vmatpush1.xpose.msra.mxu0 0.0
    %7527 = vmatprep.subr.mxu0 0.0
    %7528 = vmatpush1.xpose.msra.mxu0 0.0
    %7529 = vmatprep.subr.mxu0 0.0
    %7530 = vmatpush1.xpose.msra.mxu0 0.0
    %7531 = vmatprep.subr.mxu0 0.0
    %7532 = vmatpush1.xpose.msra.mxu0 0.0
    %7533 = vmatprep.mubr.f32.mxu0 0.0
    %7534 = vmatmul.mubr.f32.gmra.mrb[0].mxu0 %v7461
    %v7535 = vpop.f32.mrb[0].mxu0
    %v7536 = vadd.f32 0.0, %v7535
    %v7537 = vpop.f32.mrb[0].mxu0
    %7538 = vmatprep.mubr.f32.mxu0 0.0
    %7539 = vmatmul.mubr.f32.gmra.mrb[0].mxu0 %v7464
    %v7540 = vpop.f32.mrb[0].mxu0
    %v7541 = vadd.f32 0.0, %v7540
    %v7542 = vpop.f32.mrb[0].mxu0
    %7543 = vdwg.mxu0
    %v7544 = vsel %vm2552, %v7536, -inf
    %7545 = vmax.xlane.f32.xlu0 %v7544
    %v7546 = vpop.xlane.xlu0 %7545
    %v7547 = vsel %vm2552, %v7541, -inf
    %7548 = vmax.xlane.f32.xlu0 %v7547
    %v7549 = vpop.xlane.xlu0 %7548
    %v7550 = vsub.f32 %v7536, %v7546
    %v7551 = vsub.f32 %v7541, %v7549
    %v7552 = vmul.f32 %v7550, 1.442695
    %v7553 = vpow.pop %v7552
    %v7554 = vmul.f32 %v7551, 1.442695
    %v7555 = vpow.pop %v7554
    %v7556 = vsel %vm2552, %v7553, 0.0
    %7557 = vadd.xlane.f32.xlu0 %v7556
    %v7558 = vpop.xlane.xlu0 %7557
    %v7559 = vsel %vm2552, %v7555, 0.0
    %7560 = vadd.xlane.f32.xlu0 %v7559
    %v7561 = vpop.xlane.xlu0 %7560
    %v7562 = vrcp.pop %v7558
    %v7563 = vrcp.pop %v7561
    %v7564 = vmul.f32 %v7553, %v7562
    %v7565 = vmul.f32 %v7555, %v7563
    %v7566 = vsel %vm973, %v7456, 0.0
    %v7567 = vsel %vm1089, %v7386, 0.0
    %v7569 = vsel %vm393, %v7567, 0
    %7571 = vmatprep.subr.mxu0 0.0
    %7572 = vmatpush1.xpose.msra.mxu0 %v7569
    %7573 = vmatprep.subr.mxu0 0.0
    %7574 = vmatpush1.xpose.msra.mxu0 0.0
    %7575 = vmatprep.subr.mxu0 0.0
    %7576 = vmatpush1.xpose.msra.mxu0 0.0
    %7577 = vmatprep.subr.mxu0 0.0
    %7578 = vmatpush1.xpose.msra.mxu0 0.0
    %7579 = vmatprep.subr.mxu0 0.0
    %7580 = vmatpush1.xpose.msra.mxu0 0.0
    %7581 = vmatprep.subr.mxu0 0.0
    %7582 = vmatpush1.xpose.msra.mxu0 0.0
    %7583 = vmatprep.subr.mxu0 0.0
    %7584 = vmatpush1.xpose.msra.mxu0 0.0
    %7585 = vmatprep.subr.mxu0 0.0
    %7586 = vmatpush1.xpose.msra.mxu0 0.0
    %7587 = vmatprep.subr.mxu0 0.0
    %7588 = vmatpush1.xpose.msra.mxu0 0.0
    %7589 = vmatprep.subr.mxu0 0.0
    %7590 = vmatpush1.xpose.msra.mxu0 0.0
    %7591 = vmatprep.subr.mxu0 0.0
    %7592 = vmatpush1.xpose.msra.mxu0 0.0
    %7593 = vmatprep.subr.mxu0 0.0
    %7594 = vmatpush1.xpose.msra.mxu0 0.0
    %7595 = vmatprep.subr.mxu0 0.0
    %7596 = vmatpush1.xpose.msra.mxu0 0.0
    %7597 = vmatprep.subr.mxu0 0.0
    %7598 = vmatpush1.xpose.msra.mxu0 0.0
    %7599 = vmatprep.subr.mxu0 0.0
    %7600 = vmatpush1.xpose.msra.mxu0 0.0
    %7601 = vmatprep.subr.mxu0 0.0
    %7602 = vmatpush1.xpose.msra.mxu0 0.0
    %7603 = vmatprep.subr.mxu0 0.0
    %7604 = vmatpush1.xpose.msra.mxu0 0.0
    %7605 = vmatprep.subr.mxu0 0.0
    %7606 = vmatpush1.xpose.msra.mxu0 0.0
    %7607 = vmatprep.subr.mxu0 0.0
    %7608 = vmatpush1.xpose.msra.mxu0 0.0
    %7609 = vmatprep.subr.mxu0 0.0
    %7610 = vmatpush1.xpose.msra.mxu0 0.0
    %7611 = vmatprep.subr.mxu0 0.0
    %7612 = vmatpush1.xpose.msra.mxu0 0.0
    %7613 = vmatprep.subr.mxu0 0.0
    %7614 = vmatpush1.xpose.msra.mxu0 0.0
    %7615 = vmatprep.subr.mxu0 0.0
    %7616 = vmatpush1.xpose.msra.mxu0 0.0
    %7617 = vmatprep.subr.mxu0 0.0
    %7618 = vmatpush1.xpose.msra.mxu0 0.0
    %7619 = vmatprep.subr.mxu0 0.0
    %7620 = vmatpush1.xpose.msra.mxu0 0.0
    %7621 = vmatprep.subr.mxu0 0.0
    %7622 = vmatpush1.xpose.msra.mxu0 0.0
    %7623 = vmatprep.subr.mxu0 0.0
    %7624 = vmatpush1.xpose.msra.mxu0 0.0
    %7625 = vmatprep.subr.mxu0 0.0
    %7626 = vmatpush1.xpose.msra.mxu0 0.0
    %7627 = vmatprep.subr.mxu0 0.0
    %7628 = vmatpush1.xpose.msra.mxu0 0.0
    %7629 = vmatprep.subr.mxu0 0.0
    %7630 = vmatpush1.xpose.msra.mxu0 0.0
    %7631 = vmatprep.subr.mxu0 0.0
    %7632 = vmatpush1.xpose.msra.mxu0 0.0
    %7633 = vmatprep.subr.mxu0 0.0
    %7634 = vmatpush1.xpose.msra.mxu0 0.0
    %7635 = vmatprep.mubr.f32.mxu0 0.0
    %7636 = vmatmul.mubr.f32.gmra.mrb[0].mxu0 %v7461
    %v7637 = vpop.f32.mrb[0].mxu0
    %v7638 = vadd.f32 0.0, %v7637
    %v7639 = vpop.f32.mrb[0].mxu0
    %7640 = vmatprep.mubr.f32.mxu0 0.0
    %7641 = vmatmul.mubr.f32.gmra.mrb[0].mxu0 %v7464
    %v7642 = vpop.f32.mrb[0].mxu0
    %v7643 = vadd.f32 0.0, %v7642
    %v7644 = vpop.f32.mrb[0].mxu0
    %7645 = vdwg.mxu0
    %v7646 = vsel %vm2552, %v7638, -inf
    %7647 = vmax.xlane.f32.xlu0 %v7646
    %v7648 = vpop.xlane.xlu0 %7647
    %v7649 = vsel %vm2552, %v7643, -inf
    %7650 = vmax.xlane.f32.xlu0 %v7649
    %v7651 = vpop.xlane.xlu0 %7650
    %v7652 = vsub.f32 %v7638, %v7648
    %v7653 = vsub.f32 %v7643, %v7651
    %v7654 = vmul.f32 %v7652, 1.442695
    %v7655 = vpow.pop %v7654
    %v7656 = vmul.f32 %v7653, 1.442695
    %v7657 = vpow.pop %v7656
    %v7658 = vsel %vm2552, %v7655, 0.0
    %7659 = vadd.xlane.f32.xlu0 %v7658
    %v7660 = vpop.xlane.xlu0 %7659
    %v7661 = vsel %vm2552, %v7657, 0.0
    %7662 = vadd.xlane.f32.xlu0 %v7661
    %v7663 = vpop.xlane.xlu0 %7662
    %v7664 = vrcp.pop %v7660
    %v7665 = vrcp.pop %v7663
    %v7666 = vmul.f32 %v7655, %v7664
    %v7667 = vmul.f32 %v7657, %v7665
    %v7668 = vsel %vm1089, %v7456, 0.0
    %v7670 = vsel %vm2552, %v7666, 0
    %v7673 = vsel %vm2552, %v7667, 0
    %7675 = vmatprep.subr.mxu0 0.0
    %7676 = vmatpush1.msra.mxu0 %v7668
    %7677 = vmatprep.subr.mxu0 0.0
    %7678 = vmatpush1.msra.mxu0 0.0
    %7679 = vmatprep.subr.mxu0 0.0
    %7680 = vmatpush1.msra.mxu0 0.0
    %7681 = vmatprep.subr.mxu0 0.0
    %7682 = vmatpush1.msra.mxu0 0.0
    %7683 = vmatprep.subr.mxu0 0.0
    %7684 = vmatpush1.msra.mxu0 0.0
    %7685 = vmatprep.subr.mxu0 0.0
    %7686 = vmatpush1.msra.mxu0 0.0
    %7687 = vmatprep.subr.mxu0 0.0
    %7688 = vmatpush1.msra.mxu0 0.0
    %7689 = vmatprep.subr.mxu0 0.0
    %7690 = vmatpush1.msra.mxu0 0.0
    %7691 = vmatprep.subr.mxu0 0.0
    %7692 = vmatpush1.msra.mxu0 0.0
    %7693 = vmatprep.subr.mxu0 0.0
    %7694 = vmatpush1.msra.mxu0 0.0
    %7695 = vmatprep.subr.mxu0 0.0
    %7696 = vmatpush1.msra.mxu0 0.0
    %7697 = vmatprep.subr.mxu0 0.0
    %7698 = vmatpush1.msra.mxu0 0.0
    %7699 = vmatprep.subr.mxu0 0.0
    %7700 = vmatpush1.msra.mxu0 0.0
    %7701 = vmatprep.subr.mxu0 0.0
    %7702 = vmatpush1.msra.mxu0 0.0
    %7703 = vmatprep.subr.mxu0 0.0
    %7704 = vmatpush1.msra.mxu0 0.0
    %7705 = vmatprep.subr.mxu0 0.0
    %7706 = vmatpush1.msra.mxu0 0.0
    %7707 = vmatprep.subr.mxu0 0.0
    %7708 = vmatpush1.msra.mxu0 0.0
    %7709 = vmatprep.subr.mxu0 0.0
    %7710 = vmatpush1.msra.mxu0 0.0
    %7711 = vmatprep.subr.mxu0 0.0
    %7712 = vmatpush1.msra.mxu0 0.0
    %7713 = vmatprep.subr.mxu0 0.0
    %7714 = vmatpush1.msra.mxu0 0.0
    %7715 = vmatprep.subr.mxu0 0.0
    %7716 = vmatpush1.msra.mxu0 0.0
    %7717 = vmatprep.subr.mxu0 0.0
    %7718 = vmatpush1.msra.mxu0 0.0
    %7719 = vmatprep.subr.mxu0 0.0
    %7720 = vmatpush1.msra.mxu0 0.0
    %7721 = vmatprep.subr.mxu0 0.0
    %7722 = vmatpush1.msra.mxu0 0.0
    %7723 = vmatprep.subr.mxu0 0.0
    %7724 = vmatpush1.msra.mxu0 0.0
    %7725 = vmatprep.subr.mxu0 0.0
    %7726 = vmatpush1.msra.mxu0 0.0
    %7727 = vmatprep.subr.mxu0 0.0
    %7728 = vmatpush1.msra.mxu0 0.0
    %7729 = vmatprep.subr.mxu0 0.0
    %7730 = vmatpush1.msra.mxu0 0.0
    %7731 = vmatprep.subr.mxu0 0.0
    %7732 = vmatpush1.msra.mxu0 0.0
    %7733 = vmatprep.subr.mxu0 0.0
    %7734 = vmatpush1.msra.mxu0 0.0
    %7735 = vmatprep.subr.mxu0 0.0
    %7736 = vmatpush1.msra.mxu0 0.0
    %7737 = vmatprep.subr.mxu0 0.0
    %7738 = vmatpush1.msra.mxu0 0.0
    %7739 = vmatprep.mubr.f32.mxu0 0.0
    %7740 = vmatmul.mubr.f32.gmra.mrb[0].mxu0 %v7670
    %v7741 = vpop.f32.mrb[0].mxu0
    %v7742 = vadd.f32 0.0, %v7741
    %v7743 = vpop.f32.mrb[0].mxu0
    %7744 = vmatprep.mubr.f32.mxu0 0.0
    %7745 = vmatmul.mubr.f32.gmra.mrb[0].mxu0 %v7673
    %v7746 = vpop.f32.mrb[0].mxu0
    %v7747 = vadd.f32 0.0, %v7746
    %v7748 = vpop.f32.mrb[0].mxu0
    %7749 = vdwg.mxu0
    %v7751 = vsel %vm2552, %v7564, 0
    %v7754 = vsel %vm2552, %v7565, 0
    %7756 = vmatprep.subr.mxu0 0.0
    %7757 = vmatpush1.msra.mxu0 %v7566
    %7758 = vmatprep.subr.mxu0 0.0
    %7759 = vmatpush1.msra.mxu0 0.0
    %7760 = vmatprep.subr.mxu0 0.0
    %7761 = vmatpush1.msra.mxu0 0.0
    %7762 = vmatprep.subr.mxu0 0.0
    %7763 = vmatpush1.msra.mxu0 0.0
    %7764 = vmatprep.subr.mxu0 0.0
    %7765 = vmatpush1.msra.mxu0 0.0
    %7766 = vmatprep.subr.mxu0 0.0
    %7767 = vmatpush1.msra.mxu0 0.0
    %7768 = vmatprep.subr.mxu0 0.0
    %7769 = vmatpush1.msra.mxu0 0.0
    %7770 = vmatprep.subr.mxu0 0.0
    %7771 = vmatpush1.msra.mxu0 0.0
    %7772 = vmatprep.subr.mxu0 0.0
    %7773 = vmatpush1.msra.mxu0 0.0
    %7774 = vmatprep.subr.mxu0 0.0
    %7775 = vmatpush1.msra.mxu0 0.0
    %7776 = vmatprep.subr.mxu0 0.0
    %7777 = vmatpush1.msra.mxu0 0.0
    %7778 = vmatprep.subr.mxu0 0.0
    %7779 = vmatpush1.msra.mxu0 0.0
    %7780 = vmatprep.subr.mxu0 0.0
    %7781 = vmatpush1.msra.mxu0 0.0
    %7782 = vmatprep.subr.mxu0 0.0
    %7783 = vmatpush1.msra.mxu0 0.0
    %7784 = vmatprep.subr.mxu0 0.0
    %7785 = vmatpush1.msra.mxu0 0.0
    %7786 = vmatprep.subr.mxu0 0.0
    %7787 = vmatpush1.msra.mxu0 0.0
    %7788 = vmatprep.subr.mxu0 0.0
    %7789 = vmatpush1.msra.mxu0 0.0
    %7790 = vmatprep.subr.mxu0 0.0
    %7791 = vmatpush1.msra.mxu0 0.0
    %7792 = vmatprep.subr.mxu0 0.0
    %7793 = vmatpush1.msra.mxu0 0.0
    %7794 = vmatprep.subr.mxu0 0.0
    %7795 = vmatpush1.msra.mxu0 0.0
    %7796 = vmatprep.subr.mxu0 0.0
    %7797 = vmatpush1.msra.mxu0 0.0
    %7798 = vmatprep.subr.mxu0 0.0
    %7799 = vmatpush1.msra.mxu0 0.0
    %7800 = vmatprep.subr.mxu0 0.0
    %7801 = vmatpush1.msra.mxu0 0.0
    %7802 = vmatprep.subr.mxu0 0.0
    %7803 = vmatpush1.msra.mxu0 0.0
    %7804 = vmatprep.subr.mxu0 0.0
    %7805 = vmatpush1.msra.mxu0 0.0
    %7806 = vmatprep.subr.mxu0 0.0
    %7807 = vmatpush1.msra.mxu0 0.0
    %7808 = vmatprep.subr.mxu0 0.0
    %7809 = vmatpush1.msra.mxu0 0.0
    %7810 = vmatprep.subr.mxu0 0.0
    %7811 = vmatpush1.msra.mxu0 0.0
    %7812 = vmatprep.subr.mxu0 0.0
    %7813 = vmatpush1.msra.mxu0 0.0
    %7814 = vmatprep.subr.mxu0 0.0
    %7815 = vmatpush1.msra.mxu0 0.0
    %7816 = vmatprep.subr.mxu0 0.0
    %7817 = vmatpush1.msra.mxu0 0.0
    %7818 = vmatprep.subr.mxu0 0.0
    %7819 = vmatpush1.msra.mxu0 0.0
    %7820 = vmatprep.mubr.f32.mxu0 0.0
    %7821 = vmatmul.mubr.f32.gmra.mrb[0].mxu0 %v7751
    %v7822 = vpop.f32.mrb[0].mxu0
    %v7823 = vadd.f32 %v7742, %v7822
    %v7824 = vpop.f32.mrb[0].mxu0
    %7825 = vmatprep.mubr.f32.mxu0 0.0
    %7826 = vmatmul.mubr.f32.gmra.mrb[0].mxu0 %v7754
    %v7827 = vpop.f32.mrb[0].mxu0
    %v7828 = vadd.f32 %v7747, %v7827
    %v7829 = vpop.f32.mrb[0].mxu0
    %7830 = vdwg.mxu0
    %v7831 = vsel %vm1360, %v7386, 0.0
    %v7833 = vsel %vm393, %v7831, 0
    %7835 = vmatprep.subr.mxu0 0.0
    %7836 = vmatpush1.xpose.msra.mxu0 %v7833
    %7837 = vmatprep.subr.mxu0 0.0
    %7838 = vmatpush1.xpose.msra.mxu0 0.0
    %7839 = vmatprep.subr.mxu0 0.0
    %7840 = vmatpush1.xpose.msra.mxu0 0.0
    %7841 = vmatprep.subr.mxu0 0.0
    %7842 = vmatpush1.xpose.msra.mxu0 0.0
    %7843 = vmatprep.subr.mxu0 0.0
    %7844 = vmatpush1.xpose.msra.mxu0 0.0
    %7845 = vmatprep.subr.mxu0 0.0
    %7846 = vmatpush1.xpose.msra.mxu0 0.0
    %7847 = vmatprep.subr.mxu0 0.0
    %7848 = vmatpush1.xpose.msra.mxu0 0.0
    %7849 = vmatprep.subr.mxu0 0.0
    %7850 = vmatpush1.xpose.msra.mxu0 0.0
    %7851 = vmatprep.subr.mxu0 0.0
    %7852 = vmatpush1.xpose.msra.mxu0 0.0
    %7853 = vmatprep.subr.mxu0 0.0
    %7854 = vmatpush1.xpose.msra.mxu0 0.0
    %7855 = vmatprep.subr.mxu0 0.0
    %7856 = vmatpush1.xpose.msra.mxu0 0.0
    %7857 = vmatprep.subr.mxu0 0.0
    %7858 = vmatpush1.xpose.msra.mxu0 0.0
    %7859 = vmatprep.subr.mxu0 0.0
    %7860 = vmatpush1.xpose.msra.mxu0 0.0
    %7861 = vmatprep.subr.mxu0 0.0
    %7862 = vmatpush1.xpose.msra.mxu0 0.0
    %7863 = vmatprep.subr.mxu0 0.0
    %7864 = vmatpush1.xpose.msra.mxu0 0.0
    %7865 = vmatprep.subr.mxu0 0.0
    %7866 = vmatpush1.xpose.msra.mxu0 0.0
    %7867 = vmatprep.subr.mxu0 0.0
    %7868 = vmatpush1.xpose.msra.mxu0 0.0
    %7869 = vmatprep.subr.mxu0 0.0
    %7870 = vmatpush1.xpose.msra.mxu0 0.0
    %7871 = vmatprep.subr.mxu0 0.0
    %7872 = vmatpush1.xpose.msra.mxu0 0.0
    %7873 = vmatprep.subr.mxu0 0.0
    %7874 = vmatpush1.xpose.msra.mxu0 0.0
    %7875 = vmatprep.subr.mxu0 0.0
    %7876 = vmatpush1.xpose.msra.mxu0 0.0
    %7877 = vmatprep.subr.mxu0 0.0
    %7878 = vmatpush1.xpose.msra.mxu0 0.0
    %7879 = vmatprep.subr.mxu0 0.0
    %7880 = vmatpush1.xpose.msra.mxu0 0.0
    %7881 = vmatprep.subr.mxu0 0.0
    %7882 = vmatpush1.xpose.msra.mxu0 0.0
    %7883 = vmatprep.subr.mxu0 0.0
    %7884 = vmatpush1.xpose.msra.mxu0 0.0
    %7885 = vmatprep.subr.mxu0 0.0
    %7886 = vmatpush1.xpose.msra.mxu0 0.0
    %7887 = vmatprep.subr.mxu0 0.0
    %7888 = vmatpush1.xpose.msra.mxu0 0.0
    %7889 = vmatprep.subr.mxu0 0.0
    %7890 = vmatpush1.xpose.msra.mxu0 0.0
    %7891 = vmatprep.subr.mxu0 0.0
    %7892 = vmatpush1.xpose.msra.mxu0 0.0
    %7893 = vmatprep.subr.mxu0 0.0
    %7894 = vmatpush1.xpose.msra.mxu0 0.0
    %7895 = vmatprep.subr.mxu0 0.0
    %7896 = vmatpush1.xpose.msra.mxu0 0.0
    %7897 = vmatprep.subr.mxu0 0.0
    %7898 = vmatpush1.xpose.msra.mxu0 0.0
    %7899 = vmatprep.mubr.f32.mxu0 0.0
    %7900 = vmatmul.mubr.f32.gmra.mrb[0].mxu0 %v7461
    %v7901 = vpop.f32.mrb[0].mxu0
    %v7902 = vadd.f32 0.0, %v7901
    %v7903 = vpop.f32.mrb[0].mxu0
    %7904 = vmatprep.mubr.f32.mxu0 0.0
    %7905 = vmatmul.mubr.f32.gmra.mrb[0].mxu0 %v7464
    %v7906 = vpop.f32.mrb[0].mxu0
    %v7907 = vadd.f32 0.0, %v7906
    %v7908 = vpop.f32.mrb[0].mxu0
    %7909 = vdwg.mxu0
    %v7910 = vsel %vm2552, %v7902, -inf
    %7911 = vmax.xlane.f32.xlu0 %v7910
    %v7912 = vpop.xlane.xlu0 %7911
    %v7913 = vsel %vm2552, %v7907, -inf
    %7914 = vmax.xlane.f32.xlu0 %v7913
    %v7915 = vpop.xlane.xlu0 %7914
    %v7916 = vsub.f32 %v7902, %v7912
    %v7917 = vsub.f32 %v7907, %v7915
    %v7918 = vmul.f32 %v7916, 1.442695
    %v7919 = vpow.pop %v7918
    %v7920 = vmul.f32 %v7917, 1.442695
    %v7921 = vpow.pop %v7920
    %v7922 = vsel %vm2552, %v7919, 0.0
    %7923 = vadd.xlane.f32.xlu0 %v7922
    %v7924 = vpop.xlane.xlu0 %7923
    %v7925 = vsel %vm2552, %v7921, 0.0
    %7926 = vadd.xlane.f32.xlu0 %v7925
    %v7927 = vpop.xlane.xlu0 %7926
    %v7928 = vrcp.pop %v7924
    %v7929 = vrcp.pop %v7927
    %v7930 = vmul.f32 %v7919, %v7928
    %v7931 = vmul.f32 %v7921, %v7929
    %v7932 = vsel %vm1360, %v7456, 0.0
    %v7934 = vsel %vm2552, %v7930, 0
    %v7937 = vsel %vm2552, %v7931, 0
    %7939 = vmatprep.subr.mxu0 0.0
    %7940 = vmatpush1.msra.mxu0 %v7932
    %7941 = vmatprep.subr.mxu0 0.0
    %7942 = vmatpush1.msra.mxu0 0.0
    %7943 = vmatprep.subr.mxu0 0.0
    %7944 = vmatpush1.msra.mxu0 0.0
    %7945 = vmatprep.subr.mxu0 0.0
    %7946 = vmatpush1.msra.mxu0 0.0
    %7947 = vmatprep.subr.mxu0 0.0
    %7948 = vmatpush1.msra.mxu0 0.0
    %7949 = vmatprep.subr.mxu0 0.0
    %7950 = vmatpush1.msra.mxu0 0.0
    %7951 = vmatprep.subr.mxu0 0.0
    %7952 = vmatpush1.msra.mxu0 0.0
    %7953 = vmatprep.subr.mxu0 0.0
    %7954 = vmatpush1.msra.mxu0 0.0
    %7955 = vmatprep.subr.mxu0 0.0
    %7956 = vmatpush1.msra.mxu0 0.0
    %7957 = vmatprep.subr.mxu0 0.0
    %7958 = vmatpush1.msra.mxu0 0.0
    %7959 = vmatprep.subr.mxu0 0.0
    %7960 = vmatpush1.msra.mxu0 0.0
    %7961 = vmatprep.subr.mxu0 0.0
    %7962 = vmatpush1.msra.mxu0 0.0
    %7963 = vmatprep.subr.mxu0 0.0
    %7964 = vmatpush1.msra.mxu0 0.0
    %7965 = vmatprep.subr.mxu0 0.0
    %7966 = vmatpush1.msra.mxu0 0.0
    %7967 = vmatprep.subr.mxu0 0.0
    %7968 = vmatpush1.msra.mxu0 0.0
    %7969 = vmatprep.subr.mxu0 0.0
    %7970 = vmatpush1.msra.mxu0 0.0
    %7971 = vmatprep.subr.mxu0 0.0
    %7972 = vmatpush1.msra.mxu0 0.0
    %7973 = vmatprep.subr.mxu0 0.0
    %7974 = vmatpush1.msra.mxu0 0.0
    %7975 = vmatprep.subr.mxu0 0.0
    %7976 = vmatpush1.msra.mxu0 0.0
    %7977 = vmatprep.subr.mxu0 0.0
    %7978 = vmatpush1.msra.mxu0 0.0
    %7979 = vmatprep.subr.mxu0 0.0
    %7980 = vmatpush1.msra.mxu0 0.0
    %7981 = vmatprep.subr.mxu0 0.0
    %7982 = vmatpush1.msra.mxu0 0.0
    %7983 = vmatprep.subr.mxu0 0.0
    %7984 = vmatpush1.msra.mxu0 0.0
    %7985 = vmatprep.subr.mxu0 0.0
    %7986 = vmatpush1.msra.mxu0 0.0
    %7987 = vmatprep.subr.mxu0 0.0
    %7988 = vmatpush1.msra.mxu0 0.0
    %7989 = vmatprep.subr.mxu0 0.0
    %7990 = vmatpush1.msra.mxu0 0.0
    %7991 = vmatprep.subr.mxu0 0.0
    %7992 = vmatpush1.msra.mxu0 0.0
    %7993 = vmatprep.subr.mxu0 0.0
    %7994 = vmatpush1.msra.mxu0 0.0
    %7995 = vmatprep.subr.mxu0 0.0
    %7996 = vmatpush1.msra.mxu0 0.0
    %7997 = vmatprep.subr.mxu0 0.0
    %7998 = vmatpush1.msra.mxu0 0.0
    %7999 = vmatprep.subr.mxu0 0.0
    %8000 = vmatpush1.msra.mxu0 0.0
    %8001 = vmatprep.subr.mxu0 0.0
    %8002 = vmatpush1.msra.mxu0 0.0
    %8003 = vmatprep.mubr.f32.mxu0 0.0
    %8004 = vmatmul.mubr.f32.gmra.mrb[0].mxu0 %v7934
    %v8005 = vpop.f32.mrb[0].mxu0
    %v8006 = vadd.f32 0.0, %v8005
    %v8007 = vpop.f32.mrb[0].mxu0
    %8008 = vmatprep.mubr.f32.mxu0 0.0
    %8009 = vmatmul.mubr.f32.gmra.mrb[0].mxu0 %v7937
    %v8010 = vpop.f32.mrb[0].mxu0
    %v8011 = vadd.f32 0.0, %v8010
    %v8012 = vpop.f32.mrb[0].mxu0
    %8013 = vdwg.mxu0
    %v8014 = vadd.f32 %v7823, %v8006
    %v8015 = vadd.f32 %v7828, %v8011
    %v8016 = vsel %vm1552, %v7386, 0.0
    %v8018 = vsel %vm393, %v8016, 0
    %8020 = vmatprep.subr.mxu0 0.0
    %8021 = vmatpush1.xpose.msra.mxu0 %v8018
    %8022 = vmatprep.subr.mxu0 0.0
    %8023 = vmatpush1.xpose.msra.mxu0 0.0
    %8024 = vmatprep.subr.mxu0 0.0
    %8025 = vmatpush1.xpose.msra.mxu0 0.0
    %8026 = vmatprep.subr.mxu0 0.0
    %8027 = vmatpush1.xpose.msra.mxu0 0.0
    %8028 = vmatprep.subr.mxu0 0.0
    %8029 = vmatpush1.xpose.msra.mxu0 0.0
    %8030 = vmatprep.subr.mxu0 0.0
    %8031 = vmatpush1.xpose.msra.mxu0 0.0
    %8032 = vmatprep.subr.mxu0 0.0
    %8033 = vmatpush1.xpose.msra.mxu0 0.0
    %8034 = vmatprep.subr.mxu0 0.0
    %8035 = vmatpush1.xpose.msra.mxu0 0.0
    %8036 = vmatprep.subr.mxu0 0.0
    %8037 = vmatpush1.xpose.msra.mxu0 0.0
    %8038 = vmatprep.subr.mxu0 0.0
    %8039 = vmatpush1.xpose.msra.mxu0 0.0
    %8040 = vmatprep.subr.mxu0 0.0
    %8041 = vmatpush1.xpose.msra.mxu0 0.0
    %8042 = vmatprep.subr.mxu0 0.0
    %8043 = vmatpush1.xpose.msra.mxu0 0.0
    %8044 = vmatprep.subr.mxu0 0.0
    %8045 = vmatpush1.xpose.msra.mxu0 0.0
    %8046 = vmatprep.subr.mxu0 0.0
    %8047 = vmatpush1.xpose.msra.mxu0 0.0
    %8048 = vmatprep.subr.mxu0 0.0
    %8049 = vmatpush1.xpose.msra.mxu0 0.0
    %8050 = vmatprep.subr.mxu0 0.0
    %8051 = vmatpush1.xpose.msra.mxu0 0.0
    %8052 = vmatprep.subr.mxu0 0.0
    %8053 = vmatpush1.xpose.msra.mxu0 0.0
    %8054 = vmatprep.subr.mxu0 0.0
    %8055 = vmatpush1.xpose.msra.mxu0 0.0
    %8056 = vmatprep.subr.mxu0 0.0
    %8057 = vmatpush1.xpose.msra.mxu0 0.0
    %8058 = vmatprep.subr.mxu0 0.0
    %8059 = vmatpush1.xpose.msra.mxu0 0.0
    %8060 = vmatprep.subr.mxu0 0.0
    %8061 = vmatpush1.xpose.msra.mxu0 0.0
    %8062 = vmatprep.subr.mxu0 0.0
    %8063 = vmatpush1.xpose.msra.mxu0 0.0
    %8064 = vmatprep.subr.mxu0 0.0
    %8065 = vmatpush1.xpose.msra.mxu0 0.0
    %8066 = vmatprep.subr.mxu0 0.0
    %8067 = vmatpush1.xpose.msra.mxu0 0.0
    %8068 = vmatprep.subr.mxu0 0.0
    %8069 = vmatpush1.xpose.msra.mxu0 0.0
    %8070 = vmatprep.subr.mxu0 0.0
    %8071 = vmatpush1.xpose.msra.mxu0 0.0
    %8072 = vmatprep.subr.mxu0 0.0
    %8073 = vmatpush1.xpose.msra.mxu0 0.0
    %8074 = vmatprep.subr.mxu0 0.0
    %8075 = vmatpush1.xpose.msra.mxu0 0.0
    %8076 = vmatprep.subr.mxu0 0.0
    %8077 = vmatpush1.xpose.msra.mxu0 0.0
    %8078 = vmatprep.subr.mxu0 0.0
    %8079 = vmatpush1.xpose.msra.mxu0 0.0
    %8080 = vmatprep.subr.mxu0 0.0
    %8081 = vmatpush1.xpose.msra.mxu0 0.0
    %8082 = vmatprep.subr.mxu0 0.0
    %8083 = vmatpush1.xpose.msra.mxu0 0.0
    %8084 = vmatprep.mubr.f32.mxu0 0.0
    %8085 = vmatmul.mubr.f32.gmra.mrb[0].mxu0 %v7461
    %v8086 = vpop.f32.mrb[0].mxu0
    %v8087 = vadd.f32 0.0, %v8086
    %v8088 = vpop.f32.mrb[0].mxu0
    %8089 = vmatprep.mubr.f32.mxu0 0.0
    %8090 = vmatmul.mubr.f32.gmra.mrb[0].mxu0 %v7464
    %v8091 = vpop.f32.mrb[0].mxu0
    %v8092 = vadd.f32 0.0, %v8091
    %v8093 = vpop.f32.mrb[0].mxu0
    %8094 = vdwg.mxu0
    %v8095 = vsel %vm2552, %v8087, -inf
    %8096 = vmax.xlane.f32.xlu0 %v8095
    %v8097 = vpop.xlane.xlu0 %8096
    %v8098 = vsel %vm2552, %v8092, -inf
    %8099 = vmax.xlane.f32.xlu0 %v8098
    %v8100 = vpop.xlane.xlu0 %8099
    %v8101 = vsub.f32 %v8087, %v8097
    %v8102 = vsub.f32 %v8092, %v8100
    %v8103 = vmul.f32 %v8101, 1.442695
    %v8104 = vpow.pop %v8103
    %v8105 = vmul.f32 %v8102, 1.442695
    %v8106 = vpow.pop %v8105
    %v8107 = vsel %vm2552, %v8104, 0.0
    %8108 = vadd.xlane.f32.xlu0 %v8107
    %v8109 = vpop.xlane.xlu0 %8108
    %v8110 = vsel %vm2552, %v8106, 0.0
    %8111 = vadd.xlane.f32.xlu0 %v8110
    %v8112 = vpop.xlane.xlu0 %8111
    %v8113 = vrcp.pop %v8109
    %v8114 = vrcp.pop %v8112
    %v8115 = vmul.f32 %v8104, %v8113
    %v8116 = vmul.f32 %v8106, %v8114
    %v8117 = vsel %vm1552, %v7456, 0.0
    %v8119 = vsel %vm2552, %v8115, 0
    %v8122 = vsel %vm2552, %v8116, 0
    %8124 = vmatprep.subr.mxu0 0.0
    %8125 = vmatpush1.msra.mxu0 %v8117
    %8126 = vmatprep.subr.mxu0 0.0
    %8127 = vmatpush1.msra.mxu0 0.0
    %8128 = vmatprep.subr.mxu0 0.0
    %8129 = vmatpush1.msra.mxu0 0.0
    %8130 = vmatprep.subr.mxu0 0.0
    %8131 = vmatpush1.msra.mxu0 0.0
    %8132 = vmatprep.subr.mxu0 0.0
    %8133 = vmatpush1.msra.mxu0 0.0
    %8134 = vmatprep.subr.mxu0 0.0
    %8135 = vmatpush1.msra.mxu0 0.0
    %8136 = vmatprep.subr.mxu0 0.0
    %8137 = vmatpush1.msra.mxu0 0.0
    %8138 = vmatprep.subr.mxu0 0.0
    %8139 = vmatpush1.msra.mxu0 0.0
    %8140 = vmatprep.subr.mxu0 0.0
    %8141 = vmatpush1.msra.mxu0 0.0
    %8142 = vmatprep.subr.mxu0 0.0
    %8143 = vmatpush1.msra.mxu0 0.0
    %8144 = vmatprep.subr.mxu0 0.0
    %8145 = vmatpush1.msra.mxu0 0.0
    %8146 = vmatprep.subr.mxu0 0.0
    %8147 = vmatpush1.msra.mxu0 0.0
    %8148 = vmatprep.subr.mxu0 0.0
    %8149 = vmatpush1.msra.mxu0 0.0
    %8150 = vmatprep.subr.mxu0 0.0
    %8151 = vmatpush1.msra.mxu0 0.0
    %8152 = vmatprep.subr.mxu0 0.0
    %8153 = vmatpush1.msra.mxu0 0.0
    %8154 = vmatprep.subr.mxu0 0.0
    %8155 = vmatpush1.msra.mxu0 0.0
    %8156 = vmatprep.subr.mxu0 0.0
    %8157 = vmatpush1.msra.mxu0 0.0
    %8158 = vmatprep.subr.mxu0 0.0
    %8159 = vmatpush1.msra.mxu0 0.0
    %8160 = vmatprep.subr.mxu0 0.0
    %8161 = vmatpush1.msra.mxu0 0.0
    %8162 = vmatprep.subr.mxu0 0.0
    %8163 = vmatpush1.msra.mxu0 0.0
    %8164 = vmatprep.subr.mxu0 0.0
    %8165 = vmatpush1.msra.mxu0 0.0
    %8166 = vmatprep.subr.mxu0 0.0
    %8167 = vmatpush1.msra.mxu0 0.0
    %8168 = vmatprep.subr.mxu0 0.0
    %8169 = vmatpush1.msra.mxu0 0.0
    %8170 = vmatprep.subr.mxu0 0.0
    %8171 = vmatpush1.msra.mxu0 0.0
    %8172 = vmatprep.subr.mxu0 0.0
    %8173 = vmatpush1.msra.mxu0 0.0
    %8174 = vmatprep.subr.mxu0 0.0
    %8175 = vmatpush1.msra.mxu0 0.0
    %8176 = vmatprep.subr.mxu0 0.0
    %8177 = vmatpush1.msra.mxu0 0.0
    %8178 = vmatprep.subr.mxu0 0.0
    %8179 = vmatpush1.msra.mxu0 0.0
    %8180 = vmatprep.subr.mxu0 0.0
    %8181 = vmatpush1.msra.mxu0 0.0
    %8182 = vmatprep.subr.mxu0 0.0
    %8183 = vmatpush1.msra.mxu0 0.0
    %8184 = vmatprep.subr.mxu0 0.0
    %8185 = vmatpush1.msra.mxu0 0.0
    %8186 = vmatprep.subr.mxu0 0.0
    %8187 = vmatpush1.msra.mxu0 0.0
    %8188 = vmatprep.mubr.f32.mxu0 0.0
    %8189 = vmatmul.mubr.f32.gmra.mrb[0].mxu0 %v8119
    %v8190 = vpop.f32.mrb[0].mxu0
    %v8191 = vadd.f32 0.0, %v8190
    %v8192 = vpop.f32.mrb[0].mxu0
    %8193 = vmatprep.mubr.f32.mxu0 0.0
    %8194 = vmatmul.mubr.f32.gmra.mrb[0].mxu0 %v8122
    %v8195 = vpop.f32.mrb[0].mxu0
    %v8196 = vadd.f32 0.0, %v8195
    %v8197 = vpop.f32.mrb[0].mxu0
    %8198 = vdwg.mxu0
    %v8199 = vadd.f32 %v8014, %v8191
    %v8200 = vadd.f32 %v8015, %v8196
    %v8202 = vsel %vm393, %v8199, 0
    %v8205 = vsel %vm393, %v8200, 0
    %8207 = vmatprep.subr.mxu0 0.0
    %8208 = vmatpush1.msra.mxu0 %v171
    %8209 = vmatprep.subr.mxu0 0.0
    %8210 = vmatpush1.msra.mxu0 %v172
    %8211 = vmatprep.subr.mxu0 0.0
    %8212 = vmatpush1.msra.mxu0 %v173
    %8213 = vmatprep.subr.mxu0 0.0
    %8214 = vmatpush1.msra.mxu0 %v174
    %8215 = vmatprep.subr.mxu0 0.0
    %8216 = vmatpush1.msra.mxu0 0.0
    %8217 = vmatprep.subr.mxu0 0.0
    %8218 = vmatpush1.msra.mxu0 0.0
    %8219 = vmatprep.subr.mxu0 0.0
    %8220 = vmatpush1.msra.mxu0 0.0
    %8221 = vmatprep.subr.mxu0 0.0
    %8222 = vmatpush1.msra.mxu0 0.0
    %8223 = vmatprep.subr.mxu0 0.0
    %8224 = vmatpush1.msra.mxu0 0.0
    %8225 = vmatprep.subr.mxu0 0.0
    %8226 = vmatpush1.msra.mxu0 0.0
    %8227 = vmatprep.subr.mxu0 0.0
    %8228 = vmatpush1.msra.mxu0 0.0
    %8229 = vmatprep.subr.mxu0 0.0
    %8230 = vmatpush1.msra.mxu0 0.0
    %8231 = vmatprep.subr.mxu0 0.0
    %8232 = vmatpush1.msra.mxu0 0.0
    %8233 = vmatprep.subr.mxu0 0.0
    %8234 = vmatpush1.msra.mxu0 0.0
    %8235 = vmatprep.subr.mxu0 0.0
    %8236 = vmatpush1.msra.mxu0 0.0
    %8237 = vmatprep.subr.mxu0 0.0
    %8238 = vmatpush1.msra.mxu0 0.0
    %8239 = vmatprep.subr.mxu0 0.0
    %8240 = vmatpush1.msra.mxu0 0.0
    %8241 = vmatprep.subr.mxu0 0.0
    %8242 = vmatpush1.msra.mxu0 0.0
    %8243 = vmatprep.subr.mxu0 0.0
    %8244 = vmatpush1.msra.mxu0 0.0
    %8245 = vmatprep.subr.mxu0 0.0
    %8246 = vmatpush1.msra.mxu0 0.0
    %8247 = vmatprep.subr.mxu0 0.0
    %8248 = vmatpush1.msra.mxu0 0.0
    %8249 = vmatprep.subr.mxu0 0.0
    %8250 = vmatpush1.msra.mxu0 0.0
    %8251 = vmatprep.subr.mxu0 0.0
    %8252 = vmatpush1.msra.mxu0 0.0
    %8253 = vmatprep.subr.mxu0 0.0
    %8254 = vmatpush1.msra.mxu0 0.0
    %8255 = vmatprep.subr.mxu0 0.0
    %8256 = vmatpush1.msra.mxu0 0.0
    %8257 = vmatprep.subr.mxu0 0.0
    %8258 = vmatpush1.msra.mxu0 0.0
    %8259 = vmatprep.subr.mxu0 0.0
    %8260 = vmatpush1.msra.mxu0 0.0
    %8261 = vmatprep.subr.mxu0 0.0
    %8262 = vmatpush1.msra.mxu0 0.0
    %8263 = vmatprep.subr.mxu0 0.0
    %8264 = vmatpush1.msra.mxu0 0.0
    %8265 = vmatprep.subr.mxu0 0.0
    %8266 = vmatpush1.msra.mxu0 0.0
    %8267 = vmatprep.subr.mxu0 0.0
    %8268 = vmatpush1.msra.mxu0 0.0
    %8269 = vmatprep.subr.mxu0 0.0
    %8270 = vmatpush1.msra.mxu0 0.0
    %8271 = vmatprep.mubr.f32.mxu0 0.0
    %8272 = vmatmul.mubr.f32.gmra.mrb[0].mxu0 %v8202
    %v8273 = vpop.f32.mrb[0].mxu0
    %v8274 = vadd.f32 %v3214, %v8273
    %v8275 = vpop.f32.mrb[0].mxu0
    %8276 = vmatprep.mubr.f32.mxu0 0.0
    %8277 = vmatmul.mubr.f32.gmra.mrb[0].mxu0 %v8205
    %v8278 = vpop.f32.mrb[0].mxu0
    %v8279 = vadd.f32 %v3214, %v8278
    %v8280 = vpop.f32.mrb[0].mxu0
    %8281 = vdwg.mxu0
    %v8284 = vrot.slane %v8274, 7
    %v8285 = vrot.slane %v8274, 1
    %v8286 = vrot.slane %v8274, 2
    %v8287 = vrot.slane %v8274, 3
    %v8288 = vrot.slane %v8274, 4
    %v8289 = vrot.slane %v8274, 5
    %v8290 = vrot.slane %v8274, 6
    %v8291 = vrot.slane %v8279, 7
    %v8292 = vrot.slane %v8279, 1
    %v8293 = vrot.slane %v8279, 2
    %v8294 = vrot.slane %v8279, 3
    %v8295 = vrot.slane %v8279, 4
    %v8296 = vrot.slane %v8279, 5
    %v8297 = vrot.slane %v8279, 6
    %v8314 = vadd.f32 %v6880, %v8284
    %v8315 = vadd.f32 %v6881, %v8274
    %v8316 = vadd.f32 %v6882, %v8285
    %v8317 = vadd.f32 %v6883, %v8286
    %v8318 = vadd.f32 %v6884, %v8287
    %v8319 = vadd.f32 %v6885, %v8288
    %v8320 = vadd.f32 %v6886, %v8289
    %v8321 = vadd.f32 %v6887, %v8290
    %v8322 = vadd.f32 %v6888, %v8291
    %v8323 = vadd.f32 %v6889, %v8279
    %v8324 = vadd.f32 %v6890, %v8292
    %v8325 = vadd.f32 %v6891, %v8293
    %v8326 = vadd.f32 %v6892, %v8294
    %v8327 = vadd.f32 %v6893, %v8295
    %v8328 = vadd.f32 %v6894, %v8296
    %v8329 = vadd.f32 %v6895, %v8297
    %v8346 = vrot.slane %v8315, 7
    %v8347 = vsel %vm360, %v8346, %v8314
    %v8348 = vrot.slane %v8316, 6
    %v8349 = vsel %vm363, %v8348, %v8347
    %v8350 = vrot.slane %v8317, 5
    %v8351 = vsel %vm366, %v8350, %v8349
    %v8352 = vrot.slane %v8318, 4
    %v8353 = vsel %vm369, %v8352, %v8351
    %v8354 = vrot.slane %v8319, 3
    %v8355 = vsel %vm372, %v8354, %v8353
    %v8356 = vrot.slane %v8320, 2
    %v8357 = vsel %vm375, %v8356, %v8355
    %v8358 = vrot.slane %v8321, 1
    %v8359 = vsel %vm357, %v8322, %v8358
    %v8360 = vrot.slane %v8323, 7
    %v8361 = vsel %vm360, %v8360, %v8359
    %v8362 = vrot.slane %v8324, 6
    %v8363 = vsel %vm363, %v8362, %v8361
    %v8364 = vrot.slane %v8325, 5
    %v8365 = vsel %vm366, %v8364, %v8363
    %v8366 = vrot.slane %v8326, 4
    %v8367 = vsel %vm369, %v8366, %v8365
    %v8368 = vrot.slane %v8327, 3
    %v8369 = vsel %vm372, %v8368, %v8367
    %v8370 = vrot.slane %v8328, 2
    %v8371 = vsel %vm375, %v8370, %v8369
    %v8372 = vrot.slane %v8329, 1
    %v8376 = vsel %vm5445, %v8357, 0.0
    %8377 = vadd.xlane.f32.xlu0 %v8376
    %v8378 = vpop.xlane.xlu0 %8377
    %v8379 = vsel %vm393, %v8371, 0.0
    %8380 = vadd.xlane.f32.xlu0 %v8379
    %v8381 = vpop.xlane.xlu0 %8380
    %v8382 = vsel %vm5412, %v8372, 0.0
    %8383 = vadd.xlane.f32.xlu0 %v8382
    %v8384 = vpop.xlane.xlu0 %8383
    %v8385 = vmul.f32 %v8378, %v400
    %v8386 = vmul.f32 %v8381, %v400
    %v8387 = vmul.f32 %v8384, %v400
    %v8391 = vrot.slane %v8385, 1
    %v8392 = vrot.slane %v8385, 2
    %v8393 = vrot.slane %v8385, 3
    %v8394 = vrot.slane %v8385, 4
    %v8395 = vrot.slane %v8385, 5
    %v8396 = vrot.slane %v8385, 6
    %v8397 = vrot.slane %v8386, 7
    %v8398 = vrot.slane %v8386, 1
    %v8399 = vrot.slane %v8386, 2
    %v8400 = vrot.slane %v8386, 3
    %v8401 = vrot.slane %v8386, 4
    %v8402 = vrot.slane %v8386, 5
    %v8403 = vrot.slane %v8386, 6
    %v8404 = vrot.slane %v8387, 7
    %v8421 = vsub.f32 %v8314, %v8385
    %v8422 = vsub.f32 %v8315, %v8391
    %v8423 = vsub.f32 %v8316, %v8392
    %v8424 = vsub.f32 %v8317, %v8393
    %v8425 = vsub.f32 %v8318, %v8394
    %v8426 = vsub.f32 %v8319, %v8395
    %v8427 = vsub.f32 %v8320, %v8396
    %v8428 = vsub.f32 %v8321, %v8397
    %v8429 = vsub.f32 %v8322, %v8386
    %v8430 = vsub.f32 %v8323, %v8398
    %v8431 = vsub.f32 %v8324, %v8399
    %v8432 = vsub.f32 %v8325, %v8400
    %v8433 = vsub.f32 %v8326, %v8401
    %v8434 = vsub.f32 %v8327, %v8402
    %v8435 = vsub.f32 %v8328, %v8403
    %v8436 = vsub.f32 %v8329, %v8404
    %v8437 = vmul.f32 %v8421, %v8421
    %v8438 = vmul.f32 %v8422, %v8422
    %v8439 = vmul.f32 %v8423, %v8423
    %v8440 = vmul.f32 %v8424, %v8424
    %v8441 = vmul.f32 %v8425, %v8425
    %v8442 = vmul.f32 %v8426, %v8426
    %v8443 = vmul.f32 %v8427, %v8427
    %v8444 = vmul.f32 %v8428, %v8428
    %v8445 = vmul.f32 %v8429, %v8429
    %v8446 = vmul.f32 %v8430, %v8430
    %v8447 = vmul.f32 %v8431, %v8431
    %v8448 = vmul.f32 %v8432, %v8432
    %v8449 = vmul.f32 %v8433, %v8433
    %v8450 = vmul.f32 %v8434, %v8434
    %v8451 = vmul.f32 %v8435, %v8435
    %v8452 = vmul.f32 %v8436, %v8436
    %v8469 = vrot.slane %v8438, 7
    %v8470 = vsel %vm360, %v8469, %v8437
    %v8471 = vrot.slane %v8439, 6
    %v8472 = vsel %vm363, %v8471, %v8470
    %v8473 = vrot.slane %v8440, 5
    %v8474 = vsel %vm366, %v8473, %v8472
    %v8475 = vrot.slane %v8441, 4
    %v8476 = vsel %vm369, %v8475, %v8474
    %v8477 = vrot.slane %v8442, 3
    %v8478 = vsel %vm372, %v8477, %v8476
    %v8479 = vrot.slane %v8443, 2
    %v8480 = vsel %vm375, %v8479, %v8478
    %v8481 = vrot.slane %v8444, 1
    %v8482 = vsel %vm357, %v8445, %v8481
    %v8483 = vrot.slane %v8446, 7
    %v8484 = vsel %vm360, %v8483, %v8482
    %v8485 = vrot.slane %v8447, 6
    %v8486 = vsel %vm363, %v8485, %v8484
    %v8487 = vrot.slane %v8448, 5
    %v8488 = vsel %vm366, %v8487, %v8486
    %v8489 = vrot.slane %v8449, 4
    %v8490 = vsel %vm369, %v8489, %v8488
    %v8491 = vrot.slane %v8450, 3
    %v8492 = vsel %vm372, %v8491, %v8490
    %v8493 = vrot.slane %v8451, 2
    %v8494 = vsel %vm375, %v8493, %v8492
    %v8495 = vrot.slane %v8452, 1
    %v8499 = vsel %vm5445, %v8480, 0.0
    %8500 = vadd.xlane.f32.xlu0 %v8499
    %v8501 = vpop.xlane.xlu0 %8500
    %v8502 = vsel %vm393, %v8494, 0.0
    %8503 = vadd.xlane.f32.xlu0 %v8502
    %v8504 = vpop.xlane.xlu0 %8503
    %v8505 = vsel %vm5412, %v8495, 0.0
    %8506 = vadd.xlane.f32.xlu0 %v8505
    %v8507 = vpop.xlane.xlu0 %8506
    %v8508 = vmul.f32 %v8501, %v400
    %v8509 = vmul.f32 %v8504, %v400
    %v8510 = vmul.f32 %v8507, %v400
    %v8511 = vadd.f32 %v8508, 1e-05
    %v8512 = vadd.f32 %v8509, 1e-05
    %v8513 = vadd.f32 %v8510, 1e-05
    %v8514 = vrsqrt.pop %v8511
    %v8515 = vrsqrt.pop %v8512
    %v8516 = vrsqrt.pop %v8513
    %v8520 = vrot.slane %v8514, 1
    %v8521 = vrot.slane %v8514, 2
    %v8522 = vrot.slane %v8514, 3
    %v8523 = vrot.slane %v8514, 4
    %v8524 = vrot.slane %v8514, 5
    %v8525 = vrot.slane %v8514, 6
    %v8526 = vrot.slane %v8515, 7
    %v8527 = vrot.slane %v8515, 1
    %v8528 = vrot.slane %v8515, 2
    %v8529 = vrot.slane %v8515, 3
    %v8530 = vrot.slane %v8515, 4
    %v8531 = vrot.slane %v8515, 5
    %v8532 = vrot.slane %v8515, 6
    %v8533 = vrot.slane %v8516, 7
    %v8550 = vmul.f32 %v8421, %v8514
    %v8551 = vmul.f32 %v8422, %v8520
    %v8552 = vmul.f32 %v8423, %v8521
    %v8553 = vmul.f32 %v8424, %v8522
    %v8554 = vmul.f32 %v8425, %v8523
    %v8555 = vmul.f32 %v8426, %v8524
    %v8556 = vmul.f32 %v8427, %v8525
    %v8557 = vmul.f32 %v8428, %v8526
    %v8558 = vmul.f32 %v8429, %v8515
    %v8559 = vmul.f32 %v8430, %v8527
    %v8560 = vmul.f32 %v8431, %v8528
    %v8561 = vmul.f32 %v8432, %v8529
    %v8562 = vmul.f32 %v8433, %v8530
    %v8563 = vmul.f32 %v8434, %v8531
    %v8564 = vmul.f32 %v8435, %v8532
    %v8565 = vmul.f32 %v8436, %v8533
    %v8566 = vmul.f32 %v8550, %v3573
    %v8567 = vmul.f32 %v8551, %v3573
    %v8568 = vmul.f32 %v8552, %v3573
    %v8569 = vmul.f32 %v8553, %v3573
    %v8570 = vmul.f32 %v8554, %v3573
    %v8571 = vmul.f32 %v8555, %v3573
    %v8572 = vmul.f32 %v8556, %v3573
    %v8573 = vmul.f32 %v8557, %v3573
    %v8574 = vmul.f32 %v8558, %v3573
    %v8575 = vmul.f32 %v8559, %v3573
    %v8576 = vmul.f32 %v8560, %v3573
    %v8577 = vmul.f32 %v8561, %v3573
    %v8578 = vmul.f32 %v8562, %v3573
    %v8579 = vmul.f32 %v8563, %v3573
    %v8580 = vmul.f32 %v8564, %v3573
    %v8581 = vmul.f32 %v8565, %v3573
    %v8582 = vadd.f32 %v8566, %v3595
    %v8583 = vadd.f32 %v8567, %v3595
    %v8584 = vadd.f32 %v8568, %v3595
    %v8585 = vadd.f32 %v8569, %v3595
    %v8586 = vadd.f32 %v8570, %v3595
    %v8587 = vadd.f32 %v8571, %v3595
    %v8588 = vadd.f32 %v8572, %v3595
    %v8589 = vadd.f32 %v8573, %v3595
    %v8590 = vadd.f32 %v8574, %v3595
    %v8591 = vadd.f32 %v8575, %v3595
    %v8592 = vadd.f32 %v8576, %v3595
    %v8593 = vadd.f32 %v8577, %v3595
    %v8594 = vadd.f32 %v8578, %v3595
    %v8595 = vadd.f32 %v8579, %v3595
    %v8596 = vadd.f32 %v8580, %v3595
    %v8597 = vadd.f32 %v8581, %v3595
    %v8614 = vrot.slane %v8583, 7
    %v8615 = vsel %vm360, %v8614, %v8582
    %v8616 = vrot.slane %v8584, 6
    %v8617 = vsel %vm363, %v8616, %v8615
    %v8618 = vrot.slane %v8585, 5
    %v8619 = vsel %vm366, %v8618, %v8617
    %v8620 = vrot.slane %v8587, 7
    %v8621 = vsel %vm360, %v8620, %v8586
    %v8622 = vrot.slane %v8588, 6
    %v8623 = vsel %vm363, %v8622, %v8621
    %v8624 = vrot.slane %v8589, 5
    %v8625 = vsel %vm366, %v8624, %v8623
    %v8626 = vrot.slane %v8591, 7
    %v8627 = vsel %vm360, %v8626, %v8590
    %v8628 = vrot.slane %v8592, 6
    %v8629 = vsel %vm363, %v8628, %v8627
    %v8630 = vrot.slane %v8593, 5
    %v8631 = vsel %vm366, %v8630, %v8629
    %v8632 = vrot.slane %v8595, 7
    %v8633 = vsel %vm360, %v8632, %v8594
    %v8634 = vrot.slane %v8596, 6
    %v8635 = vsel %vm363, %v8634, %v8633
    %v8636 = vrot.slane %v8597, 5
    %v8637 = vsel %vm366, %v8636, %v8635
    %vm8642 = vcmask 258049
    %8643 = vst.msk [vmem:[%s3657] sm:$0x1e] %vm8642, %v8619
    %8644 = vst.msk [vmem:[%s3657 + $0x8] sm:$0x1e] %vm8642, %v8625
    %8645 = vst.msk [vmem:[%s3657 + $0x10] sm:$0x1e] %vm8642, %v8631
    %8646 = vst.msk [vmem:[%s3657 + $0x18] sm:$0x1e] %vm8642, %v8637
    %v8647 = vld [vmem:[#allocation2] sm:$0xff]
    %v8648 = vld [vmem:[#allocation2 + $0x8] sm:$0xff]
    %v8649 = vld [vmem:[#allocation2 + $0x10] sm:$0xff]
    %v8650 = vld [vmem:[#allocation2 + $0x18] sm:$0xff]
    %v8651 = vld [vmem:[#allocation2 + $0x20] sm:$0xff]
    %v8652 = vld [vmem:[#allocation2 + $0x28] sm:$0xff]
    %v8657 = vcombine.high %v8647, %v8647
    %v8658 = vcombine.high %v8648, %v8648
    %v8659 = vcombine.high %v8649, %v8649
    %v8660 = vcombine.high %v8650, %v8650
    %v8661 = vrot.slane %v8647, 5
    %v8662 = vrot.slane %v8661, 4
    %v8663 = vrot.slane %v8657, 5
    %v8664 = vsel %vm3679, %v8662, %v8663
    %v8665 = vrot.slane %v8648, 5
    %v8666 = vrot.slane %v8665, 4
    %v8667 = vrot.slane %v8658, 5
    %v8668 = vsel %vm3679, %v8666, %v8667
    %v8669 = vrot.slane %v8649, 5
    %v8670 = vrot.slane %v8669, 4
    %v8671 = vrot.slane %v8659, 5
    %v8672 = vsel %vm3679, %v8670, %v8671
    %v8673 = vrot.slane %v8650, 5
    %v8674 = vrot.slane %v8673, 4
    %v8675 = vrot.slane %v8660, 5
    %v8676 = vsel %vm3679, %v8674, %v8675
    %v8677 = vcombine.low %v8664, %v8668
    %v8678 = vcombine.low %v8672, %v8676
    %v8679 = vsel %vm393, %v8677, 0
    %v8681 = vsel %vm393, %v8678, 0
    %8683 = vmatprep.subr.mxu0 0.0
    %8684 = vmatpush1.msra.mxu0 %v180
    %8685 = vmatprep.subr.mxu0 0.0
    %8686 = vmatpush1.msra.mxu0 %v181
    %8687 = vmatprep.subr.mxu0 0.0
    %8688 = vmatpush1.msra.mxu0 %v182
    %8689 = vmatprep.subr.mxu0 0.0
    %8690 = vmatpush1.msra.mxu0 %v183
    %8691 = vmatprep.subr.mxu0 0.0
    %8692 = vmatpush1.msra.mxu0 0.0
    %8693 = vmatprep.subr.mxu0 0.0
    %8694 = vmatpush1.msra.mxu0 0.0
    %8695 = vmatprep.subr.mxu0 0.0
    %8696 = vmatpush1.msra.mxu0 0.0
    %8697 = vmatprep.subr.mxu0 0.0
    %8698 = vmatpush1.msra.mxu0 0.0
    %8699 = vmatprep.subr.mxu0 0.0
    %8700 = vmatpush1.msra.mxu0 0.0
    %8701 = vmatprep.subr.mxu0 0.0
    %8702 = vmatpush1.msra.mxu0 0.0
    %8703 = vmatprep.subr.mxu0 0.0
    %8704 = vmatpush1.msra.mxu0 0.0
    %8705 = vmatprep.subr.mxu0 0.0
    %8706 = vmatpush1.msra.mxu0 0.0
    %8707 = vmatprep.subr.mxu0 0.0
    %8708 = vmatpush1.msra.mxu0 0.0
    %8709 = vmatprep.subr.mxu0 0.0
    %8710 = vmatpush1.msra.mxu0 0.0
    %8711 = vmatprep.subr.mxu0 0.0
    %8712 = vmatpush1.msra.mxu0 0.0
    %8713 = vmatprep.subr.mxu0 0.0
    %8714 = vmatpush1.msra.mxu0 0.0
    %8715 = vmatprep.subr.mxu0 0.0
    %8716 = vmatpush1.msra.mxu0 0.0
    %8717 = vmatprep.subr.mxu0 0.0
    %8718 = vmatpush1.msra.mxu0 0.0
    %8719 = vmatprep.subr.mxu0 0.0
    %8720 = vmatpush1.msra.mxu0 0.0
    %8721 = vmatprep.subr.mxu0 0.0
    %8722 = vmatpush1.msra.mxu0 0.0
    %8723 = vmatprep.subr.mxu0 0.0
    %8724 = vmatpush1.msra.mxu0 0.0
    %8725 = vmatprep.subr.mxu0 0.0
    %8726 = vmatpush1.msra.mxu0 0.0
    %8727 = vmatprep.subr.mxu0 0.0
    %8728 = vmatpush1.msra.mxu0 0.0
    %8729 = vmatprep.subr.mxu0 0.0
    %8730 = vmatpush1.msra.mxu0 0.0
    %8731 = vmatprep.subr.mxu0 0.0
    %8732 = vmatpush1.msra.mxu0 0.0
    %8733 = vmatprep.subr.mxu0 0.0
    %8734 = vmatpush1.msra.mxu0 0.0
    %8735 = vmatprep.subr.mxu0 0.0
    %8736 = vmatpush1.msra.mxu0 0.0
    %8737 = vmatprep.subr.mxu0 0.0
    %8738 = vmatpush1.msra.mxu0 0.0
    %8739 = vmatprep.subr.mxu0 0.0
    %8740 = vmatpush1.msra.mxu0 0.0
    %8741 = vmatprep.subr.mxu0 0.0
    %8742 = vmatpush1.msra.mxu0 0.0
    %8743 = vmatprep.subr.mxu0 0.0
    %8744 = vmatpush1.msra.mxu0 0.0
    %8745 = vmatprep.subr.mxu0 0.0
    %8746 = vmatpush1.msra.mxu0 0.0
    %8747 = vmatprep.mubr.f32.mxu0 0.0
    %8748 = vmatmul.mubr.f32.gmra.mrb[0].mxu0 %v8679
    %v8749 = vpop.f32.mrb[0].mxu0
    %v8750 = vadd.f32 0.0, %v8749
    %v8751 = vpop.f32.mrb[0].mxu0
    %8752 = vmatprep.mubr.f32.mxu0 0.0
    %8753 = vmatmul.mubr.f32.gmra.mrb[0].mxu0 %v8681
    %v8754 = vpop.f32.mrb[0].mxu0
    %v8755 = vadd.f32 0.0, %v8754
    %v8756 = vpop.f32.mrb[0].mxu0
    %8757 = vdwg.mxu0
    %v8758 = vcombine.low %v8647, %v8648
    %v8759 = vcombine.low %v8649, %v8650
    %v8760 = vsel %vm393, %v8758, 0
    %v8762 = vsel %vm393, %v8759, 0
    %8764 = vmatprep.subr.mxu0 0.0
    %8765 = vmatpush1.msra.mxu0 %v176
    %8766 = vmatprep.subr.mxu0 0.0
    %8767 = vmatpush1.msra.mxu0 %v177
    %8768 = vmatprep.subr.mxu0 0.0
    %8769 = vmatpush1.msra.mxu0 %v178
    %8770 = vmatprep.subr.mxu0 0.0
    %8771 = vmatpush1.msra.mxu0 %v179
    %8772 = vmatprep.subr.mxu0 0.0
    %8773 = vmatpush1.msra.mxu0 0.0
    %8774 = vmatprep.subr.mxu0 0.0
    %8775 = vmatpush1.msra.mxu0 0.0
    %8776 = vmatprep.subr.mxu0 0.0
    %8777 = vmatpush1.msra.mxu0 0.0
    %8778 = vmatprep.subr.mxu0 0.0
    %8779 = vmatpush1.msra.mxu0 0.0
    %8780 = vmatprep.subr.mxu0 0.0
    %8781 = vmatpush1.msra.mxu0 0.0
    %8782 = vmatprep.subr.mxu0 0.0
    %8783 = vmatpush1.msra.mxu0 0.0
    %8784 = vmatprep.subr.mxu0 0.0
    %8785 = vmatpush1.msra.mxu0 0.0
    %8786 = vmatprep.subr.mxu0 0.0
    %8787 = vmatpush1.msra.mxu0 0.0
    %8788 = vmatprep.subr.mxu0 0.0
    %8789 = vmatpush1.msra.mxu0 0.0
    %8790 = vmatprep.subr.mxu0 0.0
    %8791 = vmatpush1.msra.mxu0 0.0
    %8792 = vmatprep.subr.mxu0 0.0
    %8793 = vmatpush1.msra.mxu0 0.0
    %8794 = vmatprep.subr.mxu0 0.0
    %8795 = vmatpush1.msra.mxu0 0.0
    %8796 = vmatprep.subr.mxu0 0.0
    %8797 = vmatpush1.msra.mxu0 0.0
    %8798 = vmatprep.subr.mxu0 0.0
    %8799 = vmatpush1.msra.mxu0 0.0
    %8800 = vmatprep.subr.mxu0 0.0
    %8801 = vmatpush1.msra.mxu0 0.0
    %8802 = vmatprep.subr.mxu0 0.0
    %8803 = vmatpush1.msra.mxu0 0.0
    %8804 = vmatprep.subr.mxu0 0.0
    %8805 = vmatpush1.msra.mxu0 0.0
    %8806 = vmatprep.subr.mxu0 0.0
    %8807 = vmatpush1.msra.mxu0 0.0
    %8808 = vmatprep.subr.mxu0 0.0
    %8809 = vmatpush1.msra.mxu0 0.0
    %8810 = vmatprep.subr.mxu0 0.0
    %8811 = vmatpush1.msra.mxu0 0.0
    %8812 = vmatprep.subr.mxu0 0.0
    %8813 = vmatpush1.msra.mxu0 0.0
    %8814 = vmatprep.subr.mxu0 0.0
    %8815 = vmatpush1.msra.mxu0 0.0
    %8816 = vmatprep.subr.mxu0 0.0
    %8817 = vmatpush1.msra.mxu0 0.0
    %8818 = vmatprep.subr.mxu0 0.0
    %8819 = vmatpush1.msra.mxu0 0.0
    %8820 = vmatprep.subr.mxu0 0.0
    %8821 = vmatpush1.msra.mxu0 0.0
    %8822 = vmatprep.subr.mxu0 0.0
    %8823 = vmatpush1.msra.mxu0 0.0
    %8824 = vmatprep.subr.mxu0 0.0
    %8825 = vmatpush1.msra.mxu0 0.0
    %8826 = vmatprep.subr.mxu0 0.0
    %8827 = vmatpush1.msra.mxu0 0.0
    %8828 = vmatprep.mubr.f32.mxu0 0.0
    %8829 = vmatmul.mubr.f32.gmra.mrb[0].mxu0 %v8760
    %v8830 = vpop.f32.mrb[0].mxu0
    %v8831 = vadd.f32 %v8750, %v8830
    %v8832 = vpop.f32.mrb[0].mxu0
    %8833 = vmatprep.mubr.f32.mxu0 0.0
    %8834 = vmatmul.mubr.f32.gmra.mrb[0].mxu0 %v8762
    %v8835 = vpop.f32.mrb[0].mxu0
    %v8836 = vadd.f32 %v8755, %v8835
    %v8837 = vpop.f32.mrb[0].mxu0
    %8838 = vdwg.mxu0
    %v8839 = vrot.slane %v8647, 6
    %v8840 = vrot.slane %v8839, 4
    %v8841 = vrot.slane %v8657, 6
    %v8842 = vsel %vm3860, %v8840, %v8841
    %v8843 = vrot.slane %v8648, 6
    %v8844 = vrot.slane %v8843, 4
    %v8845 = vrot.slane %v8658, 6
    %v8846 = vsel %vm3860, %v8844, %v8845
    %v8847 = vrot.slane %v8649, 6
    %v8848 = vrot.slane %v8847, 4
    %v8849 = vrot.slane %v8659, 6
    %v8850 = vsel %vm3860, %v8848, %v8849
    %v8851 = vrot.slane %v8650, 6
    %v8852 = vrot.slane %v8851, 4
    %v8853 = vrot.slane %v8660, 6
    %v8854 = vsel %vm3860, %v8852, %v8853
    %v8855 = vcombine.low %v8842, %v8846
    %v8856 = vcombine.low %v8850, %v8854
    %v8857 = vsel %vm393, %v8855, 0
    %v8859 = vsel %vm393, %v8856, 0
    %8861 = vmatprep.subr.mxu0 0.0
    %8862 = vmatpush1.msra.mxu0 %v184
    %8863 = vmatprep.subr.mxu0 0.0
    %8864 = vmatpush1.msra.mxu0 %v185
    %8865 = vmatprep.subr.mxu0 0.0
    %8866 = vmatpush1.msra.mxu0 %v186
    %8867 = vmatprep.subr.mxu0 0.0
    %8868 = vmatpush1.msra.mxu0 %v187
    %8869 = vmatprep.subr.mxu0 0.0
    %8870 = vmatpush1.msra.mxu0 0.0
    %8871 = vmatprep.subr.mxu0 0.0
    %8872 = vmatpush1.msra.mxu0 0.0
    %8873 = vmatprep.subr.mxu0 0.0
    %8874 = vmatpush1.msra.mxu0 0.0
    %8875 = vmatprep.subr.mxu0 0.0
    %8876 = vmatpush1.msra.mxu0 0.0
    %8877 = vmatprep.subr.mxu0 0.0
    %8878 = vmatpush1.msra.mxu0 0.0
    %8879 = vmatprep.subr.mxu0 0.0
    %8880 = vmatpush1.msra.mxu0 0.0
    %8881 = vmatprep.subr.mxu0 0.0
    %8882 = vmatpush1.msra.mxu0 0.0
    %8883 = vmatprep.subr.mxu0 0.0
    %8884 = vmatpush1.msra.mxu0 0.0
    %8885 = vmatprep.subr.mxu0 0.0
    %8886 = vmatpush1.msra.mxu0 0.0
    %8887 = vmatprep.subr.mxu0 0.0
    %8888 = vmatpush1.msra.mxu0 0.0
    %8889 = vmatprep.subr.mxu0 0.0
    %8890 = vmatpush1.msra.mxu0 0.0
    %8891 = vmatprep.subr.mxu0 0.0
    %8892 = vmatpush1.msra.mxu0 0.0
    %8893 = vmatprep.subr.mxu0 0.0
    %8894 = vmatpush1.msra.mxu0 0.0
    %8895 = vmatprep.subr.mxu0 0.0
    %8896 = vmatpush1.msra.mxu0 0.0
    %8897 = vmatprep.subr.mxu0 0.0
    %8898 = vmatpush1.msra.mxu0 0.0
    %8899 = vmatprep.subr.mxu0 0.0
    %8900 = vmatpush1.msra.mxu0 0.0
    %8901 = vmatprep.subr.mxu0 0.0
    %8902 = vmatpush1.msra.mxu0 0.0
    %8903 = vmatprep.subr.mxu0 0.0
    %8904 = vmatpush1.msra.mxu0 0.0
    %8905 = vmatprep.subr.mxu0 0.0
    %8906 = vmatpush1.msra.mxu0 0.0
    %8907 = vmatprep.subr.mxu0 0.0
    %8908 = vmatpush1.msra.mxu0 0.0
    %8909 = vmatprep.subr.mxu0 0.0
    %8910 = vmatpush1.msra.mxu0 0.0
    %8911 = vmatprep.subr.mxu0 0.0
    %8912 = vmatpush1.msra.mxu0 0.0
    %8913 = vmatprep.subr.mxu0 0.0
    %8914 = vmatpush1.msra.mxu0 0.0
    %8915 = vmatprep.subr.mxu0 0.0
    %8916 = vmatpush1.msra.mxu0 0.0
    %8917 = vmatprep.subr.mxu0 0.0
    %8918 = vmatpush1.msra.mxu0 0.0
    %8919 = vmatprep.subr.mxu0 0.0
    %8920 = vmatpush1.msra.mxu0 0.0
    %8921 = vmatprep.subr.mxu0 0.0
    %8922 = vmatpush1.msra.mxu0 0.0
    %8923 = vmatprep.subr.mxu0 0.0
    %8924 = vmatpush1.msra.mxu0 0.0
    %8925 = vmatprep.mubr.f32.mxu0 0.0
    %8926 = vmatmul.mubr.f32.gmra.mrb[0].mxu0 %v8857
    %v8927 = vpop.f32.mrb[0].mxu0
    %v8928 = vadd.f32 0.0, %v8927
    %v8929 = vpop.f32.mrb[0].mxu0
    %8930 = vmatprep.mubr.f32.mxu0 0.0
    %8931 = vmatmul.mubr.f32.gmra.mrb[0].mxu0 %v8859
    %v8932 = vpop.f32.mrb[0].mxu0
    %v8933 = vadd.f32 0.0, %v8932
    %v8934 = vpop.f32.mrb[0].mxu0
    %8935 = vdwg.mxu0
    %v8936 = vadd.f32 %v8831, %v8928
    %v8937 = vadd.f32 %v8836, %v8933
    %v8939 = vcombine.low %v8648, %v8649
    %v8940 = vcombine.low %v8650, %v8651
    %v8941 = vsel %vm393, %v8939, 0
    %v8943 = vsel %vm393, %v8940, 0
    %8945 = vmatprep.subr.mxu0 0.0
    %8946 = vmatpush1.msra.mxu0 %v188
    %8947 = vmatprep.subr.mxu0 0.0
    %8948 = vmatpush1.msra.mxu0 %v189
    %8949 = vmatprep.subr.mxu0 0.0
    %8950 = vmatpush1.msra.mxu0 %v190
    %8951 = vmatprep.subr.mxu0 0.0
    %8952 = vmatpush1.msra.mxu0 %v191
    %8953 = vmatprep.subr.mxu0 0.0
    %8954 = vmatpush1.msra.mxu0 0.0
    %8955 = vmatprep.subr.mxu0 0.0
    %8956 = vmatpush1.msra.mxu0 0.0
    %8957 = vmatprep.subr.mxu0 0.0
    %8958 = vmatpush1.msra.mxu0 0.0
    %8959 = vmatprep.subr.mxu0 0.0
    %8960 = vmatpush1.msra.mxu0 0.0
    %8961 = vmatprep.subr.mxu0 0.0
    %8962 = vmatpush1.msra.mxu0 0.0
    %8963 = vmatprep.subr.mxu0 0.0
    %8964 = vmatpush1.msra.mxu0 0.0
    %8965 = vmatprep.subr.mxu0 0.0
    %8966 = vmatpush1.msra.mxu0 0.0
    %8967 = vmatprep.subr.mxu0 0.0
    %8968 = vmatpush1.msra.mxu0 0.0
    %8969 = vmatprep.subr.mxu0 0.0
    %8970 = vmatpush1.msra.mxu0 0.0
    %8971 = vmatprep.subr.mxu0 0.0
    %8972 = vmatpush1.msra.mxu0 0.0
    %8973 = vmatprep.subr.mxu0 0.0
    %8974 = vmatpush1.msra.mxu0 0.0
    %8975 = vmatprep.subr.mxu0 0.0
    %8976 = vmatpush1.msra.mxu0 0.0
    %8977 = vmatprep.subr.mxu0 0.0
    %8978 = vmatpush1.msra.mxu0 0.0
    %8979 = vmatprep.subr.mxu0 0.0
    %8980 = vmatpush1.msra.mxu0 0.0
    %8981 = vmatprep.subr.mxu0 0.0
    %8982 = vmatpush1.msra.mxu0 0.0
    %8983 = vmatprep.subr.mxu0 0.0
    %8984 = vmatpush1.msra.mxu0 0.0
    %8985 = vmatprep.subr.mxu0 0.0
    %8986 = vmatpush1.msra.mxu0 0.0
    %8987 = vmatprep.subr.mxu0 0.0
    %8988 = vmatpush1.msra.mxu0 0.0
    %8989 = vmatprep.subr.mxu0 0.0
    %8990 = vmatpush1.msra.mxu0 0.0
    %8991 = vmatprep.subr.mxu0 0.0
    %8992 = vmatpush1.msra.mxu0 0.0
    %8993 = vmatprep.subr.mxu0 0.0
    %8994 = vmatpush1.msra.mxu0 0.0
    %8995 = vmatprep.subr.mxu0 0.0
    %8996 = vmatpush1.msra.mxu0 0.0
    %8997 = vmatprep.subr.mxu0 0.0
    %8998 = vmatpush1.msra.mxu0 0.0
    %8999 = vmatprep.subr.mxu0 0.0
    %9000 = vmatpush1.msra.mxu0 0.0
    %9001 = vmatprep.subr.mxu0 0.0
    %9002 = vmatpush1.msra.mxu0 0.0
    %9003 = vmatprep.subr.mxu0 0.0
    %9004 = vmatpush1.msra.mxu0 0.0
    %9005 = vmatprep.subr.mxu0 0.0
    %9006 = vmatpush1.msra.mxu0 0.0
    %9007 = vmatprep.subr.mxu0 0.0
    %9008 = vmatpush1.msra.mxu0 0.0
    %9009 = vmatprep.mubr.f32.mxu0 0.0
    %9010 = vmatmul.mubr.f32.gmra.mrb[0].mxu0 %v8941
    %v9011 = vpop.f32.mrb[0].mxu0
    %v9012 = vadd.f32 0.0, %v9011
    %v9013 = vpop.f32.mrb[0].mxu0
    %9014 = vmatprep.mubr.f32.mxu0 0.0
    %9015 = vmatmul.mubr.f32.gmra.mrb[0].mxu0 %v8943
    %v9016 = vpop.f32.mrb[0].mxu0
    %v9017 = vadd.f32 0.0, %v9016
    %v9018 = vpop.f32.mrb[0].mxu0
    %9019 = vdwg.mxu0
    %v9020 = vadd.f32 %v8936, %v9012
    %v9021 = vadd.f32 %v8937, %v9017
    %v9022 = vcombine.high %v8651, %v8651
    %v9023 = vrot.slane %v8651, 5
    %v9024 = vrot.slane %v9023, 4
    %v9025 = vrot.slane %v9022, 5
    %v9026 = vsel %vm3679, %v9024, %v9025
    %v9027 = vcombine.low %v8668, %v8672
    %v9028 = vcombine.low %v8676, %v9026
    %v9029 = vsel %vm393, %v9027, 0
    %v9031 = vsel %vm393, %v9028, 0
    %9033 = vmatprep.subr.mxu0 0.0
    %9034 = vmatpush1.msra.mxu0 %v192
    %9035 = vmatprep.subr.mxu0 0.0
    %9036 = vmatpush1.msra.mxu0 %v193
    %9037 = vmatprep.subr.mxu0 0.0
    %9038 = vmatpush1.msra.mxu0 %v194
    %9039 = vmatprep.subr.mxu0 0.0
    %9040 = vmatpush1.msra.mxu0 %v195
    %9041 = vmatprep.subr.mxu0 0.0
    %9042 = vmatpush1.msra.mxu0 0.0
    %9043 = vmatprep.subr.mxu0 0.0
    %9044 = vmatpush1.msra.mxu0 0.0
    %9045 = vmatprep.subr.mxu0 0.0
    %9046 = vmatpush1.msra.mxu0 0.0
    %9047 = vmatprep.subr.mxu0 0.0
    %9048 = vmatpush1.msra.mxu0 0.0
    %9049 = vmatprep.subr.mxu0 0.0
    %9050 = vmatpush1.msra.mxu0 0.0
    %9051 = vmatprep.subr.mxu0 0.0
    %9052 = vmatpush1.msra.mxu0 0.0
    %9053 = vmatprep.subr.mxu0 0.0
    %9054 = vmatpush1.msra.mxu0 0.0
    %9055 = vmatprep.subr.mxu0 0.0
    %9056 = vmatpush1.msra.mxu0 0.0
    %9057 = vmatprep.subr.mxu0 0.0
    %9058 = vmatpush1.msra.mxu0 0.0
    %9059 = vmatprep.subr.mxu0 0.0
    %9060 = vmatpush1.msra.mxu0 0.0
    %9061 = vmatprep.subr.mxu0 0.0
    %9062 = vmatpush1.msra.mxu0 0.0
    %9063 = vmatprep.subr.mxu0 0.0
    %9064 = vmatpush1.msra.mxu0 0.0
    %9065 = vmatprep.subr.mxu0 0.0
    %9066 = vmatpush1.msra.mxu0 0.0
    %9067 = vmatprep.subr.mxu0 0.0
    %9068 = vmatpush1.msra.mxu0 0.0
    %9069 = vmatprep.subr.mxu0 0.0
    %9070 = vmatpush1.msra.mxu0 0.0
    %9071 = vmatprep.subr.mxu0 0.0
    %9072 = vmatpush1.msra.mxu0 0.0
    %9073 = vmatprep.subr.mxu0 0.0
    %9074 = vmatpush1.msra.mxu0 0.0
    %9075 = vmatprep.subr.mxu0 0.0
    %9076 = vmatpush1.msra.mxu0 0.0
    %9077 = vmatprep.subr.mxu0 0.0
    %9078 = vmatpush1.msra.mxu0 0.0
    %9079 = vmatprep.subr.mxu0 0.0
    %9080 = vmatpush1.msra.mxu0 0.0
    %9081 = vmatprep.subr.mxu0 0.0
    %9082 = vmatpush1.msra.mxu0 0.0
    %9083 = vmatprep.subr.mxu0 0.0
    %9084 = vmatpush1.msra.mxu0 0.0
    %9085 = vmatprep.subr.mxu0 0.0
    %9086 = vmatpush1.msra.mxu0 0.0
    %9087 = vmatprep.subr.mxu0 0.0
    %9088 = vmatpush1.msra.mxu0 0.0
    %9089 = vmatprep.subr.mxu0 0.0
    %9090 = vmatpush1.msra.mxu0 0.0
    %9091 = vmatprep.subr.mxu0 0.0
    %9092 = vmatpush1.msra.mxu0 0.0
    %9093 = vmatprep.subr.mxu0 0.0
    %9094 = vmatpush1.msra.mxu0 0.0
    %9095 = vmatprep.subr.mxu0 0.0
    %9096 = vmatpush1.msra.mxu0 0.0
    %9097 = vmatprep.mubr.f32.mxu0 0.0
    %9098 = vmatmul.mubr.f32.gmra.mrb[0].mxu0 %v9029
    %v9099 = vpop.f32.mrb[0].mxu0
    %v9100 = vadd.f32 0.0, %v9099
    %v9101 = vpop.f32.mrb[0].mxu0
    %9102 = vmatprep.mubr.f32.mxu0 0.0
    %9103 = vmatmul.mubr.f32.gmra.mrb[0].mxu0 %v9031
    %v9104 = vpop.f32.mrb[0].mxu0
    %v9105 = vadd.f32 0.0, %v9104
    %v9106 = vpop.f32.mrb[0].mxu0
    %9107 = vdwg.mxu0
    %v9108 = vadd.f32 %v9020, %v9100
    %v9109 = vadd.f32 %v9021, %v9105
    %v9110 = vrot.slane %v8651, 6
    %v9111 = vrot.slane %v9110, 4
    %v9112 = vrot.slane %v9022, 6
    %v9113 = vsel %vm3860, %v9111, %v9112
    %v9114 = vcombine.low %v8846, %v8850
    %v9115 = vcombine.low %v8854, %v9113
    %v9116 = vsel %vm393, %v9114, 0
    %v9118 = vsel %vm393, %v9115, 0
    %9120 = vmatprep.subr.mxu0 0.0
    %9121 = vmatpush1.msra.mxu0 %v196
    %9122 = vmatprep.subr.mxu0 0.0
    %9123 = vmatpush1.msra.mxu0 %v197
    %9124 = vmatprep.subr.mxu0 0.0
    %9125 = vmatpush1.msra.mxu0 %v198
    %9126 = vmatprep.subr.mxu0 0.0
    %9127 = vmatpush1.msra.mxu0 %v199
    %9128 = vmatprep.subr.mxu0 0.0
    %9129 = vmatpush1.msra.mxu0 0.0
    %9130 = vmatprep.subr.mxu0 0.0
    %9131 = vmatpush1.msra.mxu0 0.0
    %9132 = vmatprep.subr.mxu0 0.0
    %9133 = vmatpush1.msra.mxu0 0.0
    %9134 = vmatprep.subr.mxu0 0.0
    %9135 = vmatpush1.msra.mxu0 0.0
    %9136 = vmatprep.subr.mxu0 0.0
    %9137 = vmatpush1.msra.mxu0 0.0
    %9138 = vmatprep.subr.mxu0 0.0
    %9139 = vmatpush1.msra.mxu0 0.0
    %9140 = vmatprep.subr.mxu0 0.0
    %9141 = vmatpush1.msra.mxu0 0.0
    %9142 = vmatprep.subr.mxu0 0.0
    %9143 = vmatpush1.msra.mxu0 0.0
    %9144 = vmatprep.subr.mxu0 0.0
    %9145 = vmatpush1.msra.mxu0 0.0
    %9146 = vmatprep.subr.mxu0 0.0
    %9147 = vmatpush1.msra.mxu0 0.0
    %9148 = vmatprep.subr.mxu0 0.0
    %9149 = vmatpush1.msra.mxu0 0.0
    %9150 = vmatprep.subr.mxu0 0.0
    %9151 = vmatpush1.msra.mxu0 0.0
    %9152 = vmatprep.subr.mxu0 0.0
    %9153 = vmatpush1.msra.mxu0 0.0
    %9154 = vmatprep.subr.mxu0 0.0
    %9155 = vmatpush1.msra.mxu0 0.0
    %9156 = vmatprep.subr.mxu0 0.0
    %9157 = vmatpush1.msra.mxu0 0.0
    %9158 = vmatprep.subr.mxu0 0.0
    %9159 = vmatpush1.msra.mxu0 0.0
    %9160 = vmatprep.subr.mxu0 0.0
    %9161 = vmatpush1.msra.mxu0 0.0
    %9162 = vmatprep.subr.mxu0 0.0
    %9163 = vmatpush1.msra.mxu0 0.0
    %9164 = vmatprep.subr.mxu0 0.0
    %9165 = vmatpush1.msra.mxu0 0.0
    %9166 = vmatprep.subr.mxu0 0.0
    %9167 = vmatpush1.msra.mxu0 0.0
    %9168 = vmatprep.subr.mxu0 0.0
    %9169 = vmatpush1.msra.mxu0 0.0
    %9170 = vmatprep.subr.mxu0 0.0
    %9171 = vmatpush1.msra.mxu0 0.0
    %9172 = vmatprep.subr.mxu0 0.0
    %9173 = vmatpush1.msra.mxu0 0.0
    %9174 = vmatprep.subr.mxu0 0.0
    %9175 = vmatpush1.msra.mxu0 0.0
    %9176 = vmatprep.subr.mxu0 0.0
    %9177 = vmatpush1.msra.mxu0 0.0
    %9178 = vmatprep.subr.mxu0 0.0
    %9179 = vmatpush1.msra.mxu0 0.0
    %9180 = vmatprep.subr.mxu0 0.0
    %9181 = vmatpush1.msra.mxu0 0.0
    %9182 = vmatprep.subr.mxu0 0.0
    %9183 = vmatpush1.msra.mxu0 0.0
    %9184 = vmatprep.mubr.f32.mxu0 0.0
    %9185 = vmatmul.mubr.f32.gmra.mrb[0].mxu0 %v9116
    %v9186 = vpop.f32.mrb[0].mxu0
    %v9187 = vadd.f32 0.0, %v9186
    %v9188 = vpop.f32.mrb[0].mxu0
    %9189 = vmatprep.mubr.f32.mxu0 0.0
    %9190 = vmatmul.mubr.f32.gmra.mrb[0].mxu0 %v9118
    %v9191 = vpop.f32.mrb[0].mxu0
    %v9192 = vadd.f32 0.0, %v9191
    %v9193 = vpop.f32.mrb[0].mxu0
    %9194 = vdwg.mxu0
    %v9195 = vadd.f32 %v9108, %v9187
    %v9196 = vadd.f32 %v9109, %v9192
    %v9198 = vcombine.low %v8651, %v8652
    %v9199 = vsel %vm393, %v9198, 0
    %9201 = vmatprep.subr.mxu0 0.0
    %9202 = vmatpush1.msra.mxu0 %v200
    %9203 = vmatprep.subr.mxu0 0.0
    %9204 = vmatpush1.msra.mxu0 %v201
    %9205 = vmatprep.subr.mxu0 0.0
    %9206 = vmatpush1.msra.mxu0 %v202
    %9207 = vmatprep.subr.mxu0 0.0
    %9208 = vmatpush1.msra.mxu0 %v203
    %9209 = vmatprep.subr.mxu0 0.0
    %9210 = vmatpush1.msra.mxu0 0.0
    %9211 = vmatprep.subr.mxu0 0.0
    %9212 = vmatpush1.msra.mxu0 0.0
    %9213 = vmatprep.subr.mxu0 0.0
    %9214 = vmatpush1.msra.mxu0 0.0
    %9215 = vmatprep.subr.mxu0 0.0
    %9216 = vmatpush1.msra.mxu0 0.0
    %9217 = vmatprep.subr.mxu0 0.0
    %9218 = vmatpush1.msra.mxu0 0.0
    %9219 = vmatprep.subr.mxu0 0.0
    %9220 = vmatpush1.msra.mxu0 0.0
    %9221 = vmatprep.subr.mxu0 0.0
    %9222 = vmatpush1.msra.mxu0 0.0
    %9223 = vmatprep.subr.mxu0 0.0
    %9224 = vmatpush1.msra.mxu0 0.0
    %9225 = vmatprep.subr.mxu0 0.0
    %9226 = vmatpush1.msra.mxu0 0.0
    %9227 = vmatprep.subr.mxu0 0.0
    %9228 = vmatpush1.msra.mxu0 0.0
    %9229 = vmatprep.subr.mxu0 0.0
    %9230 = vmatpush1.msra.mxu0 0.0
    %9231 = vmatprep.subr.mxu0 0.0
    %9232 = vmatpush1.msra.mxu0 0.0
    %9233 = vmatprep.subr.mxu0 0.0
    %9234 = vmatpush1.msra.mxu0 0.0
    %9235 = vmatprep.subr.mxu0 0.0
    %9236 = vmatpush1.msra.mxu0 0.0
    %9237 = vmatprep.subr.mxu0 0.0
    %9238 = vmatpush1.msra.mxu0 0.0
    %9239 = vmatprep.subr.mxu0 0.0
    %9240 = vmatpush1.msra.mxu0 0.0
    %9241 = vmatprep.subr.mxu0 0.0
    %9242 = vmatpush1.msra.mxu0 0.0
    %9243 = vmatprep.subr.mxu0 0.0
    %9244 = vmatpush1.msra.mxu0 0.0
    %9245 = vmatprep.subr.mxu0 0.0
    %9246 = vmatpush1.msra.mxu0 0.0
    %9247 = vmatprep.subr.mxu0 0.0
    %9248 = vmatpush1.msra.mxu0 0.0
    %9249 = vmatprep.subr.mxu0 0.0
    %9250 = vmatpush1.msra.mxu0 0.0
    %9251 = vmatprep.subr.mxu0 0.0
    %9252 = vmatpush1.msra.mxu0 0.0
    %9253 = vmatprep.subr.mxu0 0.0
    %9254 = vmatpush1.msra.mxu0 0.0
    %9255 = vmatprep.subr.mxu0 0.0
    %9256 = vmatpush1.msra.mxu0 0.0
    %9257 = vmatprep.subr.mxu0 0.0
    %9258 = vmatpush1.msra.mxu0 0.0
    %9259 = vmatprep.subr.mxu0 0.0
    %9260 = vmatpush1.msra.mxu0 0.0
    %9261 = vmatprep.subr.mxu0 0.0
    %9262 = vmatpush1.msra.mxu0 0.0
    %9263 = vmatprep.subr.mxu0 0.0
    %9264 = vmatpush1.msra.mxu0 0.0
    %9265 = vmatprep.mubr.f32.mxu0 0.0
    %9266 = vmatmul.mubr.f32.gmra.mrb[0].mxu0 %v8762
    %v9267 = vpop.f32.mrb[0].mxu0
    %v9268 = vadd.f32 0.0, %v9267
    %v9269 = vpop.f32.mrb[0].mxu0
    %9270 = vmatprep.mubr.f32.mxu0 0.0
    %9271 = vmatmul.mubr.f32.gmra.mrb[0].mxu0 %v9199
    %v9272 = vpop.f32.mrb[0].mxu0
    %v9273 = vadd.f32 0.0, %v9272
    %v9274 = vpop.f32.mrb[0].mxu0
    %9275 = vdwg.mxu0
    %v9276 = vadd.f32 %v9195, %v9268
    %v9277 = vadd.f32 %v9196, %v9273
    %v9278 = vcombine.high %v8652, %v8652
    %v9279 = vrot.slane %v8652, 5
    %v9280 = vrot.slane %v9279, 4
    %v9281 = vrot.slane %v9278, 5
    %v9282 = vsel %vm3679, %v9280, %v9281
    %v9283 = vcombine.low %v9026, %v9282
    %v9284 = vsel %vm393, %v9283, 0
    %9286 = vmatprep.subr.mxu0 0.0
    %9287 = vmatpush1.msra.mxu0 %v204
    %9288 = vmatprep.subr.mxu0 0.0
    %9289 = vmatpush1.msra.mxu0 %v205
    %9290 = vmatprep.subr.mxu0 0.0
    %9291 = vmatpush1.msra.mxu0 %v206
    %9292 = vmatprep.subr.mxu0 0.0
    %9293 = vmatpush1.msra.mxu0 %v207
    %9294 = vmatprep.subr.mxu0 0.0
    %9295 = vmatpush1.msra.mxu0 0.0
    %9296 = vmatprep.subr.mxu0 0.0
    %9297 = vmatpush1.msra.mxu0 0.0
    %9298 = vmatprep.subr.mxu0 0.0
    %9299 = vmatpush1.msra.mxu0 0.0
    %9300 = vmatprep.subr.mxu0 0.0
    %9301 = vmatpush1.msra.mxu0 0.0
    %9302 = vmatprep.subr.mxu0 0.0
    %9303 = vmatpush1.msra.mxu0 0.0
    %9304 = vmatprep.subr.mxu0 0.0
    %9305 = vmatpush1.msra.mxu0 0.0
    %9306 = vmatprep.subr.mxu0 0.0
    %9307 = vmatpush1.msra.mxu0 0.0
    %9308 = vmatprep.subr.mxu0 0.0
    %9309 = vmatpush1.msra.mxu0 0.0
    %9310 = vmatprep.subr.mxu0 0.0
    %9311 = vmatpush1.msra.mxu0 0.0
    %9312 = vmatprep.subr.mxu0 0.0
    %9313 = vmatpush1.msra.mxu0 0.0
    %9314 = vmatprep.subr.mxu0 0.0
    %9315 = vmatpush1.msra.mxu0 0.0
    %9316 = vmatprep.subr.mxu0 0.0
    %9317 = vmatpush1.msra.mxu0 0.0
    %9318 = vmatprep.subr.mxu0 0.0
    %9319 = vmatpush1.msra.mxu0 0.0
    %9320 = vmatprep.subr.mxu0 0.0
    %9321 = vmatpush1.msra.mxu0 0.0
    %9322 = vmatprep.subr.mxu0 0.0
    %9323 = vmatpush1.msra.mxu0 0.0
    %9324 = vmatprep.subr.mxu0 0.0
    %9325 = vmatpush1.msra.mxu0 0.0
    %9326 = vmatprep.subr.mxu0 0.0
    %9327 = vmatpush1.msra.mxu0 0.0
    %9328 = vmatprep.subr.mxu0 0.0
    %9329 = vmatpush1.msra.mxu0 0.0
    %9330 = vmatprep.subr.mxu0 0.0
    %9331 = vmatpush1.msra.mxu0 0.0
    %9332 = vmatprep.subr.mxu0 0.0
    %9333 = vmatpush1.msra.mxu0 0.0
    %9334 = vmatprep.subr.mxu0 0.0
    %9335 = vmatpush1.msra.mxu0 0.0
    %9336 = vmatprep.subr.mxu0 0.0
    %9337 = vmatpush1.msra.mxu0 0.0
    %9338 = vmatprep.subr.mxu0 0.0
    %9339 = vmatpush1.msra.mxu0 0.0
    %9340 = vmatprep.subr.mxu0 0.0
    %9341 = vmatpush1.msra.mxu0 0.0
    %9342 = vmatprep.subr.mxu0 0.0
    %9343 = vmatpush1.msra.mxu0 0.0
    %9344 = vmatprep.subr.mxu0 0.0
    %9345 = vmatpush1.msra.mxu0 0.0
    %9346 = vmatprep.subr.mxu0 0.0
    %9347 = vmatpush1.msra.mxu0 0.0
    %9348 = vmatprep.subr.mxu0 0.0
    %9349 = vmatpush1.msra.mxu0 0.0
    %9350 = vmatprep.mubr.f32.mxu0 0.0
    %9351 = vmatmul.mubr.f32.gmra.mrb[0].mxu0 %v8681
    %v9352 = vpop.f32.mrb[0].mxu0
    %v9353 = vadd.f32 0.0, %v9352
    %v9354 = vpop.f32.mrb[0].mxu0
    %9355 = vmatprep.mubr.f32.mxu0 0.0
    %9356 = vmatmul.mubr.f32.gmra.mrb[0].mxu0 %v9284
    %v9357 = vpop.f32.mrb[0].mxu0
    %v9358 = vadd.f32 0.0, %v9357
    %v9359 = vpop.f32.mrb[0].mxu0
    %9360 = vdwg.mxu0
    %v9361 = vadd.f32 %v9276, %v9353
    %v9362 = vadd.f32 %v9277, %v9358
    %v9363 = vrot.slane %v8652, 6
    %v9364 = vrot.slane %v9363, 4
    %v9365 = vrot.slane %v9278, 6
    %v9366 = vsel %vm3860, %v9364, %v9365
    %v9367 = vcombine.low %v9113, %v9366
    %v9368 = vsel %vm393, %v9367, 0
    %9370 = vmatprep.subr.mxu0 0.0
    %9371 = vmatpush1.msra.mxu0 %v208
    %9372 = vmatprep.subr.mxu0 0.0
    %9373 = vmatpush1.msra.mxu0 %v209
    %9374 = vmatprep.subr.mxu0 0.0
    %9375 = vmatpush1.msra.mxu0 %v210
    %9376 = vmatprep.subr.mxu0 0.0
    %9377 = vmatpush1.msra.mxu0 %v211
    %9378 = vmatprep.subr.mxu0 0.0
    %9379 = vmatpush1.msra.mxu0 0.0
    %9380 = vmatprep.subr.mxu0 0.0
    %9381 = vmatpush1.msra.mxu0 0.0
    %9382 = vmatprep.subr.mxu0 0.0
    %9383 = vmatpush1.msra.mxu0 0.0
    %9384 = vmatprep.subr.mxu0 0.0
    %9385 = vmatpush1.msra.mxu0 0.0
    %9386 = vmatprep.subr.mxu0 0.0
    %9387 = vmatpush1.msra.mxu0 0.0
    %9388 = vmatprep.subr.mxu0 0.0
    %9389 = vmatpush1.msra.mxu0 0.0
    %9390 = vmatprep.subr.mxu0 0.0
    %9391 = vmatpush1.msra.mxu0 0.0
    %9392 = vmatprep.subr.mxu0 0.0
    %9393 = vmatpush1.msra.mxu0 0.0
    %9394 = vmatprep.subr.mxu0 0.0
    %9395 = vmatpush1.msra.mxu0 0.0
    %9396 = vmatprep.subr.mxu0 0.0
    %9397 = vmatpush1.msra.mxu0 0.0
    %9398 = vmatprep.subr.mxu0 0.0
    %9399 = vmatpush1.msra.mxu0 0.0
    %9400 = vmatprep.subr.mxu0 0.0
    %9401 = vmatpush1.msra.mxu0 0.0
    %9402 = vmatprep.subr.mxu0 0.0
    %9403 = vmatpush1.msra.mxu0 0.0
    %9404 = vmatprep.subr.mxu0 0.0
    %9405 = vmatpush1.msra.mxu0 0.0
    %9406 = vmatprep.subr.mxu0 0.0
    %9407 = vmatpush1.msra.mxu0 0.0
    %9408 = vmatprep.subr.mxu0 0.0
    %9409 = vmatpush1.msra.mxu0 0.0
    %9410 = vmatprep.subr.mxu0 0.0
    %9411 = vmatpush1.msra.mxu0 0.0
    %9412 = vmatprep.subr.mxu0 0.0
    %9413 = vmatpush1.msra.mxu0 0.0
    %9414 = vmatprep.subr.mxu0 0.0
    %9415 = vmatpush1.msra.mxu0 0.0
    %9416 = vmatprep.subr.mxu0 0.0
    %9417 = vmatpush1.msra.mxu0 0.0
    %9418 = vmatprep.subr.mxu0 0.0
    %9419 = vmatpush1.msra.mxu0 0.0
    %9420 = vmatprep.subr.mxu0 0.0
    %9421 = vmatpush1.msra.mxu0 0.0
    %9422 = vmatprep.subr.mxu0 0.0
    %9423 = vmatpush1.msra.mxu0 0.0
    %9424 = vmatprep.subr.mxu0 0.0
    %9425 = vmatpush1.msra.mxu0 0.0
    %9426 = vmatprep.subr.mxu0 0.0
    %9427 = vmatpush1.msra.mxu0 0.0
    %9428 = vmatprep.subr.mxu0 0.0
    %9429 = vmatpush1.msra.mxu0 0.0
    %9430 = vmatprep.subr.mxu0 0.0
    %9431 = vmatpush1.msra.mxu0 0.0
    %9432 = vmatprep.subr.mxu0 0.0
    %9433 = vmatpush1.msra.mxu0 0.0
    %9434 = vmatprep.mubr.f32.mxu0 0.0
    %9435 = vmatmul.mubr.f32.gmra.mrb[0].mxu0 %v8859
    %v9436 = vpop.f32.mrb[0].mxu0
    %v9437 = vadd.f32 0.0, %v9436
    %v9438 = vpop.f32.mrb[0].mxu0
    %9439 = vmatprep.mubr.f32.mxu0 0.0
    %9440 = vmatmul.mubr.f32.gmra.mrb[0].mxu0 %v9368
    %v9441 = vpop.f32.mrb[0].mxu0
    %v9442 = vadd.f32 0.0, %v9441
    %v9443 = vpop.f32.mrb[0].mxu0
    %9444 = vdwg.mxu0
    %v9445 = vadd.f32 %v9361, %v9437
    %v9446 = vadd.f32 %v9362, %v9442
    %v9447 = vadd.f32 %v9445, %v4473
    %v9448 = vadd.f32 %v9446, %v4473
    %v9449 = vmul.f32 %v9447, 0.5
    %v9450 = vmul.f32 %v9448, 0.5
    %v9451 = vmul.f32 %v9447, 0.70710677
    %v9452 = vmul.f32 %v9448, 0.70710677
    %v9453 = vand.u32 2147483647, %v9451
    %v9454 = vand.u32 2147483647, %v9452
    %v9455 = vmul.f32 %v9453, 0.3275911
    %v9456 = vmul.f32 %v9454, 0.3275911
    %v9457 = vadd.f32 %v9455, 1.0
    %v9458 = vadd.f32 %v9456, 1.0
    %v9459 = vrcp.pop %v9457
    %v9460 = vmul.f32 1.0, %v9459
    %v9461 = vrcp.pop %v9458
    %v9462 = vmul.f32 1.0, %v9461
    %v9463 = vmul.f32 %v9460, 1.0614054
    %v9464 = vmul.f32 %v9462, 1.0614054
    %v9465 = vadd.f32 %v9463, -1.4531521
    %v9466 = vadd.f32 %v9464, -1.4531521
    %v9467 = vmul.f32 %v9465, %v9460
    %v9468 = vmul.f32 %v9466, %v9462
    %v9469 = vadd.f32 %v9467, 1.4214138
    %v9470 = vadd.f32 %v9468, 1.4214138
    %v9471 = vmul.f32 %v9469, %v9460
    %v9472 = vmul.f32 %v9470, %v9462
    %v9473 = vadd.f32 %v9471, -0.28449672
    %v9474 = vadd.f32 %v9472, -0.28449672
    %v9475 = vmul.f32 %v9473, %v9460
    %v9476 = vmul.f32 %v9474, %v9462
    %v9477 = vadd.f32 %v9475, 0.2548296
    %v9478 = vadd.f32 %v9476, 0.2548296
    %v9479 = vmul.f32 %v9477, %v9460
    %v9480 = vmul.f32 %v9478, %v9462
    %v9481 = vsub.f32 0.0, %v9453
    %v9482 = vsub.f32 0.0, %v9454
    %v9483 = vmul.f32 %v9481, %v9453
    %v9484 = vmul.f32 %v9482, %v9454
    %v9485 = vmul.f32 %v9483, 1.442695
    %v9486 = vpow.pop %v9485
    %v9487 = vmul.f32 %v9484, 1.442695
    %v9488 = vpow.pop %v9487
    %v9489 = vmul.f32 %v9479, %v9486
    %v9490 = vmul.f32 %v9480, %v9488
    %v9491 = vsub.f32 1.0, %v9489
    %v9492 = vsub.f32 1.0, %v9490
    %vm9493 = vcmp.ge.f32.partialorder %v9451, 0.0
    %vm9494 = vcmp.ge.f32.partialorder %v9452, 0.0
    %v9495 = vsub.f32 0.0, %v9491
    %v9496 = vsub.f32 0.0, %v9492
    %v9497 = vsel %vm9493, %v9491, %v9495
    %v9498 = vsel %vm9494, %v9492, %v9496
    %v9499 = vadd.f32 %v9497, 1.0
    %v9500 = vadd.f32 %v9498, 1.0
    %v9501 = vmul.f32 %v9449, %v9499
    %v9502 = vmul.f32 %v9450, %v9500
    %v9505 = vcombine.high %v9501, %v9501
    %v9506 = vcombine.high %v9502, %v9502
    %9509 = vst.msk [vmem:[%s3657 + $0x1] sm:$0xf] %vm4537, %v9501
    %9510 = vst.msk [vmem:[%s3657 + $0x9] sm:$0xf] %vm4537, %v9505
    %9511 = vst.msk [vmem:[%s3657 + $0x11] sm:$0xf] %vm4537, %v9502
    %9512 = vst.msk [vmem:[%s3657 + $0x19] sm:$0xf] %vm4537, %v9506
    %v9513 = vld [vmem:[#allocation2] sm:$0xff]
    %v9514 = vld [vmem:[#allocation2 + $0x8] sm:$0xff]
    %v9515 = vld [vmem:[#allocation2 + $0x10] sm:$0xff]
    %v9516 = vld [vmem:[#allocation2 + $0x18] sm:$0xff]
    %v9517 = vld [vmem:[#allocation2 + $0x20] sm:$0xff]
    %v9518 = vld [vmem:[#allocation2 + $0x28] sm:$0xff]
    %v9523 = vcombine.high %v9513, %v9513
    %v9524 = vcombine.high %v9514, %v9514
    %v9525 = vcombine.high %v9515, %v9515
    %v9526 = vcombine.high %v9516, %v9516
    %v9527 = vrot.slane %v9513, 5
    %v9528 = vrot.slane %v9527, 4
    %v9529 = vrot.slane %v9523, 5
    %v9530 = vsel %vm3679, %v9528, %v9529
    %v9531 = vrot.slane %v9514, 5
    %v9532 = vrot.slane %v9531, 4
    %v9533 = vrot.slane %v9524, 5
    %v9534 = vsel %vm3679, %v9532, %v9533
    %v9535 = vrot.slane %v9515, 5
    %v9536 = vrot.slane %v9535, 4
    %v9537 = vrot.slane %v9525, 5
    %v9538 = vsel %vm3679, %v9536, %v9537
    %v9539 = vrot.slane %v9516, 5
    %v9540 = vrot.slane %v9539, 4
    %v9541 = vrot.slane %v9526, 5
    %v9542 = vsel %vm3679, %v9540, %v9541
    %v9543 = vcombine.low %v9530, %v9534
    %v9544 = vcombine.low %v9538, %v9542
    %v9545 = vsel %vm123, %v9543, 0
    %v9547 = vsel %vm123, %v9544, 0
    %9549 = vmatprep.subr.mxu0 0.0
    %9550 = vmatpush1.msra.mxu0 %v221
    %9551 = vmatprep.subr.mxu0 0.0
    %9552 = vmatpush1.msra.mxu0 %v222
    %9553 = vmatprep.subr.mxu0 0.0
    %9554 = vmatpush1.msra.mxu0 %v223
    %9555 = vmatprep.subr.mxu0 0.0
    %9556 = vmatpush1.msra.mxu0 %v224
    %9557 = vmatprep.subr.mxu0 0.0
    %9558 = vmatpush1.msra.mxu0 %v225
    %9559 = vmatprep.subr.mxu0 0.0
    %9560 = vmatpush1.msra.mxu0 %v226
    %9561 = vmatprep.subr.mxu0 0.0
    %9562 = vmatpush1.msra.mxu0 %v227
    %9563 = vmatprep.subr.mxu0 0.0
    %9564 = vmatpush1.msra.mxu0 %v228
    %9565 = vmatprep.subr.mxu0 0.0
    %9566 = vmatpush1.msra.mxu0 0.0
    %9567 = vmatprep.subr.mxu0 0.0
    %9568 = vmatpush1.msra.mxu0 0.0
    %9569 = vmatprep.subr.mxu0 0.0
    %9570 = vmatpush1.msra.mxu0 0.0
    %9571 = vmatprep.subr.mxu0 0.0
    %9572 = vmatpush1.msra.mxu0 0.0
    %9573 = vmatprep.subr.mxu0 0.0
    %9574 = vmatpush1.msra.mxu0 0.0
    %9575 = vmatprep.subr.mxu0 0.0
    %9576 = vmatpush1.msra.mxu0 0.0
    %9577 = vmatprep.subr.mxu0 0.0
    %9578 = vmatpush1.msra.mxu0 0.0
    %9579 = vmatprep.subr.mxu0 0.0
    %9580 = vmatpush1.msra.mxu0 0.0
    %9581 = vmatprep.subr.mxu0 0.0
    %9582 = vmatpush1.msra.mxu0 0.0
    %9583 = vmatprep.subr.mxu0 0.0
    %9584 = vmatpush1.msra.mxu0 0.0
    %9585 = vmatprep.subr.mxu0 0.0
    %9586 = vmatpush1.msra.mxu0 0.0
    %9587 = vmatprep.subr.mxu0 0.0
    %9588 = vmatpush1.msra.mxu0 0.0
    %9589 = vmatprep.subr.mxu0 0.0
    %9590 = vmatpush1.msra.mxu0 0.0
    %9591 = vmatprep.subr.mxu0 0.0
    %9592 = vmatpush1.msra.mxu0 0.0
    %9593 = vmatprep.subr.mxu0 0.0
    %9594 = vmatpush1.msra.mxu0 0.0
    %9595 = vmatprep.subr.mxu0 0.0
    %9596 = vmatpush1.msra.mxu0 0.0
    %9597 = vmatprep.subr.mxu0 0.0
    %9598 = vmatpush1.msra.mxu0 0.0
    %9599 = vmatprep.subr.mxu0 0.0
    %9600 = vmatpush1.msra.mxu0 0.0
    %9601 = vmatprep.subr.mxu0 0.0
    %9602 = vmatpush1.msra.mxu0 0.0
    %9603 = vmatprep.subr.mxu0 0.0
    %9604 = vmatpush1.msra.mxu0 0.0
    %9605 = vmatprep.subr.mxu0 0.0
    %9606 = vmatpush1.msra.mxu0 0.0
    %9607 = vmatprep.subr.mxu0 0.0
    %9608 = vmatpush1.msra.mxu0 0.0
    %9609 = vmatprep.subr.mxu0 0.0
    %9610 = vmatpush1.msra.mxu0 0.0
    %9611 = vmatprep.subr.mxu0 0.0
    %9612 = vmatpush1.msra.mxu0 0.0
    %9613 = vmatprep.mubr.f32.mxu0 0.0
    %9614 = vmatmul.mubr.f32.gmra.mrb[0].mxu0 %v9545
    %v9615 = vpop.f32.mrb[0].mxu0
    %v9616 = vadd.f32 0.0, %v9615
    %v9617 = vpop.f32.mrb[0].mxu0
    %9618 = vmatprep.mubr.f32.mxu0 0.0
    %9619 = vmatmul.mubr.f32.gmra.mrb[0].mxu0 %v9547
    %v9620 = vpop.f32.mrb[0].mxu0
    %v9621 = vadd.f32 0.0, %v9620
    %v9622 = vpop.f32.mrb[0].mxu0
    %9623 = vdwg.mxu0
    %v9624 = vcombine.low %v9513, %v9514
    %v9625 = vcombine.low %v9515, %v9516
    %v9626 = vsel %vm123, %v9624, 0
    %v9628 = vsel %vm123, %v9625, 0
    %9630 = vmatprep.subr.mxu0 0.0
    %9631 = vmatpush1.msra.mxu0 %v213
    %9632 = vmatprep.subr.mxu0 0.0
    %9633 = vmatpush1.msra.mxu0 %v214
    %9634 = vmatprep.subr.mxu0 0.0
    %9635 = vmatpush1.msra.mxu0 %v215
    %9636 = vmatprep.subr.mxu0 0.0
    %9637 = vmatpush1.msra.mxu0 %v216
    %9638 = vmatprep.subr.mxu0 0.0
    %9639 = vmatpush1.msra.mxu0 %v217
    %9640 = vmatprep.subr.mxu0 0.0
    %9641 = vmatpush1.msra.mxu0 %v218
    %9642 = vmatprep.subr.mxu0 0.0
    %9643 = vmatpush1.msra.mxu0 %v219
    %9644 = vmatprep.subr.mxu0 0.0
    %9645 = vmatpush1.msra.mxu0 %v220
    %9646 = vmatprep.subr.mxu0 0.0
    %9647 = vmatpush1.msra.mxu0 0.0
    %9648 = vmatprep.subr.mxu0 0.0
    %9649 = vmatpush1.msra.mxu0 0.0
    %9650 = vmatprep.subr.mxu0 0.0
    %9651 = vmatpush1.msra.mxu0 0.0
    %9652 = vmatprep.subr.mxu0 0.0
    %9653 = vmatpush1.msra.mxu0 0.0
    %9654 = vmatprep.subr.mxu0 0.0
    %9655 = vmatpush1.msra.mxu0 0.0
    %9656 = vmatprep.subr.mxu0 0.0
    %9657 = vmatpush1.msra.mxu0 0.0
    %9658 = vmatprep.subr.mxu0 0.0
    %9659 = vmatpush1.msra.mxu0 0.0
    %9660 = vmatprep.subr.mxu0 0.0
    %9661 = vmatpush1.msra.mxu0 0.0
    %9662 = vmatprep.subr.mxu0 0.0
    %9663 = vmatpush1.msra.mxu0 0.0
    %9664 = vmatprep.subr.mxu0 0.0
    %9665 = vmatpush1.msra.mxu0 0.0
    %9666 = vmatprep.subr.mxu0 0.0
    %9667 = vmatpush1.msra.mxu0 0.0
    %9668 = vmatprep.subr.mxu0 0.0
    %9669 = vmatpush1.msra.mxu0 0.0
    %9670 = vmatprep.subr.mxu0 0.0
    %9671 = vmatpush1.msra.mxu0 0.0
    %9672 = vmatprep.subr.mxu0 0.0
    %9673 = vmatpush1.msra.mxu0 0.0
    %9674 = vmatprep.subr.mxu0 0.0
    %9675 = vmatpush1.msra.mxu0 0.0
    %9676 = vmatprep.subr.mxu0 0.0
    %9677 = vmatpush1.msra.mxu0 0.0
    %9678 = vmatprep.subr.mxu0 0.0
    %9679 = vmatpush1.msra.mxu0 0.0
    %9680 = vmatprep.subr.mxu0 0.0
    %9681 = vmatpush1.msra.mxu0 0.0
    %9682 = vmatprep.subr.mxu0 0.0
    %9683 = vmatpush1.msra.mxu0 0.0
    %9684 = vmatprep.subr.mxu0 0.0
    %9685 = vmatpush1.msra.mxu0 0.0
    %9686 = vmatprep.subr.mxu0 0.0
    %9687 = vmatpush1.msra.mxu0 0.0
    %9688 = vmatprep.subr.mxu0 0.0
    %9689 = vmatpush1.msra.mxu0 0.0
    %9690 = vmatprep.subr.mxu0 0.0
    %9691 = vmatpush1.msra.mxu0 0.0
    %9692 = vmatprep.subr.mxu0 0.0
    %9693 = vmatpush1.msra.mxu0 0.0
    %9694 = vmatprep.mubr.f32.mxu0 0.0
    %9695 = vmatmul.mubr.f32.gmra.mrb[0].mxu0 %v9626
    %v9696 = vpop.f32.mrb[0].mxu0
    %v9697 = vadd.f32 %v9616, %v9696
    %v9698 = vpop.f32.mrb[0].mxu0
    %9699 = vmatprep.mubr.f32.mxu0 0.0
    %9700 = vmatmul.mubr.f32.gmra.mrb[0].mxu0 %v9628
    %v9701 = vpop.f32.mrb[0].mxu0
    %v9702 = vadd.f32 %v9621, %v9701
    %v9703 = vpop.f32.mrb[0].mxu0
    %9704 = vdwg.mxu0
    %v9705 = vrot.slane %v9513, 6
    %v9706 = vrot.slane %v9705, 4
    %v9707 = vrot.slane %v9523, 6
    %v9708 = vsel %vm3860, %v9706, %v9707
    %v9709 = vrot.slane %v9514, 6
    %v9710 = vrot.slane %v9709, 4
    %v9711 = vrot.slane %v9524, 6
    %v9712 = vsel %vm3860, %v9710, %v9711
    %v9713 = vrot.slane %v9515, 6
    %v9714 = vrot.slane %v9713, 4
    %v9715 = vrot.slane %v9525, 6
    %v9716 = vsel %vm3860, %v9714, %v9715
    %v9717 = vrot.slane %v9516, 6
    %v9718 = vrot.slane %v9717, 4
    %v9719 = vrot.slane %v9526, 6
    %v9720 = vsel %vm3860, %v9718, %v9719
    %v9721 = vcombine.low %v9708, %v9712
    %v9722 = vcombine.low %v9716, %v9720
    %v9723 = vsel %vm123, %v9721, 0
    %v9725 = vsel %vm123, %v9722, 0
    %9727 = vmatprep.subr.mxu0 0.0
    %9728 = vmatpush1.msra.mxu0 %v229
    %9729 = vmatprep.subr.mxu0 0.0
    %9730 = vmatpush1.msra.mxu0 %v230
    %9731 = vmatprep.subr.mxu0 0.0
    %9732 = vmatpush1.msra.mxu0 %v231
    %9733 = vmatprep.subr.mxu0 0.0
    %9734 = vmatpush1.msra.mxu0 %v232
    %9735 = vmatprep.subr.mxu0 0.0
    %9736 = vmatpush1.msra.mxu0 %v233
    %9737 = vmatprep.subr.mxu0 0.0
    %9738 = vmatpush1.msra.mxu0 %v234
    %9739 = vmatprep.subr.mxu0 0.0
    %9740 = vmatpush1.msra.mxu0 %v235
    %9741 = vmatprep.subr.mxu0 0.0
    %9742 = vmatpush1.msra.mxu0 %v236
    %9743 = vmatprep.subr.mxu0 0.0
    %9744 = vmatpush1.msra.mxu0 0.0
    %9745 = vmatprep.subr.mxu0 0.0
    %9746 = vmatpush1.msra.mxu0 0.0
    %9747 = vmatprep.subr.mxu0 0.0
    %9748 = vmatpush1.msra.mxu0 0.0
    %9749 = vmatprep.subr.mxu0 0.0
    %9750 = vmatpush1.msra.mxu0 0.0
    %9751 = vmatprep.subr.mxu0 0.0
    %9752 = vmatpush1.msra.mxu0 0.0
    %9753 = vmatprep.subr.mxu0 0.0
    %9754 = vmatpush1.msra.mxu0 0.0
    %9755 = vmatprep.subr.mxu0 0.0
    %9756 = vmatpush1.msra.mxu0 0.0
    %9757 = vmatprep.subr.mxu0 0.0
    %9758 = vmatpush1.msra.mxu0 0.0
    %9759 = vmatprep.subr.mxu0 0.0
    %9760 = vmatpush1.msra.mxu0 0.0
    %9761 = vmatprep.subr.mxu0 0.0
    %9762 = vmatpush1.msra.mxu0 0.0
    %9763 = vmatprep.subr.mxu0 0.0
    %9764 = vmatpush1.msra.mxu0 0.0
    %9765 = vmatprep.subr.mxu0 0.0
    %9766 = vmatpush1.msra.mxu0 0.0
    %9767 = vmatprep.subr.mxu0 0.0
    %9768 = vmatpush1.msra.mxu0 0.0
    %9769 = vmatprep.subr.mxu0 0.0
    %9770 = vmatpush1.msra.mxu0 0.0
    %9771 = vmatprep.subr.mxu0 0.0
    %9772 = vmatpush1.msra.mxu0 0.0
    %9773 = vmatprep.subr.mxu0 0.0
    %9774 = vmatpush1.msra.mxu0 0.0
    %9775 = vmatprep.subr.mxu0 0.0
    %9776 = vmatpush1.msra.mxu0 0.0
    %9777 = vmatprep.subr.mxu0 0.0
    %9778 = vmatpush1.msra.mxu0 0.0
    %9779 = vmatprep.subr.mxu0 0.0
    %9780 = vmatpush1.msra.mxu0 0.0
    %9781 = vmatprep.subr.mxu0 0.0
    %9782 = vmatpush1.msra.mxu0 0.0
    %9783 = vmatprep.subr.mxu0 0.0
    %9784 = vmatpush1.msra.mxu0 0.0
    %9785 = vmatprep.subr.mxu0 0.0
    %9786 = vmatpush1.msra.mxu0 0.0
    %9787 = vmatprep.subr.mxu0 0.0
    %9788 = vmatpush1.msra.mxu0 0.0
    %9789 = vmatprep.subr.mxu0 0.0
    %9790 = vmatpush1.msra.mxu0 0.0
    %9791 = vmatprep.mubr.f32.mxu0 0.0
    %9792 = vmatmul.mubr.f32.gmra.mrb[0].mxu0 %v9723
    %v9793 = vpop.f32.mrb[0].mxu0
    %v9794 = vadd.f32 0.0, %v9793
    %v9795 = vpop.f32.mrb[0].mxu0
    %9796 = vmatprep.mubr.f32.mxu0 0.0
    %9797 = vmatmul.mubr.f32.gmra.mrb[0].mxu0 %v9725
    %v9798 = vpop.f32.mrb[0].mxu0
    %v9799 = vadd.f32 0.0, %v9798
    %v9800 = vpop.f32.mrb[0].mxu0
    %9801 = vdwg.mxu0
    %v9802 = vadd.f32 %v9697, %v9794
    %v9803 = vadd.f32 %v9702, %v9799
    %v9805 = vcombine.low %v9514, %v9515
    %v9806 = vcombine.low %v9516, %v9517
    %v9807 = vsel %vm123, %v9805, 0
    %v9809 = vsel %vm123, %v9806, 0
    %9811 = vmatprep.subr.mxu0 0.0
    %9812 = vmatpush1.msra.mxu0 %v237
    %9813 = vmatprep.subr.mxu0 0.0
    %9814 = vmatpush1.msra.mxu0 %v238
    %9815 = vmatprep.subr.mxu0 0.0
    %9816 = vmatpush1.msra.mxu0 %v239
    %9817 = vmatprep.subr.mxu0 0.0
    %9818 = vmatpush1.msra.mxu0 %v240
    %9819 = vmatprep.subr.mxu0 0.0
    %9820 = vmatpush1.msra.mxu0 %v241
    %9821 = vmatprep.subr.mxu0 0.0
    %9822 = vmatpush1.msra.mxu0 %v242
    %9823 = vmatprep.subr.mxu0 0.0
    %9824 = vmatpush1.msra.mxu0 %v243
    %9825 = vmatprep.subr.mxu0 0.0
    %9826 = vmatpush1.msra.mxu0 %v244
    %9827 = vmatprep.subr.mxu0 0.0
    %9828 = vmatpush1.msra.mxu0 0.0
    %9829 = vmatprep.subr.mxu0 0.0
    %9830 = vmatpush1.msra.mxu0 0.0
    %9831 = vmatprep.subr.mxu0 0.0
    %9832 = vmatpush1.msra.mxu0 0.0
    %9833 = vmatprep.subr.mxu0 0.0
    %9834 = vmatpush1.msra.mxu0 0.0
    %9835 = vmatprep.subr.mxu0 0.0
    %9836 = vmatpush1.msra.mxu0 0.0
    %9837 = vmatprep.subr.mxu0 0.0
    %9838 = vmatpush1.msra.mxu0 0.0
    %9839 = vmatprep.subr.mxu0 0.0
    %9840 = vmatpush1.msra.mxu0 0.0
    %9841 = vmatprep.subr.mxu0 0.0
    %9842 = vmatpush1.msra.mxu0 0.0
    %9843 = vmatprep.subr.mxu0 0.0
    %9844 = vmatpush1.msra.mxu0 0.0
    %9845 = vmatprep.subr.mxu0 0.0
    %9846 = vmatpush1.msra.mxu0 0.0
    %9847 = vmatprep.subr.mxu0 0.0
    %9848 = vmatpush1.msra.mxu0 0.0
    %9849 = vmatprep.subr.mxu0 0.0
    %9850 = vmatpush1.msra.mxu0 0.0
    %9851 = vmatprep.subr.mxu0 0.0
    %9852 = vmatpush1.msra.mxu0 0.0
    %9853 = vmatprep.subr.mxu0 0.0
    %9854 = vmatpush1.msra.mxu0 0.0
    %9855 = vmatprep.subr.mxu0 0.0
    %9856 = vmatpush1.msra.mxu0 0.0
    %9857 = vmatprep.subr.mxu0 0.0
    %9858 = vmatpush1.msra.mxu0 0.0
    %9859 = vmatprep.subr.mxu0 0.0
    %9860 = vmatpush1.msra.mxu0 0.0
    %9861 = vmatprep.subr.mxu0 0.0
    %9862 = vmatpush1.msra.mxu0 0.0
    %9863 = vmatprep.subr.mxu0 0.0
    %9864 = vmatpush1.msra.mxu0 0.0
    %9865 = vmatprep.subr.mxu0 0.0
    %9866 = vmatpush1.msra.mxu0 0.0
    %9867 = vmatprep.subr.mxu0 0.0
    %9868 = vmatpush1.msra.mxu0 0.0
    %9869 = vmatprep.subr.mxu0 0.0
    %9870 = vmatpush1.msra.mxu0 0.0
    %9871 = vmatprep.subr.mxu0 0.0
    %9872 = vmatpush1.msra.mxu0 0.0
    %9873 = vmatprep.subr.mxu0 0.0
    %9874 = vmatpush1.msra.mxu0 0.0
    %9875 = vmatprep.mubr.f32.mxu0 0.0
    %9876 = vmatmul.mubr.f32.gmra.mrb[0].mxu0 %v9807
    %v9877 = vpop.f32.mrb[0].mxu0
    %v9878 = vadd.f32 0.0, %v9877
    %v9879 = vpop.f32.mrb[0].mxu0
    %9880 = vmatprep.mubr.f32.mxu0 0.0
    %9881 = vmatmul.mubr.f32.gmra.mrb[0].mxu0 %v9809
    %v9882 = vpop.f32.mrb[0].mxu0
    %v9883 = vadd.f32 0.0, %v9882
    %v9884 = vpop.f32.mrb[0].mxu0
    %9885 = vdwg.mxu0
    %v9886 = vadd.f32 %v9802, %v9878
    %v9887 = vadd.f32 %v9803, %v9883
    %v9888 = vcombine.high %v9517, %v9517
    %v9889 = vrot.slane %v9517, 5
    %v9890 = vrot.slane %v9889, 4
    %v9891 = vrot.slane %v9888, 5
    %v9892 = vsel %vm3679, %v9890, %v9891
    %v9893 = vcombine.low %v9534, %v9538
    %v9894 = vcombine.low %v9542, %v9892
    %v9895 = vsel %vm123, %v9893, 0
    %v9897 = vsel %vm123, %v9894, 0
    %9899 = vmatprep.subr.mxu0 0.0
    %9900 = vmatpush1.msra.mxu0 %v245
    %9901 = vmatprep.subr.mxu0 0.0
    %9902 = vmatpush1.msra.mxu0 %v246
    %9903 = vmatprep.subr.mxu0 0.0
    %9904 = vmatpush1.msra.mxu0 %v247
    %9905 = vmatprep.subr.mxu0 0.0
    %9906 = vmatpush1.msra.mxu0 %v248
    %9907 = vmatprep.subr.mxu0 0.0
    %9908 = vmatpush1.msra.mxu0 %v249
    %9909 = vmatprep.subr.mxu0 0.0
    %9910 = vmatpush1.msra.mxu0 %v250
    %9911 = vmatprep.subr.mxu0 0.0
    %9912 = vmatpush1.msra.mxu0 %v251
    %9913 = vmatprep.subr.mxu0 0.0
    %9914 = vmatpush1.msra.mxu0 %v252
    %9915 = vmatprep.subr.mxu0 0.0
    %9916 = vmatpush1.msra.mxu0 0.0
    %9917 = vmatprep.subr.mxu0 0.0
    %9918 = vmatpush1.msra.mxu0 0.0
    %9919 = vmatprep.subr.mxu0 0.0
    %9920 = vmatpush1.msra.mxu0 0.0
    %9921 = vmatprep.subr.mxu0 0.0
    %9922 = vmatpush1.msra.mxu0 0.0
    %9923 = vmatprep.subr.mxu0 0.0
    %9924 = vmatpush1.msra.mxu0 0.0
    %9925 = vmatprep.subr.mxu0 0.0
    %9926 = vmatpush1.msra.mxu0 0.0
    %9927 = vmatprep.subr.mxu0 0.0
    %9928 = vmatpush1.msra.mxu0 0.0
    %9929 = vmatprep.subr.mxu0 0.0
    %9930 = vmatpush1.msra.mxu0 0.0
    %9931 = vmatprep.subr.mxu0 0.0
    %9932 = vmatpush1.msra.mxu0 0.0
    %9933 = vmatprep.subr.mxu0 0.0
    %9934 = vmatpush1.msra.mxu0 0.0
    %9935 = vmatprep.subr.mxu0 0.0
    %9936 = vmatpush1.msra.mxu0 0.0
    %9937 = vmatprep.subr.mxu0 0.0
    %9938 = vmatpush1.msra.mxu0 0.0
    %9939 = vmatprep.subr.mxu0 0.0
    %9940 = vmatpush1.msra.mxu0 0.0
    %9941 = vmatprep.subr.mxu0 0.0
    %9942 = vmatpush1.msra.mxu0 0.0
    %9943 = vmatprep.subr.mxu0 0.0
    %9944 = vmatpush1.msra.mxu0 0.0
    %9945 = vmatprep.subr.mxu0 0.0
    %9946 = vmatpush1.msra.mxu0 0.0
    %9947 = vmatprep.subr.mxu0 0.0
    %9948 = vmatpush1.msra.mxu0 0.0
    %9949 = vmatprep.subr.mxu0 0.0
    %9950 = vmatpush1.msra.mxu0 0.0
    %9951 = vmatprep.subr.mxu0 0.0
    %9952 = vmatpush1.msra.mxu0 0.0
    %9953 = vmatprep.subr.mxu0 0.0
    %9954 = vmatpush1.msra.mxu0 0.0
    %9955 = vmatprep.subr.mxu0 0.0
    %9956 = vmatpush1.msra.mxu0 0.0
    %9957 = vmatprep.subr.mxu0 0.0
    %9958 = vmatpush1.msra.mxu0 0.0
    %9959 = vmatprep.subr.mxu0 0.0
    %9960 = vmatpush1.msra.mxu0 0.0
    %9961 = vmatprep.subr.mxu0 0.0
    %9962 = vmatpush1.msra.mxu0 0.0
    %9963 = vmatprep.mubr.f32.mxu0 0.0
    %9964 = vmatmul.mubr.f32.gmra.mrb[0].mxu0 %v9895
    %v9965 = vpop.f32.mrb[0].mxu0
    %v9966 = vadd.f32 0.0, %v9965
    %v9967 = vpop.f32.mrb[0].mxu0
    %9968 = vmatprep.mubr.f32.mxu0 0.0
    %9969 = vmatmul.mubr.f32.gmra.mrb[0].mxu0 %v9897
    %v9970 = vpop.f32.mrb[0].mxu0
    %v9971 = vadd.f32 0.0, %v9970
    %v9972 = vpop.f32.mrb[0].mxu0
    %9973 = vdwg.mxu0
    %v9974 = vadd.f32 %v9886, %v9966
    %v9975 = vadd.f32 %v9887, %v9971
    %v9976 = vrot.slane %v9517, 6
    %v9977 = vrot.slane %v9976, 4
    %v9978 = vrot.slane %v9888, 6
    %v9979 = vsel %vm3860, %v9977, %v9978
    %v9980 = vcombine.low %v9712, %v9716
    %v9981 = vcombine.low %v9720, %v9979
    %v9982 = vsel %vm123, %v9980, 0
    %v9984 = vsel %vm123, %v9981, 0
    %9986 = vmatprep.subr.mxu0 0.0
    %9987 = vmatpush1.msra.mxu0 %v253
    %9988 = vmatprep.subr.mxu0 0.0
    %9989 = vmatpush1.msra.mxu0 %v254
    %9990 = vmatprep.subr.mxu0 0.0
    %9991 = vmatpush1.msra.mxu0 %v255
    %9992 = vmatprep.subr.mxu0 0.0
    %9993 = vmatpush1.msra.mxu0 %v256
    %9994 = vmatprep.subr.mxu0 0.0
    %9995 = vmatpush1.msra.mxu0 %v257
    %9996 = vmatprep.subr.mxu0 0.0
    %9997 = vmatpush1.msra.mxu0 %v258
    %9998 = vmatprep.subr.mxu0 0.0
    %9999 = vmatpush1.msra.mxu0 %v259
    %10000 = vmatprep.subr.mxu0 0.0
    %10001 = vmatpush1.msra.mxu0 %v260
    %10002 = vmatprep.subr.mxu0 0.0
    %10003 = vmatpush1.msra.mxu0 0.0
    %10004 = vmatprep.subr.mxu0 0.0
    %10005 = vmatpush1.msra.mxu0 0.0
    %10006 = vmatprep.subr.mxu0 0.0
    %10007 = vmatpush1.msra.mxu0 0.0
    %10008 = vmatprep.subr.mxu0 0.0
    %10009 = vmatpush1.msra.mxu0 0.0
    %10010 = vmatprep.subr.mxu0 0.0
    %10011 = vmatpush1.msra.mxu0 0.0
    %10012 = vmatprep.subr.mxu0 0.0
    %10013 = vmatpush1.msra.mxu0 0.0
    %10014 = vmatprep.subr.mxu0 0.0
    %10015 = vmatpush1.msra.mxu0 0.0
    %10016 = vmatprep.subr.mxu0 0.0
    %10017 = vmatpush1.msra.mxu0 0.0
    %10018 = vmatprep.subr.mxu0 0.0
    %10019 = vmatpush1.msra.mxu0 0.0
    %10020 = vmatprep.subr.mxu0 0.0
    %10021 = vmatpush1.msra.mxu0 0.0
    %10022 = vmatprep.subr.mxu0 0.0
    %10023 = vmatpush1.msra.mxu0 0.0
    %10024 = vmatprep.subr.mxu0 0.0
    %10025 = vmatpush1.msra.mxu0 0.0
    %10026 = vmatprep.subr.mxu0 0.0
    %10027 = vmatpush1.msra.mxu0 0.0
    %10028 = vmatprep.subr.mxu0 0.0
    %10029 = vmatpush1.msra.mxu0 0.0
    %10030 = vmatprep.subr.mxu0 0.0
    %10031 = vmatpush1.msra.mxu0 0.0
    %10032 = vmatprep.subr.mxu0 0.0
    %10033 = vmatpush1.msra.mxu0 0.0
    %10034 = vmatprep.subr.mxu0 0.0
    %10035 = vmatpush1.msra.mxu0 0.0
    %10036 = vmatprep.subr.mxu0 0.0
    %10037 = vmatpush1.msra.mxu0 0.0
    %10038 = vmatprep.subr.mxu0 0.0
    %10039 = vmatpush1.msra.mxu0 0.0
    %10040 = vmatprep.subr.mxu0 0.0
    %10041 = vmatpush1.msra.mxu0 0.0
    %10042 = vmatprep.subr.mxu0 0.0
    %10043 = vmatpush1.msra.mxu0 0.0
    %10044 = vmatprep.subr.mxu0 0.0
    %10045 = vmatpush1.msra.mxu0 0.0
    %10046 = vmatprep.subr.mxu0 0.0
    %10047 = vmatpush1.msra.mxu0 0.0
    %10048 = vmatprep.subr.mxu0 0.0
    %10049 = vmatpush1.msra.mxu0 0.0
    %10050 = vmatprep.mubr.f32.mxu0 0.0
    %10051 = vmatmul.mubr.f32.gmra.mrb[0].mxu0 %v9982
    %v10052 = vpop.f32.mrb[0].mxu0
    %v10053 = vadd.f32 0.0, %v10052
    %v10054 = vpop.f32.mrb[0].mxu0
    %10055 = vmatprep.mubr.f32.mxu0 0.0
    %10056 = vmatmul.mubr.f32.gmra.mrb[0].mxu0 %v9984
    %v10057 = vpop.f32.mrb[0].mxu0
    %v10058 = vadd.f32 0.0, %v10057
    %v10059 = vpop.f32.mrb[0].mxu0
    %10060 = vdwg.mxu0
    %v10061 = vadd.f32 %v9974, %v10053
    %v10062 = vadd.f32 %v9975, %v10058
    %v10064 = vcombine.low %v9517, %v9518
    %v10065 = vsel %vm123, %v10064, 0
    %10067 = vmatprep.subr.mxu0 0.0
    %10068 = vmatpush1.msra.mxu0 %v261
    %10069 = vmatprep.subr.mxu0 0.0
    %10070 = vmatpush1.msra.mxu0 %v262
    %10071 = vmatprep.subr.mxu0 0.0
    %10072 = vmatpush1.msra.mxu0 %v263
    %10073 = vmatprep.subr.mxu0 0.0
    %10074 = vmatpush1.msra.mxu0 %v264
    %10075 = vmatprep.subr.mxu0 0.0
    %10076 = vmatpush1.msra.mxu0 %v265
    %10077 = vmatprep.subr.mxu0 0.0
    %10078 = vmatpush1.msra.mxu0 %v266
    %10079 = vmatprep.subr.mxu0 0.0
    %10080 = vmatpush1.msra.mxu0 %v267
    %10081 = vmatprep.subr.mxu0 0.0
    %10082 = vmatpush1.msra.mxu0 %v268
    %10083 = vmatprep.subr.mxu0 0.0
    %10084 = vmatpush1.msra.mxu0 0.0
    %10085 = vmatprep.subr.mxu0 0.0
    %10086 = vmatpush1.msra.mxu0 0.0
    %10087 = vmatprep.subr.mxu0 0.0
    %10088 = vmatpush1.msra.mxu0 0.0
    %10089 = vmatprep.subr.mxu0 0.0
    %10090 = vmatpush1.msra.mxu0 0.0
    %10091 = vmatprep.subr.mxu0 0.0
    %10092 = vmatpush1.msra.mxu0 0.0
    %10093 = vmatprep.subr.mxu0 0.0
    %10094 = vmatpush1.msra.mxu0 0.0
    %10095 = vmatprep.subr.mxu0 0.0
    %10096 = vmatpush1.msra.mxu0 0.0
    %10097 = vmatprep.subr.mxu0 0.0
    %10098 = vmatpush1.msra.mxu0 0.0
    %10099 = vmatprep.subr.mxu0 0.0
    %10100 = vmatpush1.msra.mxu0 0.0
    %10101 = vmatprep.subr.mxu0 0.0
    %10102 = vmatpush1.msra.mxu0 0.0
    %10103 = vmatprep.subr.mxu0 0.0
    %10104 = vmatpush1.msra.mxu0 0.0
    %10105 = vmatprep.subr.mxu0 0.0
    %10106 = vmatpush1.msra.mxu0 0.0
    %10107 = vmatprep.subr.mxu0 0.0
    %10108 = vmatpush1.msra.mxu0 0.0
    %10109 = vmatprep.subr.mxu0 0.0
    %10110 = vmatpush1.msra.mxu0 0.0
    %10111 = vmatprep.subr.mxu0 0.0
    %10112 = vmatpush1.msra.mxu0 0.0
    %10113 = vmatprep.subr.mxu0 0.0
    %10114 = vmatpush1.msra.mxu0 0.0
    %10115 = vmatprep.subr.mxu0 0.0
    %10116 = vmatpush1.msra.mxu0 0.0
    %10117 = vmatprep.subr.mxu0 0.0
    %10118 = vmatpush1.msra.mxu0 0.0
    %10119 = vmatprep.subr.mxu0 0.0
    %10120 = vmatpush1.msra.mxu0 0.0
    %10121 = vmatprep.subr.mxu0 0.0
    %10122 = vmatpush1.msra.mxu0 0.0
    %10123 = vmatprep.subr.mxu0 0.0
    %10124 = vmatpush1.msra.mxu0 0.0
    %10125 = vmatprep.subr.mxu0 0.0
    %10126 = vmatpush1.msra.mxu0 0.0
    %10127 = vmatprep.subr.mxu0 0.0
    %10128 = vmatpush1.msra.mxu0 0.0
    %10129 = vmatprep.subr.mxu0 0.0
    %10130 = vmatpush1.msra.mxu0 0.0
    %10131 = vmatprep.mubr.f32.mxu0 0.0
    %10132 = vmatmul.mubr.f32.gmra.mrb[0].mxu0 %v9628
    %v10133 = vpop.f32.mrb[0].mxu0
    %v10134 = vadd.f32 0.0, %v10133
    %v10135 = vpop.f32.mrb[0].mxu0
    %10136 = vmatprep.mubr.f32.mxu0 0.0
    %10137 = vmatmul.mubr.f32.gmra.mrb[0].mxu0 %v10065
    %v10138 = vpop.f32.mrb[0].mxu0
    %v10139 = vadd.f32 0.0, %v10138
    %v10140 = vpop.f32.mrb[0].mxu0
    %10141 = vdwg.mxu0
    %v10142 = vadd.f32 %v10061, %v10134
    %v10143 = vadd.f32 %v10062, %v10139
    %v10144 = vcombine.high %v9518, %v9518
    %v10145 = vrot.slane %v9518, 5
    %v10146 = vrot.slane %v10145, 4
    %v10147 = vrot.slane %v10144, 5
    %v10148 = vsel %vm3679, %v10146, %v10147
    %v10149 = vcombine.low %v9892, %v10148
    %v10150 = vsel %vm123, %v10149, 0
    %10152 = vmatprep.subr.mxu0 0.0
    %10153 = vmatpush1.msra.mxu0 %v269
    %10154 = vmatprep.subr.mxu0 0.0
    %10155 = vmatpush1.msra.mxu0 %v270
    %10156 = vmatprep.subr.mxu0 0.0
    %10157 = vmatpush1.msra.mxu0 %v271
    %10158 = vmatprep.subr.mxu0 0.0
    %10159 = vmatpush1.msra.mxu0 %v272
    %10160 = vmatprep.subr.mxu0 0.0
    %10161 = vmatpush1.msra.mxu0 %v273
    %10162 = vmatprep.subr.mxu0 0.0
    %10163 = vmatpush1.msra.mxu0 %v274
    %10164 = vmatprep.subr.mxu0 0.0
    %10165 = vmatpush1.msra.mxu0 %v275
    %10166 = vmatprep.subr.mxu0 0.0
    %10167 = vmatpush1.msra.mxu0 %v276
    %10168 = vmatprep.subr.mxu0 0.0
    %10169 = vmatpush1.msra.mxu0 0.0
    %10170 = vmatprep.subr.mxu0 0.0
    %10171 = vmatpush1.msra.mxu0 0.0
    %10172 = vmatprep.subr.mxu0 0.0
    %10173 = vmatpush1.msra.mxu0 0.0
    %10174 = vmatprep.subr.mxu0 0.0
    %10175 = vmatpush1.msra.mxu0 0.0
    %10176 = vmatprep.subr.mxu0 0.0
    %10177 = vmatpush1.msra.mxu0 0.0
    %10178 = vmatprep.subr.mxu0 0.0
    %10179 = vmatpush1.msra.mxu0 0.0
    %10180 = vmatprep.subr.mxu0 0.0
    %10181 = vmatpush1.msra.mxu0 0.0
    %10182 = vmatprep.subr.mxu0 0.0
    %10183 = vmatpush1.msra.mxu0 0.0
    %10184 = vmatprep.subr.mxu0 0.0
    %10185 = vmatpush1.msra.mxu0 0.0
    %10186 = vmatprep.subr.mxu0 0.0
    %10187 = vmatpush1.msra.mxu0 0.0
    %10188 = vmatprep.subr.mxu0 0.0
    %10189 = vmatpush1.msra.mxu0 0.0
    %10190 = vmatprep.subr.mxu0 0.0
    %10191 = vmatpush1.msra.mxu0 0.0
    %10192 = vmatprep.subr.mxu0 0.0
    %10193 = vmatpush1.msra.mxu0 0.0
    %10194 = vmatprep.subr.mxu0 0.0
    %10195 = vmatpush1.msra.mxu0 0.0
    %10196 = vmatprep.subr.mxu0 0.0
    %10197 = vmatpush1.msra.mxu0 0.0
    %10198 = vmatprep.subr.mxu0 0.0
    %10199 = vmatpush1.msra.mxu0 0.0
    %10200 = vmatprep.subr.mxu0 0.0
    %10201 = vmatpush1.msra.mxu0 0.0
    %10202 = vmatprep.subr.mxu0 0.0
    %10203 = vmatpush1.msra.mxu0 0.0
    %10204 = vmatprep.subr.mxu0 0.0
    %10205 = vmatpush1.msra.mxu0 0.0
    %10206 = vmatprep.subr.mxu0 0.0
    %10207 = vmatpush1.msra.mxu0 0.0
    %10208 = vmatprep.subr.mxu0 0.0
    %10209 = vmatpush1.msra.mxu0 0.0
    %10210 = vmatprep.subr.mxu0 0.0
    %10211 = vmatpush1.msra.mxu0 0.0
    %10212 = vmatprep.subr.mxu0 0.0
    %10213 = vmatpush1.msra.mxu0 0.0
    %10214 = vmatprep.subr.mxu0 0.0
    %10215 = vmatpush1.msra.mxu0 0.0
    %10216 = vmatprep.mubr.f32.mxu0 0.0
    %10217 = vmatmul.mubr.f32.gmra.mrb[0].mxu0 %v9547
    %v10218 = vpop.f32.mrb[0].mxu0
    %v10219 = vadd.f32 0.0, %v10218
    %v10220 = vpop.f32.mrb[0].mxu0
    %10221 = vmatprep.mubr.f32.mxu0 0.0
    %10222 = vmatmul.mubr.f32.gmra.mrb[0].mxu0 %v10150
    %v10223 = vpop.f32.mrb[0].mxu0
    %v10224 = vadd.f32 0.0, %v10223
    %v10225 = vpop.f32.mrb[0].mxu0
    %10226 = vdwg.mxu0
    %v10227 = vadd.f32 %v10142, %v10219
    %v10228 = vadd.f32 %v10143, %v10224
    %v10229 = vrot.slane %v9518, 6
    %v10230 = vrot.slane %v10229, 4
    %v10231 = vrot.slane %v10144, 6
    %v10232 = vsel %vm3860, %v10230, %v10231
    %v10233 = vcombine.low %v9979, %v10232
    %v10234 = vsel %vm123, %v10233, 0
    %10236 = vmatprep.subr.mxu0 0.0
    %10237 = vmatpush1.msra.mxu0 %v277
    %10238 = vmatprep.subr.mxu0 0.0
    %10239 = vmatpush1.msra.mxu0 %v278
    %10240 = vmatprep.subr.mxu0 0.0
    %10241 = vmatpush1.msra.mxu0 %v279
    %10242 = vmatprep.subr.mxu0 0.0
    %10243 = vmatpush1.msra.mxu0 %v280
    %10244 = vmatprep.subr.mxu0 0.0
    %10245 = vmatpush1.msra.mxu0 %v281
    %10246 = vmatprep.subr.mxu0 0.0
    %10247 = vmatpush1.msra.mxu0 %v282
    %10248 = vmatprep.subr.mxu0 0.0
    %10249 = vmatpush1.msra.mxu0 %v283
    %10250 = vmatprep.subr.mxu0 0.0
    %10251 = vmatpush1.msra.mxu0 %v284
    %10252 = vmatprep.subr.mxu0 0.0
    %10253 = vmatpush1.msra.mxu0 0.0
    %10254 = vmatprep.subr.mxu0 0.0
    %10255 = vmatpush1.msra.mxu0 0.0
    %10256 = vmatprep.subr.mxu0 0.0
    %10257 = vmatpush1.msra.mxu0 0.0
    %10258 = vmatprep.subr.mxu0 0.0
    %10259 = vmatpush1.msra.mxu0 0.0
    %10260 = vmatprep.subr.mxu0 0.0
    %10261 = vmatpush1.msra.mxu0 0.0
    %10262 = vmatprep.subr.mxu0 0.0
    %10263 = vmatpush1.msra.mxu0 0.0
    %10264 = vmatprep.subr.mxu0 0.0
    %10265 = vmatpush1.msra.mxu0 0.0
    %10266 = vmatprep.subr.mxu0 0.0
    %10267 = vmatpush1.msra.mxu0 0.0
    %10268 = vmatprep.subr.mxu0 0.0
    %10269 = vmatpush1.msra.mxu0 0.0
    %10270 = vmatprep.subr.mxu0 0.0
    %10271 = vmatpush1.msra.mxu0 0.0
    %10272 = vmatprep.subr.mxu0 0.0
    %10273 = vmatpush1.msra.mxu0 0.0
    %10274 = vmatprep.subr.mxu0 0.0
    %10275 = vmatpush1.msra.mxu0 0.0
    %10276 = vmatprep.subr.mxu0 0.0
    %10277 = vmatpush1.msra.mxu0 0.0
    %10278 = vmatprep.subr.mxu0 0.0
    %10279 = vmatpush1.msra.mxu0 0.0
    %10280 = vmatprep.subr.mxu0 0.0
    %10281 = vmatpush1.msra.mxu0 0.0
    %10282 = vmatprep.subr.mxu0 0.0
    %10283 = vmatpush1.msra.mxu0 0.0
    %10284 = vmatprep.subr.mxu0 0.0
    %10285 = vmatpush1.msra.mxu0 0.0
    %10286 = vmatprep.subr.mxu0 0.0
    %10287 = vmatpush1.msra.mxu0 0.0
    %10288 = vmatprep.subr.mxu0 0.0
    %10289 = vmatpush1.msra.mxu0 0.0
    %10290 = vmatprep.subr.mxu0 0.0
    %10291 = vmatpush1.msra.mxu0 0.0
    %10292 = vmatprep.subr.mxu0 0.0
    %10293 = vmatpush1.msra.mxu0 0.0
    %10294 = vmatprep.subr.mxu0 0.0
    %10295 = vmatpush1.msra.mxu0 0.0
    %10296 = vmatprep.subr.mxu0 0.0
    %10297 = vmatpush1.msra.mxu0 0.0
    %10298 = vmatprep.subr.mxu0 0.0
    %10299 = vmatpush1.msra.mxu0 0.0
    %10300 = vmatprep.mubr.f32.mxu0 0.0
    %10301 = vmatmul.mubr.f32.gmra.mrb[0].mxu0 %v9725
    %v10302 = vpop.f32.mrb[0].mxu0
    %v10303 = vadd.f32 0.0, %v10302
    %v10304 = vpop.f32.mrb[0].mxu0
    %10305 = vmatprep.mubr.f32.mxu0 0.0
    %10306 = vmatmul.mubr.f32.gmra.mrb[0].mxu0 %v10234
    %v10307 = vpop.f32.mrb[0].mxu0
    %v10308 = vadd.f32 0.0, %v10307
    %v10309 = vpop.f32.mrb[0].mxu0
    %10310 = vdwg.mxu0
    %v10311 = vadd.f32 %v10227, %v10303
    %v10312 = vadd.f32 %v10228, %v10308
    %v10315 = vrot.slane %v10311, 7
    %v10316 = vrot.slane %v10311, 1
    %v10317 = vrot.slane %v10311, 2
    %v10318 = vrot.slane %v10311, 3
    %v10319 = vrot.slane %v10311, 4
    %v10320 = vrot.slane %v10311, 5
    %v10321 = vrot.slane %v10311, 6
    %v10322 = vrot.slane %v10312, 7
    %v10323 = vrot.slane %v10312, 1
    %v10324 = vrot.slane %v10312, 2
    %v10325 = vrot.slane %v10312, 3
    %v10326 = vrot.slane %v10312, 4
    %v10327 = vrot.slane %v10312, 5
    %v10328 = vrot.slane %v10312, 6
    %v10345 = vadd.f32 %v8314, %v10315
    %v10346 = vadd.f32 %v8315, %v10311
    %v10347 = vadd.f32 %v8316, %v10316
    %v10348 = vadd.f32 %v8317, %v10317
    %v10349 = vadd.f32 %v8318, %v10318
    %v10350 = vadd.f32 %v8319, %v10319
    %v10351 = vadd.f32 %v8320, %v10320
    %v10352 = vadd.f32 %v8321, %v10321
    %v10353 = vadd.f32 %v8322, %v10322
    %v10354 = vadd.f32 %v8323, %v10312
    %v10355 = vadd.f32 %v8324, %v10323
    %v10356 = vadd.f32 %v8325, %v10324
    %v10357 = vadd.f32 %v8326, %v10325
    %v10358 = vadd.f32 %v8327, %v10326
    %v10359 = vadd.f32 %v8328, %v10327
    %v10360 = vadd.f32 %v8329, %v10328
    %v10361 = vadd.f32 %v10345, %v5394
    %v10362 = vadd.f32 %v10346, %v5394
    %v10363 = vadd.f32 %v10347, %v5394
    %v10364 = vadd.f32 %v10348, %v5394
    %v10365 = vadd.f32 %v10349, %v5394
    %v10366 = vadd.f32 %v10350, %v5394
    %v10367 = vadd.f32 %v10351, %v5394
    %v10368 = vadd.f32 %v10352, %v5394
    %v10369 = vadd.f32 %v10353, %v5394
    %v10370 = vadd.f32 %v10354, %v5394
    %v10371 = vadd.f32 %v10355, %v5394
    %v10372 = vadd.f32 %v10356, %v5394
    %v10373 = vadd.f32 %v10357, %v5394
    %v10374 = vadd.f32 %v10358, %v5394
    %v10375 = vadd.f32 %v10359, %v5394
    %v10376 = vadd.f32 %v10360, %v5394
    %vm10377 = vcmask 254977
    %10378 = vst.msk [vmem:[#allocation3] sm:$0x2] %vm10377, %v10361
    %10379 = vst.msk [vmem:[#allocation3 + $0x2] sm:$0x2] %vm10377, %v10362
    %10380 = vst.msk [vmem:[#allocation3 + $0x4] sm:$0x2] %vm10377, %v10363
    %10381 = vst.msk [vmem:[#allocation3 + $0x6] sm:$0x2] %vm10377, %v10364
    %10382 = vst.msk [vmem:[#allocation3 + $0x8] sm:$0x2] %vm10377, %v10365
    %10383 = vst.msk [vmem:[#allocation3 + $0xa] sm:$0x2] %vm10377, %v10366
    %10384 = vst.msk [vmem:[#allocation3 + $0xc] sm:$0x2] %vm10377, %v10367
    %10385 = vst.msk [vmem:[#allocation3 + $0xe] sm:$0x2] %vm10377, %v10368
    %10386 = vst.msk [vmem:[#allocation3 + $0x10] sm:$0x2] %vm10377, %v10369
    %10387 = vst.msk [vmem:[#allocation3 + $0x12] sm:$0x2] %vm10377, %v10370
    %10388 = vst.msk [vmem:[#allocation3 + $0x14] sm:$0x2] %vm10377, %v10371
    %10389 = vst.msk [vmem:[#allocation3 + $0x16] sm:$0x2] %vm10377, %v10372
    %10390 = vst.msk [vmem:[#allocation3 + $0x18] sm:$0x2] %vm10377, %v10373
    %10391 = vst.msk [vmem:[#allocation3 + $0x1a] sm:$0x2] %vm10377, %v10374
    %10392 = vst.msk [vmem:[#allocation3 + $0x1c] sm:$0x2] %vm10377, %v10375
    %10393 = vst.msk [vmem:[#allocation3 + $0x1e] sm:$0x2] %vm10377, %v10376
    // Predicated region
    $region118: #{transformer_layer_forward.1} parent=1 // pred_check
      _
    $region119: #{transformer_layer_forward.1} parent=1 // pred_check_branch
      %10395 = sbr.rel (0) target = $region121
    $region120: #{transformer_layer_forward.1} parent=1 // pred_region
      %s10397 = ssub.s32 512, 512
      %10398 = vsyncadd [#allocation4], %s10397
      %s10399 = sshll.u32 [#allocation3], 4
      %s10400 = int_to_ptr.vmem [resolvable:$true] %s10399
      %10405 = dma.vmem_to_hbm [thread:$0]  %s10400, 512, %s59, [#allocation4], 32, 32, 2
    $region121: #{transformer_layer_forward.1} parent=1 // pred_fallthru
      _
    // Predicated region
    $region122: #{transformer_layer_forward.1} parent=1 // pred_check
      _
    $region123: #{transformer_layer_forward.1} parent=1 // pred_check_branch
      %10407 = sbr.rel (0) target = $region125
    $region124: #{transformer_layer_forward.1} parent=1 // pred_region
      %10408 = dma.done [#allocation4], 512
    $region125: #{transformer_layer_forward.1} parent=1 // pred_fallthru
      _
    %10409 = vsyncpa [#allocation4], 1

</llo_original>
